<compile_context>
chip_gen: v7x
topology: tpu7x:2x2x1
jax: 0.10.0
libtpu: 0.0.40
codegen_flags: <defaults>
</compile_context>

<pallas_src>
import functools
import numpy as np
import jax
import jax.numpy as jnp
from jax import lax
from jax.experimental import pallas as pl
from jax.experimental.pallas import tpu as pltpu

_MiB = 1024 * 1024
_BF16_WEIGHT_KEYS = ("wih_f", "wih_b", "whh_f", "whh_b", "w_conv")


# --------------------------------------------------------------------------------------
# Small hardware / capability probes (trace-time, cached)
# --------------------------------------------------------------------------------------
@functools.lru_cache(maxsize=None)
def _single_buffer_supported():
    """Probe whether pipeline_mode=pl.Buffered(1) is accepted for constant-index inputs."""
    try:
        w_spec = pl.BlockSpec((8, 128), lambda i: (0, 0), pipeline_mode=pl.Buffered(1))

        def _k(x_ref, w_ref, o_ref):
            o_ref[...] = x_ref[...] + w_ref[...]

        out = pl.pallas_call(
            _k,
            out_shape=jax.ShapeDtypeStruct((16, 128), jnp.float32),
            grid=(2,),
            in_specs=[pl.BlockSpec((8, 128), lambda i: (i, 0)), w_spec],
            out_specs=pl.BlockSpec((8, 128), lambda i: (i, 0)),
        )(jnp.zeros((16, 128), jnp.float32), jnp.ones((8, 128), jnp.float32))
        jax.block_until_ready(out)
        return True
    except Exception:
        return False


@functools.lru_cache(maxsize=None)
def _num_tensorcores():
    try:
        info = pltpu.get_tpu_info()
        for name in ("num_tensorcores", "tensorcore_count", "num_cores",
                     "core_count", "num_cores_per_chip"):
            v = getattr(info, name, None)
            if isinstance(v, (int, np.integer)) and 0 < int(v) <= 8:
                return int(v)
    except Exception:
        pass
    return 1   # v5e / v6e (single TensorCore) default


@functools.lru_cache(maxsize=None)
def _vmem_capacity_bytes():
    try:
        info = pltpu.get_tpu_info()
        v = getattr(info, "vmem_capacity_bytes", None)
        if isinstance(v, (int, np.integer)) and int(v) > 0:
            return int(v)
    except Exception:
        pass
    return 64 * _MiB   # conservative (v7x-sized) fallback


def _vmem_estimate_bytes(nf, bt, mfd, pad, weights, single_buf_weights):
    xp = nf * bt * 6 * mfd * 2                          # bf16 projection scratch
    rp = (nf + 2 * pad) * bt * mfd * 4                  # f32 padded GRU output
    io = 2 * 2 * nf * bt * mfd * 4                      # in + out tiles, double buffered
    wmul = 1 if single_buf_weights else 2
    wbytes = sum(int(np.prod(w.shape)) * int(np.dtype(w.dtype).itemsize)
                 for w in weights) * wmul
    return xp + rp + io + wbytes + 2 * _MiB             # slack for Mosaic internals


def _choose_batch_tile(bs, nf, mfd, pad, weights, n_cores, budget, single_buf):
    cands = [bt for bt in range(1, bs + 1) if bs % bt == 0]
    feasible = [bt for bt in cands
                if _vmem_estimate_bytes(nf, bt, mfd, pad, weights, single_buf) <= budget]
    if not feasible:
        feasible = [1]

    def score(bt):
        n_tiles = bs // bt
        return (
            0 if n_tiles >= n_cores else 1,              # keep every TensorCore busy
            n_tiles,                                     # ...with as few grid steps as possible
            0 if (bt % 8 == 0 or bt == bs) else 1,       # sublane-aligned per-step stores
            -bt,
        )

    return min(feasible, key=score)


# --------------------------------------------------------------------------------------
# Kernel
# --------------------------------------------------------------------------------------
def _sigmoid(v):
    # exact identity; tanh maps to the EUP, keeping divides off the recurrence chain
    return 0.5 * (jnp.tanh(0.5 * v) + 1.0)


def _gru_cell(gx, off, gh, h, mfd):
    r_g = _sigmoid(gx[:, off:off + mfd] + gh[:, 0:mfd])
    z_g = _sigmoid(gx[:, off + mfd:off + 2 * mfd] + gh[:, mfd:2 * mfd])
    n_g = jnp.tanh(gx[:, off + 2 * mfd:off + 3 * mfd] + r_g * gh[:, 2 * mfd:3 * mfd])
    return (1.0 - z_g) * n_g + z_g * h


def _g3block_kernel(x_ref,
                    wih_ref, bih_ref,
                    whh_f_ref, bhh_f_ref, whh_b_ref, bhh_b_ref,
                    w_conv_ref, b_conv_ref, gamma_ref, beta_ref,
                    assign_mg_ref, assign_gm_ref,
                    out_ref,
                    xp_scr, rp_scr,
                    *, ks, dilation, pad, groups, grouped_conv,
                    eps=1e-5, neg_slope=0.01):
    nf, bt, mfd = x_ref.shape
    cpg = mfd // groups
    bf16 = jnp.bfloat16

    # ---- 1. both GRU directions' input projections: one wide bf16 MXU matmul -------
    # (x is NOT held live past this point; it is re-read from VMEM for the residual.)
    # TODO(synk): for very long nf, chunk this projection / xp_scr over time tiles.
    x2d = x_ref[...].reshape(nf * bt, mfd).astype(bf16)
    xp = jnp.dot(x2d, wih_ref[...], preferred_element_type=jnp.float32) + bih_ref[...]
    xp_scr[...] = xp.reshape(nf, bt, 6 * mfd).astype(bf16)

    # ---- 2. zero only the conv halo ('same' padding) rows of the padded r buffer ---
    if pad > 0:
        zero_edge = jnp.zeros((pad, bt, mfd), jnp.float32)
        rp_scr[0:pad] = zero_edge
        rp_scr[pad + nf:pad + nf + pad] = zero_edge

    # ---- 3. interleaved fwd/bwd GRU recurrence (2x ILP on the serial chain) --------
    # loop invariants hoisted (JAX does not CSE broadcasts; refs read once)
    whh_f = whh_f_ref[...]                               # bf16 (mfd, 3*mfd)
    whh_b = whh_b_ref[...]
    bhh_f = jnp.broadcast_to(bhh_f_ref[...], (bt, 3 * mfd))
    bhh_b = jnp.broadcast_to(bhh_b_ref[...], (bt, 3 * mfd))

    def step(s, carry):
        h_f, h_b = carry
        tb = nf - 1 - s
        gh_f = jnp.dot(h_f.astype(bf16), whh_f, preferred_element_type=jnp.float32) + bhh_f
        gh_b = jnp.dot(h_b.astype(bf16), whh_b, preferred_element_type=jnp.float32) + bhh_b
        gx_f = xp_scr[s].astype(jnp.float32)             # gate math in f32 (v5e VPU)
        gx_b = xp_scr[tb].astype(jnp.float32)
        h_f = _gru_cell(gx_f, 0, gh_f, h_f, mfd)
        h_b = _gru_cell(gx_b, 3 * mfd, gh_b, h_b, mfd)

        # r(t) = h_fwd(t) + h_bwd(t) accumulated in place: whichever direction reaches
        # a row first writes it, the second read-modify-writes (no rb_scr, no sweep).
        first = (2 * s) < (nf - 1)
        second = (2 * s) > (nf - 1)

        @pl.when(first)
        def _():
            rp_scr[pad + s] = h_f
            rp_scr[pad + tb] = h_b

        @pl.when(second)
        def _():
            rp_scr[pad + s] = rp_scr[pad + s] + h_f
            rp_scr[pad + tb] = rp_scr[pad + tb] + h_b

        if nf % 2 == 1:                                  # fwd/bwd meet on the middle row
            @pl.when((2 * s) == (nf - 1))
            def _():
                rp_scr[pad + s] = h_f + h_b

        return h_f, h_b

    h0 = jnp.zeros((bt, mfd), jnp.float32)
    unroll = nf if nf <= 32 else 8                       # partial unroll for long nf
    lax.fori_loop(0, nf, step, (h0, h0), unroll=unroll)

    # ---- 4./5. grouped dilated Conv1d: per-tap bf16 MXU matmuls ---------------------
    rpb = rp_scr[...].astype(bf16)                       # one cast of the padded r buffer

    if grouped_conv:
        # large cpg (>=128): per-group (nf*bt, cpg) x (cpg, cpg) dots -- no zero FLOPs
        cols = []
        for g in range(groups):
            acc_g = None
            for k in range(ks):
                seg = rpb[k * dilation:k * dilation + nf, :, g * cpg:(g + 1) * cpg]
                t = jnp.dot(seg.reshape(nf * bt, cpg), w_conv_ref[k, g],
                            preferred_element_type=jnp.float32)
                acc_g = t if acc_g is None else acc_g + t
            cols.append(acc_g)
        acc = jnp.concatenate(cols, axis=-1)
    else:
        # small cpg: block-diagonal weight keeps lanes dense
        acc = None
        for k in range(ks):
            seg = rpb[k * dilation:k * dilation + nf]
            t = jnp.dot(seg.reshape(nf * bt, mfd), w_conv_ref[k],
                        preferred_element_type=jnp.float32)
            acc = t if acc is None else acc + t

    c = acc.reshape(nf, bt, mfd) + b_conv_ref[...].reshape(1, 1, mfd)

    # ---- 6. GroupNorm (strictly f32, mean-centered variance: no cancellation) ------
    denom = float(nf * cpg)
    assign_mg = assign_mg_ref[...]                       # (mfd, groups) one-hot
    assign_gm = assign_gm_ref[...]                       # (groups, mfd) one-hot
    sum_c = jnp.sum(c, axis=0)                           # (bt, mfd)
    g_mean = jnp.dot(sum_c, assign_mg, preferred_element_type=jnp.float32) / denom
    mean_ch = jnp.dot(g_mean, assign_gm, preferred_element_type=jnp.float32)
    d = c - mean_ch[None, :, :]
    sum_d2 = jnp.sum(d * d, axis=0)
    g_var = jnp.dot(sum_d2, assign_mg, preferred_element_type=jnp.float32) / denom
    g_rstd = lax.rsqrt(g_var + eps)
    rstd_ch = jnp.dot(g_rstd, assign_gm, preferred_element_type=jnp.float32)
    cn = (d * rstd_ch[None, :, :] * gamma_ref[...].reshape(1, 1, mfd)
          + beta_ref[...].reshape(1, 1, mfd))
    cact = jnp.where(cn >= 0, cn, neg_slope * cn)        # LeakyReLU(0.01)

    # ---- 7. residual: y = x + r + LeakyReLU(GN(conv(r))) ---------------------------
    out_ref[...] = x_ref[...] + rp_scr[pad:pad + nf] + cact


# --------------------------------------------------------------------------------------
# Wrapper
# --------------------------------------------------------------------------------------
def g3block_forward(x_ncl, packed, *, ks, dilation, groups, batch_tile=None):
    bs, mfd, nf = x_ncl.shape
    if ((ks - 1) * dilation) % 2 != 0:
        raise ValueError("(ks-1)*dilation must be even for 'same' padding; the PyTorch "
                         "module's residual add has the same requirement.")
    pad = (ks - 1) * dilation // 2

    # TODO(synk): pad mfd to a multiple of 128 at this boundary for production shapes
    # (keeps the 3*mfd gate slices lane-aligned and the writeback lane-dense).
    x_tbf = jnp.transpose(x_ncl, (2, 0, 1)).astype(jnp.float32)       # (nf, bs, mfd)

    weight_args = (packed["wih"], packed["bih"],
                   packed["whh_f"], packed["bhh_f"],
                   packed["whh_b"], packed["bhh_b"],
                   packed["w_conv"], packed["b_conv"],
                   packed["gamma"], packed["beta"],
                   packed["assign_mg"], packed["assign_gm"])

    single_buf = _single_buffer_supported()

    # VMEM budgeting: leave headroom for Mosaic internals -> ~48 MiB/TC on v7x (64 MiB),
    # ~112 MiB/TC on v5e/v6e (128 MiB).
    cap = _vmem_capacity_bytes()
    vmem_limit = int(max(32 * _MiB, min(cap - 16 * _MiB, 112 * _MiB)))
    budget = int(0.75 * vmem_limit)

    n_cores = _num_tensorcores()
    if batch_tile is not None and bs % batch_tile == 0:
        bt = batch_tile
    else:
        bt = _choose_batch_tile(bs, nf, mfd, pad, weight_args, n_cores, budget, single_buf)
    grid = (bs // bt,)

    def bcast_spec(arr):
        nd = arr.ndim
        idx = lambda b, _nd=nd: (0,) * _nd
        if single_buf:
            # constant-index weights: single buffer (no wasted double-buffer VMEM)
            return pl.BlockSpec(arr.shape, idx, pipeline_mode=pl.Buffered(1))
        return pl.BlockSpec(arr.shape, idx)

    kernel = functools.partial(_g3block_kernel, ks=ks, dilation=dilation, pad=pad,
                               groups=groups,
                               grouped_conv=(packed["w_conv"].ndim == 4))

    y_tbf = pl.pallas_call(
        kernel,
        out_shape=jax.ShapeDtypeStruct((nf, bs, mfd), jnp.float32),
        grid=grid,
        in_specs=[pl.BlockSpec((nf, bt, mfd), lambda b: (0, b, 0))]
                 + [bcast_spec(w) for w in weight_args],
        out_specs=pl.BlockSpec((nf, bt, mfd), lambda b: (0, b, 0)),
        scratch_shapes=[
            pltpu.VMEM((nf, bt, 6 * mfd), jnp.bfloat16),              # xp: projections
            pltpu.VMEM((nf + 2 * pad, bt, mfd), jnp.float32),         # rp: padded GRU out
        ],
        compiler_params=pltpu.CompilerParams(
            dimension_semantics=("parallel",),
            vmem_limit_bytes=vmem_limit),
    )(x_tbf, *weight_args)

    return jnp.transpose(y_tbf, (1, 2, 0))                            # back to (bs, mfd, nf)


# --------------------------------------------------------------------------------------
# Parameters (torch-like) and one-time kernel-ready packing (glue)
# --------------------------------------------------------------------------------------
def init_params(key, mfd, ks, groups):
    keys = jax.random.split(key, 12)
    scale = 0.2

    def rnd(k, shape, s=scale):
        return jax.random.normal(k, shape, jnp.float32) * s

    cpg = mfd // groups
    return {
        # GRU weights stored pre-transposed: (in, 3*hidden), gate order [r, z, n]
        "wih_f": rnd(keys[0], (mfd, 3 * mfd)),
        "whh_f": rnd(keys[1], (mfd, 3 * mfd)),
        "bih_f": rnd(keys[2], (1, 3 * mfd)),
        "bhh_f": rnd(keys[3], (1, 3 * mfd)),
        "wih_b": rnd(keys[4], (mfd, 3 * mfd)),
        "whh_b": rnd(keys[5], (mfd, 3 * mfd)),
        "bih_b": rnd(keys[6], (1, 3 * mfd)),
        "bhh_b": rnd(keys[7], (1, 3 * mfd)),
        # Conv1d weight in torch layout (out=mfd, in=mfd//groups, ks)
        "w_conv": rnd(keys[8], (mfd, cpg, ks)),
        "b_conv": rnd(keys[9], (1, mfd)),
        "gamma": 1.0 + rnd(keys[10], (1, mfd), 0.1),
        "beta": rnd(keys[11], (1, mfd), 0.1),
    }


def pack_params(p, mfd, ks, groups):
    cpg = mfd // groups
    # both directions' input projections concatenated -> one wide bf16 MXU matmul
    wih = jnp.concatenate([p["wih_f"], p["wih_b"]], axis=1).astype(jnp.bfloat16)
    bih = jnp.concatenate([p["bih_f"], p["bih_b"]], axis=1)            # f32 bias
    w_t = np.asarray(p["w_conv"], np.float32)                          # (mfd, cpg, ks)
    if cpg >= 128:
        # per-group weights (ks, groups, in=cpg, out=cpg): no zero-FLOP padding
        w_pack = np.zeros((ks, groups, cpg, cpg), np.float32)
        for g in range(groups):
            sl = slice(g * cpg, (g + 1) * cpg)
            w_pack[:, g] = np.transpose(w_t[sl], (2, 1, 0))
    else:
        # block-diagonal (ks, in=mfd, out=mfd): keeps lanes dense for small cpg
        w_pack = np.zeros((ks, mfd, mfd), np.float32)
        for g in range(groups):
            sl = slice(g * cpg, (g + 1) * cpg)
            w_pack[:, sl, sl] = np.transpose(w_t[sl], (2, 1, 0))
    # one-hot channel<->group assignment, precomputed (kernel skips iota/compare work)
    assign_mg = (np.arange(mfd)[:, None] // cpg
                 == np.arange(groups)[None, :]).astype(np.float32)     # (mfd, groups)
    return {
        "wih": wih, "bih": bih,
        "whh_f": p["whh_f"].astype(jnp.bfloat16), "bhh_f": p["bhh_f"],
        "whh_b": p["whh_b"].astype(jnp.bfloat16), "bhh_b": p["bhh_b"],
        "w_conv": jnp.asarray(w_pack).astype(jnp.bfloat16),
        "b_conv": p["b_conv"],
        "gamma": p["gamma"], "beta": p["beta"],
        "assign_mg": jnp.asarray(assign_mg),
        "assign_gm": jnp.asarray(np.ascontiguousarray(assign_mg.T)),
    }


def _bf16_round(a):
    return np.asarray(jnp.asarray(a).astype(jnp.bfloat16).astype(jnp.float32))


# --------------------------------------------------------------------------------------
# Pure NumPy reference (same math as the torch module)
# --------------------------------------------------------------------------------------
def reference_forward(x_ncl, p, *, ks, dilation, groups):
    def sig(v):
        return 1.0 / (1.0 + np.exp(-v))

    x = np.asarray(x_ncl, np.float64)
    bs, mfd, nf = x.shape
    cpg = mfd // groups
    pad = (ks - 1) * dilation // 2
    xt = np.transpose(x, (0, 2, 1))
    P = {k: np.asarray(v, np.float64) for k, v in p.items()}

    def gru_dir(wih, whh, bih, bhh, reverse):
        h = np.zeros((bs, mfd))
        outs = np.zeros((bs, nf, mfd))
        order = range(nf - 1, -1, -1) if reverse else range(nf)
        for t in order:
            gx = xt[:, t, :] @ wih + bih[0]
            gh = h @ whh + bhh[0]
            rg = sig(gx[:, :mfd] + gh[:, :mfd])
            zg = sig(gx[:, mfd:2 * mfd] + gh[:, mfd:2 * mfd])
            ng = np.tanh(gx[:, 2 * mfd:] + rg * gh[:, 2 * mfd:])
            h = (1 - zg) * ng + zg * h
            outs[:, t, :] = h
        return outs

    r = (gru_dir(P["wih_f"], P["whh_f"], P["bih_f"], P["bhh_f"], False)
         + gru_dir(P["wih_b"], P["whh_b"], P["bih_b"], P["bhh_b"], True))

    rp = np.pad(r, ((0, 0), (pad, pad), (0, 0)))
    c = np.zeros((bs, nf, mfd))
    for g in range(groups):
        sl = slice(g * cpg, (g + 1) * cpg)
        for k in range(ks):
            c[:, :, sl] += (rp[:, k * dilation:k * dilation + nf, sl]
                            @ P["w_conv"][sl, :, k].T)
    c += P["b_conv"][0]

    cn = np.empty_like(c)
    for g in range(groups):
        sl = slice(g * cpg, (g + 1) * cpg)
        cg = c[:, :, sl]
        mean = cg.mean(axis=(1, 2), keepdims=True)
        var = cg.var(axis=(1, 2), keepdims=True)
        cn[:, :, sl] = ((cg - mean) / np.sqrt(var + 1e-5)
                        * P["gamma"][0, sl] + P["beta"][0, sl])
    cact = np.where(cn >= 0, cn, 0.01 * cn)
    y = xt + r + cact
    return np.transpose(y, (0, 2, 1))


if __name__ == "__main__":
    bs, mfd, nf = 2, 32, 16          # (batch, feat_dim, n_frames) as in G3Block.forward
    ks, dilation, groups = 3, 1, 4

    key = jax.random.PRNGKey(0)
    kx, kp = jax.random.split(key)
    x = jax.random.normal(kx, (bs, mfd, nf), jnp.float32)
    params = init_params(kp, mfd, ks, groups)
    packed = pack_params(params, mfd, ks, groups)

    fwd = jax.jit(functools.partial(g3block_forward, ks=ks, dilation=dilation,
                                    groups=groups))
    y = jax.block_until_ready(fwd(x, packed))
    assert y.shape == (bs, mfd, nf)

    # The kernel stores its MXU operand weights in bf16; the reference consumes the same
    # bf16-rounded weights (cast back to f64) so the comparison isolates kernel math.
    # Remaining diff is bf16 activation rounding vs. a float64 reference.
    params_ref = {k: (_bf16_round(v) if k in _BF16_WEIGHT_KEYS else np.asarray(v))
                  for k, v in params.items()}
    ref = reference_forward(np.asarray(x), params_ref,
                            ks=ks, dilation=dilation, groups=groups)
    np.testing.assert_allclose(np.asarray(y), ref, rtol=5e-2, atol=5e-2)
    print("KERNEL_OK")
</pallas_src>

<mosaic_0001>
module attributes {stable_mosaic.version = 11 : i64} {
  func.func @_g3block_kernel(%arg0: i32, %arg1: memref<16x2x32xf32, #tpu.memory_space<vmem>>, %arg2: memref<32x192xbf16, #tpu.memory_space<vmem>>, %arg3: memref<1x192xf32, #tpu.memory_space<vmem>>, %arg4: memref<32x96xbf16, #tpu.memory_space<vmem>>, %arg5: memref<1x96xf32, #tpu.memory_space<vmem>>, %arg6: memref<32x96xbf16, #tpu.memory_space<vmem>>, %arg7: memref<1x96xf32, #tpu.memory_space<vmem>>, %arg8: memref<3x32x32xbf16, #tpu.memory_space<vmem>>, %arg9: memref<1x32xf32, #tpu.memory_space<vmem>>, %arg10: memref<1x32xf32, #tpu.memory_space<vmem>>, %arg11: memref<1x32xf32, #tpu.memory_space<vmem>>, %arg12: memref<32x4xf32, #tpu.memory_space<vmem>>, %arg13: memref<4x32xf32, #tpu.memory_space<vmem>>, %arg14: memref<16x2x32xf32, #tpu.memory_space<vmem>>, %arg15: memref<16x2x192xbf16, #tpu.memory_space<vmem>>, %arg16: memref<18x2x32xf32, #tpu.memory_space<vmem>>) attributes {dimension_semantics = [#tpu.dimension_semantics<parallel>], iteration_bounds = array<i64: 1>, scalar_prefetch = 0 : i64, scratch_operands = 2 : i64, tpu.core_type = #tpu.core_type<tc>, window_params = [{transform_indices = @transform_0, window_bounds = array<i64: 16, 2, 32>}, {pipeline_mode = #tpu.pipeline_mode<synchronous>, transform_indices = @transform_1, window_bounds = array<i64: 32, 192>}, {pipeline_mode = #tpu.pipeline_mode<synchronous>, transform_indices = @transform_2, window_bounds = array<i64: 1, 192>}, {pipeline_mode = #tpu.pipeline_mode<synchronous>, transform_indices = @transform_3, window_bounds = array<i64: 32, 96>}, {pipeline_mode = #tpu.pipeline_mode<synchronous>, transform_indices = @transform_4, window_bounds = array<i64: 1, 96>}, {pipeline_mode = #tpu.pipeline_mode<synchronous>, transform_indices = @transform_5, window_bounds = array<i64: 32, 96>}, {pipeline_mode = #tpu.pipeline_mode<synchronous>, transform_indices = @transform_6, window_bounds = array<i64: 1, 96>}, {pipeline_mode = #tpu.pipeline_mode<synchronous>, transform_indices = @transform_7, window_bounds = array<i64: 3, 32, 32>}, {pipeline_mode = #tpu.pipeline_mode<synchronous>, transform_indices = @transform_8, window_bounds = array<i64: 1, 32>}, {pipeline_mode = #tpu.pipeline_mode<synchronous>, transform_indices = @transform_9, window_bounds = array<i64: 1, 32>}, {pipeline_mode = #tpu.pipeline_mode<synchronous>, transform_indices = @transform_10, window_bounds = array<i64: 1, 32>}, {pipeline_mode = #tpu.pipeline_mode<synchronous>, transform_indices = @transform_11, window_bounds = array<i64: 32, 4>}, {pipeline_mode = #tpu.pipeline_mode<synchronous>, transform_indices = @transform_12, window_bounds = array<i64: 4, 32>}, {transform_indices = @transform_13, window_bounds = array<i64: 16, 2, 32>}]} {
    %c0 = arith.constant 0 : index
    %c0_0 = arith.constant 0 : index
    %c0_1 = arith.constant 0 : index
    %0 = vector.load %arg1[%c0, %c0_0, %c0_1] : memref<16x2x32xf32, #tpu.memory_space<vmem>>, vector<16x2x32xf32>
    %1 = vector.shape_cast %0 : vector<16x2x32xf32> to vector<32x32xf32>
    %2 = arith.truncf %1 : vector<32x32xf32> to vector<32x32xbf16>
    %c0_2 = arith.constant 0 : index
    %c0_3 = arith.constant 0 : index
    %3 = vector.load %arg2[%c0_2, %c0_3] : memref<32x192xbf16, #tpu.memory_space<vmem>>, vector<32x192xbf16>
    %cst = arith.constant dense<0.000000e+00> : vector<32x192xf32>
    %4 = tpu.matmul %2, %3, %cst {dimension_numbers = #tpu.dot_dimension_numbers<[1], [0], [0], [1], [0, 0, 1, 1], [], []>} : vector<32x32xbf16>, vector<32x192xbf16>, vector<32x192xf32> -> vector<32x192xf32>
    %c0_4 = arith.constant 0 : index
    %c0_5 = arith.constant 0 : index
    %5 = vector.load %arg3[%c0_4, %c0_5] : memref<1x192xf32, #tpu.memory_space<vmem>>, vector<1x192xf32>
    %6 = vector.broadcast %5 : vector<1x192xf32> to vector<32x192xf32>
    %7 = arith.addf %4, %6 : vector<32x192xf32>
    %8 = vector.shape_cast %7 : vector<32x192xf32> to vector<16x2x192xf32>
    %9 = arith.truncf %8 : vector<16x2x192xf32> to vector<16x2x192xbf16>
    %c0_6 = arith.constant 0 : index
    %c0_7 = arith.constant 0 : index
    %c0_8 = arith.constant 0 : index
    %10 = vector.load %arg15[%c0_6, %c0_7, %c0_8] : memref<16x2x192xbf16, #tpu.memory_space<vmem>>, vector<16x2x192xbf16>
    tpu.vector_store %arg15[%c0_6, %c0_7, %c0_8], %9 {strides = array<i32>} : memref<16x2x192xbf16, #tpu.memory_space<vmem>>, vector<16x2x192xbf16>,
    %cst_9 = arith.constant 0.000000e+00 : f32
    %11 = vector.broadcast %cst_9 : f32 to vector<1x2x32xf32>
    %c0_10 = arith.constant 0 : index
    %c0_11 = arith.constant 0 : index
    %c0_12 = arith.constant 0 : index
    %12 = vector.load %arg16[%c0_10, %c0_11, %c0_12] : memref<18x2x32xf32, #tpu.memory_space<vmem>>, vector<1x2x32xf32>
    tpu.vector_store %arg16[%c0_10, %c0_11, %c0_12], %11 {strides = array<i32>} : memref<18x2x32xf32, #tpu.memory_space<vmem>>, vector<1x2x32xf32>,
    %c17 = arith.constant 17 : index
    %c0_13 = arith.constant 0 : index
    %c0_14 = arith.constant 0 : index
    %13 = vector.load %arg16[%c17, %c0_13, %c0_14] : memref<18x2x32xf32, #tpu.memory_space<vmem>>, vector<1x2x32xf32>
    tpu.vector_store %arg16[%c17, %c0_13, %c0_14], %11 {strides = array<i32>} : memref<18x2x32xf32, #tpu.memory_space<vmem>>, vector<1x2x32xf32>,
    %c0_15 = arith.constant 0 : index
    %c0_16 = arith.constant 0 : index
    %14 = vector.load %arg4[%c0_15, %c0_16] : memref<32x96xbf16, #tpu.memory_space<vmem>>, vector<32x96xbf16>
    %c0_17 = arith.constant 0 : index
    %c0_18 = arith.constant 0 : index
    %15 = vector.load %arg6[%c0_17, %c0_18] : memref<32x96xbf16, #tpu.memory_space<vmem>>, vector<32x96xbf16>
    %c0_19 = arith.constant 0 : index
    %c0_20 = arith.constant 0 : index
    %16 = vector.load %arg5[%c0_19, %c0_20] : memref<1x96xf32, #tpu.memory_space<vmem>>, vector<1x96xf32>
    %17 = vector.shape_cast %16 : vector<1x96xf32> to vector<1x96xf32>
    %18 = vector.broadcast %17 : vector<1x96xf32> to vector<2x96xf32>
    %c0_21 = arith.constant 0 : index
    %c0_22 = arith.constant 0 : index
    %19 = vector.load %arg7[%c0_21, %c0_22] : memref<1x96xf32, #tpu.memory_space<vmem>>, vector<1x96xf32>
    %20 = vector.shape_cast %19 : vector<1x96xf32> to vector<1x96xf32>
    %21 = vector.broadcast %20 : vector<1x96xf32> to vector<2x96xf32>
    %cst_23 = arith.constant 0.000000e+00 : f32
    %22 = vector.broadcast %cst_23 : f32 to vector<2x32xf32>
    %c0_i32 = arith.constant 0 : i32
    %c15_i32 = arith.constant 15 : i32
    %23 = arith.subi %c15_i32, %c0_i32 : i32
    %24 = arith.truncf %22 : vector<2x32xf32> to vector<2x32xbf16>
    %cst_24 = arith.constant dense<0.000000e+00> : vector<2x96xf32>
    %25 = tpu.matmul %24, %14, %cst_24 {dimension_numbers = #tpu.dot_dimension_numbers<[1], [0], [0], [1], [0, 0, 1, 1], [], []>} : vector<2x32xbf16>, vector<32x96xbf16>, vector<2x96xf32> -> vector<2x96xf32>
    %26 = arith.addf %25, %18 : vector<2x96xf32>
    %27 = arith.truncf %22 : vector<2x32xf32> to vector<2x32xbf16>
    %cst_25 = arith.constant dense<0.000000e+00> : vector<2x96xf32>
    %28 = tpu.matmul %27, %15, %cst_25 {dimension_numbers = #tpu.dot_dimension_numbers<[1], [0], [0], [1], [0, 0, 1, 1], [], []>} : vector<2x32xbf16>, vector<32x96xbf16>, vector<2x96xf32> -> vector<2x96xf32>
    %29 = arith.addf %28, %21 : vector<2x96xf32>
    %30 = arith.index_cast %c0_i32 : i32 to index
    %c0_26 = arith.constant 0 : index
    %c0_27 = arith.constant 0 : index
    %31 = vector.load %arg15[%30, %c0_26, %c0_27] : memref<16x2x192xbf16, #tpu.memory_space<vmem>>, vector<1x2x192xbf16>
    %32 = vector.shape_cast %31 : vector<1x2x192xbf16> to vector<2x192xbf16>
    %33 = arith.extf %32 : vector<2x192xbf16> to vector<2x192xf32>
    %34 = arith.index_cast %23 : i32 to index
    %c0_28 = arith.constant 0 : index
    %c0_29 = arith.constant 0 : index
    %35 = vector.load %arg15[%34, %c0_28, %c0_29] : memref<16x2x192xbf16, #tpu.memory_space<vmem>>, vector<1x2x192xbf16>
    %36 = vector.shape_cast %35 : vector<1x2x192xbf16> to vector<2x192xbf16>
    %37 = arith.extf %36 : vector<2x192xbf16> to vector<2x192xf32>
    %38 = vector.extract_strided_slice %33 {offsets = [0, 0], sizes = [2, 32], strides = [1, 1]} : vector<2x192xf32> to vector<2x32xf32>
    %39 = vector.extract_strided_slice %26 {offsets = [0, 0], sizes = [2, 32], strides = [1, 1]} : vector<2x96xf32> to vector<2x32xf32>
    %40 = arith.addf %38, %39 : vector<2x32xf32>
    %cst_30 = arith.constant 5.000000e-01 : f32
    %41 = vector.broadcast %cst_30 : f32 to vector<2x32xf32>
    %42 = arith.mulf %41, %40 : vector<2x32xf32>
    %43 = math.tanh %42 : vector<2x32xf32>
    %cst_31 = arith.constant 1.000000e+00 : f32
    %44 = vector.broadcast %cst_31 : f32 to vector<2x32xf32>
    %45 = arith.addf %43, %44 : vector<2x32xf32>
    %cst_32 = arith.constant 5.000000e-01 : f32
    %46 = vector.broadcast %cst_32 : f32 to vector<2x32xf32>
    %47 = arith.mulf %46, %45 : vector<2x32xf32>
    %48 = vector.extract_strided_slice %33 {offsets = [0, 32], sizes = [2, 32], strides = [1, 1]} : vector<2x192xf32> to vector<2x32xf32>
    %49 = vector.extract_strided_slice %26 {offsets = [0, 32], sizes = [2, 32], strides = [1, 1]} : vector<2x96xf32> to vector<2x32xf32>
    %50 = arith.addf %48, %49 : vector<2x32xf32>
    %cst_33 = arith.constant 5.000000e-01 : f32
    %51 = vector.broadcast %cst_33 : f32 to vector<2x32xf32>
    %52 = arith.mulf %51, %50 : vector<2x32xf32>
    %53 = math.tanh %52 : vector<2x32xf32>
    %cst_34 = arith.constant 1.000000e+00 : f32
    %54 = vector.broadcast %cst_34 : f32 to vector<2x32xf32>
    %55 = arith.addf %53, %54 : vector<2x32xf32>
    %cst_35 = arith.constant 5.000000e-01 : f32
    %56 = vector.broadcast %cst_35 : f32 to vector<2x32xf32>
    %57 = arith.mulf %56, %55 : vector<2x32xf32>
    %58 = vector.extract_strided_slice %33 {offsets = [0, 64], sizes = [2, 32], strides = [1, 1]} : vector<2x192xf32> to vector<2x32xf32>
    %59 = vector.extract_strided_slice %26 {offsets = [0, 64], sizes = [2, 32], strides = [1, 1]} : vector<2x96xf32> to vector<2x32xf32>
    %60 = arith.mulf %47, %59 : vector<2x32xf32>
    %61 = arith.addf %58, %60 : vector<2x32xf32>
    %62 = math.tanh %61 : vector<2x32xf32>
    %cst_36 = arith.constant 1.000000e+00 : f32
    %63 = vector.broadcast %cst_36 : f32 to vector<2x32xf32>
    %64 = arith.subf %63, %57 : vector<2x32xf32>
    %65 = arith.mulf %64, %62 : vector<2x32xf32>
    %66 = arith.mulf %57, %22 : vector<2x32xf32>
    %67 = arith.addf %65, %66 : vector<2x32xf32>
    %68 = vector.extract_strided_slice %37 {offsets = [0, 96], sizes = [2, 32], strides = [1, 1]} : vector<2x192xf32> to vector<2x32xf32>
    %69 = vector.extract_strided_slice %29 {offsets = [0, 0], sizes = [2, 32], strides = [1, 1]} : vector<2x96xf32> to vector<2x32xf32>
    %70 = arith.addf %68, %69 : vector<2x32xf32>
    %cst_37 = arith.constant 5.000000e-01 : f32
    %71 = vector.broadcast %cst_37 : f32 to vector<2x32xf32>
    %72 = arith.mulf %71, %70 : vector<2x32xf32>
    %73 = math.tanh %72 : vector<2x32xf32>
    %cst_38 = arith.constant 1.000000e+00 : f32
    %74 = vector.broadcast %cst_38 : f32 to vector<2x32xf32>
    %75 = arith.addf %73, %74 : vector<2x32xf32>
    %cst_39 = arith.constant 5.000000e-01 : f32
    %76 = vector.broadcast %cst_39 : f32 to vector<2x32xf32>
    %77 = arith.mulf %76, %75 : vector<2x32xf32>
    %78 = vector.extract_strided_slice %37 {offsets = [0, 128], sizes = [2, 32], strides = [1, 1]} : vector<2x192xf32> to vector<2x32xf32>
    %79 = vector.extract_strided_slice %29 {offsets = [0, 32], sizes = [2, 32], strides = [1, 1]} : vector<2x96xf32> to vector<2x32xf32>
    %80 = arith.addf %78, %79 : vector<2x32xf32>
    %cst_40 = arith.constant 5.000000e-01 : f32
    %81 = vector.broadcast %cst_40 : f32 to vector<2x32xf32>
    %82 = arith.mulf %81, %80 : vector<2x32xf32>
    %83 = math.tanh %82 : vector<2x32xf32>
    %cst_41 = arith.constant 1.000000e+00 : f32
    %84 = vector.broadcast %cst_41 : f32 to vector<2x32xf32>
    %85 = arith.addf %83, %84 : vector<2x32xf32>
    %cst_42 = arith.constant 5.000000e-01 : f32
    %86 = vector.broadcast %cst_42 : f32 to vector<2x32xf32>
    %87 = arith.mulf %86, %85 : vector<2x32xf32>
    %88 = vector.extract_strided_slice %37 {offsets = [0, 160], sizes = [2, 32], strides = [1, 1]} : vector<2x192xf32> to vector<2x32xf32>
    %89 = vector.extract_strided_slice %29 {offsets = [0, 64], sizes = [2, 32], strides = [1, 1]} : vector<2x96xf32> to vector<2x32xf32>
    %90 = arith.mulf %77, %89 : vector<2x32xf32>
    %91 = arith.addf %88, %90 : vector<2x32xf32>
    %92 = math.tanh %91 : vector<2x32xf32>
    %cst_43 = arith.constant 1.000000e+00 : f32
    %93 = vector.broadcast %cst_43 : f32 to vector<2x32xf32>
    %94 = arith.subf %93, %87 : vector<2x32xf32>
    %95 = arith.mulf %94, %92 : vector<2x32xf32>
    %96 = arith.mulf %87, %22 : vector<2x32xf32>
    %97 = arith.addf %95, %96 : vector<2x32xf32>
    %c2_i32 = arith.constant 2 : i32
    %98 = arith.muli %c2_i32, %c0_i32 : i32
    %c15_i32_44 = arith.constant 15 : i32
    %99 = arith.cmpi slt, %98, %c15_i32_44 : i32
    %c2_i32_45 = arith.constant 2 : i32
    %100 = arith.muli %c2_i32_45, %c0_i32 : i32
    %c15_i32_46 = arith.constant 15 : i32
    %101 = arith.cmpi sgt, %100, %c15_i32_46 : i32
    %102 = arith.extui %99 : i1 to i32
    %c0_i32_47 = arith.constant 0 : i32
    %103 = arith.cmpi ne, %102, %c0_i32_47 : i32
    scf.if %103 {
      %c1_i32_499 = arith.constant 1 : i32
      %1415 = arith.addi %c1_i32_499, %c0_i32 : i32
      %1416 = arith.index_cast %1415 : i32 to index
      %c0_500 = arith.constant 0 : index
      %c0_501 = arith.constant 0 : index
      %1417 = vector.load %arg16[%1416, %c0_500, %c0_501] : memref<18x2x32xf32, #tpu.memory_space<vmem>>, vector<1x2x32xf32>
      %1418 = vector.shape_cast %1417 : vector<1x2x32xf32> to vector<2x32xf32>
      %1419 = vector.shape_cast %67 : vector<2x32xf32> to vector<1x2x32xf32>
      tpu.vector_store %arg16[%1416, %c0_500, %c0_501], %1419 {strides = array<i32>} : memref<18x2x32xf32, #tpu.memory_space<vmem>>, vector<1x2x32xf32>,
      %c1_i32_502 = arith.constant 1 : i32
      %1420 = arith.addi %c1_i32_502, %23 : i32
      %1421 = arith.index_cast %1420 : i32 to index
      %c0_503 = arith.constant 0 : index
      %c0_504 = arith.constant 0 : index
      %1422 = vector.load %arg16[%1421, %c0_503, %c0_504] : memref<18x2x32xf32, #tpu.memory_space<vmem>>, vector<1x2x32xf32>
      %1423 = vector.shape_cast %1422 : vector<1x2x32xf32> to vector<2x32xf32>
      %1424 = vector.shape_cast %97 : vector<2x32xf32> to vector<1x2x32xf32>
      tpu.vector_store %arg16[%1421, %c0_503, %c0_504], %1424 {strides = array<i32>} : memref<18x2x32xf32, #tpu.memory_space<vmem>>, vector<1x2x32xf32>,
    } else {
    }
    %104 = arith.extui %101 : i1 to i32
    %c0_i32_48 = arith.constant 0 : i32
    %105 = arith.cmpi ne, %104, %c0_i32_48 : i32
    scf.if %105 {
      %c1_i32_499 = arith.constant 1 : i32
      %1415 = arith.addi %c1_i32_499, %c0_i32 : i32
      %1416 = arith.index_cast %1415 : i32 to index
      %c0_500 = arith.constant 0 : index
      %c0_501 = arith.constant 0 : index
      %1417 = vector.load %arg16[%1416, %c0_500, %c0_501] : memref<18x2x32xf32, #tpu.memory_space<vmem>>, vector<1x2x32xf32>
      %1418 = vector.shape_cast %1417 : vector<1x2x32xf32> to vector<2x32xf32>
      %1419 = arith.addf %1418, %67 : vector<2x32xf32>
      %c1_i32_502 = arith.constant 1 : i32
      %1420 = arith.addi %c1_i32_502, %c0_i32 : i32
      %1421 = arith.index_cast %1420 : i32 to index
      %c0_503 = arith.constant 0 : index
      %c0_504 = arith.constant 0 : index
      %1422 = vector.load %arg16[%1421, %c0_503, %c0_504] : memref<18x2x32xf32, #tpu.memory_space<vmem>>, vector<1x2x32xf32>
      %1423 = vector.shape_cast %1422 : vector<1x2x32xf32> to vector<2x32xf32>
      %1424 = vector.shape_cast %1419 : vector<2x32xf32> to vector<1x2x32xf32>
      tpu.vector_store %arg16[%1421, %c0_503, %c0_504], %1424 {strides = array<i32>} : memref<18x2x32xf32, #tpu.memory_space<vmem>>, vector<1x2x32xf32>,
      %c1_i32_505 = arith.constant 1 : i32
      %1425 = arith.addi %c1_i32_505, %23 : i32
      %1426 = arith.index_cast %1425 : i32 to index
      %c0_506 = arith.constant 0 : index
      %c0_507 = arith.constant 0 : index
      %1427 = vector.load %arg16[%1426, %c0_506, %c0_507] : memref<18x2x32xf32, #tpu.memory_space<vmem>>, vector<1x2x32xf32>
      %1428 = vector.shape_cast %1427 : vector<1x2x32xf32> to vector<2x32xf32>
      %1429 = arith.addf %1428, %97 : vector<2x32xf32>
      %c1_i32_508 = arith.constant 1 : i32
      %1430 = arith.addi %c1_i32_508, %23 : i32
      %1431 = arith.index_cast %1430 : i32 to index
      %c0_509 = arith.constant 0 : index
      %c0_510 = arith.constant 0 : index
      %1432 = vector.load %arg16[%1431, %c0_509, %c0_510] : memref<18x2x32xf32, #tpu.memory_space<vmem>>, vector<1x2x32xf32>
      %1433 = vector.shape_cast %1432 : vector<1x2x32xf32> to vector<2x32xf32>
      %1434 = vector.shape_cast %1429 : vector<2x32xf32> to vector<1x2x32xf32>
      tpu.vector_store %arg16[%1431, %c0_509, %c0_510], %1434 {strides = array<i32>} : memref<18x2x32xf32, #tpu.memory_space<vmem>>, vector<1x2x32xf32>,
    } else {
    }
    %c1_i32 = arith.constant 1 : i32
    %c15_i32_49 = arith.constant 15 : i32
    %106 = arith.subi %c15_i32_49, %c1_i32 : i32
    %107 = arith.truncf %67 : vector<2x32xf32> to vector<2x32xbf16>
    %cst_50 = arith.constant dense<0.000000e+00> : vector<2x96xf32>
    %108 = tpu.matmul %107, %14, %cst_50 {dimension_numbers = #tpu.dot_dimension_numbers<[1], [0], [0], [1], [0, 0, 1, 1], [], []>} : vector<2x32xbf16>, vector<32x96xbf16>, vector<2x96xf32> -> vector<2x96xf32>
    %109 = arith.addf %108, %18 : vector<2x96xf32>
    %110 = arith.truncf %97 : vector<2x32xf32> to vector<2x32xbf16>
    %cst_51 = arith.constant dense<0.000000e+00> : vector<2x96xf32>
    %111 = tpu.matmul %110, %15, %cst_51 {dimension_numbers = #tpu.dot_dimension_numbers<[1], [0], [0], [1], [0, 0, 1, 1], [], []>} : vector<2x32xbf16>, vector<32x96xbf16>, vector<2x96xf32> -> vector<2x96xf32>
    %112 = arith.addf %111, %21 : vector<2x96xf32>
    %113 = arith.index_cast %c1_i32 : i32 to index
    %c0_52 = arith.constant 0 : index
    %c0_53 = arith.constant 0 : index
    %114 = vector.load %arg15[%113, %c0_52, %c0_53] : memref<16x2x192xbf16, #tpu.memory_space<vmem>>, vector<1x2x192xbf16>
    %115 = vector.shape_cast %114 : vector<1x2x192xbf16> to vector<2x192xbf16>
    %116 = arith.extf %115 : vector<2x192xbf16> to vector<2x192xf32>
    %117 = arith.index_cast %106 : i32 to index
    %c0_54 = arith.constant 0 : index
    %c0_55 = arith.constant 0 : index
    %118 = vector.load %arg15[%117, %c0_54, %c0_55] : memref<16x2x192xbf16, #tpu.memory_space<vmem>>, vector<1x2x192xbf16>
    %119 = vector.shape_cast %118 : vector<1x2x192xbf16> to vector<2x192xbf16>
    %120 = arith.extf %119 : vector<2x192xbf16> to vector<2x192xf32>
    %121 = vector.extract_strided_slice %116 {offsets = [0, 0], sizes = [2, 32], strides = [1, 1]} : vector<2x192xf32> to vector<2x32xf32>
    %122 = vector.extract_strided_slice %109 {offsets = [0, 0], sizes = [2, 32], strides = [1, 1]} : vector<2x96xf32> to vector<2x32xf32>
    %123 = arith.addf %121, %122 : vector<2x32xf32>
    %cst_56 = arith.constant 5.000000e-01 : f32
    %124 = vector.broadcast %cst_56 : f32 to vector<2x32xf32>
    %125 = arith.mulf %124, %123 : vector<2x32xf32>
    %126 = math.tanh %125 : vector<2x32xf32>
    %cst_57 = arith.constant 1.000000e+00 : f32
    %127 = vector.broadcast %cst_57 : f32 to vector<2x32xf32>
    %128 = arith.addf %126, %127 : vector<2x32xf32>
    %cst_58 = arith.constant 5.000000e-01 : f32
    %129 = vector.broadcast %cst_58 : f32 to vector<2x32xf32>
    %130 = arith.mulf %129, %128 : vector<2x32xf32>
    %131 = vector.extract_strided_slice %116 {offsets = [0, 32], sizes = [2, 32], strides = [1, 1]} : vector<2x192xf32> to vector<2x32xf32>
    %132 = vector.extract_strided_slice %109 {offsets = [0, 32], sizes = [2, 32], strides = [1, 1]} : vector<2x96xf32> to vector<2x32xf32>
    %133 = arith.addf %131, %132 : vector<2x32xf32>
    %cst_59 = arith.constant 5.000000e-01 : f32
    %134 = vector.broadcast %cst_59 : f32 to vector<2x32xf32>
    %135 = arith.mulf %134, %133 : vector<2x32xf32>
    %136 = math.tanh %135 : vector<2x32xf32>
    %cst_60 = arith.constant 1.000000e+00 : f32
    %137 = vector.broadcast %cst_60 : f32 to vector<2x32xf32>
    %138 = arith.addf %136, %137 : vector<2x32xf32>
    %cst_61 = arith.constant 5.000000e-01 : f32
    %139 = vector.broadcast %cst_61 : f32 to vector<2x32xf32>
    %140 = arith.mulf %139, %138 : vector<2x32xf32>
    %141 = vector.extract_strided_slice %116 {offsets = [0, 64], sizes = [2, 32], strides = [1, 1]} : vector<2x192xf32> to vector<2x32xf32>
    %142 = vector.extract_strided_slice %109 {offsets = [0, 64], sizes = [2, 32], strides = [1, 1]} : vector<2x96xf32> to vector<2x32xf32>
    %143 = arith.mulf %130, %142 : vector<2x32xf32>
    %144 = arith.addf %141, %143 : vector<2x32xf32>
    %145 = math.tanh %144 : vector<2x32xf32>
    %cst_62 = arith.constant 1.000000e+00 : f32
    %146 = vector.broadcast %cst_62 : f32 to vector<2x32xf32>
    %147 = arith.subf %146, %140 : vector<2x32xf32>
    %148 = arith.mulf %147, %145 : vector<2x32xf32>
    %149 = arith.mulf %140, %67 : vector<2x32xf32>
    %150 = arith.addf %148, %149 : vector<2x32xf32>
    %151 = vector.extract_strided_slice %120 {offsets = [0, 96], sizes = [2, 32], strides = [1, 1]} : vector<2x192xf32> to vector<2x32xf32>
    %152 = vector.extract_strided_slice %112 {offsets = [0, 0], sizes = [2, 32], strides = [1, 1]} : vector<2x96xf32> to vector<2x32xf32>
    %153 = arith.addf %151, %152 : vector<2x32xf32>
    %cst_63 = arith.constant 5.000000e-01 : f32
    %154 = vector.broadcast %cst_63 : f32 to vector<2x32xf32>
    %155 = arith.mulf %154, %153 : vector<2x32xf32>
    %156 = math.tanh %155 : vector<2x32xf32>
    %cst_64 = arith.constant 1.000000e+00 : f32
    %157 = vector.broadcast %cst_64 : f32 to vector<2x32xf32>
    %158 = arith.addf %156, %157 : vector<2x32xf32>
    %cst_65 = arith.constant 5.000000e-01 : f32
    %159 = vector.broadcast %cst_65 : f32 to vector<2x32xf32>
    %160 = arith.mulf %159, %158 : vector<2x32xf32>
    %161 = vector.extract_strided_slice %120 {offsets = [0, 128], sizes = [2, 32], strides = [1, 1]} : vector<2x192xf32> to vector<2x32xf32>
    %162 = vector.extract_strided_slice %112 {offsets = [0, 32], sizes = [2, 32], strides = [1, 1]} : vector<2x96xf32> to vector<2x32xf32>
    %163 = arith.addf %161, %162 : vector<2x32xf32>
    %cst_66 = arith.constant 5.000000e-01 : f32
    %164 = vector.broadcast %cst_66 : f32 to vector<2x32xf32>
    %165 = arith.mulf %164, %163 : vector<2x32xf32>
    %166 = math.tanh %165 : vector<2x32xf32>
    %cst_67 = arith.constant 1.000000e+00 : f32
    %167 = vector.broadcast %cst_67 : f32 to vector<2x32xf32>
    %168 = arith.addf %166, %167 : vector<2x32xf32>
    %cst_68 = arith.constant 5.000000e-01 : f32
    %169 = vector.broadcast %cst_68 : f32 to vector<2x32xf32>
    %170 = arith.mulf %169, %168 : vector<2x32xf32>
    %171 = vector.extract_strided_slice %120 {offsets = [0, 160], sizes = [2, 32], strides = [1, 1]} : vector<2x192xf32> to vector<2x32xf32>
    %172 = vector.extract_strided_slice %112 {offsets = [0, 64], sizes = [2, 32], strides = [1, 1]} : vector<2x96xf32> to vector<2x32xf32>
    %173 = arith.mulf %160, %172 : vector<2x32xf32>
    %174 = arith.addf %171, %173 : vector<2x32xf32>
    %175 = math.tanh %174 : vector<2x32xf32>
    %cst_69 = arith.constant 1.000000e+00 : f32
    %176 = vector.broadcast %cst_69 : f32 to vector<2x32xf32>
    %177 = arith.subf %176, %170 : vector<2x32xf32>
    %178 = arith.mulf %177, %175 : vector<2x32xf32>
    %179 = arith.mulf %170, %97 : vector<2x32xf32>
    %180 = arith.addf %178, %179 : vector<2x32xf32>
    %c2_i32_70 = arith.constant 2 : i32
    %181 = arith.muli %c2_i32_70, %c1_i32 : i32
    %c15_i32_71 = arith.constant 15 : i32
    %182 = arith.cmpi slt, %181, %c15_i32_71 : i32
    %c2_i32_72 = arith.constant 2 : i32
    %183 = arith.muli %c2_i32_72, %c1_i32 : i32
    %c15_i32_73 = arith.constant 15 : i32
    %184 = arith.cmpi sgt, %183, %c15_i32_73 : i32
    %185 = arith.extui %182 : i1 to i32
    %c0_i32_74 = arith.constant 0 : i32
    %186 = arith.cmpi ne, %185, %c0_i32_74 : i32
    scf.if %186 {
      %c1_i32_499 = arith.constant 1 : i32
      %1415 = arith.addi %c1_i32_499, %c1_i32 : i32
      %1416 = arith.index_cast %1415 : i32 to index
      %c0_500 = arith.constant 0 : index
      %c0_501 = arith.constant 0 : index
      %1417 = vector.load %arg16[%1416, %c0_500, %c0_501] : memref<18x2x32xf32, #tpu.memory_space<vmem>>, vector<1x2x32xf32>
      %1418 = vector.shape_cast %1417 : vector<1x2x32xf32> to vector<2x32xf32>
      %1419 = vector.shape_cast %150 : vector<2x32xf32> to vector<1x2x32xf32>
      tpu.vector_store %arg16[%1416, %c0_500, %c0_501], %1419 {strides = array<i32>} : memref<18x2x32xf32, #tpu.memory_space<vmem>>, vector<1x2x32xf32>,
      %c1_i32_502 = arith.constant 1 : i32
      %1420 = arith.addi %c1_i32_502, %106 : i32
      %1421 = arith.index_cast %1420 : i32 to index
      %c0_503 = arith.constant 0 : index
      %c0_504 = arith.constant 0 : index
      %1422 = vector.load %arg16[%1421, %c0_503, %c0_504] : memref<18x2x32xf32, #tpu.memory_space<vmem>>, vector<1x2x32xf32>
      %1423 = vector.shape_cast %1422 : vector<1x2x32xf32> to vector<2x32xf32>
      %1424 = vector.shape_cast %180 : vector<2x32xf32> to vector<1x2x32xf32>
      tpu.vector_store %arg16[%1421, %c0_503, %c0_504], %1424 {strides = array<i32>} : memref<18x2x32xf32, #tpu.memory_space<vmem>>, vector<1x2x32xf32>,
    } else {
    }
    %187 = arith.extui %184 : i1 to i32
    %c0_i32_75 = arith.constant 0 : i32
    %188 = arith.cmpi ne, %187, %c0_i32_75 : i32
    scf.if %188 {
      %c1_i32_499 = arith.constant 1 : i32
      %1415 = arith.addi %c1_i32_499, %c1_i32 : i32
      %1416 = arith.index_cast %1415 : i32 to index
      %c0_500 = arith.constant 0 : index
      %c0_501 = arith.constant 0 : index
      %1417 = vector.load %arg16[%1416, %c0_500, %c0_501] : memref<18x2x32xf32, #tpu.memory_space<vmem>>, vector<1x2x32xf32>
      %1418 = vector.shape_cast %1417 : vector<1x2x32xf32> to vector<2x32xf32>
      %1419 = arith.addf %1418, %150 : vector<2x32xf32>
      %c1_i32_502 = arith.constant 1 : i32
      %1420 = arith.addi %c1_i32_502, %c1_i32 : i32
      %1421 = arith.index_cast %1420 : i32 to index
      %c0_503 = arith.constant 0 : index
      %c0_504 = arith.constant 0 : index
      %1422 = vector.load %arg16[%1421, %c0_503, %c0_504] : memref<18x2x32xf32, #tpu.memory_space<vmem>>, vector<1x2x32xf32>
      %1423 = vector.shape_cast %1422 : vector<1x2x32xf32> to vector<2x32xf32>
      %1424 = vector.shape_cast %1419 : vector<2x32xf32> to vector<1x2x32xf32>
      tpu.vector_store %arg16[%1421, %c0_503, %c0_504], %1424 {strides = array<i32>} : memref<18x2x32xf32, #tpu.memory_space<vmem>>, vector<1x2x32xf32>,
      %c1_i32_505 = arith.constant 1 : i32
      %1425 = arith.addi %c1_i32_505, %106 : i32
      %1426 = arith.index_cast %1425 : i32 to index
      %c0_506 = arith.constant 0 : index
      %c0_507 = arith.constant 0 : index
      %1427 = vector.load %arg16[%1426, %c0_506, %c0_507] : memref<18x2x32xf32, #tpu.memory_space<vmem>>, vector<1x2x32xf32>
      %1428 = vector.shape_cast %1427 : vector<1x2x32xf32> to vector<2x32xf32>
      %1429 = arith.addf %1428, %180 : vector<2x32xf32>
      %c1_i32_508 = arith.constant 1 : i32
      %1430 = arith.addi %c1_i32_508, %106 : i32
      %1431 = arith.index_cast %1430 : i32 to index
      %c0_509 = arith.constant 0 : index
      %c0_510 = arith.constant 0 : index
      %1432 = vector.load %arg16[%1431, %c0_509, %c0_510] : memref<18x2x32xf32, #tpu.memory_space<vmem>>, vector<1x2x32xf32>
      %1433 = vector.shape_cast %1432 : vector<1x2x32xf32> to vector<2x32xf32>
      %1434 = vector.shape_cast %1429 : vector<2x32xf32> to vector<1x2x32xf32>
      tpu.vector_store %arg16[%1431, %c0_509, %c0_510], %1434 {strides = array<i32>} : memref<18x2x32xf32, #tpu.memory_space<vmem>>, vector<1x2x32xf32>,
    } else {
    }
    %c2_i32_76 = arith.constant 2 : i32
    %c15_i32_77 = arith.constant 15 : i32
    %189 = arith.subi %c15_i32_77, %c2_i32_76 : i32
    %190 = arith.truncf %150 : vector<2x32xf32> to vector<2x32xbf16>
    %cst_78 = arith.constant dense<0.000000e+00> : vector<2x96xf32>
    %191 = tpu.matmul %190, %14, %cst_78 {dimension_numbers = #tpu.dot_dimension_numbers<[1], [0], [0], [1], [0, 0, 1, 1], [], []>} : vector<2x32xbf16>, vector<32x96xbf16>, vector<2x96xf32> -> vector<2x96xf32>
    %192 = arith.addf %191, %18 : vector<2x96xf32>
    %193 = arith.truncf %180 : vector<2x32xf32> to vector<2x32xbf16>
    %cst_79 = arith.constant dense<0.000000e+00> : vector<2x96xf32>
    %194 = tpu.matmul %193, %15, %cst_79 {dimension_numbers = #tpu.dot_dimension_numbers<[1], [0], [0], [1], [0, 0, 1, 1], [], []>} : vector<2x32xbf16>, vector<32x96xbf16>, vector<2x96xf32> -> vector<2x96xf32>
    %195 = arith.addf %194, %21 : vector<2x96xf32>
    %196 = arith.index_cast %c2_i32_76 : i32 to index
    %c0_80 = arith.constant 0 : index
    %c0_81 = arith.constant 0 : index
    %197 = vector.load %arg15[%196, %c0_80, %c0_81] : memref<16x2x192xbf16, #tpu.memory_space<vmem>>, vector<1x2x192xbf16>
    %198 = vector.shape_cast %197 : vector<1x2x192xbf16> to vector<2x192xbf16>
    %199 = arith.extf %198 : vector<2x192xbf16> to vector<2x192xf32>
    %200 = arith.index_cast %189 : i32 to index
    %c0_82 = arith.constant 0 : index
    %c0_83 = arith.constant 0 : index
    %201 = vector.load %arg15[%200, %c0_82, %c0_83] : memref<16x2x192xbf16, #tpu.memory_space<vmem>>, vector<1x2x192xbf16>
    %202 = vector.shape_cast %201 : vector<1x2x192xbf16> to vector<2x192xbf16>
    %203 = arith.extf %202 : vector<2x192xbf16> to vector<2x192xf32>
    %204 = vector.extract_strided_slice %199 {offsets = [0, 0], sizes = [2, 32], strides = [1, 1]} : vector<2x192xf32> to vector<2x32xf32>
    %205 = vector.extract_strided_slice %192 {offsets = [0, 0], sizes = [2, 32], strides = [1, 1]} : vector<2x96xf32> to vector<2x32xf32>
    %206 = arith.addf %204, %205 : vector<2x32xf32>
    %cst_84 = arith.constant 5.000000e-01 : f32
    %207 = vector.broadcast %cst_84 : f32 to vector<2x32xf32>
    %208 = arith.mulf %207, %206 : vector<2x32xf32>
    %209 = math.tanh %208 : vector<2x32xf32>
    %cst_85 = arith.constant 1.000000e+00 : f32
    %210 = vector.broadcast %cst_85 : f32 to vector<2x32xf32>
    %211 = arith.addf %209, %210 : vector<2x32xf32>
    %cst_86 = arith.constant 5.000000e-01 : f32
    %212 = vector.broadcast %cst_86 : f32 to vector<2x32xf32>
    %213 = arith.mulf %212, %211 : vector<2x32xf32>
    %214 = vector.extract_strided_slice %199 {offsets = [0, 32], sizes = [2, 32], strides = [1, 1]} : vector<2x192xf32> to vector<2x32xf32>
    %215 = vector.extract_strided_slice %192 {offsets = [0, 32], sizes = [2, 32], strides = [1, 1]} : vector<2x96xf32> to vector<2x32xf32>
    %216 = arith.addf %214, %215 : vector<2x32xf32>
    %cst_87 = arith.constant 5.000000e-01 : f32
    %217 = vector.broadcast %cst_87 : f32 to vector<2x32xf32>
    %218 = arith.mulf %217, %216 : vector<2x32xf32>
    %219 = math.tanh %218 : vector<2x32xf32>
    %cst_88 = arith.constant 1.000000e+00 : f32
    %220 = vector.broadcast %cst_88 : f32 to vector<2x32xf32>
    %221 = arith.addf %219, %220 : vector<2x32xf32>
    %cst_89 = arith.constant 5.000000e-01 : f32
    %222 = vector.broadcast %cst_89 : f32 to vector<2x32xf32>
    %223 = arith.mulf %222, %221 : vector<2x32xf32>
    %224 = vector.extract_strided_slice %199 {offsets = [0, 64], sizes = [2, 32], strides = [1, 1]} : vector<2x192xf32> to vector<2x32xf32>
    %225 = vector.extract_strided_slice %192 {offsets = [0, 64], sizes = [2, 32], strides = [1, 1]} : vector<2x96xf32> to vector<2x32xf32>
    %226 = arith.mulf %213, %225 : vector<2x32xf32>
    %227 = arith.addf %224, %226 : vector<2x32xf32>
    %228 = math.tanh %227 : vector<2x32xf32>
    %cst_90 = arith.constant 1.000000e+00 : f32
    %229 = vector.broadcast %cst_90 : f32 to vector<2x32xf32>
    %230 = arith.subf %229, %223 : vector<2x32xf32>
    %231 = arith.mulf %230, %228 : vector<2x32xf32>
    %232 = arith.mulf %223, %150 : vector<2x32xf32>
    %233 = arith.addf %231, %232 : vector<2x32xf32>
    %234 = vector.extract_strided_slice %203 {offsets = [0, 96], sizes = [2, 32], strides = [1, 1]} : vector<2x192xf32> to vector<2x32xf32>
    %235 = vector.extract_strided_slice %195 {offsets = [0, 0], sizes = [2, 32], strides = [1, 1]} : vector<2x96xf32> to vector<2x32xf32>
    %236 = arith.addf %234, %235 : vector<2x32xf32>
    %cst_91 = arith.constant 5.000000e-01 : f32
    %237 = vector.broadcast %cst_91 : f32 to vector<2x32xf32>
    %238 = arith.mulf %237, %236 : vector<2x32xf32>
    %239 = math.tanh %238 : vector<2x32xf32>
    %cst_92 = arith.constant 1.000000e+00 : f32
    %240 = vector.broadcast %cst_92 : f32 to vector<2x32xf32>
    %241 = arith.addf %239, %240 : vector<2x32xf32>
    %cst_93 = arith.constant 5.000000e-01 : f32
    %242 = vector.broadcast %cst_93 : f32 to vector<2x32xf32>
    %243 = arith.mulf %242, %241 : vector<2x32xf32>
    %244 = vector.extract_strided_slice %203 {offsets = [0, 128], sizes = [2, 32], strides = [1, 1]} : vector<2x192xf32> to vector<2x32xf32>
    %245 = vector.extract_strided_slice %195 {offsets = [0, 32], sizes = [2, 32], strides = [1, 1]} : vector<2x96xf32> to vector<2x32xf32>
    %246 = arith.addf %244, %245 : vector<2x32xf32>
    %cst_94 = arith.constant 5.000000e-01 : f32
    %247 = vector.broadcast %cst_94 : f32 to vector<2x32xf32>
    %248 = arith.mulf %247, %246 : vector<2x32xf32>
    %249 = math.tanh %248 : vector<2x32xf32>
    %cst_95 = arith.constant 1.000000e+00 : f32
    %250 = vector.broadcast %cst_95 : f32 to vector<2x32xf32>
    %251 = arith.addf %249, %250 : vector<2x32xf32>
    %cst_96 = arith.constant 5.000000e-01 : f32
    %252 = vector.broadcast %cst_96 : f32 to vector<2x32xf32>
    %253 = arith.mulf %252, %251 : vector<2x32xf32>
    %254 = vector.extract_strided_slice %203 {offsets = [0, 160], sizes = [2, 32], strides = [1, 1]} : vector<2x192xf32> to vector<2x32xf32>
    %255 = vector.extract_strided_slice %195 {offsets = [0, 64], sizes = [2, 32], strides = [1, 1]} : vector<2x96xf32> to vector<2x32xf32>
    %256 = arith.mulf %243, %255 : vector<2x32xf32>
    %257 = arith.addf %254, %256 : vector<2x32xf32>
    %258 = math.tanh %257 : vector<2x32xf32>
    %cst_97 = arith.constant 1.000000e+00 : f32
    %259 = vector.broadcast %cst_97 : f32 to vector<2x32xf32>
    %260 = arith.subf %259, %253 : vector<2x32xf32>
    %261 = arith.mulf %260, %258 : vector<2x32xf32>
    %262 = arith.mulf %253, %180 : vector<2x32xf32>
    %263 = arith.addf %261, %262 : vector<2x32xf32>
    %c2_i32_98 = arith.constant 2 : i32
    %264 = arith.muli %c2_i32_98, %c2_i32_76 : i32
    %c15_i32_99 = arith.constant 15 : i32
    %265 = arith.cmpi slt, %264, %c15_i32_99 : i32
    %c2_i32_100 = arith.constant 2 : i32
    %266 = arith.muli %c2_i32_100, %c2_i32_76 : i32
    %c15_i32_101 = arith.constant 15 : i32
    %267 = arith.cmpi sgt, %266, %c15_i32_101 : i32
    %268 = arith.extui %265 : i1 to i32
    %c0_i32_102 = arith.constant 0 : i32
    %269 = arith.cmpi ne, %268, %c0_i32_102 : i32
    scf.if %269 {
      %c1_i32_499 = arith.constant 1 : i32
      %1415 = arith.addi %c1_i32_499, %c2_i32_76 : i32
      %1416 = arith.index_cast %1415 : i32 to index
      %c0_500 = arith.constant 0 : index
      %c0_501 = arith.constant 0 : index
      %1417 = vector.load %arg16[%1416, %c0_500, %c0_501] : memref<18x2x32xf32, #tpu.memory_space<vmem>>, vector<1x2x32xf32>
      %1418 = vector.shape_cast %1417 : vector<1x2x32xf32> to vector<2x32xf32>
      %1419 = vector.shape_cast %233 : vector<2x32xf32> to vector<1x2x32xf32>
      tpu.vector_store %arg16[%1416, %c0_500, %c0_501], %1419 {strides = array<i32>} : memref<18x2x32xf32, #tpu.memory_space<vmem>>, vector<1x2x32xf32>,
      %c1_i32_502 = arith.constant 1 : i32
      %1420 = arith.addi %c1_i32_502, %189 : i32
      %1421 = arith.index_cast %1420 : i32 to index
      %c0_503 = arith.constant 0 : index
      %c0_504 = arith.constant 0 : index
      %1422 = vector.load %arg16[%1421, %c0_503, %c0_504] : memref<18x2x32xf32, #tpu.memory_space<vmem>>, vector<1x2x32xf32>
      %1423 = vector.shape_cast %1422 : vector<1x2x32xf32> to vector<2x32xf32>
      %1424 = vector.shape_cast %263 : vector<2x32xf32> to vector<1x2x32xf32>
      tpu.vector_store %arg16[%1421, %c0_503, %c0_504], %1424 {strides = array<i32>} : memref<18x2x32xf32, #tpu.memory_space<vmem>>, vector<1x2x32xf32>,
    } else {
    }
    %270 = arith.extui %267 : i1 to i32
    %c0_i32_103 = arith.constant 0 : i32
    %271 = arith.cmpi ne, %270, %c0_i32_103 : i32
    scf.if %271 {
      %c1_i32_499 = arith.constant 1 : i32
      %1415 = arith.addi %c1_i32_499, %c2_i32_76 : i32
      %1416 = arith.index_cast %1415 : i32 to index
      %c0_500 = arith.constant 0 : index
      %c0_501 = arith.constant 0 : index
      %1417 = vector.load %arg16[%1416, %c0_500, %c0_501] : memref<18x2x32xf32, #tpu.memory_space<vmem>>, vector<1x2x32xf32>
      %1418 = vector.shape_cast %1417 : vector<1x2x32xf32> to vector<2x32xf32>
      %1419 = arith.addf %1418, %233 : vector<2x32xf32>
      %c1_i32_502 = arith.constant 1 : i32
      %1420 = arith.addi %c1_i32_502, %c2_i32_76 : i32
      %1421 = arith.index_cast %1420 : i32 to index
      %c0_503 = arith.constant 0 : index
      %c0_504 = arith.constant 0 : index
      %1422 = vector.load %arg16[%1421, %c0_503, %c0_504] : memref<18x2x32xf32, #tpu.memory_space<vmem>>, vector<1x2x32xf32>
      %1423 = vector.shape_cast %1422 : vector<1x2x32xf32> to vector<2x32xf32>
      %1424 = vector.shape_cast %1419 : vector<2x32xf32> to vector<1x2x32xf32>
      tpu.vector_store %arg16[%1421, %c0_503, %c0_504], %1424 {strides = array<i32>} : memref<18x2x32xf32, #tpu.memory_space<vmem>>, vector<1x2x32xf32>,
      %c1_i32_505 = arith.constant 1 : i32
      %1425 = arith.addi %c1_i32_505, %189 : i32
      %1426 = arith.index_cast %1425 : i32 to index
      %c0_506 = arith.constant 0 : index
      %c0_507 = arith.constant 0 : index
      %1427 = vector.load %arg16[%1426, %c0_506, %c0_507] : memref<18x2x32xf32, #tpu.memory_space<vmem>>, vector<1x2x32xf32>
      %1428 = vector.shape_cast %1427 : vector<1x2x32xf32> to vector<2x32xf32>
      %1429 = arith.addf %1428, %263 : vector<2x32xf32>
      %c1_i32_508 = arith.constant 1 : i32
      %1430 = arith.addi %c1_i32_508, %189 : i32
      %1431 = arith.index_cast %1430 : i32 to index
      %c0_509 = arith.constant 0 : index
      %c0_510 = arith.constant 0 : index
      %1432 = vector.load %arg16[%1431, %c0_509, %c0_510] : memref<18x2x32xf32, #tpu.memory_space<vmem>>, vector<1x2x32xf32>
      %1433 = vector.shape_cast %1432 : vector<1x2x32xf32> to vector<2x32xf32>
      %1434 = vector.shape_cast %1429 : vector<2x32xf32> to vector<1x2x32xf32>
      tpu.vector_store %arg16[%1431, %c0_509, %c0_510], %1434 {strides = array<i32>} : memref<18x2x32xf32, #tpu.memory_space<vmem>>, vector<1x2x32xf32>,
    } else {
    }
    %c3_i32 = arith.constant 3 : i32
    %c15_i32_104 = arith.constant 15 : i32
    %272 = arith.subi %c15_i32_104, %c3_i32 : i32
    %273 = arith.truncf %233 : vector<2x32xf32> to vector<2x32xbf16>
    %cst_105 = arith.constant dense<0.000000e+00> : vector<2x96xf32>
    %274 = tpu.matmul %273, %14, %cst_105 {dimension_numbers = #tpu.dot_dimension_numbers<[1], [0], [0], [1], [0, 0, 1, 1], [], []>} : vector<2x32xbf16>, vector<32x96xbf16>, vector<2x96xf32> -> vector<2x96xf32>
    %275 = arith.addf %274, %18 : vector<2x96xf32>
    %276 = arith.truncf %263 : vector<2x32xf32> to vector<2x32xbf16>
    %cst_106 = arith.constant dense<0.000000e+00> : vector<2x96xf32>
    %277 = tpu.matmul %276, %15, %cst_106 {dimension_numbers = #tpu.dot_dimension_numbers<[1], [0], [0], [1], [0, 0, 1, 1], [], []>} : vector<2x32xbf16>, vector<32x96xbf16>, vector<2x96xf32> -> vector<2x96xf32>
    %278 = arith.addf %277, %21 : vector<2x96xf32>
    %279 = arith.index_cast %c3_i32 : i32 to index
    %c0_107 = arith.constant 0 : index
    %c0_108 = arith.constant 0 : index
    %280 = vector.load %arg15[%279, %c0_107, %c0_108] : memref<16x2x192xbf16, #tpu.memory_space<vmem>>, vector<1x2x192xbf16>
    %281 = vector.shape_cast %280 : vector<1x2x192xbf16> to vector<2x192xbf16>
    %282 = arith.extf %281 : vector<2x192xbf16> to vector<2x192xf32>
    %283 = arith.index_cast %272 : i32 to index
    %c0_109 = arith.constant 0 : index
    %c0_110 = arith.constant 0 : index
    %284 = vector.load %arg15[%283, %c0_109, %c0_110] : memref<16x2x192xbf16, #tpu.memory_space<vmem>>, vector<1x2x192xbf16>
    %285 = vector.shape_cast %284 : vector<1x2x192xbf16> to vector<2x192xbf16>
    %286 = arith.extf %285 : vector<2x192xbf16> to vector<2x192xf32>
    %287 = vector.extract_strided_slice %282 {offsets = [0, 0], sizes = [2, 32], strides = [1, 1]} : vector<2x192xf32> to vector<2x32xf32>
    %288 = vector.extract_strided_slice %275 {offsets = [0, 0], sizes = [2, 32], strides = [1, 1]} : vector<2x96xf32> to vector<2x32xf32>
    %289 = arith.addf %287, %288 : vector<2x32xf32>
    %cst_111 = arith.constant 5.000000e-01 : f32
    %290 = vector.broadcast %cst_111 : f32 to vector<2x32xf32>
    %291 = arith.mulf %290, %289 : vector<2x32xf32>
    %292 = math.tanh %291 : vector<2x32xf32>
    %cst_112 = arith.constant 1.000000e+00 : f32
    %293 = vector.broadcast %cst_112 : f32 to vector<2x32xf32>
    %294 = arith.addf %292, %293 : vector<2x32xf32>
    %cst_113 = arith.constant 5.000000e-01 : f32
    %295 = vector.broadcast %cst_113 : f32 to vector<2x32xf32>
    %296 = arith.mulf %295, %294 : vector<2x32xf32>
    %297 = vector.extract_strided_slice %282 {offsets = [0, 32], sizes = [2, 32], strides = [1, 1]} : vector<2x192xf32> to vector<2x32xf32>
    %298 = vector.extract_strided_slice %275 {offsets = [0, 32], sizes = [2, 32], strides = [1, 1]} : vector<2x96xf32> to vector<2x32xf32>
    %299 = arith.addf %297, %298 : vector<2x32xf32>
    %cst_114 = arith.constant 5.000000e-01 : f32
    %300 = vector.broadcast %cst_114 : f32 to vector<2x32xf32>
    %301 = arith.mulf %300, %299 : vector<2x32xf32>
    %302 = math.tanh %301 : vector<2x32xf32>
    %cst_115 = arith.constant 1.000000e+00 : f32
    %303 = vector.broadcast %cst_115 : f32 to vector<2x32xf32>
    %304 = arith.addf %302, %303 : vector<2x32xf32>
    %cst_116 = arith.constant 5.000000e-01 : f32
    %305 = vector.broadcast %cst_116 : f32 to vector<2x32xf32>
    %306 = arith.mulf %305, %304 : vector<2x32xf32>
    %307 = vector.extract_strided_slice %282 {offsets = [0, 64], sizes = [2, 32], strides = [1, 1]} : vector<2x192xf32> to vector<2x32xf32>
    %308 = vector.extract_strided_slice %275 {offsets = [0, 64], sizes = [2, 32], strides = [1, 1]} : vector<2x96xf32> to vector<2x32xf32>
    %309 = arith.mulf %296, %308 : vector<2x32xf32>
    %310 = arith.addf %307, %309 : vector<2x32xf32>
    %311 = math.tanh %310 : vector<2x32xf32>
    %cst_117 = arith.constant 1.000000e+00 : f32
    %312 = vector.broadcast %cst_117 : f32 to vector<2x32xf32>
    %313 = arith.subf %312, %306 : vector<2x32xf32>
    %314 = arith.mulf %313, %311 : vector<2x32xf32>
    %315 = arith.mulf %306, %233 : vector<2x32xf32>
    %316 = arith.addf %314, %315 : vector<2x32xf32>
    %317 = vector.extract_strided_slice %286 {offsets = [0, 96], sizes = [2, 32], strides = [1, 1]} : vector<2x192xf32> to vector<2x32xf32>
    %318 = vector.extract_strided_slice %278 {offsets = [0, 0], sizes = [2, 32], strides = [1, 1]} : vector<2x96xf32> to vector<2x32xf32>
    %319 = arith.addf %317, %318 : vector<2x32xf32>
    %cst_118 = arith.constant 5.000000e-01 : f32
    %320 = vector.broadcast %cst_118 : f32 to vector<2x32xf32>
    %321 = arith.mulf %320, %319 : vector<2x32xf32>
    %322 = math.tanh %321 : vector<2x32xf32>
    %cst_119 = arith.constant 1.000000e+00 : f32
    %323 = vector.broadcast %cst_119 : f32 to vector<2x32xf32>
    %324 = arith.addf %322, %323 : vector<2x32xf32>
    %cst_120 = arith.constant 5.000000e-01 : f32
    %325 = vector.broadcast %cst_120 : f32 to vector<2x32xf32>
    %326 = arith.mulf %325, %324 : vector<2x32xf32>
    %327 = vector.extract_strided_slice %286 {offsets = [0, 128], sizes = [2, 32], strides = [1, 1]} : vector<2x192xf32> to vector<2x32xf32>
    %328 = vector.extract_strided_slice %278 {offsets = [0, 32], sizes = [2, 32], strides = [1, 1]} : vector<2x96xf32> to vector<2x32xf32>
    %329 = arith.addf %327, %328 : vector<2x32xf32>
    %cst_121 = arith.constant 5.000000e-01 : f32
    %330 = vector.broadcast %cst_121 : f32 to vector<2x32xf32>
    %331 = arith.mulf %330, %329 : vector<2x32xf32>
    %332 = math.tanh %331 : vector<2x32xf32>
    %cst_122 = arith.constant 1.000000e+00 : f32
    %333 = vector.broadcast %cst_122 : f32 to vector<2x32xf32>
    %334 = arith.addf %332, %333 : vector<2x32xf32>
    %cst_123 = arith.constant 5.000000e-01 : f32
    %335 = vector.broadcast %cst_123 : f32 to vector<2x32xf32>
    %336 = arith.mulf %335, %334 : vector<2x32xf32>
    %337 = vector.extract_strided_slice %286 {offsets = [0, 160], sizes = [2, 32], strides = [1, 1]} : vector<2x192xf32> to vector<2x32xf32>
    %338 = vector.extract_strided_slice %278 {offsets = [0, 64], sizes = [2, 32], strides = [1, 1]} : vector<2x96xf32> to vector<2x32xf32>
    %339 = arith.mulf %326, %338 : vector<2x32xf32>
    %340 = arith.addf %337, %339 : vector<2x32xf32>
    %341 = math.tanh %340 : vector<2x32xf32>
    %cst_124 = arith.constant 1.000000e+00 : f32
    %342 = vector.broadcast %cst_124 : f32 to vector<2x32xf32>
    %343 = arith.subf %342, %336 : vector<2x32xf32>
    %344 = arith.mulf %343, %341 : vector<2x32xf32>
    %345 = arith.mulf %336, %263 : vector<2x32xf32>
    %346 = arith.addf %344, %345 : vector<2x32xf32>
    %c2_i32_125 = arith.constant 2 : i32
    %347 = arith.muli %c2_i32_125, %c3_i32 : i32
    %c15_i32_126 = arith.constant 15 : i32
    %348 = arith.cmpi slt, %347, %c15_i32_126 : i32
    %c2_i32_127 = arith.constant 2 : i32
    %349 = arith.muli %c2_i32_127, %c3_i32 : i32
    %c15_i32_128 = arith.constant 15 : i32
    %350 = arith.cmpi sgt, %349, %c15_i32_128 : i32
    %351 = arith.extui %348 : i1 to i32
    %c0_i32_129 = arith.constant 0 : i32
    %352 = arith.cmpi ne, %351, %c0_i32_129 : i32
    scf.if %352 {
      %c1_i32_499 = arith.constant 1 : i32
      %1415 = arith.addi %c1_i32_499, %c3_i32 : i32
      %1416 = arith.index_cast %1415 : i32 to index
      %c0_500 = arith.constant 0 : index
      %c0_501 = arith.constant 0 : index
      %1417 = vector.load %arg16[%1416, %c0_500, %c0_501] : memref<18x2x32xf32, #tpu.memory_space<vmem>>, vector<1x2x32xf32>
      %1418 = vector.shape_cast %1417 : vector<1x2x32xf32> to vector<2x32xf32>
      %1419 = vector.shape_cast %316 : vector<2x32xf32> to vector<1x2x32xf32>
      tpu.vector_store %arg16[%1416, %c0_500, %c0_501], %1419 {strides = array<i32>} : memref<18x2x32xf32, #tpu.memory_space<vmem>>, vector<1x2x32xf32>,
      %c1_i32_502 = arith.constant 1 : i32
      %1420 = arith.addi %c1_i32_502, %272 : i32
      %1421 = arith.index_cast %1420 : i32 to index
      %c0_503 = arith.constant 0 : index
      %c0_504 = arith.constant 0 : index
      %1422 = vector.load %arg16[%1421, %c0_503, %c0_504] : memref<18x2x32xf32, #tpu.memory_space<vmem>>, vector<1x2x32xf32>
      %1423 = vector.shape_cast %1422 : vector<1x2x32xf32> to vector<2x32xf32>
      %1424 = vector.shape_cast %346 : vector<2x32xf32> to vector<1x2x32xf32>
      tpu.vector_store %arg16[%1421, %c0_503, %c0_504], %1424 {strides = array<i32>} : memref<18x2x32xf32, #tpu.memory_space<vmem>>, vector<1x2x32xf32>,
    } else {
    }
    %353 = arith.extui %350 : i1 to i32
    %c0_i32_130 = arith.constant 0 : i32
    %354 = arith.cmpi ne, %353, %c0_i32_130 : i32
    scf.if %354 {
      %c1_i32_499 = arith.constant 1 : i32
      %1415 = arith.addi %c1_i32_499, %c3_i32 : i32
      %1416 = arith.index_cast %1415 : i32 to index
      %c0_500 = arith.constant 0 : index
      %c0_501 = arith.constant 0 : index
      %1417 = vector.load %arg16[%1416, %c0_500, %c0_501] : memref<18x2x32xf32, #tpu.memory_space<vmem>>, vector<1x2x32xf32>
      %1418 = vector.shape_cast %1417 : vector<1x2x32xf32> to vector<2x32xf32>
      %1419 = arith.addf %1418, %316 : vector<2x32xf32>
      %c1_i32_502 = arith.constant 1 : i32
      %1420 = arith.addi %c1_i32_502, %c3_i32 : i32
      %1421 = arith.index_cast %1420 : i32 to index
      %c0_503 = arith.constant 0 : index
      %c0_504 = arith.constant 0 : index
      %1422 = vector.load %arg16[%1421, %c0_503, %c0_504] : memref<18x2x32xf32, #tpu.memory_space<vmem>>, vector<1x2x32xf32>
      %1423 = vector.shape_cast %1422 : vector<1x2x32xf32> to vector<2x32xf32>
      %1424 = vector.shape_cast %1419 : vector<2x32xf32> to vector<1x2x32xf32>
      tpu.vector_store %arg16[%1421, %c0_503, %c0_504], %1424 {strides = array<i32>} : memref<18x2x32xf32, #tpu.memory_space<vmem>>, vector<1x2x32xf32>,
      %c1_i32_505 = arith.constant 1 : i32
      %1425 = arith.addi %c1_i32_505, %272 : i32
      %1426 = arith.index_cast %1425 : i32 to index
      %c0_506 = arith.constant 0 : index
      %c0_507 = arith.constant 0 : index
      %1427 = vector.load %arg16[%1426, %c0_506, %c0_507] : memref<18x2x32xf32, #tpu.memory_space<vmem>>, vector<1x2x32xf32>
      %1428 = vector.shape_cast %1427 : vector<1x2x32xf32> to vector<2x32xf32>
      %1429 = arith.addf %1428, %346 : vector<2x32xf32>
      %c1_i32_508 = arith.constant 1 : i32
      %1430 = arith.addi %c1_i32_508, %272 : i32
      %1431 = arith.index_cast %1430 : i32 to index
      %c0_509 = arith.constant 0 : index
      %c0_510 = arith.constant 0 : index
      %1432 = vector.load %arg16[%1431, %c0_509, %c0_510] : memref<18x2x32xf32, #tpu.memory_space<vmem>>, vector<1x2x32xf32>
      %1433 = vector.shape_cast %1432 : vector<1x2x32xf32> to vector<2x32xf32>
      %1434 = vector.shape_cast %1429 : vector<2x32xf32> to vector<1x2x32xf32>
      tpu.vector_store %arg16[%1431, %c0_509, %c0_510], %1434 {strides = array<i32>} : memref<18x2x32xf32, #tpu.memory_space<vmem>>, vector<1x2x32xf32>,
    } else {
    }
    %c4_i32 = arith.constant 4 : i32
    %c15_i32_131 = arith.constant 15 : i32
    %355 = arith.subi %c15_i32_131, %c4_i32 : i32
    %356 = arith.truncf %316 : vector<2x32xf32> to vector<2x32xbf16>
    %cst_132 = arith.constant dense<0.000000e+00> : vector<2x96xf32>
    %357 = tpu.matmul %356, %14, %cst_132 {dimension_numbers = #tpu.dot_dimension_numbers<[1], [0], [0], [1], [0, 0, 1, 1], [], []>} : vector<2x32xbf16>, vector<32x96xbf16>, vector<2x96xf32> -> vector<2x96xf32>
    %358 = arith.addf %357, %18 : vector<2x96xf32>
    %359 = arith.truncf %346 : vector<2x32xf32> to vector<2x32xbf16>
    %cst_133 = arith.constant dense<0.000000e+00> : vector<2x96xf32>
    %360 = tpu.matmul %359, %15, %cst_133 {dimension_numbers = #tpu.dot_dimension_numbers<[1], [0], [0], [1], [0, 0, 1, 1], [], []>} : vector<2x32xbf16>, vector<32x96xbf16>, vector<2x96xf32> -> vector<2x96xf32>
    %361 = arith.addf %360, %21 : vector<2x96xf32>
    %362 = arith.index_cast %c4_i32 : i32 to index
    %c0_134 = arith.constant 0 : index
    %c0_135 = arith.constant 0 : index
    %363 = vector.load %arg15[%362, %c0_134, %c0_135] : memref<16x2x192xbf16, #tpu.memory_space<vmem>>, vector<1x2x192xbf16>
    %364 = vector.shape_cast %363 : vector<1x2x192xbf16> to vector<2x192xbf16>
    %365 = arith.extf %364 : vector<2x192xbf16> to vector<2x192xf32>
    %366 = arith.index_cast %355 : i32 to index
    %c0_136 = arith.constant 0 : index
    %c0_137 = arith.constant 0 : index
    %367 = vector.load %arg15[%366, %c0_136, %c0_137] : memref<16x2x192xbf16, #tpu.memory_space<vmem>>, vector<1x2x192xbf16>
    %368 = vector.shape_cast %367 : vector<1x2x192xbf16> to vector<2x192xbf16>
    %369 = arith.extf %368 : vector<2x192xbf16> to vector<2x192xf32>
    %370 = vector.extract_strided_slice %365 {offsets = [0, 0], sizes = [2, 32], strides = [1, 1]} : vector<2x192xf32> to vector<2x32xf32>
    %371 = vector.extract_strided_slice %358 {offsets = [0, 0], sizes = [2, 32], strides = [1, 1]} : vector<2x96xf32> to vector<2x32xf32>
    %372 = arith.addf %370, %371 : vector<2x32xf32>
    %cst_138 = arith.constant 5.000000e-01 : f32
    %373 = vector.broadcast %cst_138 : f32 to vector<2x32xf32>
    %374 = arith.mulf %373, %372 : vector<2x32xf32>
    %375 = math.tanh %374 : vector<2x32xf32>
    %cst_139 = arith.constant 1.000000e+00 : f32
    %376 = vector.broadcast %cst_139 : f32 to vector<2x32xf32>
    %377 = arith.addf %375, %376 : vector<2x32xf32>
    %cst_140 = arith.constant 5.000000e-01 : f32
    %378 = vector.broadcast %cst_140 : f32 to vector<2x32xf32>
    %379 = arith.mulf %378, %377 : vector<2x32xf32>
    %380 = vector.extract_strided_slice %365 {offsets = [0, 32], sizes = [2, 32], strides = [1, 1]} : vector<2x192xf32> to vector<2x32xf32>
    %381 = vector.extract_strided_slice %358 {offsets = [0, 32], sizes = [2, 32], strides = [1, 1]} : vector<2x96xf32> to vector<2x32xf32>
    %382 = arith.addf %380, %381 : vector<2x32xf32>
    %cst_141 = arith.constant 5.000000e-01 : f32
    %383 = vector.broadcast %cst_141 : f32 to vector<2x32xf32>
    %384 = arith.mulf %383, %382 : vector<2x32xf32>
    %385 = math.tanh %384 : vector<2x32xf32>
    %cst_142 = arith.constant 1.000000e+00 : f32
    %386 = vector.broadcast %cst_142 : f32 to vector<2x32xf32>
    %387 = arith.addf %385, %386 : vector<2x32xf32>
    %cst_143 = arith.constant 5.000000e-01 : f32
    %388 = vector.broadcast %cst_143 : f32 to vector<2x32xf32>
    %389 = arith.mulf %388, %387 : vector<2x32xf32>
    %390 = vector.extract_strided_slice %365 {offsets = [0, 64], sizes = [2, 32], strides = [1, 1]} : vector<2x192xf32> to vector<2x32xf32>
    %391 = vector.extract_strided_slice %358 {offsets = [0, 64], sizes = [2, 32], strides = [1, 1]} : vector<2x96xf32> to vector<2x32xf32>
    %392 = arith.mulf %379, %391 : vector<2x32xf32>
    %393 = arith.addf %390, %392 : vector<2x32xf32>
    %394 = math.tanh %393 : vector<2x32xf32>
    %cst_144 = arith.constant 1.000000e+00 : f32
    %395 = vector.broadcast %cst_144 : f32 to vector<2x32xf32>
    %396 = arith.subf %395, %389 : vector<2x32xf32>
    %397 = arith.mulf %396, %394 : vector<2x32xf32>
    %398 = arith.mulf %389, %316 : vector<2x32xf32>
    %399 = arith.addf %397, %398 : vector<2x32xf32>
    %400 = vector.extract_strided_slice %369 {offsets = [0, 96], sizes = [2, 32], strides = [1, 1]} : vector<2x192xf32> to vector<2x32xf32>
    %401 = vector.extract_strided_slice %361 {offsets = [0, 0], sizes = [2, 32], strides = [1, 1]} : vector<2x96xf32> to vector<2x32xf32>
    %402 = arith.addf %400, %401 : vector<2x32xf32>
    %cst_145 = arith.constant 5.000000e-01 : f32
    %403 = vector.broadcast %cst_145 : f32 to vector<2x32xf32>
    %404 = arith.mulf %403, %402 : vector<2x32xf32>
    %405 = math.tanh %404 : vector<2x32xf32>
    %cst_146 = arith.constant 1.000000e+00 : f32
    %406 = vector.broadcast %cst_146 : f32 to vector<2x32xf32>
    %407 = arith.addf %405, %406 : vector<2x32xf32>
    %cst_147 = arith.constant 5.000000e-01 : f32
    %408 = vector.broadcast %cst_147 : f32 to vector<2x32xf32>
    %409 = arith.mulf %408, %407 : vector<2x32xf32>
    %410 = vector.extract_strided_slice %369 {offsets = [0, 128], sizes = [2, 32], strides = [1, 1]} : vector<2x192xf32> to vector<2x32xf32>
    %411 = vector.extract_strided_slice %361 {offsets = [0, 32], sizes = [2, 32], strides = [1, 1]} : vector<2x96xf32> to vector<2x32xf32>
    %412 = arith.addf %410, %411 : vector<2x32xf32>
    %cst_148 = arith.constant 5.000000e-01 : f32
    %413 = vector.broadcast %cst_148 : f32 to vector<2x32xf32>
    %414 = arith.mulf %413, %412 : vector<2x32xf32>
    %415 = math.tanh %414 : vector<2x32xf32>
    %cst_149 = arith.constant 1.000000e+00 : f32
    %416 = vector.broadcast %cst_149 : f32 to vector<2x32xf32>
    %417 = arith.addf %415, %416 : vector<2x32xf32>
    %cst_150 = arith.constant 5.000000e-01 : f32
    %418 = vector.broadcast %cst_150 : f32 to vector<2x32xf32>
    %419 = arith.mulf %418, %417 : vector<2x32xf32>
    %420 = vector.extract_strided_slice %369 {offsets = [0, 160], sizes = [2, 32], strides = [1, 1]} : vector<2x192xf32> to vector<2x32xf32>
    %421 = vector.extract_strided_slice %361 {offsets = [0, 64], sizes = [2, 32], strides = [1, 1]} : vector<2x96xf32> to vector<2x32xf32>
    %422 = arith.mulf %409, %421 : vector<2x32xf32>
    %423 = arith.addf %420, %422 : vector<2x32xf32>
    %424 = math.tanh %423 : vector<2x32xf32>
    %cst_151 = arith.constant 1.000000e+00 : f32
    %425 = vector.broadcast %cst_151 : f32 to vector<2x32xf32>
    %426 = arith.subf %425, %419 : vector<2x32xf32>
    %427 = arith.mulf %426, %424 : vector<2x32xf32>
    %428 = arith.mulf %419, %346 : vector<2x32xf32>
    %429 = arith.addf %427, %428 : vector<2x32xf32>
    %c2_i32_152 = arith.constant 2 : i32
    %430 = arith.muli %c2_i32_152, %c4_i32 : i32
    %c15_i32_153 = arith.constant 15 : i32
    %431 = arith.cmpi slt, %430, %c15_i32_153 : i32
    %c2_i32_154 = arith.constant 2 : i32
    %432 = arith.muli %c2_i32_154, %c4_i32 : i32
    %c15_i32_155 = arith.constant 15 : i32
    %433 = arith.cmpi sgt, %432, %c15_i32_155 : i32
    %434 = arith.extui %431 : i1 to i32
    %c0_i32_156 = arith.constant 0 : i32
    %435 = arith.cmpi ne, %434, %c0_i32_156 : i32
    scf.if %435 {
      %c1_i32_499 = arith.constant 1 : i32
      %1415 = arith.addi %c1_i32_499, %c4_i32 : i32
      %1416 = arith.index_cast %1415 : i32 to index
      %c0_500 = arith.constant 0 : index
      %c0_501 = arith.constant 0 : index
      %1417 = vector.load %arg16[%1416, %c0_500, %c0_501] : memref<18x2x32xf32, #tpu.memory_space<vmem>>, vector<1x2x32xf32>
      %1418 = vector.shape_cast %1417 : vector<1x2x32xf32> to vector<2x32xf32>
      %1419 = vector.shape_cast %399 : vector<2x32xf32> to vector<1x2x32xf32>
      tpu.vector_store %arg16[%1416, %c0_500, %c0_501], %1419 {strides = array<i32>} : memref<18x2x32xf32, #tpu.memory_space<vmem>>, vector<1x2x32xf32>,
      %c1_i32_502 = arith.constant 1 : i32
      %1420 = arith.addi %c1_i32_502, %355 : i32
      %1421 = arith.index_cast %1420 : i32 to index
      %c0_503 = arith.constant 0 : index
      %c0_504 = arith.constant 0 : index
      %1422 = vector.load %arg16[%1421, %c0_503, %c0_504] : memref<18x2x32xf32, #tpu.memory_space<vmem>>, vector<1x2x32xf32>
      %1423 = vector.shape_cast %1422 : vector<1x2x32xf32> to vector<2x32xf32>
      %1424 = vector.shape_cast %429 : vector<2x32xf32> to vector<1x2x32xf32>
      tpu.vector_store %arg16[%1421, %c0_503, %c0_504], %1424 {strides = array<i32>} : memref<18x2x32xf32, #tpu.memory_space<vmem>>, vector<1x2x32xf32>,
    } else {
    }
    %436 = arith.extui %433 : i1 to i32
    %c0_i32_157 = arith.constant 0 : i32
    %437 = arith.cmpi ne, %436, %c0_i32_157 : i32
    scf.if %437 {
      %c1_i32_499 = arith.constant 1 : i32
      %1415 = arith.addi %c1_i32_499, %c4_i32 : i32
      %1416 = arith.index_cast %1415 : i32 to index
      %c0_500 = arith.constant 0 : index
      %c0_501 = arith.constant 0 : index
      %1417 = vector.load %arg16[%1416, %c0_500, %c0_501] : memref<18x2x32xf32, #tpu.memory_space<vmem>>, vector<1x2x32xf32>
      %1418 = vector.shape_cast %1417 : vector<1x2x32xf32> to vector<2x32xf32>
      %1419 = arith.addf %1418, %399 : vector<2x32xf32>
      %c1_i32_502 = arith.constant 1 : i32
      %1420 = arith.addi %c1_i32_502, %c4_i32 : i32
      %1421 = arith.index_cast %1420 : i32 to index
      %c0_503 = arith.constant 0 : index
      %c0_504 = arith.constant 0 : index
      %1422 = vector.load %arg16[%1421, %c0_503, %c0_504] : memref<18x2x32xf32, #tpu.memory_space<vmem>>, vector<1x2x32xf32>
      %1423 = vector.shape_cast %1422 : vector<1x2x32xf32> to vector<2x32xf32>
      %1424 = vector.shape_cast %1419 : vector<2x32xf32> to vector<1x2x32xf32>
      tpu.vector_store %arg16[%1421, %c0_503, %c0_504], %1424 {strides = array<i32>} : memref<18x2x32xf32, #tpu.memory_space<vmem>>, vector<1x2x32xf32>,
      %c1_i32_505 = arith.constant 1 : i32
      %1425 = arith.addi %c1_i32_505, %355 : i32
      %1426 = arith.index_cast %1425 : i32 to index
      %c0_506 = arith.constant 0 : index
      %c0_507 = arith.constant 0 : index
      %1427 = vector.load %arg16[%1426, %c0_506, %c0_507] : memref<18x2x32xf32, #tpu.memory_space<vmem>>, vector<1x2x32xf32>
      %1428 = vector.shape_cast %1427 : vector<1x2x32xf32> to vector<2x32xf32>
      %1429 = arith.addf %1428, %429 : vector<2x32xf32>
      %c1_i32_508 = arith.constant 1 : i32
      %1430 = arith.addi %c1_i32_508, %355 : i32
      %1431 = arith.index_cast %1430 : i32 to index
      %c0_509 = arith.constant 0 : index
      %c0_510 = arith.constant 0 : index
      %1432 = vector.load %arg16[%1431, %c0_509, %c0_510] : memref<18x2x32xf32, #tpu.memory_space<vmem>>, vector<1x2x32xf32>
      %1433 = vector.shape_cast %1432 : vector<1x2x32xf32> to vector<2x32xf32>
      %1434 = vector.shape_cast %1429 : vector<2x32xf32> to vector<1x2x32xf32>
      tpu.vector_store %arg16[%1431, %c0_509, %c0_510], %1434 {strides = array<i32>} : memref<18x2x32xf32, #tpu.memory_space<vmem>>, vector<1x2x32xf32>,
    } else {
    }
    %c5_i32 = arith.constant 5 : i32
    %c15_i32_158 = arith.constant 15 : i32
    %438 = arith.subi %c15_i32_158, %c5_i32 : i32
    %439 = arith.truncf %399 : vector<2x32xf32> to vector<2x32xbf16>
    %cst_159 = arith.constant dense<0.000000e+00> : vector<2x96xf32>
    %440 = tpu.matmul %439, %14, %cst_159 {dimension_numbers = #tpu.dot_dimension_numbers<[1], [0], [0], [1], [0, 0, 1, 1], [], []>} : vector<2x32xbf16>, vector<32x96xbf16>, vector<2x96xf32> -> vector<2x96xf32>
    %441 = arith.addf %440, %18 : vector<2x96xf32>
    %442 = arith.truncf %429 : vector<2x32xf32> to vector<2x32xbf16>
    %cst_160 = arith.constant dense<0.000000e+00> : vector<2x96xf32>
    %443 = tpu.matmul %442, %15, %cst_160 {dimension_numbers = #tpu.dot_dimension_numbers<[1], [0], [0], [1], [0, 0, 1, 1], [], []>} : vector<2x32xbf16>, vector<32x96xbf16>, vector<2x96xf32> -> vector<2x96xf32>
    %444 = arith.addf %443, %21 : vector<2x96xf32>
    %445 = arith.index_cast %c5_i32 : i32 to index
    %c0_161 = arith.constant 0 : index
    %c0_162 = arith.constant 0 : index
    %446 = vector.load %arg15[%445, %c0_161, %c0_162] : memref<16x2x192xbf16, #tpu.memory_space<vmem>>, vector<1x2x192xbf16>
    %447 = vector.shape_cast %446 : vector<1x2x192xbf16> to vector<2x192xbf16>
    %448 = arith.extf %447 : vector<2x192xbf16> to vector<2x192xf32>
    %449 = arith.index_cast %438 : i32 to index
    %c0_163 = arith.constant 0 : index
    %c0_164 = arith.constant 0 : index
    %450 = vector.load %arg15[%449, %c0_163, %c0_164] : memref<16x2x192xbf16, #tpu.memory_space<vmem>>, vector<1x2x192xbf16>
    %451 = vector.shape_cast %450 : vector<1x2x192xbf16> to vector<2x192xbf16>
    %452 = arith.extf %451 : vector<2x192xbf16> to vector<2x192xf32>
    %453 = vector.extract_strided_slice %448 {offsets = [0, 0], sizes = [2, 32], strides = [1, 1]} : vector<2x192xf32> to vector<2x32xf32>
    %454 = vector.extract_strided_slice %441 {offsets = [0, 0], sizes = [2, 32], strides = [1, 1]} : vector<2x96xf32> to vector<2x32xf32>
    %455 = arith.addf %453, %454 : vector<2x32xf32>
    %cst_165 = arith.constant 5.000000e-01 : f32
    %456 = vector.broadcast %cst_165 : f32 to vector<2x32xf32>
    %457 = arith.mulf %456, %455 : vector<2x32xf32>
    %458 = math.tanh %457 : vector<2x32xf32>
    %cst_166 = arith.constant 1.000000e+00 : f32
    %459 = vector.broadcast %cst_166 : f32 to vector<2x32xf32>
    %460 = arith.addf %458, %459 : vector<2x32xf32>
    %cst_167 = arith.constant 5.000000e-01 : f32
    %461 = vector.broadcast %cst_167 : f32 to vector<2x32xf32>
    %462 = arith.mulf %461, %460 : vector<2x32xf32>
    %463 = vector.extract_strided_slice %448 {offsets = [0, 32], sizes = [2, 32], strides = [1, 1]} : vector<2x192xf32> to vector<2x32xf32>
    %464 = vector.extract_strided_slice %441 {offsets = [0, 32], sizes = [2, 32], strides = [1, 1]} : vector<2x96xf32> to vector<2x32xf32>
    %465 = arith.addf %463, %464 : vector<2x32xf32>
    %cst_168 = arith.constant 5.000000e-01 : f32
    %466 = vector.broadcast %cst_168 : f32 to vector<2x32xf32>
    %467 = arith.mulf %466, %465 : vector<2x32xf32>
    %468 = math.tanh %467 : vector<2x32xf32>
    %cst_169 = arith.constant 1.000000e+00 : f32
    %469 = vector.broadcast %cst_169 : f32 to vector<2x32xf32>
    %470 = arith.addf %468, %469 : vector<2x32xf32>
    %cst_170 = arith.constant 5.000000e-01 : f32
    %471 = vector.broadcast %cst_170 : f32 to vector<2x32xf32>
    %472 = arith.mulf %471, %470 : vector<2x32xf32>
    %473 = vector.extract_strided_slice %448 {offsets = [0, 64], sizes = [2, 32], strides = [1, 1]} : vector<2x192xf32> to vector<2x32xf32>
    %474 = vector.extract_strided_slice %441 {offsets = [0, 64], sizes = [2, 32], strides = [1, 1]} : vector<2x96xf32> to vector<2x32xf32>
    %475 = arith.mulf %462, %474 : vector<2x32xf32>
    %476 = arith.addf %473, %475 : vector<2x32xf32>
    %477 = math.tanh %476 : vector<2x32xf32>
    %cst_171 = arith.constant 1.000000e+00 : f32
    %478 = vector.broadcast %cst_171 : f32 to vector<2x32xf32>
    %479 = arith.subf %478, %472 : vector<2x32xf32>
    %480 = arith.mulf %479, %477 : vector<2x32xf32>
    %481 = arith.mulf %472, %399 : vector<2x32xf32>
    %482 = arith.addf %480, %481 : vector<2x32xf32>
    %483 = vector.extract_strided_slice %452 {offsets = [0, 96], sizes = [2, 32], strides = [1, 1]} : vector<2x192xf32> to vector<2x32xf32>
    %484 = vector.extract_strided_slice %444 {offsets = [0, 0], sizes = [2, 32], strides = [1, 1]} : vector<2x96xf32> to vector<2x32xf32>
    %485 = arith.addf %483, %484 : vector<2x32xf32>
    %cst_172 = arith.constant 5.000000e-01 : f32
    %486 = vector.broadcast %cst_172 : f32 to vector<2x32xf32>
    %487 = arith.mulf %486, %485 : vector<2x32xf32>
    %488 = math.tanh %487 : vector<2x32xf32>
    %cst_173 = arith.constant 1.000000e+00 : f32
    %489 = vector.broadcast %cst_173 : f32 to vector<2x32xf32>
    %490 = arith.addf %488, %489 : vector<2x32xf32>
    %cst_174 = arith.constant 5.000000e-01 : f32
    %491 = vector.broadcast %cst_174 : f32 to vector<2x32xf32>
    %492 = arith.mulf %491, %490 : vector<2x32xf32>
    %493 = vector.extract_strided_slice %452 {offsets = [0, 128], sizes = [2, 32], strides = [1, 1]} : vector<2x192xf32> to vector<2x32xf32>
    %494 = vector.extract_strided_slice %444 {offsets = [0, 32], sizes = [2, 32], strides = [1, 1]} : vector<2x96xf32> to vector<2x32xf32>
    %495 = arith.addf %493, %494 : vector<2x32xf32>
    %cst_175 = arith.constant 5.000000e-01 : f32
    %496 = vector.broadcast %cst_175 : f32 to vector<2x32xf32>
    %497 = arith.mulf %496, %495 : vector<2x32xf32>
    %498 = math.tanh %497 : vector<2x32xf32>
    %cst_176 = arith.constant 1.000000e+00 : f32
    %499 = vector.broadcast %cst_176 : f32 to vector<2x32xf32>
    %500 = arith.addf %498, %499 : vector<2x32xf32>
    %cst_177 = arith.constant 5.000000e-01 : f32
    %501 = vector.broadcast %cst_177 : f32 to vector<2x32xf32>
    %502 = arith.mulf %501, %500 : vector<2x32xf32>
    %503 = vector.extract_strided_slice %452 {offsets = [0, 160], sizes = [2, 32], strides = [1, 1]} : vector<2x192xf32> to vector<2x32xf32>
    %504 = vector.extract_strided_slice %444 {offsets = [0, 64], sizes = [2, 32], strides = [1, 1]} : vector<2x96xf32> to vector<2x32xf32>
    %505 = arith.mulf %492, %504 : vector<2x32xf32>
    %506 = arith.addf %503, %505 : vector<2x32xf32>
    %507 = math.tanh %506 : vector<2x32xf32>
    %cst_178 = arith.constant 1.000000e+00 : f32
    %508 = vector.broadcast %cst_178 : f32 to vector<2x32xf32>
    %509 = arith.subf %508, %502 : vector<2x32xf32>
    %510 = arith.mulf %509, %507 : vector<2x32xf32>
    %511 = arith.mulf %502, %429 : vector<2x32xf32>
    %512 = arith.addf %510, %511 : vector<2x32xf32>
    %c2_i32_179 = arith.constant 2 : i32
    %513 = arith.muli %c2_i32_179, %c5_i32 : i32
    %c15_i32_180 = arith.constant 15 : i32
    %514 = arith.cmpi slt, %513, %c15_i32_180 : i32
    %c2_i32_181 = arith.constant 2 : i32
    %515 = arith.muli %c2_i32_181, %c5_i32 : i32
    %c15_i32_182 = arith.constant 15 : i32
    %516 = arith.cmpi sgt, %515, %c15_i32_182 : i32
    %517 = arith.extui %514 : i1 to i32
    %c0_i32_183 = arith.constant 0 : i32
    %518 = arith.cmpi ne, %517, %c0_i32_183 : i32
    scf.if %518 {
      %c1_i32_499 = arith.constant 1 : i32
      %1415 = arith.addi %c1_i32_499, %c5_i32 : i32
      %1416 = arith.index_cast %1415 : i32 to index
      %c0_500 = arith.constant 0 : index
      %c0_501 = arith.constant 0 : index
      %1417 = vector.load %arg16[%1416, %c0_500, %c0_501] : memref<18x2x32xf32, #tpu.memory_space<vmem>>, vector<1x2x32xf32>
      %1418 = vector.shape_cast %1417 : vector<1x2x32xf32> to vector<2x32xf32>
      %1419 = vector.shape_cast %482 : vector<2x32xf32> to vector<1x2x32xf32>
      tpu.vector_store %arg16[%1416, %c0_500, %c0_501], %1419 {strides = array<i32>} : memref<18x2x32xf32, #tpu.memory_space<vmem>>, vector<1x2x32xf32>,
      %c1_i32_502 = arith.constant 1 : i32
      %1420 = arith.addi %c1_i32_502, %438 : i32
      %1421 = arith.index_cast %1420 : i32 to index
      %c0_503 = arith.constant 0 : index
      %c0_504 = arith.constant 0 : index
      %1422 = vector.load %arg16[%1421, %c0_503, %c0_504] : memref<18x2x32xf32, #tpu.memory_space<vmem>>, vector<1x2x32xf32>
      %1423 = vector.shape_cast %1422 : vector<1x2x32xf32> to vector<2x32xf32>
      %1424 = vector.shape_cast %512 : vector<2x32xf32> to vector<1x2x32xf32>
      tpu.vector_store %arg16[%1421, %c0_503, %c0_504], %1424 {strides = array<i32>} : memref<18x2x32xf32, #tpu.memory_space<vmem>>, vector<1x2x32xf32>,
    } else {
    }
    %519 = arith.extui %516 : i1 to i32
    %c0_i32_184 = arith.constant 0 : i32
    %520 = arith.cmpi ne, %519, %c0_i32_184 : i32
    scf.if %520 {
      %c1_i32_499 = arith.constant 1 : i32
      %1415 = arith.addi %c1_i32_499, %c5_i32 : i32
      %1416 = arith.index_cast %1415 : i32 to index
      %c0_500 = arith.constant 0 : index
      %c0_501 = arith.constant 0 : index
      %1417 = vector.load %arg16[%1416, %c0_500, %c0_501] : memref<18x2x32xf32, #tpu.memory_space<vmem>>, vector<1x2x32xf32>
      %1418 = vector.shape_cast %1417 : vector<1x2x32xf32> to vector<2x32xf32>
      %1419 = arith.addf %1418, %482 : vector<2x32xf32>
      %c1_i32_502 = arith.constant 1 : i32
      %1420 = arith.addi %c1_i32_502, %c5_i32 : i32
      %1421 = arith.index_cast %1420 : i32 to index
      %c0_503 = arith.constant 0 : index
      %c0_504 = arith.constant 0 : index
      %1422 = vector.load %arg16[%1421, %c0_503, %c0_504] : memref<18x2x32xf32, #tpu.memory_space<vmem>>, vector<1x2x32xf32>
      %1423 = vector.shape_cast %1422 : vector<1x2x32xf32> to vector<2x32xf32>
      %1424 = vector.shape_cast %1419 : vector<2x32xf32> to vector<1x2x32xf32>
      tpu.vector_store %arg16[%1421, %c0_503, %c0_504], %1424 {strides = array<i32>} : memref<18x2x32xf32, #tpu.memory_space<vmem>>, vector<1x2x32xf32>,
      %c1_i32_505 = arith.constant 1 : i32
      %1425 = arith.addi %c1_i32_505, %438 : i32
      %1426 = arith.index_cast %1425 : i32 to index
      %c0_506 = arith.constant 0 : index
      %c0_507 = arith.constant 0 : index
      %1427 = vector.load %arg16[%1426, %c0_506, %c0_507] : memref<18x2x32xf32, #tpu.memory_space<vmem>>, vector<1x2x32xf32>
      %1428 = vector.shape_cast %1427 : vector<1x2x32xf32> to vector<2x32xf32>
      %1429 = arith.addf %1428, %512 : vector<2x32xf32>
      %c1_i32_508 = arith.constant 1 : i32
      %1430 = arith.addi %c1_i32_508, %438 : i32
      %1431 = arith.index_cast %1430 : i32 to index
      %c0_509 = arith.constant 0 : index
      %c0_510 = arith.constant 0 : index
      %1432 = vector.load %arg16[%1431, %c0_509, %c0_510] : memref<18x2x32xf32, #tpu.memory_space<vmem>>, vector<1x2x32xf32>
      %1433 = vector.shape_cast %1432 : vector<1x2x32xf32> to vector<2x32xf32>
      %1434 = vector.shape_cast %1429 : vector<2x32xf32> to vector<1x2x32xf32>
      tpu.vector_store %arg16[%1431, %c0_509, %c0_510], %1434 {strides = array<i32>} : memref<18x2x32xf32, #tpu.memory_space<vmem>>, vector<1x2x32xf32>,
    } else {
    }
    %c6_i32 = arith.constant 6 : i32
    %c15_i32_185 = arith.constant 15 : i32
    %521 = arith.subi %c15_i32_185, %c6_i32 : i32
    %522 = arith.truncf %482 : vector<2x32xf32> to vector<2x32xbf16>
    %cst_186 = arith.constant dense<0.000000e+00> : vector<2x96xf32>
    %523 = tpu.matmul %522, %14, %cst_186 {dimension_numbers = #tpu.dot_dimension_numbers<[1], [0], [0], [1], [0, 0, 1, 1], [], []>} : vector<2x32xbf16>, vector<32x96xbf16>, vector<2x96xf32> -> vector<2x96xf32>
    %524 = arith.addf %523, %18 : vector<2x96xf32>
    %525 = arith.truncf %512 : vector<2x32xf32> to vector<2x32xbf16>
    %cst_187 = arith.constant dense<0.000000e+00> : vector<2x96xf32>
    %526 = tpu.matmul %525, %15, %cst_187 {dimension_numbers = #tpu.dot_dimension_numbers<[1], [0], [0], [1], [0, 0, 1, 1], [], []>} : vector<2x32xbf16>, vector<32x96xbf16>, vector<2x96xf32> -> vector<2x96xf32>
    %527 = arith.addf %526, %21 : vector<2x96xf32>
    %528 = arith.index_cast %c6_i32 : i32 to index
    %c0_188 = arith.constant 0 : index
    %c0_189 = arith.constant 0 : index
    %529 = vector.load %arg15[%528, %c0_188, %c0_189] : memref<16x2x192xbf16, #tpu.memory_space<vmem>>, vector<1x2x192xbf16>
    %530 = vector.shape_cast %529 : vector<1x2x192xbf16> to vector<2x192xbf16>
    %531 = arith.extf %530 : vector<2x192xbf16> to vector<2x192xf32>
    %532 = arith.index_cast %521 : i32 to index
    %c0_190 = arith.constant 0 : index
    %c0_191 = arith.constant 0 : index
    %533 = vector.load %arg15[%532, %c0_190, %c0_191] : memref<16x2x192xbf16, #tpu.memory_space<vmem>>, vector<1x2x192xbf16>
    %534 = vector.shape_cast %533 : vector<1x2x192xbf16> to vector<2x192xbf16>
    %535 = arith.extf %534 : vector<2x192xbf16> to vector<2x192xf32>
    %536 = vector.extract_strided_slice %531 {offsets = [0, 0], sizes = [2, 32], strides = [1, 1]} : vector<2x192xf32> to vector<2x32xf32>
    %537 = vector.extract_strided_slice %524 {offsets = [0, 0], sizes = [2, 32], strides = [1, 1]} : vector<2x96xf32> to vector<2x32xf32>
    %538 = arith.addf %536, %537 : vector<2x32xf32>
    %cst_192 = arith.constant 5.000000e-01 : f32
    %539 = vector.broadcast %cst_192 : f32 to vector<2x32xf32>
    %540 = arith.mulf %539, %538 : vector<2x32xf32>
    %541 = math.tanh %540 : vector<2x32xf32>
    %cst_193 = arith.constant 1.000000e+00 : f32
    %542 = vector.broadcast %cst_193 : f32 to vector<2x32xf32>
    %543 = arith.addf %541, %542 : vector<2x32xf32>
    %cst_194 = arith.constant 5.000000e-01 : f32
    %544 = vector.broadcast %cst_194 : f32 to vector<2x32xf32>
    %545 = arith.mulf %544, %543 : vector<2x32xf32>
    %546 = vector.extract_strided_slice %531 {offsets = [0, 32], sizes = [2, 32], strides = [1, 1]} : vector<2x192xf32> to vector<2x32xf32>
    %547 = vector.extract_strided_slice %524 {offsets = [0, 32], sizes = [2, 32], strides = [1, 1]} : vector<2x96xf32> to vector<2x32xf32>
    %548 = arith.addf %546, %547 : vector<2x32xf32>
    %cst_195 = arith.constant 5.000000e-01 : f32
    %549 = vector.broadcast %cst_195 : f32 to vector<2x32xf32>
    %550 = arith.mulf %549, %548 : vector<2x32xf32>
    %551 = math.tanh %550 : vector<2x32xf32>
    %cst_196 = arith.constant 1.000000e+00 : f32
    %552 = vector.broadcast %cst_196 : f32 to vector<2x32xf32>
    %553 = arith.addf %551, %552 : vector<2x32xf32>
    %cst_197 = arith.constant 5.000000e-01 : f32
    %554 = vector.broadcast %cst_197 : f32 to vector<2x32xf32>
    %555 = arith.mulf %554, %553 : vector<2x32xf32>
    %556 = vector.extract_strided_slice %531 {offsets = [0, 64], sizes = [2, 32], strides = [1, 1]} : vector<2x192xf32> to vector<2x32xf32>
    %557 = vector.extract_strided_slice %524 {offsets = [0, 64], sizes = [2, 32], strides = [1, 1]} : vector<2x96xf32> to vector<2x32xf32>
    %558 = arith.mulf %545, %557 : vector<2x32xf32>
    %559 = arith.addf %556, %558 : vector<2x32xf32>
    %560 = math.tanh %559 : vector<2x32xf32>
    %cst_198 = arith.constant 1.000000e+00 : f32
    %561 = vector.broadcast %cst_198 : f32 to vector<2x32xf32>
    %562 = arith.subf %561, %555 : vector<2x32xf32>
    %563 = arith.mulf %562, %560 : vector<2x32xf32>
    %564 = arith.mulf %555, %482 : vector<2x32xf32>
    %565 = arith.addf %563, %564 : vector<2x32xf32>
    %566 = vector.extract_strided_slice %535 {offsets = [0, 96], sizes = [2, 32], strides = [1, 1]} : vector<2x192xf32> to vector<2x32xf32>
    %567 = vector.extract_strided_slice %527 {offsets = [0, 0], sizes = [2, 32], strides = [1, 1]} : vector<2x96xf32> to vector<2x32xf32>
    %568 = arith.addf %566, %567 : vector<2x32xf32>
    %cst_199 = arith.constant 5.000000e-01 : f32
    %569 = vector.broadcast %cst_199 : f32 to vector<2x32xf32>
    %570 = arith.mulf %569, %568 : vector<2x32xf32>
    %571 = math.tanh %570 : vector<2x32xf32>
    %cst_200 = arith.constant 1.000000e+00 : f32
    %572 = vector.broadcast %cst_200 : f32 to vector<2x32xf32>
    %573 = arith.addf %571, %572 : vector<2x32xf32>
    %cst_201 = arith.constant 5.000000e-01 : f32
    %574 = vector.broadcast %cst_201 : f32 to vector<2x32xf32>
    %575 = arith.mulf %574, %573 : vector<2x32xf32>
    %576 = vector.extract_strided_slice %535 {offsets = [0, 128], sizes = [2, 32], strides = [1, 1]} : vector<2x192xf32> to vector<2x32xf32>
    %577 = vector.extract_strided_slice %527 {offsets = [0, 32], sizes = [2, 32], strides = [1, 1]} : vector<2x96xf32> to vector<2x32xf32>
    %578 = arith.addf %576, %577 : vector<2x32xf32>
    %cst_202 = arith.constant 5.000000e-01 : f32
    %579 = vector.broadcast %cst_202 : f32 to vector<2x32xf32>
    %580 = arith.mulf %579, %578 : vector<2x32xf32>
    %581 = math.tanh %580 : vector<2x32xf32>
    %cst_203 = arith.constant 1.000000e+00 : f32
    %582 = vector.broadcast %cst_203 : f32 to vector<2x32xf32>
    %583 = arith.addf %581, %582 : vector<2x32xf32>
    %cst_204 = arith.constant 5.000000e-01 : f32
    %584 = vector.broadcast %cst_204 : f32 to vector<2x32xf32>
    %585 = arith.mulf %584, %583 : vector<2x32xf32>
    %586 = vector.extract_strided_slice %535 {offsets = [0, 160], sizes = [2, 32], strides = [1, 1]} : vector<2x192xf32> to vector<2x32xf32>
    %587 = vector.extract_strided_slice %527 {offsets = [0, 64], sizes = [2, 32], strides = [1, 1]} : vector<2x96xf32> to vector<2x32xf32>
    %588 = arith.mulf %575, %587 : vector<2x32xf32>
    %589 = arith.addf %586, %588 : vector<2x32xf32>
    %590 = math.tanh %589 : vector<2x32xf32>
    %cst_205 = arith.constant 1.000000e+00 : f32
    %591 = vector.broadcast %cst_205 : f32 to vector<2x32xf32>
    %592 = arith.subf %591, %585 : vector<2x32xf32>
    %593 = arith.mulf %592, %590 : vector<2x32xf32>
    %594 = arith.mulf %585, %512 : vector<2x32xf32>
    %595 = arith.addf %593, %594 : vector<2x32xf32>
    %c2_i32_206 = arith.constant 2 : i32
    %596 = arith.muli %c2_i32_206, %c6_i32 : i32
    %c15_i32_207 = arith.constant 15 : i32
    %597 = arith.cmpi slt, %596, %c15_i32_207 : i32
    %c2_i32_208 = arith.constant 2 : i32
    %598 = arith.muli %c2_i32_208, %c6_i32 : i32
    %c15_i32_209 = arith.constant 15 : i32
    %599 = arith.cmpi sgt, %598, %c15_i32_209 : i32
    %600 = arith.extui %597 : i1 to i32
    %c0_i32_210 = arith.constant 0 : i32
    %601 = arith.cmpi ne, %600, %c0_i32_210 : i32
    scf.if %601 {
      %c1_i32_499 = arith.constant 1 : i32
      %1415 = arith.addi %c1_i32_499, %c6_i32 : i32
      %1416 = arith.index_cast %1415 : i32 to index
      %c0_500 = arith.constant 0 : index
      %c0_501 = arith.constant 0 : index
      %1417 = vector.load %arg16[%1416, %c0_500, %c0_501] : memref<18x2x32xf32, #tpu.memory_space<vmem>>, vector<1x2x32xf32>
      %1418 = vector.shape_cast %1417 : vector<1x2x32xf32> to vector<2x32xf32>
      %1419 = vector.shape_cast %565 : vector<2x32xf32> to vector<1x2x32xf32>
      tpu.vector_store %arg16[%1416, %c0_500, %c0_501], %1419 {strides = array<i32>} : memref<18x2x32xf32, #tpu.memory_space<vmem>>, vector<1x2x32xf32>,
      %c1_i32_502 = arith.constant 1 : i32
      %1420 = arith.addi %c1_i32_502, %521 : i32
      %1421 = arith.index_cast %1420 : i32 to index
      %c0_503 = arith.constant 0 : index
      %c0_504 = arith.constant 0 : index
      %1422 = vector.load %arg16[%1421, %c0_503, %c0_504] : memref<18x2x32xf32, #tpu.memory_space<vmem>>, vector<1x2x32xf32>
      %1423 = vector.shape_cast %1422 : vector<1x2x32xf32> to vector<2x32xf32>
      %1424 = vector.shape_cast %595 : vector<2x32xf32> to vector<1x2x32xf32>
      tpu.vector_store %arg16[%1421, %c0_503, %c0_504], %1424 {strides = array<i32>} : memref<18x2x32xf32, #tpu.memory_space<vmem>>, vector<1x2x32xf32>,
    } else {
    }
    %602 = arith.extui %599 : i1 to i32
    %c0_i32_211 = arith.constant 0 : i32
    %603 = arith.cmpi ne, %602, %c0_i32_211 : i32
    scf.if %603 {
      %c1_i32_499 = arith.constant 1 : i32
      %1415 = arith.addi %c1_i32_499, %c6_i32 : i32
      %1416 = arith.index_cast %1415 : i32 to index
      %c0_500 = arith.constant 0 : index
      %c0_501 = arith.constant 0 : index
      %1417 = vector.load %arg16[%1416, %c0_500, %c0_501] : memref<18x2x32xf32, #tpu.memory_space<vmem>>, vector<1x2x32xf32>
      %1418 = vector.shape_cast %1417 : vector<1x2x32xf32> to vector<2x32xf32>
      %1419 = arith.addf %1418, %565 : vector<2x32xf32>
      %c1_i32_502 = arith.constant 1 : i32
      %1420 = arith.addi %c1_i32_502, %c6_i32 : i32
      %1421 = arith.index_cast %1420 : i32 to index
      %c0_503 = arith.constant 0 : index
      %c0_504 = arith.constant 0 : index
      %1422 = vector.load %arg16[%1421, %c0_503, %c0_504] : memref<18x2x32xf32, #tpu.memory_space<vmem>>, vector<1x2x32xf32>
      %1423 = vector.shape_cast %1422 : vector<1x2x32xf32> to vector<2x32xf32>
      %1424 = vector.shape_cast %1419 : vector<2x32xf32> to vector<1x2x32xf32>
      tpu.vector_store %arg16[%1421, %c0_503, %c0_504], %1424 {strides = array<i32>} : memref<18x2x32xf32, #tpu.memory_space<vmem>>, vector<1x2x32xf32>,
      %c1_i32_505 = arith.constant 1 : i32
      %1425 = arith.addi %c1_i32_505, %521 : i32
      %1426 = arith.index_cast %1425 : i32 to index
      %c0_506 = arith.constant 0 : index
      %c0_507 = arith.constant 0 : index
      %1427 = vector.load %arg16[%1426, %c0_506, %c0_507] : memref<18x2x32xf32, #tpu.memory_space<vmem>>, vector<1x2x32xf32>
      %1428 = vector.shape_cast %1427 : vector<1x2x32xf32> to vector<2x32xf32>
      %1429 = arith.addf %1428, %595 : vector<2x32xf32>
      %c1_i32_508 = arith.constant 1 : i32
      %1430 = arith.addi %c1_i32_508, %521 : i32
      %1431 = arith.index_cast %1430 : i32 to index
      %c0_509 = arith.constant 0 : index
      %c0_510 = arith.constant 0 : index
      %1432 = vector.load %arg16[%1431, %c0_509, %c0_510] : memref<18x2x32xf32, #tpu.memory_space<vmem>>, vector<1x2x32xf32>
      %1433 = vector.shape_cast %1432 : vector<1x2x32xf32> to vector<2x32xf32>
      %1434 = vector.shape_cast %1429 : vector<2x32xf32> to vector<1x2x32xf32>
      tpu.vector_store %arg16[%1431, %c0_509, %c0_510], %1434 {strides = array<i32>} : memref<18x2x32xf32, #tpu.memory_space<vmem>>, vector<1x2x32xf32>,
    } else {
    }
    %c7_i32 = arith.constant 7 : i32
    %c15_i32_212 = arith.constant 15 : i32
    %604 = arith.subi %c15_i32_212, %c7_i32 : i32
    %605 = arith.truncf %565 : vector<2x32xf32> to vector<2x32xbf16>
    %cst_213 = arith.constant dense<0.000000e+00> : vector<2x96xf32>
    %606 = tpu.matmul %605, %14, %cst_213 {dimension_numbers = #tpu.dot_dimension_numbers<[1], [0], [0], [1], [0, 0, 1, 1], [], []>} : vector<2x32xbf16>, vector<32x96xbf16>, vector<2x96xf32> -> vector<2x96xf32>
    %607 = arith.addf %606, %18 : vector<2x96xf32>
    %608 = arith.truncf %595 : vector<2x32xf32> to vector<2x32xbf16>
    %cst_214 = arith.constant dense<0.000000e+00> : vector<2x96xf32>
    %609 = tpu.matmul %608, %15, %cst_214 {dimension_numbers = #tpu.dot_dimension_numbers<[1], [0], [0], [1], [0, 0, 1, 1], [], []>} : vector<2x32xbf16>, vector<32x96xbf16>, vector<2x96xf32> -> vector<2x96xf32>
    %610 = arith.addf %609, %21 : vector<2x96xf32>
    %611 = arith.index_cast %c7_i32 : i32 to index
    %c0_215 = arith.constant 0 : index
    %c0_216 = arith.constant 0 : index
    %612 = vector.load %arg15[%611, %c0_215, %c0_216] : memref<16x2x192xbf16, #tpu.memory_space<vmem>>, vector<1x2x192xbf16>
    %613 = vector.shape_cast %612 : vector<1x2x192xbf16> to vector<2x192xbf16>
    %614 = arith.extf %613 : vector<2x192xbf16> to vector<2x192xf32>
    %615 = arith.index_cast %604 : i32 to index
    %c0_217 = arith.constant 0 : index
    %c0_218 = arith.constant 0 : index
    %616 = vector.load %arg15[%615, %c0_217, %c0_218] : memref<16x2x192xbf16, #tpu.memory_space<vmem>>, vector<1x2x192xbf16>
    %617 = vector.shape_cast %616 : vector<1x2x192xbf16> to vector<2x192xbf16>
    %618 = arith.extf %617 : vector<2x192xbf16> to vector<2x192xf32>
    %619 = vector.extract_strided_slice %614 {offsets = [0, 0], sizes = [2, 32], strides = [1, 1]} : vector<2x192xf32> to vector<2x32xf32>
    %620 = vector.extract_strided_slice %607 {offsets = [0, 0], sizes = [2, 32], strides = [1, 1]} : vector<2x96xf32> to vector<2x32xf32>
    %621 = arith.addf %619, %620 : vector<2x32xf32>
    %cst_219 = arith.constant 5.000000e-01 : f32
    %622 = vector.broadcast %cst_219 : f32 to vector<2x32xf32>
    %623 = arith.mulf %622, %621 : vector<2x32xf32>
    %624 = math.tanh %623 : vector<2x32xf32>
    %cst_220 = arith.constant 1.000000e+00 : f32
    %625 = vector.broadcast %cst_220 : f32 to vector<2x32xf32>
    %626 = arith.addf %624, %625 : vector<2x32xf32>
    %cst_221 = arith.constant 5.000000e-01 : f32
    %627 = vector.broadcast %cst_221 : f32 to vector<2x32xf32>
    %628 = arith.mulf %627, %626 : vector<2x32xf32>
    %629 = vector.extract_strided_slice %614 {offsets = [0, 32], sizes = [2, 32], strides = [1, 1]} : vector<2x192xf32> to vector<2x32xf32>
    %630 = vector.extract_strided_slice %607 {offsets = [0, 32], sizes = [2, 32], strides = [1, 1]} : vector<2x96xf32> to vector<2x32xf32>
    %631 = arith.addf %629, %630 : vector<2x32xf32>
    %cst_222 = arith.constant 5.000000e-01 : f32
    %632 = vector.broadcast %cst_222 : f32 to vector<2x32xf32>
    %633 = arith.mulf %632, %631 : vector<2x32xf32>
    %634 = math.tanh %633 : vector<2x32xf32>
    %cst_223 = arith.constant 1.000000e+00 : f32
    %635 = vector.broadcast %cst_223 : f32 to vector<2x32xf32>
    %636 = arith.addf %634, %635 : vector<2x32xf32>
    %cst_224 = arith.constant 5.000000e-01 : f32
    %637 = vector.broadcast %cst_224 : f32 to vector<2x32xf32>
    %638 = arith.mulf %637, %636 : vector<2x32xf32>
    %639 = vector.extract_strided_slice %614 {offsets = [0, 64], sizes = [2, 32], strides = [1, 1]} : vector<2x192xf32> to vector<2x32xf32>
    %640 = vector.extract_strided_slice %607 {offsets = [0, 64], sizes = [2, 32], strides = [1, 1]} : vector<2x96xf32> to vector<2x32xf32>
    %641 = arith.mulf %628, %640 : vector<2x32xf32>
    %642 = arith.addf %639, %641 : vector<2x32xf32>
    %643 = math.tanh %642 : vector<2x32xf32>
    %cst_225 = arith.constant 1.000000e+00 : f32
    %644 = vector.broadcast %cst_225 : f32 to vector<2x32xf32>
    %645 = arith.subf %644, %638 : vector<2x32xf32>
    %646 = arith.mulf %645, %643 : vector<2x32xf32>
    %647 = arith.mulf %638, %565 : vector<2x32xf32>
    %648 = arith.addf %646, %647 : vector<2x32xf32>
    %649 = vector.extract_strided_slice %618 {offsets = [0, 96], sizes = [2, 32], strides = [1, 1]} : vector<2x192xf32> to vector<2x32xf32>
    %650 = vector.extract_strided_slice %610 {offsets = [0, 0], sizes = [2, 32], strides = [1, 1]} : vector<2x96xf32> to vector<2x32xf32>
    %651 = arith.addf %649, %650 : vector<2x32xf32>
    %cst_226 = arith.constant 5.000000e-01 : f32
    %652 = vector.broadcast %cst_226 : f32 to vector<2x32xf32>
    %653 = arith.mulf %652, %651 : vector<2x32xf32>
    %654 = math.tanh %653 : vector<2x32xf32>
    %cst_227 = arith.constant 1.000000e+00 : f32
    %655 = vector.broadcast %cst_227 : f32 to vector<2x32xf32>
    %656 = arith.addf %654, %655 : vector<2x32xf32>
    %cst_228 = arith.constant 5.000000e-01 : f32
    %657 = vector.broadcast %cst_228 : f32 to vector<2x32xf32>
    %658 = arith.mulf %657, %656 : vector<2x32xf32>
    %659 = vector.extract_strided_slice %618 {offsets = [0, 128], sizes = [2, 32], strides = [1, 1]} : vector<2x192xf32> to vector<2x32xf32>
    %660 = vector.extract_strided_slice %610 {offsets = [0, 32], sizes = [2, 32], strides = [1, 1]} : vector<2x96xf32> to vector<2x32xf32>
    %661 = arith.addf %659, %660 : vector<2x32xf32>
    %cst_229 = arith.constant 5.000000e-01 : f32
    %662 = vector.broadcast %cst_229 : f32 to vector<2x32xf32>
    %663 = arith.mulf %662, %661 : vector<2x32xf32>
    %664 = math.tanh %663 : vector<2x32xf32>
    %cst_230 = arith.constant 1.000000e+00 : f32
    %665 = vector.broadcast %cst_230 : f32 to vector<2x32xf32>
    %666 = arith.addf %664, %665 : vector<2x32xf32>
    %cst_231 = arith.constant 5.000000e-01 : f32
    %667 = vector.broadcast %cst_231 : f32 to vector<2x32xf32>
    %668 = arith.mulf %667, %666 : vector<2x32xf32>
    %669 = vector.extract_strided_slice %618 {offsets = [0, 160], sizes = [2, 32], strides = [1, 1]} : vector<2x192xf32> to vector<2x32xf32>
    %670 = vector.extract_strided_slice %610 {offsets = [0, 64], sizes = [2, 32], strides = [1, 1]} : vector<2x96xf32> to vector<2x32xf32>
    %671 = arith.mulf %658, %670 : vector<2x32xf32>
    %672 = arith.addf %669, %671 : vector<2x32xf32>
    %673 = math.tanh %672 : vector<2x32xf32>
    %cst_232 = arith.constant 1.000000e+00 : f32
    %674 = vector.broadcast %cst_232 : f32 to vector<2x32xf32>
    %675 = arith.subf %674, %668 : vector<2x32xf32>
    %676 = arith.mulf %675, %673 : vector<2x32xf32>
    %677 = arith.mulf %668, %595 : vector<2x32xf32>
    %678 = arith.addf %676, %677 : vector<2x32xf32>
    %c2_i32_233 = arith.constant 2 : i32
    %679 = arith.muli %c2_i32_233, %c7_i32 : i32
    %c15_i32_234 = arith.constant 15 : i32
    %680 = arith.cmpi slt, %679, %c15_i32_234 : i32
    %c2_i32_235 = arith.constant 2 : i32
    %681 = arith.muli %c2_i32_235, %c7_i32 : i32
    %c15_i32_236 = arith.constant 15 : i32
    %682 = arith.cmpi sgt, %681, %c15_i32_236 : i32
    %683 = arith.extui %680 : i1 to i32
    %c0_i32_237 = arith.constant 0 : i32
    %684 = arith.cmpi ne, %683, %c0_i32_237 : i32
    scf.if %684 {
      %c1_i32_499 = arith.constant 1 : i32
      %1415 = arith.addi %c1_i32_499, %c7_i32 : i32
      %1416 = arith.index_cast %1415 : i32 to index
      %c0_500 = arith.constant 0 : index
      %c0_501 = arith.constant 0 : index
      %1417 = vector.load %arg16[%1416, %c0_500, %c0_501] : memref<18x2x32xf32, #tpu.memory_space<vmem>>, vector<1x2x32xf32>
      %1418 = vector.shape_cast %1417 : vector<1x2x32xf32> to vector<2x32xf32>
      %1419 = vector.shape_cast %648 : vector<2x32xf32> to vector<1x2x32xf32>
      tpu.vector_store %arg16[%1416, %c0_500, %c0_501], %1419 {strides = array<i32>} : memref<18x2x32xf32, #tpu.memory_space<vmem>>, vector<1x2x32xf32>,
      %c1_i32_502 = arith.constant 1 : i32
      %1420 = arith.addi %c1_i32_502, %604 : i32
      %1421 = arith.index_cast %1420 : i32 to index
      %c0_503 = arith.constant 0 : index
      %c0_504 = arith.constant 0 : index
      %1422 = vector.load %arg16[%1421, %c0_503, %c0_504] : memref<18x2x32xf32, #tpu.memory_space<vmem>>, vector<1x2x32xf32>
      %1423 = vector.shape_cast %1422 : vector<1x2x32xf32> to vector<2x32xf32>
      %1424 = vector.shape_cast %678 : vector<2x32xf32> to vector<1x2x32xf32>
      tpu.vector_store %arg16[%1421, %c0_503, %c0_504], %1424 {strides = array<i32>} : memref<18x2x32xf32, #tpu.memory_space<vmem>>, vector<1x2x32xf32>,
    } else {
    }
    %685 = arith.extui %682 : i1 to i32
    %c0_i32_238 = arith.constant 0 : i32
    %686 = arith.cmpi ne, %685, %c0_i32_238 : i32
    scf.if %686 {
      %c1_i32_499 = arith.constant 1 : i32
      %1415 = arith.addi %c1_i32_499, %c7_i32 : i32
      %1416 = arith.index_cast %1415 : i32 to index
      %c0_500 = arith.constant 0 : index
      %c0_501 = arith.constant 0 : index
      %1417 = vector.load %arg16[%1416, %c0_500, %c0_501] : memref<18x2x32xf32, #tpu.memory_space<vmem>>, vector<1x2x32xf32>
      %1418 = vector.shape_cast %1417 : vector<1x2x32xf32> to vector<2x32xf32>
      %1419 = arith.addf %1418, %648 : vector<2x32xf32>
      %c1_i32_502 = arith.constant 1 : i32
      %1420 = arith.addi %c1_i32_502, %c7_i32 : i32
      %1421 = arith.index_cast %1420 : i32 to index
      %c0_503 = arith.constant 0 : index
      %c0_504 = arith.constant 0 : index
      %1422 = vector.load %arg16[%1421, %c0_503, %c0_504] : memref<18x2x32xf32, #tpu.memory_space<vmem>>, vector<1x2x32xf32>
      %1423 = vector.shape_cast %1422 : vector<1x2x32xf32> to vector<2x32xf32>
      %1424 = vector.shape_cast %1419 : vector<2x32xf32> to vector<1x2x32xf32>
      tpu.vector_store %arg16[%1421, %c0_503, %c0_504], %1424 {strides = array<i32>} : memref<18x2x32xf32, #tpu.memory_space<vmem>>, vector<1x2x32xf32>,
      %c1_i32_505 = arith.constant 1 : i32
      %1425 = arith.addi %c1_i32_505, %604 : i32
      %1426 = arith.index_cast %1425 : i32 to index
      %c0_506 = arith.constant 0 : index
      %c0_507 = arith.constant 0 : index
      %1427 = vector.load %arg16[%1426, %c0_506, %c0_507] : memref<18x2x32xf32, #tpu.memory_space<vmem>>, vector<1x2x32xf32>
      %1428 = vector.shape_cast %1427 : vector<1x2x32xf32> to vector<2x32xf32>
      %1429 = arith.addf %1428, %678 : vector<2x32xf32>
      %c1_i32_508 = arith.constant 1 : i32
      %1430 = arith.addi %c1_i32_508, %604 : i32
      %1431 = arith.index_cast %1430 : i32 to index
      %c0_509 = arith.constant 0 : index
      %c0_510 = arith.constant 0 : index
      %1432 = vector.load %arg16[%1431, %c0_509, %c0_510] : memref<18x2x32xf32, #tpu.memory_space<vmem>>, vector<1x2x32xf32>
      %1433 = vector.shape_cast %1432 : vector<1x2x32xf32> to vector<2x32xf32>
      %1434 = vector.shape_cast %1429 : vector<2x32xf32> to vector<1x2x32xf32>
      tpu.vector_store %arg16[%1431, %c0_509, %c0_510], %1434 {strides = array<i32>} : memref<18x2x32xf32, #tpu.memory_space<vmem>>, vector<1x2x32xf32>,
    } else {
    }
    %c8_i32 = arith.constant 8 : i32
    %c15_i32_239 = arith.constant 15 : i32
    %687 = arith.subi %c15_i32_239, %c8_i32 : i32
    %688 = arith.truncf %648 : vector<2x32xf32> to vector<2x32xbf16>
    %cst_240 = arith.constant dense<0.000000e+00> : vector<2x96xf32>
    %689 = tpu.matmul %688, %14, %cst_240 {dimension_numbers = #tpu.dot_dimension_numbers<[1], [0], [0], [1], [0, 0, 1, 1], [], []>} : vector<2x32xbf16>, vector<32x96xbf16>, vector<2x96xf32> -> vector<2x96xf32>
    %690 = arith.addf %689, %18 : vector<2x96xf32>
    %691 = arith.truncf %678 : vector<2x32xf32> to vector<2x32xbf16>
    %cst_241 = arith.constant dense<0.000000e+00> : vector<2x96xf32>
    %692 = tpu.matmul %691, %15, %cst_241 {dimension_numbers = #tpu.dot_dimension_numbers<[1], [0], [0], [1], [0, 0, 1, 1], [], []>} : vector<2x32xbf16>, vector<32x96xbf16>, vector<2x96xf32> -> vector<2x96xf32>
    %693 = arith.addf %692, %21 : vector<2x96xf32>
    %694 = arith.index_cast %c8_i32 : i32 to index
    %c0_242 = arith.constant 0 : index
    %c0_243 = arith.constant 0 : index
    %695 = vector.load %arg15[%694, %c0_242, %c0_243] : memref<16x2x192xbf16, #tpu.memory_space<vmem>>, vector<1x2x192xbf16>
    %696 = vector.shape_cast %695 : vector<1x2x192xbf16> to vector<2x192xbf16>
    %697 = arith.extf %696 : vector<2x192xbf16> to vector<2x192xf32>
    %698 = arith.index_cast %687 : i32 to index
    %c0_244 = arith.constant 0 : index
    %c0_245 = arith.constant 0 : index
    %699 = vector.load %arg15[%698, %c0_244, %c0_245] : memref<16x2x192xbf16, #tpu.memory_space<vmem>>, vector<1x2x192xbf16>
    %700 = vector.shape_cast %699 : vector<1x2x192xbf16> to vector<2x192xbf16>
    %701 = arith.extf %700 : vector<2x192xbf16> to vector<2x192xf32>
    %702 = vector.extract_strided_slice %697 {offsets = [0, 0], sizes = [2, 32], strides = [1, 1]} : vector<2x192xf32> to vector<2x32xf32>
    %703 = vector.extract_strided_slice %690 {offsets = [0, 0], sizes = [2, 32], strides = [1, 1]} : vector<2x96xf32> to vector<2x32xf32>
    %704 = arith.addf %702, %703 : vector<2x32xf32>
    %cst_246 = arith.constant 5.000000e-01 : f32
    %705 = vector.broadcast %cst_246 : f32 to vector<2x32xf32>
    %706 = arith.mulf %705, %704 : vector<2x32xf32>
    %707 = math.tanh %706 : vector<2x32xf32>
    %cst_247 = arith.constant 1.000000e+00 : f32
    %708 = vector.broadcast %cst_247 : f32 to vector<2x32xf32>
    %709 = arith.addf %707, %708 : vector<2x32xf32>
    %cst_248 = arith.constant 5.000000e-01 : f32
    %710 = vector.broadcast %cst_248 : f32 to vector<2x32xf32>
    %711 = arith.mulf %710, %709 : vector<2x32xf32>
    %712 = vector.extract_strided_slice %697 {offsets = [0, 32], sizes = [2, 32], strides = [1, 1]} : vector<2x192xf32> to vector<2x32xf32>
    %713 = vector.extract_strided_slice %690 {offsets = [0, 32], sizes = [2, 32], strides = [1, 1]} : vector<2x96xf32> to vector<2x32xf32>
    %714 = arith.addf %712, %713 : vector<2x32xf32>
    %cst_249 = arith.constant 5.000000e-01 : f32
    %715 = vector.broadcast %cst_249 : f32 to vector<2x32xf32>
    %716 = arith.mulf %715, %714 : vector<2x32xf32>
    %717 = math.tanh %716 : vector<2x32xf32>
    %cst_250 = arith.constant 1.000000e+00 : f32
    %718 = vector.broadcast %cst_250 : f32 to vector<2x32xf32>
    %719 = arith.addf %717, %718 : vector<2x32xf32>
    %cst_251 = arith.constant 5.000000e-01 : f32
    %720 = vector.broadcast %cst_251 : f32 to vector<2x32xf32>
    %721 = arith.mulf %720, %719 : vector<2x32xf32>
    %722 = vector.extract_strided_slice %697 {offsets = [0, 64], sizes = [2, 32], strides = [1, 1]} : vector<2x192xf32> to vector<2x32xf32>
    %723 = vector.extract_strided_slice %690 {offsets = [0, 64], sizes = [2, 32], strides = [1, 1]} : vector<2x96xf32> to vector<2x32xf32>
    %724 = arith.mulf %711, %723 : vector<2x32xf32>
    %725 = arith.addf %722, %724 : vector<2x32xf32>
    %726 = math.tanh %725 : vector<2x32xf32>
    %cst_252 = arith.constant 1.000000e+00 : f32
    %727 = vector.broadcast %cst_252 : f32 to vector<2x32xf32>
    %728 = arith.subf %727, %721 : vector<2x32xf32>
    %729 = arith.mulf %728, %726 : vector<2x32xf32>
    %730 = arith.mulf %721, %648 : vector<2x32xf32>
    %731 = arith.addf %729, %730 : vector<2x32xf32>
    %732 = vector.extract_strided_slice %701 {offsets = [0, 96], sizes = [2, 32], strides = [1, 1]} : vector<2x192xf32> to vector<2x32xf32>
    %733 = vector.extract_strided_slice %693 {offsets = [0, 0], sizes = [2, 32], strides = [1, 1]} : vector<2x96xf32> to vector<2x32xf32>
    %734 = arith.addf %732, %733 : vector<2x32xf32>
    %cst_253 = arith.constant 5.000000e-01 : f32
    %735 = vector.broadcast %cst_253 : f32 to vector<2x32xf32>
    %736 = arith.mulf %735, %734 : vector<2x32xf32>
    %737 = math.tanh %736 : vector<2x32xf32>
    %cst_254 = arith.constant 1.000000e+00 : f32
    %738 = vector.broadcast %cst_254 : f32 to vector<2x32xf32>
    %739 = arith.addf %737, %738 : vector<2x32xf32>
    %cst_255 = arith.constant 5.000000e-01 : f32
    %740 = vector.broadcast %cst_255 : f32 to vector<2x32xf32>
    %741 = arith.mulf %740, %739 : vector<2x32xf32>
    %742 = vector.extract_strided_slice %701 {offsets = [0, 128], sizes = [2, 32], strides = [1, 1]} : vector<2x192xf32> to vector<2x32xf32>
    %743 = vector.extract_strided_slice %693 {offsets = [0, 32], sizes = [2, 32], strides = [1, 1]} : vector<2x96xf32> to vector<2x32xf32>
    %744 = arith.addf %742, %743 : vector<2x32xf32>
    %cst_256 = arith.constant 5.000000e-01 : f32
    %745 = vector.broadcast %cst_256 : f32 to vector<2x32xf32>
    %746 = arith.mulf %745, %744 : vector<2x32xf32>
    %747 = math.tanh %746 : vector<2x32xf32>
    %cst_257 = arith.constant 1.000000e+00 : f32
    %748 = vector.broadcast %cst_257 : f32 to vector<2x32xf32>
    %749 = arith.addf %747, %748 : vector<2x32xf32>
    %cst_258 = arith.constant 5.000000e-01 : f32
    %750 = vector.broadcast %cst_258 : f32 to vector<2x32xf32>
    %751 = arith.mulf %750, %749 : vector<2x32xf32>
    %752 = vector.extract_strided_slice %701 {offsets = [0, 160], sizes = [2, 32], strides = [1, 1]} : vector<2x192xf32> to vector<2x32xf32>
    %753 = vector.extract_strided_slice %693 {offsets = [0, 64], sizes = [2, 32], strides = [1, 1]} : vector<2x96xf32> to vector<2x32xf32>
    %754 = arith.mulf %741, %753 : vector<2x32xf32>
    %755 = arith.addf %752, %754 : vector<2x32xf32>
    %756 = math.tanh %755 : vector<2x32xf32>
    %cst_259 = arith.constant 1.000000e+00 : f32
    %757 = vector.broadcast %cst_259 : f32 to vector<2x32xf32>
    %758 = arith.subf %757, %751 : vector<2x32xf32>
    %759 = arith.mulf %758, %756 : vector<2x32xf32>
    %760 = arith.mulf %751, %678 : vector<2x32xf32>
    %761 = arith.addf %759, %760 : vector<2x32xf32>
    %c2_i32_260 = arith.constant 2 : i32
    %762 = arith.muli %c2_i32_260, %c8_i32 : i32
    %c15_i32_261 = arith.constant 15 : i32
    %763 = arith.cmpi slt, %762, %c15_i32_261 : i32
    %c2_i32_262 = arith.constant 2 : i32
    %764 = arith.muli %c2_i32_262, %c8_i32 : i32
    %c15_i32_263 = arith.constant 15 : i32
    %765 = arith.cmpi sgt, %764, %c15_i32_263 : i32
    %766 = arith.extui %763 : i1 to i32
    %c0_i32_264 = arith.constant 0 : i32
    %767 = arith.cmpi ne, %766, %c0_i32_264 : i32
    scf.if %767 {
      %c1_i32_499 = arith.constant 1 : i32
      %1415 = arith.addi %c1_i32_499, %c8_i32 : i32
      %1416 = arith.index_cast %1415 : i32 to index
      %c0_500 = arith.constant 0 : index
      %c0_501 = arith.constant 0 : index
      %1417 = vector.load %arg16[%1416, %c0_500, %c0_501] : memref<18x2x32xf32, #tpu.memory_space<vmem>>, vector<1x2x32xf32>
      %1418 = vector.shape_cast %1417 : vector<1x2x32xf32> to vector<2x32xf32>
      %1419 = vector.shape_cast %731 : vector<2x32xf32> to vector<1x2x32xf32>
      tpu.vector_store %arg16[%1416, %c0_500, %c0_501], %1419 {strides = array<i32>} : memref<18x2x32xf32, #tpu.memory_space<vmem>>, vector<1x2x32xf32>,
      %c1_i32_502 = arith.constant 1 : i32
      %1420 = arith.addi %c1_i32_502, %687 : i32
      %1421 = arith.index_cast %1420 : i32 to index
      %c0_503 = arith.constant 0 : index
      %c0_504 = arith.constant 0 : index
      %1422 = vector.load %arg16[%1421, %c0_503, %c0_504] : memref<18x2x32xf32, #tpu.memory_space<vmem>>, vector<1x2x32xf32>
      %1423 = vector.shape_cast %1422 : vector<1x2x32xf32> to vector<2x32xf32>
      %1424 = vector.shape_cast %761 : vector<2x32xf32> to vector<1x2x32xf32>
      tpu.vector_store %arg16[%1421, %c0_503, %c0_504], %1424 {strides = array<i32>} : memref<18x2x32xf32, #tpu.memory_space<vmem>>, vector<1x2x32xf32>,
    } else {
    }
    %768 = arith.extui %765 : i1 to i32
    %c0_i32_265 = arith.constant 0 : i32
    %769 = arith.cmpi ne, %768, %c0_i32_265 : i32
    scf.if %769 {
      %c1_i32_499 = arith.constant 1 : i32
      %1415 = arith.addi %c1_i32_499, %c8_i32 : i32
      %1416 = arith.index_cast %1415 : i32 to index
      %c0_500 = arith.constant 0 : index
      %c0_501 = arith.constant 0 : index
      %1417 = vector.load %arg16[%1416, %c0_500, %c0_501] : memref<18x2x32xf32, #tpu.memory_space<vmem>>, vector<1x2x32xf32>
      %1418 = vector.shape_cast %1417 : vector<1x2x32xf32> to vector<2x32xf32>
      %1419 = arith.addf %1418, %731 : vector<2x32xf32>
      %c1_i32_502 = arith.constant 1 : i32
      %1420 = arith.addi %c1_i32_502, %c8_i32 : i32
      %1421 = arith.index_cast %1420 : i32 to index
      %c0_503 = arith.constant 0 : index
      %c0_504 = arith.constant 0 : index
      %1422 = vector.load %arg16[%1421, %c0_503, %c0_504] : memref<18x2x32xf32, #tpu.memory_space<vmem>>, vector<1x2x32xf32>
      %1423 = vector.shape_cast %1422 : vector<1x2x32xf32> to vector<2x32xf32>
      %1424 = vector.shape_cast %1419 : vector<2x32xf32> to vector<1x2x32xf32>
      tpu.vector_store %arg16[%1421, %c0_503, %c0_504], %1424 {strides = array<i32>} : memref<18x2x32xf32, #tpu.memory_space<vmem>>, vector<1x2x32xf32>,
      %c1_i32_505 = arith.constant 1 : i32
      %1425 = arith.addi %c1_i32_505, %687 : i32
      %1426 = arith.index_cast %1425 : i32 to index
      %c0_506 = arith.constant 0 : index
      %c0_507 = arith.constant 0 : index
      %1427 = vector.load %arg16[%1426, %c0_506, %c0_507] : memref<18x2x32xf32, #tpu.memory_space<vmem>>, vector<1x2x32xf32>
      %1428 = vector.shape_cast %1427 : vector<1x2x32xf32> to vector<2x32xf32>
      %1429 = arith.addf %1428, %761 : vector<2x32xf32>
      %c1_i32_508 = arith.constant 1 : i32
      %1430 = arith.addi %c1_i32_508, %687 : i32
      %1431 = arith.index_cast %1430 : i32 to index
      %c0_509 = arith.constant 0 : index
      %c0_510 = arith.constant 0 : index
      %1432 = vector.load %arg16[%1431, %c0_509, %c0_510] : memref<18x2x32xf32, #tpu.memory_space<vmem>>, vector<1x2x32xf32>
      %1433 = vector.shape_cast %1432 : vector<1x2x32xf32> to vector<2x32xf32>
      %1434 = vector.shape_cast %1429 : vector<2x32xf32> to vector<1x2x32xf32>
      tpu.vector_store %arg16[%1431, %c0_509, %c0_510], %1434 {strides = array<i32>} : memref<18x2x32xf32, #tpu.memory_space<vmem>>, vector<1x2x32xf32>,
    } else {
    }
    %c9_i32 = arith.constant 9 : i32
    %c15_i32_266 = arith.constant 15 : i32
    %770 = arith.subi %c15_i32_266, %c9_i32 : i32
    %771 = arith.truncf %731 : vector<2x32xf32> to vector<2x32xbf16>
    %cst_267 = arith.constant dense<0.000000e+00> : vector<2x96xf32>
    %772 = tpu.matmul %771, %14, %cst_267 {dimension_numbers = #tpu.dot_dimension_numbers<[1], [0], [0], [1], [0, 0, 1, 1], [], []>} : vector<2x32xbf16>, vector<32x96xbf16>, vector<2x96xf32> -> vector<2x96xf32>
    %773 = arith.addf %772, %18 : vector<2x96xf32>
    %774 = arith.truncf %761 : vector<2x32xf32> to vector<2x32xbf16>
    %cst_268 = arith.constant dense<0.000000e+00> : vector<2x96xf32>
    %775 = tpu.matmul %774, %15, %cst_268 {dimension_numbers = #tpu.dot_dimension_numbers<[1], [0], [0], [1], [0, 0, 1, 1], [], []>} : vector<2x32xbf16>, vector<32x96xbf16>, vector<2x96xf32> -> vector<2x96xf32>
    %776 = arith.addf %775, %21 : vector<2x96xf32>
    %777 = arith.index_cast %c9_i32 : i32 to index
    %c0_269 = arith.constant 0 : index
    %c0_270 = arith.constant 0 : index
    %778 = vector.load %arg15[%777, %c0_269, %c0_270] : memref<16x2x192xbf16, #tpu.memory_space<vmem>>, vector<1x2x192xbf16>
    %779 = vector.shape_cast %778 : vector<1x2x192xbf16> to vector<2x192xbf16>
    %780 = arith.extf %779 : vector<2x192xbf16> to vector<2x192xf32>
    %781 = arith.index_cast %770 : i32 to index
    %c0_271 = arith.constant 0 : index
    %c0_272 = arith.constant 0 : index
    %782 = vector.load %arg15[%781, %c0_271, %c0_272] : memref<16x2x192xbf16, #tpu.memory_space<vmem>>, vector<1x2x192xbf16>
    %783 = vector.shape_cast %782 : vector<1x2x192xbf16> to vector<2x192xbf16>
    %784 = arith.extf %783 : vector<2x192xbf16> to vector<2x192xf32>
    %785 = vector.extract_strided_slice %780 {offsets = [0, 0], sizes = [2, 32], strides = [1, 1]} : vector<2x192xf32> to vector<2x32xf32>
    %786 = vector.extract_strided_slice %773 {offsets = [0, 0], sizes = [2, 32], strides = [1, 1]} : vector<2x96xf32> to vector<2x32xf32>
    %787 = arith.addf %785, %786 : vector<2x32xf32>
    %cst_273 = arith.constant 5.000000e-01 : f32
    %788 = vector.broadcast %cst_273 : f32 to vector<2x32xf32>
    %789 = arith.mulf %788, %787 : vector<2x32xf32>
    %790 = math.tanh %789 : vector<2x32xf32>
    %cst_274 = arith.constant 1.000000e+00 : f32
    %791 = vector.broadcast %cst_274 : f32 to vector<2x32xf32>
    %792 = arith.addf %790, %791 : vector<2x32xf32>
    %cst_275 = arith.constant 5.000000e-01 : f32
    %793 = vector.broadcast %cst_275 : f32 to vector<2x32xf32>
    %794 = arith.mulf %793, %792 : vector<2x32xf32>
    %795 = vector.extract_strided_slice %780 {offsets = [0, 32], sizes = [2, 32], strides = [1, 1]} : vector<2x192xf32> to vector<2x32xf32>
    %796 = vector.extract_strided_slice %773 {offsets = [0, 32], sizes = [2, 32], strides = [1, 1]} : vector<2x96xf32> to vector<2x32xf32>
    %797 = arith.addf %795, %796 : vector<2x32xf32>
    %cst_276 = arith.constant 5.000000e-01 : f32
    %798 = vector.broadcast %cst_276 : f32 to vector<2x32xf32>
    %799 = arith.mulf %798, %797 : vector<2x32xf32>
    %800 = math.tanh %799 : vector<2x32xf32>
    %cst_277 = arith.constant 1.000000e+00 : f32
    %801 = vector.broadcast %cst_277 : f32 to vector<2x32xf32>
    %802 = arith.addf %800, %801 : vector<2x32xf32>
    %cst_278 = arith.constant 5.000000e-01 : f32
    %803 = vector.broadcast %cst_278 : f32 to vector<2x32xf32>
    %804 = arith.mulf %803, %802 : vector<2x32xf32>
    %805 = vector.extract_strided_slice %780 {offsets = [0, 64], sizes = [2, 32], strides = [1, 1]} : vector<2x192xf32> to vector<2x32xf32>
    %806 = vector.extract_strided_slice %773 {offsets = [0, 64], sizes = [2, 32], strides = [1, 1]} : vector<2x96xf32> to vector<2x32xf32>
    %807 = arith.mulf %794, %806 : vector<2x32xf32>
    %808 = arith.addf %805, %807 : vector<2x32xf32>
    %809 = math.tanh %808 : vector<2x32xf32>
    %cst_279 = arith.constant 1.000000e+00 : f32
    %810 = vector.broadcast %cst_279 : f32 to vector<2x32xf32>
    %811 = arith.subf %810, %804 : vector<2x32xf32>
    %812 = arith.mulf %811, %809 : vector<2x32xf32>
    %813 = arith.mulf %804, %731 : vector<2x32xf32>
    %814 = arith.addf %812, %813 : vector<2x32xf32>
    %815 = vector.extract_strided_slice %784 {offsets = [0, 96], sizes = [2, 32], strides = [1, 1]} : vector<2x192xf32> to vector<2x32xf32>
    %816 = vector.extract_strided_slice %776 {offsets = [0, 0], sizes = [2, 32], strides = [1, 1]} : vector<2x96xf32> to vector<2x32xf32>
    %817 = arith.addf %815, %816 : vector<2x32xf32>
    %cst_280 = arith.constant 5.000000e-01 : f32
    %818 = vector.broadcast %cst_280 : f32 to vector<2x32xf32>
    %819 = arith.mulf %818, %817 : vector<2x32xf32>
    %820 = math.tanh %819 : vector<2x32xf32>
    %cst_281 = arith.constant 1.000000e+00 : f32
    %821 = vector.broadcast %cst_281 : f32 to vector<2x32xf32>
    %822 = arith.addf %820, %821 : vector<2x32xf32>
    %cst_282 = arith.constant 5.000000e-01 : f32
    %823 = vector.broadcast %cst_282 : f32 to vector<2x32xf32>
    %824 = arith.mulf %823, %822 : vector<2x32xf32>
    %825 = vector.extract_strided_slice %784 {offsets = [0, 128], sizes = [2, 32], strides = [1, 1]} : vector<2x192xf32> to vector<2x32xf32>
    %826 = vector.extract_strided_slice %776 {offsets = [0, 32], sizes = [2, 32], strides = [1, 1]} : vector<2x96xf32> to vector<2x32xf32>
    %827 = arith.addf %825, %826 : vector<2x32xf32>
    %cst_283 = arith.constant 5.000000e-01 : f32
    %828 = vector.broadcast %cst_283 : f32 to vector<2x32xf32>
    %829 = arith.mulf %828, %827 : vector<2x32xf32>
    %830 = math.tanh %829 : vector<2x32xf32>
    %cst_284 = arith.constant 1.000000e+00 : f32
    %831 = vector.broadcast %cst_284 : f32 to vector<2x32xf32>
    %832 = arith.addf %830, %831 : vector<2x32xf32>
    %cst_285 = arith.constant 5.000000e-01 : f32
    %833 = vector.broadcast %cst_285 : f32 to vector<2x32xf32>
    %834 = arith.mulf %833, %832 : vector<2x32xf32>
    %835 = vector.extract_strided_slice %784 {offsets = [0, 160], sizes = [2, 32], strides = [1, 1]} : vector<2x192xf32> to vector<2x32xf32>
    %836 = vector.extract_strided_slice %776 {offsets = [0, 64], sizes = [2, 32], strides = [1, 1]} : vector<2x96xf32> to vector<2x32xf32>
    %837 = arith.mulf %824, %836 : vector<2x32xf32>
    %838 = arith.addf %835, %837 : vector<2x32xf32>
    %839 = math.tanh %838 : vector<2x32xf32>
    %cst_286 = arith.constant 1.000000e+00 : f32
    %840 = vector.broadcast %cst_286 : f32 to vector<2x32xf32>
    %841 = arith.subf %840, %834 : vector<2x32xf32>
    %842 = arith.mulf %841, %839 : vector<2x32xf32>
    %843 = arith.mulf %834, %761 : vector<2x32xf32>
    %844 = arith.addf %842, %843 : vector<2x32xf32>
    %c2_i32_287 = arith.constant 2 : i32
    %845 = arith.muli %c2_i32_287, %c9_i32 : i32
    %c15_i32_288 = arith.constant 15 : i32
    %846 = arith.cmpi slt, %845, %c15_i32_288 : i32
    %c2_i32_289 = arith.constant 2 : i32
    %847 = arith.muli %c2_i32_289, %c9_i32 : i32
    %c15_i32_290 = arith.constant 15 : i32
    %848 = arith.cmpi sgt, %847, %c15_i32_290 : i32
    %849 = arith.extui %846 : i1 to i32
    %c0_i32_291 = arith.constant 0 : i32
    %850 = arith.cmpi ne, %849, %c0_i32_291 : i32
    scf.if %850 {
      %c1_i32_499 = arith.constant 1 : i32
      %1415 = arith.addi %c1_i32_499, %c9_i32 : i32
      %1416 = arith.index_cast %1415 : i32 to index
      %c0_500 = arith.constant 0 : index
      %c0_501 = arith.constant 0 : index
      %1417 = vector.load %arg16[%1416, %c0_500, %c0_501] : memref<18x2x32xf32, #tpu.memory_space<vmem>>, vector<1x2x32xf32>
      %1418 = vector.shape_cast %1417 : vector<1x2x32xf32> to vector<2x32xf32>
      %1419 = vector.shape_cast %814 : vector<2x32xf32> to vector<1x2x32xf32>
      tpu.vector_store %arg16[%1416, %c0_500, %c0_501], %1419 {strides = array<i32>} : memref<18x2x32xf32, #tpu.memory_space<vmem>>, vector<1x2x32xf32>,
      %c1_i32_502 = arith.constant 1 : i32
      %1420 = arith.addi %c1_i32_502, %770 : i32
      %1421 = arith.index_cast %1420 : i32 to index
      %c0_503 = arith.constant 0 : index
      %c0_504 = arith.constant 0 : index
      %1422 = vector.load %arg16[%1421, %c0_503, %c0_504] : memref<18x2x32xf32, #tpu.memory_space<vmem>>, vector<1x2x32xf32>
      %1423 = vector.shape_cast %1422 : vector<1x2x32xf32> to vector<2x32xf32>
      %1424 = vector.shape_cast %844 : vector<2x32xf32> to vector<1x2x32xf32>
      tpu.vector_store %arg16[%1421, %c0_503, %c0_504], %1424 {strides = array<i32>} : memref<18x2x32xf32, #tpu.memory_space<vmem>>, vector<1x2x32xf32>,
    } else {
    }
    %851 = arith.extui %848 : i1 to i32
    %c0_i32_292 = arith.constant 0 : i32
    %852 = arith.cmpi ne, %851, %c0_i32_292 : i32
    scf.if %852 {
      %c1_i32_499 = arith.constant 1 : i32
      %1415 = arith.addi %c1_i32_499, %c9_i32 : i32
      %1416 = arith.index_cast %1415 : i32 to index
      %c0_500 = arith.constant 0 : index
      %c0_501 = arith.constant 0 : index
      %1417 = vector.load %arg16[%1416, %c0_500, %c0_501] : memref<18x2x32xf32, #tpu.memory_space<vmem>>, vector<1x2x32xf32>
      %1418 = vector.shape_cast %1417 : vector<1x2x32xf32> to vector<2x32xf32>
      %1419 = arith.addf %1418, %814 : vector<2x32xf32>
      %c1_i32_502 = arith.constant 1 : i32
      %1420 = arith.addi %c1_i32_502, %c9_i32 : i32
      %1421 = arith.index_cast %1420 : i32 to index
      %c0_503 = arith.constant 0 : index
      %c0_504 = arith.constant 0 : index
      %1422 = vector.load %arg16[%1421, %c0_503, %c0_504] : memref<18x2x32xf32, #tpu.memory_space<vmem>>, vector<1x2x32xf32>
      %1423 = vector.shape_cast %1422 : vector<1x2x32xf32> to vector<2x32xf32>
      %1424 = vector.shape_cast %1419 : vector<2x32xf32> to vector<1x2x32xf32>
      tpu.vector_store %arg16[%1421, %c0_503, %c0_504], %1424 {strides = array<i32>} : memref<18x2x32xf32, #tpu.memory_space<vmem>>, vector<1x2x32xf32>,
      %c1_i32_505 = arith.constant 1 : i32
      %1425 = arith.addi %c1_i32_505, %770 : i32
      %1426 = arith.index_cast %1425 : i32 to index
      %c0_506 = arith.constant 0 : index
      %c0_507 = arith.constant 0 : index
      %1427 = vector.load %arg16[%1426, %c0_506, %c0_507] : memref<18x2x32xf32, #tpu.memory_space<vmem>>, vector<1x2x32xf32>
      %1428 = vector.shape_cast %1427 : vector<1x2x32xf32> to vector<2x32xf32>
      %1429 = arith.addf %1428, %844 : vector<2x32xf32>
      %c1_i32_508 = arith.constant 1 : i32
      %1430 = arith.addi %c1_i32_508, %770 : i32
      %1431 = arith.index_cast %1430 : i32 to index
      %c0_509 = arith.constant 0 : index
      %c0_510 = arith.constant 0 : index
      %1432 = vector.load %arg16[%1431, %c0_509, %c0_510] : memref<18x2x32xf32, #tpu.memory_space<vmem>>, vector<1x2x32xf32>
      %1433 = vector.shape_cast %1432 : vector<1x2x32xf32> to vector<2x32xf32>
      %1434 = vector.shape_cast %1429 : vector<2x32xf32> to vector<1x2x32xf32>
      tpu.vector_store %arg16[%1431, %c0_509, %c0_510], %1434 {strides = array<i32>} : memref<18x2x32xf32, #tpu.memory_space<vmem>>, vector<1x2x32xf32>,
    } else {
    }
    %c10_i32 = arith.constant 10 : i32
    %c15_i32_293 = arith.constant 15 : i32
    %853 = arith.subi %c15_i32_293, %c10_i32 : i32
    %854 = arith.truncf %814 : vector<2x32xf32> to vector<2x32xbf16>
    %cst_294 = arith.constant dense<0.000000e+00> : vector<2x96xf32>
    %855 = tpu.matmul %854, %14, %cst_294 {dimension_numbers = #tpu.dot_dimension_numbers<[1], [0], [0], [1], [0, 0, 1, 1], [], []>} : vector<2x32xbf16>, vector<32x96xbf16>, vector<2x96xf32> -> vector<2x96xf32>
    %856 = arith.addf %855, %18 : vector<2x96xf32>
    %857 = arith.truncf %844 : vector<2x32xf32> to vector<2x32xbf16>
    %cst_295 = arith.constant dense<0.000000e+00> : vector<2x96xf32>
    %858 = tpu.matmul %857, %15, %cst_295 {dimension_numbers = #tpu.dot_dimension_numbers<[1], [0], [0], [1], [0, 0, 1, 1], [], []>} : vector<2x32xbf16>, vector<32x96xbf16>, vector<2x96xf32> -> vector<2x96xf32>
    %859 = arith.addf %858, %21 : vector<2x96xf32>
    %860 = arith.index_cast %c10_i32 : i32 to index
    %c0_296 = arith.constant 0 : index
    %c0_297 = arith.constant 0 : index
    %861 = vector.load %arg15[%860, %c0_296, %c0_297] : memref<16x2x192xbf16, #tpu.memory_space<vmem>>, vector<1x2x192xbf16>
    %862 = vector.shape_cast %861 : vector<1x2x192xbf16> to vector<2x192xbf16>
    %863 = arith.extf %862 : vector<2x192xbf16> to vector<2x192xf32>
    %864 = arith.index_cast %853 : i32 to index
    %c0_298 = arith.constant 0 : index
    %c0_299 = arith.constant 0 : index
    %865 = vector.load %arg15[%864, %c0_298, %c0_299] : memref<16x2x192xbf16, #tpu.memory_space<vmem>>, vector<1x2x192xbf16>
    %866 = vector.shape_cast %865 : vector<1x2x192xbf16> to vector<2x192xbf16>
    %867 = arith.extf %866 : vector<2x192xbf16> to vector<2x192xf32>
    %868 = vector.extract_strided_slice %863 {offsets = [0, 0], sizes = [2, 32], strides = [1, 1]} : vector<2x192xf32> to vector<2x32xf32>
    %869 = vector.extract_strided_slice %856 {offsets = [0, 0], sizes = [2, 32], strides = [1, 1]} : vector<2x96xf32> to vector<2x32xf32>
    %870 = arith.addf %868, %869 : vector<2x32xf32>
    %cst_300 = arith.constant 5.000000e-01 : f32
    %871 = vector.broadcast %cst_300 : f32 to vector<2x32xf32>
    %872 = arith.mulf %871, %870 : vector<2x32xf32>
    %873 = math.tanh %872 : vector<2x32xf32>
    %cst_301 = arith.constant 1.000000e+00 : f32
    %874 = vector.broadcast %cst_301 : f32 to vector<2x32xf32>
    %875 = arith.addf %873, %874 : vector<2x32xf32>
    %cst_302 = arith.constant 5.000000e-01 : f32
    %876 = vector.broadcast %cst_302 : f32 to vector<2x32xf32>
    %877 = arith.mulf %876, %875 : vector<2x32xf32>
    %878 = vector.extract_strided_slice %863 {offsets = [0, 32], sizes = [2, 32], strides = [1, 1]} : vector<2x192xf32> to vector<2x32xf32>
    %879 = vector.extract_strided_slice %856 {offsets = [0, 32], sizes = [2, 32], strides = [1, 1]} : vector<2x96xf32> to vector<2x32xf32>
    %880 = arith.addf %878, %879 : vector<2x32xf32>
    %cst_303 = arith.constant 5.000000e-01 : f32
    %881 = vector.broadcast %cst_303 : f32 to vector<2x32xf32>
    %882 = arith.mulf %881, %880 : vector<2x32xf32>
    %883 = math.tanh %882 : vector<2x32xf32>
    %cst_304 = arith.constant 1.000000e+00 : f32
    %884 = vector.broadcast %cst_304 : f32 to vector<2x32xf32>
    %885 = arith.addf %883, %884 : vector<2x32xf32>
    %cst_305 = arith.constant 5.000000e-01 : f32
    %886 = vector.broadcast %cst_305 : f32 to vector<2x32xf32>
    %887 = arith.mulf %886, %885 : vector<2x32xf32>
    %888 = vector.extract_strided_slice %863 {offsets = [0, 64], sizes = [2, 32], strides = [1, 1]} : vector<2x192xf32> to vector<2x32xf32>
    %889 = vector.extract_strided_slice %856 {offsets = [0, 64], sizes = [2, 32], strides = [1, 1]} : vector<2x96xf32> to vector<2x32xf32>
    %890 = arith.mulf %877, %889 : vector<2x32xf32>
    %891 = arith.addf %888, %890 : vector<2x32xf32>
    %892 = math.tanh %891 : vector<2x32xf32>
    %cst_306 = arith.constant 1.000000e+00 : f32
    %893 = vector.broadcast %cst_306 : f32 to vector<2x32xf32>
    %894 = arith.subf %893, %887 : vector<2x32xf32>
    %895 = arith.mulf %894, %892 : vector<2x32xf32>
    %896 = arith.mulf %887, %814 : vector<2x32xf32>
    %897 = arith.addf %895, %896 : vector<2x32xf32>
    %898 = vector.extract_strided_slice %867 {offsets = [0, 96], sizes = [2, 32], strides = [1, 1]} : vector<2x192xf32> to vector<2x32xf32>
    %899 = vector.extract_strided_slice %859 {offsets = [0, 0], sizes = [2, 32], strides = [1, 1]} : vector<2x96xf32> to vector<2x32xf32>
    %900 = arith.addf %898, %899 : vector<2x32xf32>
    %cst_307 = arith.constant 5.000000e-01 : f32
    %901 = vector.broadcast %cst_307 : f32 to vector<2x32xf32>
    %902 = arith.mulf %901, %900 : vector<2x32xf32>
    %903 = math.tanh %902 : vector<2x32xf32>
    %cst_308 = arith.constant 1.000000e+00 : f32
    %904 = vector.broadcast %cst_308 : f32 to vector<2x32xf32>
    %905 = arith.addf %903, %904 : vector<2x32xf32>
    %cst_309 = arith.constant 5.000000e-01 : f32
    %906 = vector.broadcast %cst_309 : f32 to vector<2x32xf32>
    %907 = arith.mulf %906, %905 : vector<2x32xf32>
    %908 = vector.extract_strided_slice %867 {offsets = [0, 128], sizes = [2, 32], strides = [1, 1]} : vector<2x192xf32> to vector<2x32xf32>
    %909 = vector.extract_strided_slice %859 {offsets = [0, 32], sizes = [2, 32], strides = [1, 1]} : vector<2x96xf32> to vector<2x32xf32>
    %910 = arith.addf %908, %909 : vector<2x32xf32>
    %cst_310 = arith.constant 5.000000e-01 : f32
    %911 = vector.broadcast %cst_310 : f32 to vector<2x32xf32>
    %912 = arith.mulf %911, %910 : vector<2x32xf32>
    %913 = math.tanh %912 : vector<2x32xf32>
    %cst_311 = arith.constant 1.000000e+00 : f32
    %914 = vector.broadcast %cst_311 : f32 to vector<2x32xf32>
    %915 = arith.addf %913, %914 : vector<2x32xf32>
    %cst_312 = arith.constant 5.000000e-01 : f32
    %916 = vector.broadcast %cst_312 : f32 to vector<2x32xf32>
    %917 = arith.mulf %916, %915 : vector<2x32xf32>
    %918 = vector.extract_strided_slice %867 {offsets = [0, 160], sizes = [2, 32], strides = [1, 1]} : vector<2x192xf32> to vector<2x32xf32>
    %919 = vector.extract_strided_slice %859 {offsets = [0, 64], sizes = [2, 32], strides = [1, 1]} : vector<2x96xf32> to vector<2x32xf32>
    %920 = arith.mulf %907, %919 : vector<2x32xf32>
    %921 = arith.addf %918, %920 : vector<2x32xf32>
    %922 = math.tanh %921 : vector<2x32xf32>
    %cst_313 = arith.constant 1.000000e+00 : f32
    %923 = vector.broadcast %cst_313 : f32 to vector<2x32xf32>
    %924 = arith.subf %923, %917 : vector<2x32xf32>
    %925 = arith.mulf %924, %922 : vector<2x32xf32>
    %926 = arith.mulf %917, %844 : vector<2x32xf32>
    %927 = arith.addf %925, %926 : vector<2x32xf32>
    %c2_i32_314 = arith.constant 2 : i32
    %928 = arith.muli %c2_i32_314, %c10_i32 : i32
    %c15_i32_315 = arith.constant 15 : i32
    %929 = arith.cmpi slt, %928, %c15_i32_315 : i32
    %c2_i32_316 = arith.constant 2 : i32
    %930 = arith.muli %c2_i32_316, %c10_i32 : i32
    %c15_i32_317 = arith.constant 15 : i32
    %931 = arith.cmpi sgt, %930, %c15_i32_317 : i32
    %932 = arith.extui %929 : i1 to i32
    %c0_i32_318 = arith.constant 0 : i32
    %933 = arith.cmpi ne, %932, %c0_i32_318 : i32
    scf.if %933 {
      %c1_i32_499 = arith.constant 1 : i32
      %1415 = arith.addi %c1_i32_499, %c10_i32 : i32
      %1416 = arith.index_cast %1415 : i32 to index
      %c0_500 = arith.constant 0 : index
      %c0_501 = arith.constant 0 : index
      %1417 = vector.load %arg16[%1416, %c0_500, %c0_501] : memref<18x2x32xf32, #tpu.memory_space<vmem>>, vector<1x2x32xf32>
      %1418 = vector.shape_cast %1417 : vector<1x2x32xf32> to vector<2x32xf32>
      %1419 = vector.shape_cast %897 : vector<2x32xf32> to vector<1x2x32xf32>
      tpu.vector_store %arg16[%1416, %c0_500, %c0_501], %1419 {strides = array<i32>} : memref<18x2x32xf32, #tpu.memory_space<vmem>>, vector<1x2x32xf32>,
      %c1_i32_502 = arith.constant 1 : i32
      %1420 = arith.addi %c1_i32_502, %853 : i32
      %1421 = arith.index_cast %1420 : i32 to index
      %c0_503 = arith.constant 0 : index
      %c0_504 = arith.constant 0 : index
      %1422 = vector.load %arg16[%1421, %c0_503, %c0_504] : memref<18x2x32xf32, #tpu.memory_space<vmem>>, vector<1x2x32xf32>
      %1423 = vector.shape_cast %1422 : vector<1x2x32xf32> to vector<2x32xf32>
      %1424 = vector.shape_cast %927 : vector<2x32xf32> to vector<1x2x32xf32>
      tpu.vector_store %arg16[%1421, %c0_503, %c0_504], %1424 {strides = array<i32>} : memref<18x2x32xf32, #tpu.memory_space<vmem>>, vector<1x2x32xf32>,
    } else {
    }
    %934 = arith.extui %931 : i1 to i32
    %c0_i32_319 = arith.constant 0 : i32
    %935 = arith.cmpi ne, %934, %c0_i32_319 : i32
    scf.if %935 {
      %c1_i32_499 = arith.constant 1 : i32
      %1415 = arith.addi %c1_i32_499, %c10_i32 : i32
      %1416 = arith.index_cast %1415 : i32 to index
      %c0_500 = arith.constant 0 : index
      %c0_501 = arith.constant 0 : index
      %1417 = vector.load %arg16[%1416, %c0_500, %c0_501] : memref<18x2x32xf32, #tpu.memory_space<vmem>>, vector<1x2x32xf32>
      %1418 = vector.shape_cast %1417 : vector<1x2x32xf32> to vector<2x32xf32>
      %1419 = arith.addf %1418, %897 : vector<2x32xf32>
      %c1_i32_502 = arith.constant 1 : i32
      %1420 = arith.addi %c1_i32_502, %c10_i32 : i32
      %1421 = arith.index_cast %1420 : i32 to index
      %c0_503 = arith.constant 0 : index
      %c0_504 = arith.constant 0 : index
      %1422 = vector.load %arg16[%1421, %c0_503, %c0_504] : memref<18x2x32xf32, #tpu.memory_space<vmem>>, vector<1x2x32xf32>
      %1423 = vector.shape_cast %1422 : vector<1x2x32xf32> to vector<2x32xf32>
      %1424 = vector.shape_cast %1419 : vector<2x32xf32> to vector<1x2x32xf32>
      tpu.vector_store %arg16[%1421, %c0_503, %c0_504], %1424 {strides = array<i32>} : memref<18x2x32xf32, #tpu.memory_space<vmem>>, vector<1x2x32xf32>,
      %c1_i32_505 = arith.constant 1 : i32
      %1425 = arith.addi %c1_i32_505, %853 : i32
      %1426 = arith.index_cast %1425 : i32 to index
      %c0_506 = arith.constant 0 : index
      %c0_507 = arith.constant 0 : index
      %1427 = vector.load %arg16[%1426, %c0_506, %c0_507] : memref<18x2x32xf32, #tpu.memory_space<vmem>>, vector<1x2x32xf32>
      %1428 = vector.shape_cast %1427 : vector<1x2x32xf32> to vector<2x32xf32>
      %1429 = arith.addf %1428, %927 : vector<2x32xf32>
      %c1_i32_508 = arith.constant 1 : i32
      %1430 = arith.addi %c1_i32_508, %853 : i32
      %1431 = arith.index_cast %1430 : i32 to index
      %c0_509 = arith.constant 0 : index
      %c0_510 = arith.constant 0 : index
      %1432 = vector.load %arg16[%1431, %c0_509, %c0_510] : memref<18x2x32xf32, #tpu.memory_space<vmem>>, vector<1x2x32xf32>
      %1433 = vector.shape_cast %1432 : vector<1x2x32xf32> to vector<2x32xf32>
      %1434 = vector.shape_cast %1429 : vector<2x32xf32> to vector<1x2x32xf32>
      tpu.vector_store %arg16[%1431, %c0_509, %c0_510], %1434 {strides = array<i32>} : memref<18x2x32xf32, #tpu.memory_space<vmem>>, vector<1x2x32xf32>,
    } else {
    }
    %c11_i32 = arith.constant 11 : i32
    %c15_i32_320 = arith.constant 15 : i32
    %936 = arith.subi %c15_i32_320, %c11_i32 : i32
    %937 = arith.truncf %897 : vector<2x32xf32> to vector<2x32xbf16>
    %cst_321 = arith.constant dense<0.000000e+00> : vector<2x96xf32>
    %938 = tpu.matmul %937, %14, %cst_321 {dimension_numbers = #tpu.dot_dimension_numbers<[1], [0], [0], [1], [0, 0, 1, 1], [], []>} : vector<2x32xbf16>, vector<32x96xbf16>, vector<2x96xf32> -> vector<2x96xf32>
    %939 = arith.addf %938, %18 : vector<2x96xf32>
    %940 = arith.truncf %927 : vector<2x32xf32> to vector<2x32xbf16>
    %cst_322 = arith.constant dense<0.000000e+00> : vector<2x96xf32>
    %941 = tpu.matmul %940, %15, %cst_322 {dimension_numbers = #tpu.dot_dimension_numbers<[1], [0], [0], [1], [0, 0, 1, 1], [], []>} : vector<2x32xbf16>, vector<32x96xbf16>, vector<2x96xf32> -> vector<2x96xf32>
    %942 = arith.addf %941, %21 : vector<2x96xf32>
    %943 = arith.index_cast %c11_i32 : i32 to index
    %c0_323 = arith.constant 0 : index
    %c0_324 = arith.constant 0 : index
    %944 = vector.load %arg15[%943, %c0_323, %c0_324] : memref<16x2x192xbf16, #tpu.memory_space<vmem>>, vector<1x2x192xbf16>
    %945 = vector.shape_cast %944 : vector<1x2x192xbf16> to vector<2x192xbf16>
    %946 = arith.extf %945 : vector<2x192xbf16> to vector<2x192xf32>
    %947 = arith.index_cast %936 : i32 to index
    %c0_325 = arith.constant 0 : index
    %c0_326 = arith.constant 0 : index
    %948 = vector.load %arg15[%947, %c0_325, %c0_326] : memref<16x2x192xbf16, #tpu.memory_space<vmem>>, vector<1x2x192xbf16>
    %949 = vector.shape_cast %948 : vector<1x2x192xbf16> to vector<2x192xbf16>
    %950 = arith.extf %949 : vector<2x192xbf16> to vector<2x192xf32>
    %951 = vector.extract_strided_slice %946 {offsets = [0, 0], sizes = [2, 32], strides = [1, 1]} : vector<2x192xf32> to vector<2x32xf32>
    %952 = vector.extract_strided_slice %939 {offsets = [0, 0], sizes = [2, 32], strides = [1, 1]} : vector<2x96xf32> to vector<2x32xf32>
    %953 = arith.addf %951, %952 : vector<2x32xf32>
    %cst_327 = arith.constant 5.000000e-01 : f32
    %954 = vector.broadcast %cst_327 : f32 to vector<2x32xf32>
    %955 = arith.mulf %954, %953 : vector<2x32xf32>
    %956 = math.tanh %955 : vector<2x32xf32>
    %cst_328 = arith.constant 1.000000e+00 : f32
    %957 = vector.broadcast %cst_328 : f32 to vector<2x32xf32>
    %958 = arith.addf %956, %957 : vector<2x32xf32>
    %cst_329 = arith.constant 5.000000e-01 : f32
    %959 = vector.broadcast %cst_329 : f32 to vector<2x32xf32>
    %960 = arith.mulf %959, %958 : vector<2x32xf32>
    %961 = vector.extract_strided_slice %946 {offsets = [0, 32], sizes = [2, 32], strides = [1, 1]} : vector<2x192xf32> to vector<2x32xf32>
    %962 = vector.extract_strided_slice %939 {offsets = [0, 32], sizes = [2, 32], strides = [1, 1]} : vector<2x96xf32> to vector<2x32xf32>
    %963 = arith.addf %961, %962 : vector<2x32xf32>
    %cst_330 = arith.constant 5.000000e-01 : f32
    %964 = vector.broadcast %cst_330 : f32 to vector<2x32xf32>
    %965 = arith.mulf %964, %963 : vector<2x32xf32>
    %966 = math.tanh %965 : vector<2x32xf32>
    %cst_331 = arith.constant 1.000000e+00 : f32
    %967 = vector.broadcast %cst_331 : f32 to vector<2x32xf32>
    %968 = arith.addf %966, %967 : vector<2x32xf32>
    %cst_332 = arith.constant 5.000000e-01 : f32
    %969 = vector.broadcast %cst_332 : f32 to vector<2x32xf32>
    %970 = arith.mulf %969, %968 : vector<2x32xf32>
    %971 = vector.extract_strided_slice %946 {offsets = [0, 64], sizes = [2, 32], strides = [1, 1]} : vector<2x192xf32> to vector<2x32xf32>
    %972 = vector.extract_strided_slice %939 {offsets = [0, 64], sizes = [2, 32], strides = [1, 1]} : vector<2x96xf32> to vector<2x32xf32>
    %973 = arith.mulf %960, %972 : vector<2x32xf32>
    %974 = arith.addf %971, %973 : vector<2x32xf32>
    %975 = math.tanh %974 : vector<2x32xf32>
    %cst_333 = arith.constant 1.000000e+00 : f32
    %976 = vector.broadcast %cst_333 : f32 to vector<2x32xf32>
    %977 = arith.subf %976, %970 : vector<2x32xf32>
    %978 = arith.mulf %977, %975 : vector<2x32xf32>
    %979 = arith.mulf %970, %897 : vector<2x32xf32>
    %980 = arith.addf %978, %979 : vector<2x32xf32>
    %981 = vector.extract_strided_slice %950 {offsets = [0, 96], sizes = [2, 32], strides = [1, 1]} : vector<2x192xf32> to vector<2x32xf32>
    %982 = vector.extract_strided_slice %942 {offsets = [0, 0], sizes = [2, 32], strides = [1, 1]} : vector<2x96xf32> to vector<2x32xf32>
    %983 = arith.addf %981, %982 : vector<2x32xf32>
    %cst_334 = arith.constant 5.000000e-01 : f32
    %984 = vector.broadcast %cst_334 : f32 to vector<2x32xf32>
    %985 = arith.mulf %984, %983 : vector<2x32xf32>
    %986 = math.tanh %985 : vector<2x32xf32>
    %cst_335 = arith.constant 1.000000e+00 : f32
    %987 = vector.broadcast %cst_335 : f32 to vector<2x32xf32>
    %988 = arith.addf %986, %987 : vector<2x32xf32>
    %cst_336 = arith.constant 5.000000e-01 : f32
    %989 = vector.broadcast %cst_336 : f32 to vector<2x32xf32>
    %990 = arith.mulf %989, %988 : vector<2x32xf32>
    %991 = vector.extract_strided_slice %950 {offsets = [0, 128], sizes = [2, 32], strides = [1, 1]} : vector<2x192xf32> to vector<2x32xf32>
    %992 = vector.extract_strided_slice %942 {offsets = [0, 32], sizes = [2, 32], strides = [1, 1]} : vector<2x96xf32> to vector<2x32xf32>
    %993 = arith.addf %991, %992 : vector<2x32xf32>
    %cst_337 = arith.constant 5.000000e-01 : f32
    %994 = vector.broadcast %cst_337 : f32 to vector<2x32xf32>
    %995 = arith.mulf %994, %993 : vector<2x32xf32>
    %996 = math.tanh %995 : vector<2x32xf32>
    %cst_338 = arith.constant 1.000000e+00 : f32
    %997 = vector.broadcast %cst_338 : f32 to vector<2x32xf32>
    %998 = arith.addf %996, %997 : vector<2x32xf32>
    %cst_339 = arith.constant 5.000000e-01 : f32
    %999 = vector.broadcast %cst_339 : f32 to vector<2x32xf32>
    %1000 = arith.mulf %999, %998 : vector<2x32xf32>
    %1001 = vector.extract_strided_slice %950 {offsets = [0, 160], sizes = [2, 32], strides = [1, 1]} : vector<2x192xf32> to vector<2x32xf32>
    %1002 = vector.extract_strided_slice %942 {offsets = [0, 64], sizes = [2, 32], strides = [1, 1]} : vector<2x96xf32> to vector<2x32xf32>
    %1003 = arith.mulf %990, %1002 : vector<2x32xf32>
    %1004 = arith.addf %1001, %1003 : vector<2x32xf32>
    %1005 = math.tanh %1004 : vector<2x32xf32>
    %cst_340 = arith.constant 1.000000e+00 : f32
    %1006 = vector.broadcast %cst_340 : f32 to vector<2x32xf32>
    %1007 = arith.subf %1006, %1000 : vector<2x32xf32>
    %1008 = arith.mulf %1007, %1005 : vector<2x32xf32>
    %1009 = arith.mulf %1000, %927 : vector<2x32xf32>
    %1010 = arith.addf %1008, %1009 : vector<2x32xf32>
    %c2_i32_341 = arith.constant 2 : i32
    %1011 = arith.muli %c2_i32_341, %c11_i32 : i32
    %c15_i32_342 = arith.constant 15 : i32
    %1012 = arith.cmpi slt, %1011, %c15_i32_342 : i32
    %c2_i32_343 = arith.constant 2 : i32
    %1013 = arith.muli %c2_i32_343, %c11_i32 : i32
    %c15_i32_344 = arith.constant 15 : i32
    %1014 = arith.cmpi sgt, %1013, %c15_i32_344 : i32
    %1015 = arith.extui %1012 : i1 to i32
    %c0_i32_345 = arith.constant 0 : i32
    %1016 = arith.cmpi ne, %1015, %c0_i32_345 : i32
    scf.if %1016 {
      %c1_i32_499 = arith.constant 1 : i32
      %1415 = arith.addi %c1_i32_499, %c11_i32 : i32
      %1416 = arith.index_cast %1415 : i32 to index
      %c0_500 = arith.constant 0 : index
      %c0_501 = arith.constant 0 : index
      %1417 = vector.load %arg16[%1416, %c0_500, %c0_501] : memref<18x2x32xf32, #tpu.memory_space<vmem>>, vector<1x2x32xf32>
      %1418 = vector.shape_cast %1417 : vector<1x2x32xf32> to vector<2x32xf32>
      %1419 = vector.shape_cast %980 : vector<2x32xf32> to vector<1x2x32xf32>
      tpu.vector_store %arg16[%1416, %c0_500, %c0_501], %1419 {strides = array<i32>} : memref<18x2x32xf32, #tpu.memory_space<vmem>>, vector<1x2x32xf32>,
      %c1_i32_502 = arith.constant 1 : i32
      %1420 = arith.addi %c1_i32_502, %936 : i32
      %1421 = arith.index_cast %1420 : i32 to index
      %c0_503 = arith.constant 0 : index
      %c0_504 = arith.constant 0 : index
      %1422 = vector.load %arg16[%1421, %c0_503, %c0_504] : memref<18x2x32xf32, #tpu.memory_space<vmem>>, vector<1x2x32xf32>
      %1423 = vector.shape_cast %1422 : vector<1x2x32xf32> to vector<2x32xf32>
      %1424 = vector.shape_cast %1010 : vector<2x32xf32> to vector<1x2x32xf32>
      tpu.vector_store %arg16[%1421, %c0_503, %c0_504], %1424 {strides = array<i32>} : memref<18x2x32xf32, #tpu.memory_space<vmem>>, vector<1x2x32xf32>,
    } else {
    }
    %1017 = arith.extui %1014 : i1 to i32
    %c0_i32_346 = arith.constant 0 : i32
    %1018 = arith.cmpi ne, %1017, %c0_i32_346 : i32
    scf.if %1018 {
      %c1_i32_499 = arith.constant 1 : i32
      %1415 = arith.addi %c1_i32_499, %c11_i32 : i32
      %1416 = arith.index_cast %1415 : i32 to index
      %c0_500 = arith.constant 0 : index
      %c0_501 = arith.constant 0 : index
      %1417 = vector.load %arg16[%1416, %c0_500, %c0_501] : memref<18x2x32xf32, #tpu.memory_space<vmem>>, vector<1x2x32xf32>
      %1418 = vector.shape_cast %1417 : vector<1x2x32xf32> to vector<2x32xf32>
      %1419 = arith.addf %1418, %980 : vector<2x32xf32>
      %c1_i32_502 = arith.constant 1 : i32
      %1420 = arith.addi %c1_i32_502, %c11_i32 : i32
      %1421 = arith.index_cast %1420 : i32 to index
      %c0_503 = arith.constant 0 : index
      %c0_504 = arith.constant 0 : index
      %1422 = vector.load %arg16[%1421, %c0_503, %c0_504] : memref<18x2x32xf32, #tpu.memory_space<vmem>>, vector<1x2x32xf32>
      %1423 = vector.shape_cast %1422 : vector<1x2x32xf32> to vector<2x32xf32>
      %1424 = vector.shape_cast %1419 : vector<2x32xf32> to vector<1x2x32xf32>
      tpu.vector_store %arg16[%1421, %c0_503, %c0_504], %1424 {strides = array<i32>} : memref<18x2x32xf32, #tpu.memory_space<vmem>>, vector<1x2x32xf32>,
      %c1_i32_505 = arith.constant 1 : i32
      %1425 = arith.addi %c1_i32_505, %936 : i32
      %1426 = arith.index_cast %1425 : i32 to index
      %c0_506 = arith.constant 0 : index
      %c0_507 = arith.constant 0 : index
      %1427 = vector.load %arg16[%1426, %c0_506, %c0_507] : memref<18x2x32xf32, #tpu.memory_space<vmem>>, vector<1x2x32xf32>
      %1428 = vector.shape_cast %1427 : vector<1x2x32xf32> to vector<2x32xf32>
      %1429 = arith.addf %1428, %1010 : vector<2x32xf32>
      %c1_i32_508 = arith.constant 1 : i32
      %1430 = arith.addi %c1_i32_508, %936 : i32
      %1431 = arith.index_cast %1430 : i32 to index
      %c0_509 = arith.constant 0 : index
      %c0_510 = arith.constant 0 : index
      %1432 = vector.load %arg16[%1431, %c0_509, %c0_510] : memref<18x2x32xf32, #tpu.memory_space<vmem>>, vector<1x2x32xf32>
      %1433 = vector.shape_cast %1432 : vector<1x2x32xf32> to vector<2x32xf32>
      %1434 = vector.shape_cast %1429 : vector<2x32xf32> to vector<1x2x32xf32>
      tpu.vector_store %arg16[%1431, %c0_509, %c0_510], %1434 {strides = array<i32>} : memref<18x2x32xf32, #tpu.memory_space<vmem>>, vector<1x2x32xf32>,
    } else {
    }
    %c12_i32 = arith.constant 12 : i32
    %c15_i32_347 = arith.constant 15 : i32
    %1019 = arith.subi %c15_i32_347, %c12_i32 : i32
    %1020 = arith.truncf %980 : vector<2x32xf32> to vector<2x32xbf16>
    %cst_348 = arith.constant dense<0.000000e+00> : vector<2x96xf32>
    %1021 = tpu.matmul %1020, %14, %cst_348 {dimension_numbers = #tpu.dot_dimension_numbers<[1], [0], [0], [1], [0, 0, 1, 1], [], []>} : vector<2x32xbf16>, vector<32x96xbf16>, vector<2x96xf32> -> vector<2x96xf32>
    %1022 = arith.addf %1021, %18 : vector<2x96xf32>
    %1023 = arith.truncf %1010 : vector<2x32xf32> to vector<2x32xbf16>
    %cst_349 = arith.constant dense<0.000000e+00> : vector<2x96xf32>
    %1024 = tpu.matmul %1023, %15, %cst_349 {dimension_numbers = #tpu.dot_dimension_numbers<[1], [0], [0], [1], [0, 0, 1, 1], [], []>} : vector<2x32xbf16>, vector<32x96xbf16>, vector<2x96xf32> -> vector<2x96xf32>
    %1025 = arith.addf %1024, %21 : vector<2x96xf32>
    %1026 = arith.index_cast %c12_i32 : i32 to index
    %c0_350 = arith.constant 0 : index
    %c0_351 = arith.constant 0 : index
    %1027 = vector.load %arg15[%1026, %c0_350, %c0_351] : memref<16x2x192xbf16, #tpu.memory_space<vmem>>, vector<1x2x192xbf16>
    %1028 = vector.shape_cast %1027 : vector<1x2x192xbf16> to vector<2x192xbf16>
    %1029 = arith.extf %1028 : vector<2x192xbf16> to vector<2x192xf32>
    %1030 = arith.index_cast %1019 : i32 to index
    %c0_352 = arith.constant 0 : index
    %c0_353 = arith.constant 0 : index
    %1031 = vector.load %arg15[%1030, %c0_352, %c0_353] : memref<16x2x192xbf16, #tpu.memory_space<vmem>>, vector<1x2x192xbf16>
    %1032 = vector.shape_cast %1031 : vector<1x2x192xbf16> to vector<2x192xbf16>
    %1033 = arith.extf %1032 : vector<2x192xbf16> to vector<2x192xf32>
    %1034 = vector.extract_strided_slice %1029 {offsets = [0, 0], sizes = [2, 32], strides = [1, 1]} : vector<2x192xf32> to vector<2x32xf32>
    %1035 = vector.extract_strided_slice %1022 {offsets = [0, 0], sizes = [2, 32], strides = [1, 1]} : vector<2x96xf32> to vector<2x32xf32>
    %1036 = arith.addf %1034, %1035 : vector<2x32xf32>
    %cst_354 = arith.constant 5.000000e-01 : f32
    %1037 = vector.broadcast %cst_354 : f32 to vector<2x32xf32>
    %1038 = arith.mulf %1037, %1036 : vector<2x32xf32>
    %1039 = math.tanh %1038 : vector<2x32xf32>
    %cst_355 = arith.constant 1.000000e+00 : f32
    %1040 = vector.broadcast %cst_355 : f32 to vector<2x32xf32>
    %1041 = arith.addf %1039, %1040 : vector<2x32xf32>
    %cst_356 = arith.constant 5.000000e-01 : f32
    %1042 = vector.broadcast %cst_356 : f32 to vector<2x32xf32>
    %1043 = arith.mulf %1042, %1041 : vector<2x32xf32>
    %1044 = vector.extract_strided_slice %1029 {offsets = [0, 32], sizes = [2, 32], strides = [1, 1]} : vector<2x192xf32> to vector<2x32xf32>
    %1045 = vector.extract_strided_slice %1022 {offsets = [0, 32], sizes = [2, 32], strides = [1, 1]} : vector<2x96xf32> to vector<2x32xf32>
    %1046 = arith.addf %1044, %1045 : vector<2x32xf32>
    %cst_357 = arith.constant 5.000000e-01 : f32
    %1047 = vector.broadcast %cst_357 : f32 to vector<2x32xf32>
    %1048 = arith.mulf %1047, %1046 : vector<2x32xf32>
    %1049 = math.tanh %1048 : vector<2x32xf32>
    %cst_358 = arith.constant 1.000000e+00 : f32
    %1050 = vector.broadcast %cst_358 : f32 to vector<2x32xf32>
    %1051 = arith.addf %1049, %1050 : vector<2x32xf32>
    %cst_359 = arith.constant 5.000000e-01 : f32
    %1052 = vector.broadcast %cst_359 : f32 to vector<2x32xf32>
    %1053 = arith.mulf %1052, %1051 : vector<2x32xf32>
    %1054 = vector.extract_strided_slice %1029 {offsets = [0, 64], sizes = [2, 32], strides = [1, 1]} : vector<2x192xf32> to vector<2x32xf32>
    %1055 = vector.extract_strided_slice %1022 {offsets = [0, 64], sizes = [2, 32], strides = [1, 1]} : vector<2x96xf32> to vector<2x32xf32>
    %1056 = arith.mulf %1043, %1055 : vector<2x32xf32>
    %1057 = arith.addf %1054, %1056 : vector<2x32xf32>
    %1058 = math.tanh %1057 : vector<2x32xf32>
    %cst_360 = arith.constant 1.000000e+00 : f32
    %1059 = vector.broadcast %cst_360 : f32 to vector<2x32xf32>
    %1060 = arith.subf %1059, %1053 : vector<2x32xf32>
    %1061 = arith.mulf %1060, %1058 : vector<2x32xf32>
    %1062 = arith.mulf %1053, %980 : vector<2x32xf32>
    %1063 = arith.addf %1061, %1062 : vector<2x32xf32>
    %1064 = vector.extract_strided_slice %1033 {offsets = [0, 96], sizes = [2, 32], strides = [1, 1]} : vector<2x192xf32> to vector<2x32xf32>
    %1065 = vector.extract_strided_slice %1025 {offsets = [0, 0], sizes = [2, 32], strides = [1, 1]} : vector<2x96xf32> to vector<2x32xf32>
    %1066 = arith.addf %1064, %1065 : vector<2x32xf32>
    %cst_361 = arith.constant 5.000000e-01 : f32
    %1067 = vector.broadcast %cst_361 : f32 to vector<2x32xf32>
    %1068 = arith.mulf %1067, %1066 : vector<2x32xf32>
    %1069 = math.tanh %1068 : vector<2x32xf32>
    %cst_362 = arith.constant 1.000000e+00 : f32
    %1070 = vector.broadcast %cst_362 : f32 to vector<2x32xf32>
    %1071 = arith.addf %1069, %1070 : vector<2x32xf32>
    %cst_363 = arith.constant 5.000000e-01 : f32
    %1072 = vector.broadcast %cst_363 : f32 to vector<2x32xf32>
    %1073 = arith.mulf %1072, %1071 : vector<2x32xf32>
    %1074 = vector.extract_strided_slice %1033 {offsets = [0, 128], sizes = [2, 32], strides = [1, 1]} : vector<2x192xf32> to vector<2x32xf32>
    %1075 = vector.extract_strided_slice %1025 {offsets = [0, 32], sizes = [2, 32], strides = [1, 1]} : vector<2x96xf32> to vector<2x32xf32>
    %1076 = arith.addf %1074, %1075 : vector<2x32xf32>
    %cst_364 = arith.constant 5.000000e-01 : f32
    %1077 = vector.broadcast %cst_364 : f32 to vector<2x32xf32>
    %1078 = arith.mulf %1077, %1076 : vector<2x32xf32>
    %1079 = math.tanh %1078 : vector<2x32xf32>
    %cst_365 = arith.constant 1.000000e+00 : f32
    %1080 = vector.broadcast %cst_365 : f32 to vector<2x32xf32>
    %1081 = arith.addf %1079, %1080 : vector<2x32xf32>
    %cst_366 = arith.constant 5.000000e-01 : f32
    %1082 = vector.broadcast %cst_366 : f32 to vector<2x32xf32>
    %1083 = arith.mulf %1082, %1081 : vector<2x32xf32>
    %1084 = vector.extract_strided_slice %1033 {offsets = [0, 160], sizes = [2, 32], strides = [1, 1]} : vector<2x192xf32> to vector<2x32xf32>
    %1085 = vector.extract_strided_slice %1025 {offsets = [0, 64], sizes = [2, 32], strides = [1, 1]} : vector<2x96xf32> to vector<2x32xf32>
    %1086 = arith.mulf %1073, %1085 : vector<2x32xf32>
    %1087 = arith.addf %1084, %1086 : vector<2x32xf32>
    %1088 = math.tanh %1087 : vector<2x32xf32>
    %cst_367 = arith.constant 1.000000e+00 : f32
    %1089 = vector.broadcast %cst_367 : f32 to vector<2x32xf32>
    %1090 = arith.subf %1089, %1083 : vector<2x32xf32>
    %1091 = arith.mulf %1090, %1088 : vector<2x32xf32>
    %1092 = arith.mulf %1083, %1010 : vector<2x32xf32>
    %1093 = arith.addf %1091, %1092 : vector<2x32xf32>
    %c2_i32_368 = arith.constant 2 : i32
    %1094 = arith.muli %c2_i32_368, %c12_i32 : i32
    %c15_i32_369 = arith.constant 15 : i32
    %1095 = arith.cmpi slt, %1094, %c15_i32_369 : i32
    %c2_i32_370 = arith.constant 2 : i32
    %1096 = arith.muli %c2_i32_370, %c12_i32 : i32
    %c15_i32_371 = arith.constant 15 : i32
    %1097 = arith.cmpi sgt, %1096, %c15_i32_371 : i32
    %1098 = arith.extui %1095 : i1 to i32
    %c0_i32_372 = arith.constant 0 : i32
    %1099 = arith.cmpi ne, %1098, %c0_i32_372 : i32
    scf.if %1099 {
      %c1_i32_499 = arith.constant 1 : i32
      %1415 = arith.addi %c1_i32_499, %c12_i32 : i32
      %1416 = arith.index_cast %1415 : i32 to index
      %c0_500 = arith.constant 0 : index
      %c0_501 = arith.constant 0 : index
      %1417 = vector.load %arg16[%1416, %c0_500, %c0_501] : memref<18x2x32xf32, #tpu.memory_space<vmem>>, vector<1x2x32xf32>
      %1418 = vector.shape_cast %1417 : vector<1x2x32xf32> to vector<2x32xf32>
      %1419 = vector.shape_cast %1063 : vector<2x32xf32> to vector<1x2x32xf32>
      tpu.vector_store %arg16[%1416, %c0_500, %c0_501], %1419 {strides = array<i32>} : memref<18x2x32xf32, #tpu.memory_space<vmem>>, vector<1x2x32xf32>,
      %c1_i32_502 = arith.constant 1 : i32
      %1420 = arith.addi %c1_i32_502, %1019 : i32
      %1421 = arith.index_cast %1420 : i32 to index
      %c0_503 = arith.constant 0 : index
      %c0_504 = arith.constant 0 : index
      %1422 = vector.load %arg16[%1421, %c0_503, %c0_504] : memref<18x2x32xf32, #tpu.memory_space<vmem>>, vector<1x2x32xf32>
      %1423 = vector.shape_cast %1422 : vector<1x2x32xf32> to vector<2x32xf32>
      %1424 = vector.shape_cast %1093 : vector<2x32xf32> to vector<1x2x32xf32>
      tpu.vector_store %arg16[%1421, %c0_503, %c0_504], %1424 {strides = array<i32>} : memref<18x2x32xf32, #tpu.memory_space<vmem>>, vector<1x2x32xf32>,
    } else {
    }
    %1100 = arith.extui %1097 : i1 to i32
    %c0_i32_373 = arith.constant 0 : i32
    %1101 = arith.cmpi ne, %1100, %c0_i32_373 : i32
    scf.if %1101 {
      %c1_i32_499 = arith.constant 1 : i32
      %1415 = arith.addi %c1_i32_499, %c12_i32 : i32
      %1416 = arith.index_cast %1415 : i32 to index
      %c0_500 = arith.constant 0 : index
      %c0_501 = arith.constant 0 : index
      %1417 = vector.load %arg16[%1416, %c0_500, %c0_501] : memref<18x2x32xf32, #tpu.memory_space<vmem>>, vector<1x2x32xf32>
      %1418 = vector.shape_cast %1417 : vector<1x2x32xf32> to vector<2x32xf32>
      %1419 = arith.addf %1418, %1063 : vector<2x32xf32>
      %c1_i32_502 = arith.constant 1 : i32
      %1420 = arith.addi %c1_i32_502, %c12_i32 : i32
      %1421 = arith.index_cast %1420 : i32 to index
      %c0_503 = arith.constant 0 : index
      %c0_504 = arith.constant 0 : index
      %1422 = vector.load %arg16[%1421, %c0_503, %c0_504] : memref<18x2x32xf32, #tpu.memory_space<vmem>>, vector<1x2x32xf32>
      %1423 = vector.shape_cast %1422 : vector<1x2x32xf32> to vector<2x32xf32>
      %1424 = vector.shape_cast %1419 : vector<2x32xf32> to vector<1x2x32xf32>
      tpu.vector_store %arg16[%1421, %c0_503, %c0_504], %1424 {strides = array<i32>} : memref<18x2x32xf32, #tpu.memory_space<vmem>>, vector<1x2x32xf32>,
      %c1_i32_505 = arith.constant 1 : i32
      %1425 = arith.addi %c1_i32_505, %1019 : i32
      %1426 = arith.index_cast %1425 : i32 to index
      %c0_506 = arith.constant 0 : index
      %c0_507 = arith.constant 0 : index
      %1427 = vector.load %arg16[%1426, %c0_506, %c0_507] : memref<18x2x32xf32, #tpu.memory_space<vmem>>, vector<1x2x32xf32>
      %1428 = vector.shape_cast %1427 : vector<1x2x32xf32> to vector<2x32xf32>
      %1429 = arith.addf %1428, %1093 : vector<2x32xf32>
      %c1_i32_508 = arith.constant 1 : i32
      %1430 = arith.addi %c1_i32_508, %1019 : i32
      %1431 = arith.index_cast %1430 : i32 to index
      %c0_509 = arith.constant 0 : index
      %c0_510 = arith.constant 0 : index
      %1432 = vector.load %arg16[%1431, %c0_509, %c0_510] : memref<18x2x32xf32, #tpu.memory_space<vmem>>, vector<1x2x32xf32>
      %1433 = vector.shape_cast %1432 : vector<1x2x32xf32> to vector<2x32xf32>
      %1434 = vector.shape_cast %1429 : vector<2x32xf32> to vector<1x2x32xf32>
      tpu.vector_store %arg16[%1431, %c0_509, %c0_510], %1434 {strides = array<i32>} : memref<18x2x32xf32, #tpu.memory_space<vmem>>, vector<1x2x32xf32>,
    } else {
    }
    %c13_i32 = arith.constant 13 : i32
    %c15_i32_374 = arith.constant 15 : i32
    %1102 = arith.subi %c15_i32_374, %c13_i32 : i32
    %1103 = arith.truncf %1063 : vector<2x32xf32> to vector<2x32xbf16>
    %cst_375 = arith.constant dense<0.000000e+00> : vector<2x96xf32>
    %1104 = tpu.matmul %1103, %14, %cst_375 {dimension_numbers = #tpu.dot_dimension_numbers<[1], [0], [0], [1], [0, 0, 1, 1], [], []>} : vector<2x32xbf16>, vector<32x96xbf16>, vector<2x96xf32> -> vector<2x96xf32>
    %1105 = arith.addf %1104, %18 : vector<2x96xf32>
    %1106 = arith.truncf %1093 : vector<2x32xf32> to vector<2x32xbf16>
    %cst_376 = arith.constant dense<0.000000e+00> : vector<2x96xf32>
    %1107 = tpu.matmul %1106, %15, %cst_376 {dimension_numbers = #tpu.dot_dimension_numbers<[1], [0], [0], [1], [0, 0, 1, 1], [], []>} : vector<2x32xbf16>, vector<32x96xbf16>, vector<2x96xf32> -> vector<2x96xf32>
    %1108 = arith.addf %1107, %21 : vector<2x96xf32>
    %1109 = arith.index_cast %c13_i32 : i32 to index
    %c0_377 = arith.constant 0 : index
    %c0_378 = arith.constant 0 : index
    %1110 = vector.load %arg15[%1109, %c0_377, %c0_378] : memref<16x2x192xbf16, #tpu.memory_space<vmem>>, vector<1x2x192xbf16>
    %1111 = vector.shape_cast %1110 : vector<1x2x192xbf16> to vector<2x192xbf16>
    %1112 = arith.extf %1111 : vector<2x192xbf16> to vector<2x192xf32>
    %1113 = arith.index_cast %1102 : i32 to index
    %c0_379 = arith.constant 0 : index
    %c0_380 = arith.constant 0 : index
    %1114 = vector.load %arg15[%1113, %c0_379, %c0_380] : memref<16x2x192xbf16, #tpu.memory_space<vmem>>, vector<1x2x192xbf16>
    %1115 = vector.shape_cast %1114 : vector<1x2x192xbf16> to vector<2x192xbf16>
    %1116 = arith.extf %1115 : vector<2x192xbf16> to vector<2x192xf32>
    %1117 = vector.extract_strided_slice %1112 {offsets = [0, 0], sizes = [2, 32], strides = [1, 1]} : vector<2x192xf32> to vector<2x32xf32>
    %1118 = vector.extract_strided_slice %1105 {offsets = [0, 0], sizes = [2, 32], strides = [1, 1]} : vector<2x96xf32> to vector<2x32xf32>
    %1119 = arith.addf %1117, %1118 : vector<2x32xf32>
    %cst_381 = arith.constant 5.000000e-01 : f32
    %1120 = vector.broadcast %cst_381 : f32 to vector<2x32xf32>
    %1121 = arith.mulf %1120, %1119 : vector<2x32xf32>
    %1122 = math.tanh %1121 : vector<2x32xf32>
    %cst_382 = arith.constant 1.000000e+00 : f32
    %1123 = vector.broadcast %cst_382 : f32 to vector<2x32xf32>
    %1124 = arith.addf %1122, %1123 : vector<2x32xf32>
    %cst_383 = arith.constant 5.000000e-01 : f32
    %1125 = vector.broadcast %cst_383 : f32 to vector<2x32xf32>
    %1126 = arith.mulf %1125, %1124 : vector<2x32xf32>
    %1127 = vector.extract_strided_slice %1112 {offsets = [0, 32], sizes = [2, 32], strides = [1, 1]} : vector<2x192xf32> to vector<2x32xf32>
    %1128 = vector.extract_strided_slice %1105 {offsets = [0, 32], sizes = [2, 32], strides = [1, 1]} : vector<2x96xf32> to vector<2x32xf32>
    %1129 = arith.addf %1127, %1128 : vector<2x32xf32>
    %cst_384 = arith.constant 5.000000e-01 : f32
    %1130 = vector.broadcast %cst_384 : f32 to vector<2x32xf32>
    %1131 = arith.mulf %1130, %1129 : vector<2x32xf32>
    %1132 = math.tanh %1131 : vector<2x32xf32>
    %cst_385 = arith.constant 1.000000e+00 : f32
    %1133 = vector.broadcast %cst_385 : f32 to vector<2x32xf32>
    %1134 = arith.addf %1132, %1133 : vector<2x32xf32>
    %cst_386 = arith.constant 5.000000e-01 : f32
    %1135 = vector.broadcast %cst_386 : f32 to vector<2x32xf32>
    %1136 = arith.mulf %1135, %1134 : vector<2x32xf32>
    %1137 = vector.extract_strided_slice %1112 {offsets = [0, 64], sizes = [2, 32], strides = [1, 1]} : vector<2x192xf32> to vector<2x32xf32>
    %1138 = vector.extract_strided_slice %1105 {offsets = [0, 64], sizes = [2, 32], strides = [1, 1]} : vector<2x96xf32> to vector<2x32xf32>
    %1139 = arith.mulf %1126, %1138 : vector<2x32xf32>
    %1140 = arith.addf %1137, %1139 : vector<2x32xf32>
    %1141 = math.tanh %1140 : vector<2x32xf32>
    %cst_387 = arith.constant 1.000000e+00 : f32
    %1142 = vector.broadcast %cst_387 : f32 to vector<2x32xf32>
    %1143 = arith.subf %1142, %1136 : vector<2x32xf32>
    %1144 = arith.mulf %1143, %1141 : vector<2x32xf32>
    %1145 = arith.mulf %1136, %1063 : vector<2x32xf32>
    %1146 = arith.addf %1144, %1145 : vector<2x32xf32>
    %1147 = vector.extract_strided_slice %1116 {offsets = [0, 96], sizes = [2, 32], strides = [1, 1]} : vector<2x192xf32> to vector<2x32xf32>
    %1148 = vector.extract_strided_slice %1108 {offsets = [0, 0], sizes = [2, 32], strides = [1, 1]} : vector<2x96xf32> to vector<2x32xf32>
    %1149 = arith.addf %1147, %1148 : vector<2x32xf32>
    %cst_388 = arith.constant 5.000000e-01 : f32
    %1150 = vector.broadcast %cst_388 : f32 to vector<2x32xf32>
    %1151 = arith.mulf %1150, %1149 : vector<2x32xf32>
    %1152 = math.tanh %1151 : vector<2x32xf32>
    %cst_389 = arith.constant 1.000000e+00 : f32
    %1153 = vector.broadcast %cst_389 : f32 to vector<2x32xf32>
    %1154 = arith.addf %1152, %1153 : vector<2x32xf32>
    %cst_390 = arith.constant 5.000000e-01 : f32
    %1155 = vector.broadcast %cst_390 : f32 to vector<2x32xf32>
    %1156 = arith.mulf %1155, %1154 : vector<2x32xf32>
    %1157 = vector.extract_strided_slice %1116 {offsets = [0, 128], sizes = [2, 32], strides = [1, 1]} : vector<2x192xf32> to vector<2x32xf32>
    %1158 = vector.extract_strided_slice %1108 {offsets = [0, 32], sizes = [2, 32], strides = [1, 1]} : vector<2x96xf32> to vector<2x32xf32>
    %1159 = arith.addf %1157, %1158 : vector<2x32xf32>
    %cst_391 = arith.constant 5.000000e-01 : f32
    %1160 = vector.broadcast %cst_391 : f32 to vector<2x32xf32>
    %1161 = arith.mulf %1160, %1159 : vector<2x32xf32>
    %1162 = math.tanh %1161 : vector<2x32xf32>
    %cst_392 = arith.constant 1.000000e+00 : f32
    %1163 = vector.broadcast %cst_392 : f32 to vector<2x32xf32>
    %1164 = arith.addf %1162, %1163 : vector<2x32xf32>
    %cst_393 = arith.constant 5.000000e-01 : f32
    %1165 = vector.broadcast %cst_393 : f32 to vector<2x32xf32>
    %1166 = arith.mulf %1165, %1164 : vector<2x32xf32>
    %1167 = vector.extract_strided_slice %1116 {offsets = [0, 160], sizes = [2, 32], strides = [1, 1]} : vector<2x192xf32> to vector<2x32xf32>
    %1168 = vector.extract_strided_slice %1108 {offsets = [0, 64], sizes = [2, 32], strides = [1, 1]} : vector<2x96xf32> to vector<2x32xf32>
    %1169 = arith.mulf %1156, %1168 : vector<2x32xf32>
    %1170 = arith.addf %1167, %1169 : vector<2x32xf32>
    %1171 = math.tanh %1170 : vector<2x32xf32>
    %cst_394 = arith.constant 1.000000e+00 : f32
    %1172 = vector.broadcast %cst_394 : f32 to vector<2x32xf32>
    %1173 = arith.subf %1172, %1166 : vector<2x32xf32>
    %1174 = arith.mulf %1173, %1171 : vector<2x32xf32>
    %1175 = arith.mulf %1166, %1093 : vector<2x32xf32>
    %1176 = arith.addf %1174, %1175 : vector<2x32xf32>
    %c2_i32_395 = arith.constant 2 : i32
    %1177 = arith.muli %c2_i32_395, %c13_i32 : i32
    %c15_i32_396 = arith.constant 15 : i32
    %1178 = arith.cmpi slt, %1177, %c15_i32_396 : i32
    %c2_i32_397 = arith.constant 2 : i32
    %1179 = arith.muli %c2_i32_397, %c13_i32 : i32
    %c15_i32_398 = arith.constant 15 : i32
    %1180 = arith.cmpi sgt, %1179, %c15_i32_398 : i32
    %1181 = arith.extui %1178 : i1 to i32
    %c0_i32_399 = arith.constant 0 : i32
    %1182 = arith.cmpi ne, %1181, %c0_i32_399 : i32
    scf.if %1182 {
      %c1_i32_499 = arith.constant 1 : i32
      %1415 = arith.addi %c1_i32_499, %c13_i32 : i32
      %1416 = arith.index_cast %1415 : i32 to index
      %c0_500 = arith.constant 0 : index
      %c0_501 = arith.constant 0 : index
      %1417 = vector.load %arg16[%1416, %c0_500, %c0_501] : memref<18x2x32xf32, #tpu.memory_space<vmem>>, vector<1x2x32xf32>
      %1418 = vector.shape_cast %1417 : vector<1x2x32xf32> to vector<2x32xf32>
      %1419 = vector.shape_cast %1146 : vector<2x32xf32> to vector<1x2x32xf32>
      tpu.vector_store %arg16[%1416, %c0_500, %c0_501], %1419 {strides = array<i32>} : memref<18x2x32xf32, #tpu.memory_space<vmem>>, vector<1x2x32xf32>,
      %c1_i32_502 = arith.constant 1 : i32
      %1420 = arith.addi %c1_i32_502, %1102 : i32
      %1421 = arith.index_cast %1420 : i32 to index
      %c0_503 = arith.constant 0 : index
      %c0_504 = arith.constant 0 : index
      %1422 = vector.load %arg16[%1421, %c0_503, %c0_504] : memref<18x2x32xf32, #tpu.memory_space<vmem>>, vector<1x2x32xf32>
      %1423 = vector.shape_cast %1422 : vector<1x2x32xf32> to vector<2x32xf32>
      %1424 = vector.shape_cast %1176 : vector<2x32xf32> to vector<1x2x32xf32>
      tpu.vector_store %arg16[%1421, %c0_503, %c0_504], %1424 {strides = array<i32>} : memref<18x2x32xf32, #tpu.memory_space<vmem>>, vector<1x2x32xf32>,
    } else {
    }
    %1183 = arith.extui %1180 : i1 to i32
    %c0_i32_400 = arith.constant 0 : i32
    %1184 = arith.cmpi ne, %1183, %c0_i32_400 : i32
    scf.if %1184 {
      %c1_i32_499 = arith.constant 1 : i32
      %1415 = arith.addi %c1_i32_499, %c13_i32 : i32
      %1416 = arith.index_cast %1415 : i32 to index
      %c0_500 = arith.constant 0 : index
      %c0_501 = arith.constant 0 : index
      %1417 = vector.load %arg16[%1416, %c0_500, %c0_501] : memref<18x2x32xf32, #tpu.memory_space<vmem>>, vector<1x2x32xf32>
      %1418 = vector.shape_cast %1417 : vector<1x2x32xf32> to vector<2x32xf32>
      %1419 = arith.addf %1418, %1146 : vector<2x32xf32>
      %c1_i32_502 = arith.constant 1 : i32
      %1420 = arith.addi %c1_i32_502, %c13_i32 : i32
      %1421 = arith.index_cast %1420 : i32 to index
      %c0_503 = arith.constant 0 : index
      %c0_504 = arith.constant 0 : index
      %1422 = vector.load %arg16[%1421, %c0_503, %c0_504] : memref<18x2x32xf32, #tpu.memory_space<vmem>>, vector<1x2x32xf32>
      %1423 = vector.shape_cast %1422 : vector<1x2x32xf32> to vector<2x32xf32>
      %1424 = vector.shape_cast %1419 : vector<2x32xf32> to vector<1x2x32xf32>
      tpu.vector_store %arg16[%1421, %c0_503, %c0_504], %1424 {strides = array<i32>} : memref<18x2x32xf32, #tpu.memory_space<vmem>>, vector<1x2x32xf32>,
      %c1_i32_505 = arith.constant 1 : i32
      %1425 = arith.addi %c1_i32_505, %1102 : i32
      %1426 = arith.index_cast %1425 : i32 to index
      %c0_506 = arith.constant 0 : index
      %c0_507 = arith.constant 0 : index
      %1427 = vector.load %arg16[%1426, %c0_506, %c0_507] : memref<18x2x32xf32, #tpu.memory_space<vmem>>, vector<1x2x32xf32>
      %1428 = vector.shape_cast %1427 : vector<1x2x32xf32> to vector<2x32xf32>
      %1429 = arith.addf %1428, %1176 : vector<2x32xf32>
      %c1_i32_508 = arith.constant 1 : i32
      %1430 = arith.addi %c1_i32_508, %1102 : i32
      %1431 = arith.index_cast %1430 : i32 to index
      %c0_509 = arith.constant 0 : index
      %c0_510 = arith.constant 0 : index
      %1432 = vector.load %arg16[%1431, %c0_509, %c0_510] : memref<18x2x32xf32, #tpu.memory_space<vmem>>, vector<1x2x32xf32>
      %1433 = vector.shape_cast %1432 : vector<1x2x32xf32> to vector<2x32xf32>
      %1434 = vector.shape_cast %1429 : vector<2x32xf32> to vector<1x2x32xf32>
      tpu.vector_store %arg16[%1431, %c0_509, %c0_510], %1434 {strides = array<i32>} : memref<18x2x32xf32, #tpu.memory_space<vmem>>, vector<1x2x32xf32>,
    } else {
    }
    %c14_i32 = arith.constant 14 : i32
    %c15_i32_401 = arith.constant 15 : i32
    %1185 = arith.subi %c15_i32_401, %c14_i32 : i32
    %1186 = arith.truncf %1146 : vector<2x32xf32> to vector<2x32xbf16>
    %cst_402 = arith.constant dense<0.000000e+00> : vector<2x96xf32>
    %1187 = tpu.matmul %1186, %14, %cst_402 {dimension_numbers = #tpu.dot_dimension_numbers<[1], [0], [0], [1], [0, 0, 1, 1], [], []>} : vector<2x32xbf16>, vector<32x96xbf16>, vector<2x96xf32> -> vector<2x96xf32>
    %1188 = arith.addf %1187, %18 : vector<2x96xf32>
    %1189 = arith.truncf %1176 : vector<2x32xf32> to vector<2x32xbf16>
    %cst_403 = arith.constant dense<0.000000e+00> : vector<2x96xf32>
    %1190 = tpu.matmul %1189, %15, %cst_403 {dimension_numbers = #tpu.dot_dimension_numbers<[1], [0], [0], [1], [0, 0, 1, 1], [], []>} : vector<2x32xbf16>, vector<32x96xbf16>, vector<2x96xf32> -> vector<2x96xf32>
    %1191 = arith.addf %1190, %21 : vector<2x96xf32>
    %1192 = arith.index_cast %c14_i32 : i32 to index
    %c0_404 = arith.constant 0 : index
    %c0_405 = arith.constant 0 : index
    %1193 = vector.load %arg15[%1192, %c0_404, %c0_405] : memref<16x2x192xbf16, #tpu.memory_space<vmem>>, vector<1x2x192xbf16>
    %1194 = vector.shape_cast %1193 : vector<1x2x192xbf16> to vector<2x192xbf16>
    %1195 = arith.extf %1194 : vector<2x192xbf16> to vector<2x192xf32>
    %1196 = arith.index_cast %1185 : i32 to index
    %c0_406 = arith.constant 0 : index
    %c0_407 = arith.constant 0 : index
    %1197 = vector.load %arg15[%1196, %c0_406, %c0_407] : memref<16x2x192xbf16, #tpu.memory_space<vmem>>, vector<1x2x192xbf16>
    %1198 = vector.shape_cast %1197 : vector<1x2x192xbf16> to vector<2x192xbf16>
    %1199 = arith.extf %1198 : vector<2x192xbf16> to vector<2x192xf32>
    %1200 = vector.extract_strided_slice %1195 {offsets = [0, 0], sizes = [2, 32], strides = [1, 1]} : vector<2x192xf32> to vector<2x32xf32>
    %1201 = vector.extract_strided_slice %1188 {offsets = [0, 0], sizes = [2, 32], strides = [1, 1]} : vector<2x96xf32> to vector<2x32xf32>
    %1202 = arith.addf %1200, %1201 : vector<2x32xf32>
    %cst_408 = arith.constant 5.000000e-01 : f32
    %1203 = vector.broadcast %cst_408 : f32 to vector<2x32xf32>
    %1204 = arith.mulf %1203, %1202 : vector<2x32xf32>
    %1205 = math.tanh %1204 : vector<2x32xf32>
    %cst_409 = arith.constant 1.000000e+00 : f32
    %1206 = vector.broadcast %cst_409 : f32 to vector<2x32xf32>
    %1207 = arith.addf %1205, %1206 : vector<2x32xf32>
    %cst_410 = arith.constant 5.000000e-01 : f32
    %1208 = vector.broadcast %cst_410 : f32 to vector<2x32xf32>
    %1209 = arith.mulf %1208, %1207 : vector<2x32xf32>
    %1210 = vector.extract_strided_slice %1195 {offsets = [0, 32], sizes = [2, 32], strides = [1, 1]} : vector<2x192xf32> to vector<2x32xf32>
    %1211 = vector.extract_strided_slice %1188 {offsets = [0, 32], sizes = [2, 32], strides = [1, 1]} : vector<2x96xf32> to vector<2x32xf32>
    %1212 = arith.addf %1210, %1211 : vector<2x32xf32>
    %cst_411 = arith.constant 5.000000e-01 : f32
    %1213 = vector.broadcast %cst_411 : f32 to vector<2x32xf32>
    %1214 = arith.mulf %1213, %1212 : vector<2x32xf32>
    %1215 = math.tanh %1214 : vector<2x32xf32>
    %cst_412 = arith.constant 1.000000e+00 : f32
    %1216 = vector.broadcast %cst_412 : f32 to vector<2x32xf32>
    %1217 = arith.addf %1215, %1216 : vector<2x32xf32>
    %cst_413 = arith.constant 5.000000e-01 : f32
    %1218 = vector.broadcast %cst_413 : f32 to vector<2x32xf32>
    %1219 = arith.mulf %1218, %1217 : vector<2x32xf32>
    %1220 = vector.extract_strided_slice %1195 {offsets = [0, 64], sizes = [2, 32], strides = [1, 1]} : vector<2x192xf32> to vector<2x32xf32>
    %1221 = vector.extract_strided_slice %1188 {offsets = [0, 64], sizes = [2, 32], strides = [1, 1]} : vector<2x96xf32> to vector<2x32xf32>
    %1222 = arith.mulf %1209, %1221 : vector<2x32xf32>
    %1223 = arith.addf %1220, %1222 : vector<2x32xf32>
    %1224 = math.tanh %1223 : vector<2x32xf32>
    %cst_414 = arith.constant 1.000000e+00 : f32
    %1225 = vector.broadcast %cst_414 : f32 to vector<2x32xf32>
    %1226 = arith.subf %1225, %1219 : vector<2x32xf32>
    %1227 = arith.mulf %1226, %1224 : vector<2x32xf32>
    %1228 = arith.mulf %1219, %1146 : vector<2x32xf32>
    %1229 = arith.addf %1227, %1228 : vector<2x32xf32>
    %1230 = vector.extract_strided_slice %1199 {offsets = [0, 96], sizes = [2, 32], strides = [1, 1]} : vector<2x192xf32> to vector<2x32xf32>
    %1231 = vector.extract_strided_slice %1191 {offsets = [0, 0], sizes = [2, 32], strides = [1, 1]} : vector<2x96xf32> to vector<2x32xf32>
    %1232 = arith.addf %1230, %1231 : vector<2x32xf32>
    %cst_415 = arith.constant 5.000000e-01 : f32
    %1233 = vector.broadcast %cst_415 : f32 to vector<2x32xf32>
    %1234 = arith.mulf %1233, %1232 : vector<2x32xf32>
    %1235 = math.tanh %1234 : vector<2x32xf32>
    %cst_416 = arith.constant 1.000000e+00 : f32
    %1236 = vector.broadcast %cst_416 : f32 to vector<2x32xf32>
    %1237 = arith.addf %1235, %1236 : vector<2x32xf32>
    %cst_417 = arith.constant 5.000000e-01 : f32
    %1238 = vector.broadcast %cst_417 : f32 to vector<2x32xf32>
    %1239 = arith.mulf %1238, %1237 : vector<2x32xf32>
    %1240 = vector.extract_strided_slice %1199 {offsets = [0, 128], sizes = [2, 32], strides = [1, 1]} : vector<2x192xf32> to vector<2x32xf32>
    %1241 = vector.extract_strided_slice %1191 {offsets = [0, 32], sizes = [2, 32], strides = [1, 1]} : vector<2x96xf32> to vector<2x32xf32>
    %1242 = arith.addf %1240, %1241 : vector<2x32xf32>
    %cst_418 = arith.constant 5.000000e-01 : f32
    %1243 = vector.broadcast %cst_418 : f32 to vector<2x32xf32>
    %1244 = arith.mulf %1243, %1242 : vector<2x32xf32>
    %1245 = math.tanh %1244 : vector<2x32xf32>
    %cst_419 = arith.constant 1.000000e+00 : f32
    %1246 = vector.broadcast %cst_419 : f32 to vector<2x32xf32>
    %1247 = arith.addf %1245, %1246 : vector<2x32xf32>
    %cst_420 = arith.constant 5.000000e-01 : f32
    %1248 = vector.broadcast %cst_420 : f32 to vector<2x32xf32>
    %1249 = arith.mulf %1248, %1247 : vector<2x32xf32>
    %1250 = vector.extract_strided_slice %1199 {offsets = [0, 160], sizes = [2, 32], strides = [1, 1]} : vector<2x192xf32> to vector<2x32xf32>
    %1251 = vector.extract_strided_slice %1191 {offsets = [0, 64], sizes = [2, 32], strides = [1, 1]} : vector<2x96xf32> to vector<2x32xf32>
    %1252 = arith.mulf %1239, %1251 : vector<2x32xf32>
    %1253 = arith.addf %1250, %1252 : vector<2x32xf32>
    %1254 = math.tanh %1253 : vector<2x32xf32>
    %cst_421 = arith.constant 1.000000e+00 : f32
    %1255 = vector.broadcast %cst_421 : f32 to vector<2x32xf32>
    %1256 = arith.subf %1255, %1249 : vector<2x32xf32>
    %1257 = arith.mulf %1256, %1254 : vector<2x32xf32>
    %1258 = arith.mulf %1249, %1176 : vector<2x32xf32>
    %1259 = arith.addf %1257, %1258 : vector<2x32xf32>
    %c2_i32_422 = arith.constant 2 : i32
    %1260 = arith.muli %c2_i32_422, %c14_i32 : i32
    %c15_i32_423 = arith.constant 15 : i32
    %1261 = arith.cmpi slt, %1260, %c15_i32_423 : i32
    %c2_i32_424 = arith.constant 2 : i32
    %1262 = arith.muli %c2_i32_424, %c14_i32 : i32
    %c15_i32_425 = arith.constant 15 : i32
    %1263 = arith.cmpi sgt, %1262, %c15_i32_425 : i32
    %1264 = arith.extui %1261 : i1 to i32
    %c0_i32_426 = arith.constant 0 : i32
    %1265 = arith.cmpi ne, %1264, %c0_i32_426 : i32
    scf.if %1265 {
      %c1_i32_499 = arith.constant 1 : i32
      %1415 = arith.addi %c1_i32_499, %c14_i32 : i32
      %1416 = arith.index_cast %1415 : i32 to index
      %c0_500 = arith.constant 0 : index
      %c0_501 = arith.constant 0 : index
      %1417 = vector.load %arg16[%1416, %c0_500, %c0_501] : memref<18x2x32xf32, #tpu.memory_space<vmem>>, vector<1x2x32xf32>
      %1418 = vector.shape_cast %1417 : vector<1x2x32xf32> to vector<2x32xf32>
      %1419 = vector.shape_cast %1229 : vector<2x32xf32> to vector<1x2x32xf32>
      tpu.vector_store %arg16[%1416, %c0_500, %c0_501], %1419 {strides = array<i32>} : memref<18x2x32xf32, #tpu.memory_space<vmem>>, vector<1x2x32xf32>,
      %c1_i32_502 = arith.constant 1 : i32
      %1420 = arith.addi %c1_i32_502, %1185 : i32
      %1421 = arith.index_cast %1420 : i32 to index
      %c0_503 = arith.constant 0 : index
      %c0_504 = arith.constant 0 : index
      %1422 = vector.load %arg16[%1421, %c0_503, %c0_504] : memref<18x2x32xf32, #tpu.memory_space<vmem>>, vector<1x2x32xf32>
      %1423 = vector.shape_cast %1422 : vector<1x2x32xf32> to vector<2x32xf32>
      %1424 = vector.shape_cast %1259 : vector<2x32xf32> to vector<1x2x32xf32>
      tpu.vector_store %arg16[%1421, %c0_503, %c0_504], %1424 {strides = array<i32>} : memref<18x2x32xf32, #tpu.memory_space<vmem>>, vector<1x2x32xf32>,
    } else {
    }
    %1266 = arith.extui %1263 : i1 to i32
    %c0_i32_427 = arith.constant 0 : i32
    %1267 = arith.cmpi ne, %1266, %c0_i32_427 : i32
    scf.if %1267 {
      %c1_i32_499 = arith.constant 1 : i32
      %1415 = arith.addi %c1_i32_499, %c14_i32 : i32
      %1416 = arith.index_cast %1415 : i32 to index
      %c0_500 = arith.constant 0 : index
      %c0_501 = arith.constant 0 : index
      %1417 = vector.load %arg16[%1416, %c0_500, %c0_501] : memref<18x2x32xf32, #tpu.memory_space<vmem>>, vector<1x2x32xf32>
      %1418 = vector.shape_cast %1417 : vector<1x2x32xf32> to vector<2x32xf32>
      %1419 = arith.addf %1418, %1229 : vector<2x32xf32>
      %c1_i32_502 = arith.constant 1 : i32
      %1420 = arith.addi %c1_i32_502, %c14_i32 : i32
      %1421 = arith.index_cast %1420 : i32 to index
      %c0_503 = arith.constant 0 : index
      %c0_504 = arith.constant 0 : index
      %1422 = vector.load %arg16[%1421, %c0_503, %c0_504] : memref<18x2x32xf32, #tpu.memory_space<vmem>>, vector<1x2x32xf32>
      %1423 = vector.shape_cast %1422 : vector<1x2x32xf32> to vector<2x32xf32>
      %1424 = vector.shape_cast %1419 : vector<2x32xf32> to vector<1x2x32xf32>
      tpu.vector_store %arg16[%1421, %c0_503, %c0_504], %1424 {strides = array<i32>} : memref<18x2x32xf32, #tpu.memory_space<vmem>>, vector<1x2x32xf32>,
      %c1_i32_505 = arith.constant 1 : i32
      %1425 = arith.addi %c1_i32_505, %1185 : i32
      %1426 = arith.index_cast %1425 : i32 to index
      %c0_506 = arith.constant 0 : index
      %c0_507 = arith.constant 0 : index
      %1427 = vector.load %arg16[%1426, %c0_506, %c0_507] : memref<18x2x32xf32, #tpu.memory_space<vmem>>, vector<1x2x32xf32>
      %1428 = vector.shape_cast %1427 : vector<1x2x32xf32> to vector<2x32xf32>
      %1429 = arith.addf %1428, %1259 : vector<2x32xf32>
      %c1_i32_508 = arith.constant 1 : i32
      %1430 = arith.addi %c1_i32_508, %1185 : i32
      %1431 = arith.index_cast %1430 : i32 to index
      %c0_509 = arith.constant 0 : index
      %c0_510 = arith.constant 0 : index
      %1432 = vector.load %arg16[%1431, %c0_509, %c0_510] : memref<18x2x32xf32, #tpu.memory_space<vmem>>, vector<1x2x32xf32>
      %1433 = vector.shape_cast %1432 : vector<1x2x32xf32> to vector<2x32xf32>
      %1434 = vector.shape_cast %1429 : vector<2x32xf32> to vector<1x2x32xf32>
      tpu.vector_store %arg16[%1431, %c0_509, %c0_510], %1434 {strides = array<i32>} : memref<18x2x32xf32, #tpu.memory_space<vmem>>, vector<1x2x32xf32>,
    } else {
    }
    %c15_i32_428 = arith.constant 15 : i32
    %c15_i32_429 = arith.constant 15 : i32
    %1268 = arith.subi %c15_i32_429, %c15_i32_428 : i32
    %1269 = arith.truncf %1229 : vector<2x32xf32> to vector<2x32xbf16>
    %cst_430 = arith.constant dense<0.000000e+00> : vector<2x96xf32>
    %1270 = tpu.matmul %1269, %14, %cst_430 {dimension_numbers = #tpu.dot_dimension_numbers<[1], [0], [0], [1], [0, 0, 1, 1], [], []>} : vector<2x32xbf16>, vector<32x96xbf16>, vector<2x96xf32> -> vector<2x96xf32>
    %1271 = arith.addf %1270, %18 : vector<2x96xf32>
    %1272 = arith.truncf %1259 : vector<2x32xf32> to vector<2x32xbf16>
    %cst_431 = arith.constant dense<0.000000e+00> : vector<2x96xf32>
    %1273 = tpu.matmul %1272, %15, %cst_431 {dimension_numbers = #tpu.dot_dimension_numbers<[1], [0], [0], [1], [0, 0, 1, 1], [], []>} : vector<2x32xbf16>, vector<32x96xbf16>, vector<2x96xf32> -> vector<2x96xf32>
    %1274 = arith.addf %1273, %21 : vector<2x96xf32>
    %1275 = arith.index_cast %c15_i32_428 : i32 to index
    %c0_432 = arith.constant 0 : index
    %c0_433 = arith.constant 0 : index
    %1276 = vector.load %arg15[%1275, %c0_432, %c0_433] : memref<16x2x192xbf16, #tpu.memory_space<vmem>>, vector<1x2x192xbf16>
    %1277 = vector.shape_cast %1276 : vector<1x2x192xbf16> to vector<2x192xbf16>
    %1278 = arith.extf %1277 : vector<2x192xbf16> to vector<2x192xf32>
    %1279 = arith.index_cast %1268 : i32 to index
    %c0_434 = arith.constant 0 : index
    %c0_435 = arith.constant 0 : index
    %1280 = vector.load %arg15[%1279, %c0_434, %c0_435] : memref<16x2x192xbf16, #tpu.memory_space<vmem>>, vector<1x2x192xbf16>
    %1281 = vector.shape_cast %1280 : vector<1x2x192xbf16> to vector<2x192xbf16>
    %1282 = arith.extf %1281 : vector<2x192xbf16> to vector<2x192xf32>
    %1283 = vector.extract_strided_slice %1278 {offsets = [0, 0], sizes = [2, 32], strides = [1, 1]} : vector<2x192xf32> to vector<2x32xf32>
    %1284 = vector.extract_strided_slice %1271 {offsets = [0, 0], sizes = [2, 32], strides = [1, 1]} : vector<2x96xf32> to vector<2x32xf32>
    %1285 = arith.addf %1283, %1284 : vector<2x32xf32>
    %cst_436 = arith.constant 5.000000e-01 : f32
    %1286 = vector.broadcast %cst_436 : f32 to vector<2x32xf32>
    %1287 = arith.mulf %1286, %1285 : vector<2x32xf32>
    %1288 = math.tanh %1287 : vector<2x32xf32>
    %cst_437 = arith.constant 1.000000e+00 : f32
    %1289 = vector.broadcast %cst_437 : f32 to vector<2x32xf32>
    %1290 = arith.addf %1288, %1289 : vector<2x32xf32>
    %cst_438 = arith.constant 5.000000e-01 : f32
    %1291 = vector.broadcast %cst_438 : f32 to vector<2x32xf32>
    %1292 = arith.mulf %1291, %1290 : vector<2x32xf32>
    %1293 = vector.extract_strided_slice %1278 {offsets = [0, 32], sizes = [2, 32], strides = [1, 1]} : vector<2x192xf32> to vector<2x32xf32>
    %1294 = vector.extract_strided_slice %1271 {offsets = [0, 32], sizes = [2, 32], strides = [1, 1]} : vector<2x96xf32> to vector<2x32xf32>
    %1295 = arith.addf %1293, %1294 : vector<2x32xf32>
    %cst_439 = arith.constant 5.000000e-01 : f32
    %1296 = vector.broadcast %cst_439 : f32 to vector<2x32xf32>
    %1297 = arith.mulf %1296, %1295 : vector<2x32xf32>
    %1298 = math.tanh %1297 : vector<2x32xf32>
    %cst_440 = arith.constant 1.000000e+00 : f32
    %1299 = vector.broadcast %cst_440 : f32 to vector<2x32xf32>
    %1300 = arith.addf %1298, %1299 : vector<2x32xf32>
    %cst_441 = arith.constant 5.000000e-01 : f32
    %1301 = vector.broadcast %cst_441 : f32 to vector<2x32xf32>
    %1302 = arith.mulf %1301, %1300 : vector<2x32xf32>
    %1303 = vector.extract_strided_slice %1278 {offsets = [0, 64], sizes = [2, 32], strides = [1, 1]} : vector<2x192xf32> to vector<2x32xf32>
    %1304 = vector.extract_strided_slice %1271 {offsets = [0, 64], sizes = [2, 32], strides = [1, 1]} : vector<2x96xf32> to vector<2x32xf32>
    %1305 = arith.mulf %1292, %1304 : vector<2x32xf32>
    %1306 = arith.addf %1303, %1305 : vector<2x32xf32>
    %1307 = math.tanh %1306 : vector<2x32xf32>
    %cst_442 = arith.constant 1.000000e+00 : f32
    %1308 = vector.broadcast %cst_442 : f32 to vector<2x32xf32>
    %1309 = arith.subf %1308, %1302 : vector<2x32xf32>
    %1310 = arith.mulf %1309, %1307 : vector<2x32xf32>
    %1311 = arith.mulf %1302, %1229 : vector<2x32xf32>
    %1312 = arith.addf %1310, %1311 : vector<2x32xf32>
    %1313 = vector.extract_strided_slice %1282 {offsets = [0, 96], sizes = [2, 32], strides = [1, 1]} : vector<2x192xf32> to vector<2x32xf32>
    %1314 = vector.extract_strided_slice %1274 {offsets = [0, 0], sizes = [2, 32], strides = [1, 1]} : vector<2x96xf32> to vector<2x32xf32>
    %1315 = arith.addf %1313, %1314 : vector<2x32xf32>
    %cst_443 = arith.constant 5.000000e-01 : f32
    %1316 = vector.broadcast %cst_443 : f32 to vector<2x32xf32>
    %1317 = arith.mulf %1316, %1315 : vector<2x32xf32>
    %1318 = math.tanh %1317 : vector<2x32xf32>
    %cst_444 = arith.constant 1.000000e+00 : f32
    %1319 = vector.broadcast %cst_444 : f32 to vector<2x32xf32>
    %1320 = arith.addf %1318, %1319 : vector<2x32xf32>
    %cst_445 = arith.constant 5.000000e-01 : f32
    %1321 = vector.broadcast %cst_445 : f32 to vector<2x32xf32>
    %1322 = arith.mulf %1321, %1320 : vector<2x32xf32>
    %1323 = vector.extract_strided_slice %1282 {offsets = [0, 128], sizes = [2, 32], strides = [1, 1]} : vector<2x192xf32> to vector<2x32xf32>
    %1324 = vector.extract_strided_slice %1274 {offsets = [0, 32], sizes = [2, 32], strides = [1, 1]} : vector<2x96xf32> to vector<2x32xf32>
    %1325 = arith.addf %1323, %1324 : vector<2x32xf32>
    %cst_446 = arith.constant 5.000000e-01 : f32
    %1326 = vector.broadcast %cst_446 : f32 to vector<2x32xf32>
    %1327 = arith.mulf %1326, %1325 : vector<2x32xf32>
    %1328 = math.tanh %1327 : vector<2x32xf32>
    %cst_447 = arith.constant 1.000000e+00 : f32
    %1329 = vector.broadcast %cst_447 : f32 to vector<2x32xf32>
    %1330 = arith.addf %1328, %1329 : vector<2x32xf32>
    %cst_448 = arith.constant 5.000000e-01 : f32
    %1331 = vector.broadcast %cst_448 : f32 to vector<2x32xf32>
    %1332 = arith.mulf %1331, %1330 : vector<2x32xf32>
    %1333 = vector.extract_strided_slice %1282 {offsets = [0, 160], sizes = [2, 32], strides = [1, 1]} : vector<2x192xf32> to vector<2x32xf32>
    %1334 = vector.extract_strided_slice %1274 {offsets = [0, 64], sizes = [2, 32], strides = [1, 1]} : vector<2x96xf32> to vector<2x32xf32>
    %1335 = arith.mulf %1322, %1334 : vector<2x32xf32>
    %1336 = arith.addf %1333, %1335 : vector<2x32xf32>
    %1337 = math.tanh %1336 : vector<2x32xf32>
    %cst_449 = arith.constant 1.000000e+00 : f32
    %1338 = vector.broadcast %cst_449 : f32 to vector<2x32xf32>
    %1339 = arith.subf %1338, %1332 : vector<2x32xf32>
    %1340 = arith.mulf %1339, %1337 : vector<2x32xf32>
    %1341 = arith.mulf %1332, %1259 : vector<2x32xf32>
    %1342 = arith.addf %1340, %1341 : vector<2x32xf32>
    %c2_i32_450 = arith.constant 2 : i32
    %1343 = arith.muli %c2_i32_450, %c15_i32_428 : i32
    %c15_i32_451 = arith.constant 15 : i32
    %1344 = arith.cmpi slt, %1343, %c15_i32_451 : i32
    %c2_i32_452 = arith.constant 2 : i32
    %1345 = arith.muli %c2_i32_452, %c15_i32_428 : i32
    %c15_i32_453 = arith.constant 15 : i32
    %1346 = arith.cmpi sgt, %1345, %c15_i32_453 : i32
    %1347 = arith.extui %1344 : i1 to i32
    %c0_i32_454 = arith.constant 0 : i32
    %1348 = arith.cmpi ne, %1347, %c0_i32_454 : i32
    scf.if %1348 {
      %c1_i32_499 = arith.constant 1 : i32
      %1415 = arith.addi %c1_i32_499, %c15_i32_428 : i32
      %1416 = arith.index_cast %1415 : i32 to index
      %c0_500 = arith.constant 0 : index
      %c0_501 = arith.constant 0 : index
      %1417 = vector.load %arg16[%1416, %c0_500, %c0_501] : memref<18x2x32xf32, #tpu.memory_space<vmem>>, vector<1x2x32xf32>
      %1418 = vector.shape_cast %1417 : vector<1x2x32xf32> to vector<2x32xf32>
      %1419 = vector.shape_cast %1312 : vector<2x32xf32> to vector<1x2x32xf32>
      tpu.vector_store %arg16[%1416, %c0_500, %c0_501], %1419 {strides = array<i32>} : memref<18x2x32xf32, #tpu.memory_space<vmem>>, vector<1x2x32xf32>,
      %c1_i32_502 = arith.constant 1 : i32
      %1420 = arith.addi %c1_i32_502, %1268 : i32
      %1421 = arith.index_cast %1420 : i32 to index
      %c0_503 = arith.constant 0 : index
      %c0_504 = arith.constant 0 : index
      %1422 = vector.load %arg16[%1421, %c0_503, %c0_504] : memref<18x2x32xf32, #tpu.memory_space<vmem>>, vector<1x2x32xf32>
      %1423 = vector.shape_cast %1422 : vector<1x2x32xf32> to vector<2x32xf32>
      %1424 = vector.shape_cast %1342 : vector<2x32xf32> to vector<1x2x32xf32>
      tpu.vector_store %arg16[%1421, %c0_503, %c0_504], %1424 {strides = array<i32>} : memref<18x2x32xf32, #tpu.memory_space<vmem>>, vector<1x2x32xf32>,
    } else {
    }
    %1349 = arith.extui %1346 : i1 to i32
    %c0_i32_455 = arith.constant 0 : i32
    %1350 = arith.cmpi ne, %1349, %c0_i32_455 : i32
    scf.if %1350 {
      %c1_i32_499 = arith.constant 1 : i32
      %1415 = arith.addi %c1_i32_499, %c15_i32_428 : i32
      %1416 = arith.index_cast %1415 : i32 to index
      %c0_500 = arith.constant 0 : index
      %c0_501 = arith.constant 0 : index
      %1417 = vector.load %arg16[%1416, %c0_500, %c0_501] : memref<18x2x32xf32, #tpu.memory_space<vmem>>, vector<1x2x32xf32>
      %1418 = vector.shape_cast %1417 : vector<1x2x32xf32> to vector<2x32xf32>
      %1419 = arith.addf %1418, %1312 : vector<2x32xf32>
      %c1_i32_502 = arith.constant 1 : i32
      %1420 = arith.addi %c1_i32_502, %c15_i32_428 : i32
      %1421 = arith.index_cast %1420 : i32 to index
      %c0_503 = arith.constant 0 : index
      %c0_504 = arith.constant 0 : index
      %1422 = vector.load %arg16[%1421, %c0_503, %c0_504] : memref<18x2x32xf32, #tpu.memory_space<vmem>>, vector<1x2x32xf32>
      %1423 = vector.shape_cast %1422 : vector<1x2x32xf32> to vector<2x32xf32>
      %1424 = vector.shape_cast %1419 : vector<2x32xf32> to vector<1x2x32xf32>
      tpu.vector_store %arg16[%1421, %c0_503, %c0_504], %1424 {strides = array<i32>} : memref<18x2x32xf32, #tpu.memory_space<vmem>>, vector<1x2x32xf32>,
      %c1_i32_505 = arith.constant 1 : i32
      %1425 = arith.addi %c1_i32_505, %1268 : i32
      %1426 = arith.index_cast %1425 : i32 to index
      %c0_506 = arith.constant 0 : index
      %c0_507 = arith.constant 0 : index
      %1427 = vector.load %arg16[%1426, %c0_506, %c0_507] : memref<18x2x32xf32, #tpu.memory_space<vmem>>, vector<1x2x32xf32>
      %1428 = vector.shape_cast %1427 : vector<1x2x32xf32> to vector<2x32xf32>
      %1429 = arith.addf %1428, %1342 : vector<2x32xf32>
      %c1_i32_508 = arith.constant 1 : i32
      %1430 = arith.addi %c1_i32_508, %1268 : i32
      %1431 = arith.index_cast %1430 : i32 to index
      %c0_509 = arith.constant 0 : index
      %c0_510 = arith.constant 0 : index
      %1432 = vector.load %arg16[%1431, %c0_509, %c0_510] : memref<18x2x32xf32, #tpu.memory_space<vmem>>, vector<1x2x32xf32>
      %1433 = vector.shape_cast %1432 : vector<1x2x32xf32> to vector<2x32xf32>
      %1434 = vector.shape_cast %1429 : vector<2x32xf32> to vector<1x2x32xf32>
      tpu.vector_store %arg16[%1431, %c0_509, %c0_510], %1434 {strides = array<i32>} : memref<18x2x32xf32, #tpu.memory_space<vmem>>, vector<1x2x32xf32>,
    } else {
    }
    %c16_i32 = arith.constant 16 : i32
    %c0_456 = arith.constant 0 : index
    %c0_457 = arith.constant 0 : index
    %c0_458 = arith.constant 0 : index
    %1351 = vector.load %arg16[%c0_456, %c0_457, %c0_458] : memref<18x2x32xf32, #tpu.memory_space<vmem>>, vector<18x2x32xf32>
    %1352 = arith.truncf %1351 : vector<18x2x32xf32> to vector<18x2x32xbf16>
    %1353 = vector.extract_strided_slice %1352 {offsets = [0, 0, 0], sizes = [16, 2, 32], strides = [1, 1, 1]} : vector<18x2x32xbf16> to vector<16x2x32xbf16>
    %1354 = vector.shape_cast %1353 : vector<16x2x32xbf16> to vector<32x32xbf16>
    %c0_459 = arith.constant 0 : index
    %c0_460 = arith.constant 0 : index
    %c0_461 = arith.constant 0 : index
    %1355 = vector.load %arg8[%c0_459, %c0_460, %c0_461] : memref<3x32x32xbf16, #tpu.memory_space<vmem>>, vector<1x32x32xbf16>
    %1356 = vector.shape_cast %1355 : vector<1x32x32xbf16> to vector<32x32xbf16>
    %cst_462 = arith.constant dense<0.000000e+00> : vector<32x32xf32>
    %1357 = tpu.matmul %1354, %1356, %cst_462 {dimension_numbers = #tpu.dot_dimension_numbers<[1], [0], [0], [1], [0, 0, 1, 1], [], []>} : vector<32x32xbf16>, vector<32x32xbf16>, vector<32x32xf32> -> vector<32x32xf32>
    %1358 = vector.extract_strided_slice %1352 {offsets = [1, 0, 0], sizes = [16, 2, 32], strides = [1, 1, 1]} : vector<18x2x32xbf16> to vector<16x2x32xbf16>
    %1359 = vector.shape_cast %1358 : vector<16x2x32xbf16> to vector<32x32xbf16>
    %c1 = arith.constant 1 : index
    %c0_463 = arith.constant 0 : index
    %c0_464 = arith.constant 0 : index
    %1360 = vector.load %arg8[%c1, %c0_463, %c0_464] : memref<3x32x32xbf16, #tpu.memory_space<vmem>>, vector<1x32x32xbf16>
    %1361 = vector.shape_cast %1360 : vector<1x32x32xbf16> to vector<32x32xbf16>
    %cst_465 = arith.constant dense<0.000000e+00> : vector<32x32xf32>
    %1362 = tpu.matmul %1359, %1361, %cst_465 {dimension_numbers = #tpu.dot_dimension_numbers<[1], [0], [0], [1], [0, 0, 1, 1], [], []>} : vector<32x32xbf16>, vector<32x32xbf16>, vector<32x32xf32> -> vector<32x32xf32>
    %1363 = arith.addf %1357, %1362 : vector<32x32xf32>
    %1364 = vector.extract_strided_slice %1352 {offsets = [2, 0, 0], sizes = [16, 2, 32], strides = [1, 1, 1]} : vector<18x2x32xbf16> to vector<16x2x32xbf16>
    %1365 = vector.shape_cast %1364 : vector<16x2x32xbf16> to vector<32x32xbf16>
    %c2 = arith.constant 2 : index
    %c0_466 = arith.constant 0 : index
    %c0_467 = arith.constant 0 : index
    %1366 = vector.load %arg8[%c2, %c0_466, %c0_467] : memref<3x32x32xbf16, #tpu.memory_space<vmem>>, vector<1x32x32xbf16>
    %1367 = vector.shape_cast %1366 : vector<1x32x32xbf16> to vector<32x32xbf16>
    %cst_468 = arith.constant dense<0.000000e+00> : vector<32x32xf32>
    %1368 = tpu.matmul %1365, %1367, %cst_468 {dimension_numbers = #tpu.dot_dimension_numbers<[1], [0], [0], [1], [0, 0, 1, 1], [], []>} : vector<32x32xbf16>, vector<32x32xbf16>, vector<32x32xf32> -> vector<32x32xf32>
    %1369 = arith.addf %1363, %1368 : vector<32x32xf32>
    %1370 = vector.shape_cast %1369 : vector<32x32xf32> to vector<16x2x32xf32>
    %c0_469 = arith.constant 0 : index
    %c0_470 = arith.constant 0 : index
    %1371 = vector.load %arg9[%c0_469, %c0_470] : memref<1x32xf32, #tpu.memory_space<vmem>>, vector<1x32xf32>
    %1372 = vector.shape_cast %1371 : vector<1x32xf32> to vector<1x1x32xf32>
    %1373 = vector.broadcast %1372 : vector<1x1x32xf32> to vector<16x2x32xf32>
    %1374 = arith.addf %1370, %1373 : vector<16x2x32xf32>
    %c0_471 = arith.constant 0 : index
    %c0_472 = arith.constant 0 : index
    %1375 = vector.load %arg12[%c0_471, %c0_472] : memref<32x4xf32, #tpu.memory_space<vmem>>, vector<32x4xf32>
    %c0_473 = arith.constant 0 : index
    %c0_474 = arith.constant 0 : index
    %1376 = vector.load %arg13[%c0_473, %c0_474] : memref<4x32xf32, #tpu.memory_space<vmem>>, vector<4x32xf32>
    %cst_475 = arith.constant dense<0.000000e+00> : vector<2x32xf32>
    %1377 = vector.multi_reduction <add>, %1374, %cst_475 [0] : vector<16x2x32xf32> to vector<2x32xf32>
    %cst_476 = arith.constant dense<0.000000e+00> : vector<2x4xf32>
    %1378 = tpu.matmul %1377, %1375, %cst_476 {dimension_numbers = #tpu.dot_dimension_numbers<[1], [0], [0], [1], [0, 0, 1, 1], [], []>} : vector<2x32xf32>, vector<32x4xf32>, vector<2x4xf32> -> vector<2x4xf32>
    %cst_477 = arith.constant 1.280000e+02 : f32
    %1379 = vector.broadcast %cst_477 : f32 to vector<2x4xf32>
    %1380 = arith.divf %1378, %1379 : vector<2x4xf32>
    %cst_478 = arith.constant dense<0.000000e+00> : vector<2x32xf32>
    %1381 = tpu.matmul %1380, %1376, %cst_478 {dimension_numbers = #tpu.dot_dimension_numbers<[1], [0], [0], [1], [0, 0, 1, 1], [], []>} : vector<2x4xf32>, vector<4x32xf32>, vector<2x32xf32> -> vector<2x32xf32>
    %1382 = vector.shape_cast %1381 : vector<2x32xf32> to vector<1x2x32xf32>
    %1383 = vector.broadcast %1382 : vector<1x2x32xf32> to vector<16x2x32xf32>
    %1384 = arith.subf %1374, %1383 : vector<16x2x32xf32>
    %1385 = arith.mulf %1384, %1384 : vector<16x2x32xf32>
    %cst_479 = arith.constant dense<0.000000e+00> : vector<2x32xf32>
    %1386 = vector.multi_reduction <add>, %1385, %cst_479 [0] : vector<16x2x32xf32> to vector<2x32xf32>
    %cst_480 = arith.constant dense<0.000000e+00> : vector<2x4xf32>
    %1387 = tpu.matmul %1386, %1375, %cst_480 {dimension_numbers = #tpu.dot_dimension_numbers<[1], [0], [0], [1], [0, 0, 1, 1], [], []>} : vector<2x32xf32>, vector<32x4xf32>, vector<2x4xf32> -> vector<2x4xf32>
    %cst_481 = arith.constant 1.280000e+02 : f32
    %1388 = vector.broadcast %cst_481 : f32 to vector<2x4xf32>
    %1389 = arith.divf %1387, %1388 : vector<2x4xf32>
    %cst_482 = arith.constant 9.99999974E-6 : f32
    %1390 = vector.broadcast %cst_482 : f32 to vector<2x4xf32>
    %1391 = arith.addf %1389, %1390 : vector<2x4xf32>
    %1392 = math.rsqrt %1391 : vector<2x4xf32>
    %cst_483 = arith.constant dense<0.000000e+00> : vector<2x32xf32>
    %1393 = tpu.matmul %1392, %1376, %cst_483 {dimension_numbers = #tpu.dot_dimension_numbers<[1], [0], [0], [1], [0, 0, 1, 1], [], []>} : vector<2x4xf32>, vector<4x32xf32>, vector<2x32xf32> -> vector<2x32xf32>
    %1394 = vector.shape_cast %1393 : vector<2x32xf32> to vector<1x2x32xf32>
    %1395 = vector.broadcast %1394 : vector<1x2x32xf32> to vector<16x2x32xf32>
    %1396 = arith.mulf %1384, %1395 : vector<16x2x32xf32>
    %c0_484 = arith.constant 0 : index
    %c0_485 = arith.constant 0 : index
    %1397 = vector.load %arg10[%c0_484, %c0_485] : memref<1x32xf32, #tpu.memory_space<vmem>>, vector<1x32xf32>
    %1398 = vector.shape_cast %1397 : vector<1x32xf32> to vector<1x1x32xf32>
    %1399 = vector.broadcast %1398 : vector<1x1x32xf32> to vector<16x2x32xf32>
    %1400 = arith.mulf %1396, %1399 : vector<16x2x32xf32>
    %c0_486 = arith.constant 0 : index
    %c0_487 = arith.constant 0 : index
    %1401 = vector.load %arg11[%c0_486, %c0_487] : memref<1x32xf32, #tpu.memory_space<vmem>>, vector<1x32xf32>
    %1402 = vector.shape_cast %1401 : vector<1x32xf32> to vector<1x1x32xf32>
    %1403 = vector.broadcast %1402 : vector<1x1x32xf32> to vector<16x2x32xf32>
    %1404 = arith.addf %1400, %1403 : vector<16x2x32xf32>
    %cst_488 = arith.constant 0.000000e+00 : f32
    %1405 = vector.broadcast %cst_488 : f32 to vector<16x2x32xf32>
    %1406 = arith.cmpf oge, %1404, %1405 : vector<16x2x32xf32>
    %cst_489 = arith.constant 0.00999999977 : f32
    %1407 = vector.broadcast %cst_489 : f32 to vector<16x2x32xf32>
    %1408 = arith.mulf %1407, %1404 : vector<16x2x32xf32>
    %1409 = arith.select %1406, %1404, %1408 : vector<16x2x32xi1>, vector<16x2x32xf32>
    %c0_490 = arith.constant 0 : index
    %c0_491 = arith.constant 0 : index
    %c0_492 = arith.constant 0 : index
    %1410 = vector.load %arg1[%c0_490, %c0_491, %c0_492] : memref<16x2x32xf32, #tpu.memory_space<vmem>>, vector<16x2x32xf32>
    %c1_493 = arith.constant 1 : index
    %c0_494 = arith.constant 0 : index
    %c0_495 = arith.constant 0 : index
    %1411 = vector.load %arg16[%c1_493, %c0_494, %c0_495] : memref<18x2x32xf32, #tpu.memory_space<vmem>>, vector<16x2x32xf32>
    %1412 = arith.addf %1410, %1411 : vector<16x2x32xf32>
    %1413 = arith.addf %1412, %1409 : vector<16x2x32xf32>
    %c0_496 = arith.constant 0 : index
    %c0_497 = arith.constant 0 : index
    %c0_498 = arith.constant 0 : index
    %1414 = vector.load %arg14[%c0_496, %c0_497, %c0_498] : memref<16x2x32xf32, #tpu.memory_space<vmem>>, vector<16x2x32xf32>
    tpu.vector_store %arg14[%c0_496, %c0_497, %c0_498], %1413 {strides = array<i32>} : memref<16x2x32xf32, #tpu.memory_space<vmem>>, vector<16x2x32xf32>,
    return
  }
  func.func @transform_0(%arg0: i32) -> (i32, i32, i32) {
    %c0_i32 = arith.constant 0 : i32
    %c0_i32_0 = arith.constant 0 : i32
    %c0_i32_1 = arith.constant 0 : i32
    return %c0_i32, %arg0, %c0_i32_0 : i32, i32, i32
  }
  func.func @transform_1(%arg0: i32) -> (i32, i32) {
    %c0_i32 = arith.constant 0 : i32
    %c0_i32_0 = arith.constant 0 : i32
    %c0_i32_1 = arith.constant 0 : i32
    return %c0_i32, %c0_i32_0 : i32, i32
  }
  func.func @transform_2(%arg0: i32) -> (i32, i32) {
    %c0_i32 = arith.constant 0 : i32
    %c0_i32_0 = arith.constant 0 : i32
    %c0_i32_1 = arith.constant 0 : i32
    return %c0_i32, %c0_i32_0 : i32, i32
  }
  func.func @transform_3(%arg0: i32) -> (i32, i32) {
    %c0_i32 = arith.constant 0 : i32
    %c0_i32_0 = arith.constant 0 : i32
    %c0_i32_1 = arith.constant 0 : i32
    return %c0_i32, %c0_i32_0 : i32, i32
  }
  func.func @transform_4(%arg0: i32) -> (i32, i32) {
    %c0_i32 = arith.constant 0 : i32
    %c0_i32_0 = arith.constant 0 : i32
    %c0_i32_1 = arith.constant 0 : i32
    return %c0_i32, %c0_i32_0 : i32, i32
  }
  func.func @transform_5(%arg0: i32) -> (i32, i32) {
    %c0_i32 = arith.constant 0 : i32
    %c0_i32_0 = arith.constant 0 : i32
    %c0_i32_1 = arith.constant 0 : i32
    return %c0_i32, %c0_i32_0 : i32, i32
  }
  func.func @transform_6(%arg0: i32) -> (i32, i32) {
    %c0_i32 = arith.constant 0 : i32
    %c0_i32_0 = arith.constant 0 : i32
    %c0_i32_1 = arith.constant 0 : i32
    return %c0_i32, %c0_i32_0 : i32, i32
  }
  func.func @transform_7(%arg0: i32) -> (i32, i32, i32) {
    %c0_i32 = arith.constant 0 : i32
    %c0_i32_0 = arith.constant 0 : i32
    %c0_i32_1 = arith.constant 0 : i32
    %c0_i32_2 = arith.constant 0 : i32
    return %c0_i32, %c0_i32_0, %c0_i32_1 : i32, i32, i32
  }
  func.func @transform_8(%arg0: i32) -> (i32, i32) {
    %c0_i32 = arith.constant 0 : i32
    %c0_i32_0 = arith.constant 0 : i32
    %c0_i32_1 = arith.constant 0 : i32
    return %c0_i32, %c0_i32_0 : i32, i32
  }
  func.func @transform_9(%arg0: i32) -> (i32, i32) {
    %c0_i32 = arith.constant 0 : i32
    %c0_i32_0 = arith.constant 0 : i32
    %c0_i32_1 = arith.constant 0 : i32
    return %c0_i32, %c0_i32_0 : i32, i32
  }
  func.func @transform_10(%arg0: i32) -> (i32, i32) {
    %c0_i32 = arith.constant 0 : i32
    %c0_i32_0 = arith.constant 0 : i32
    %c0_i32_1 = arith.constant 0 : i32
    return %c0_i32, %c0_i32_0 : i32, i32
  }
  func.func @transform_11(%arg0: i32) -> (i32, i32) {
    %c0_i32 = arith.constant 0 : i32
    %c0_i32_0 = arith.constant 0 : i32
    %c0_i32_1 = arith.constant 0 : i32
    return %c0_i32, %c0_i32_0 : i32, i32
  }
  func.func @transform_12(%arg0: i32) -> (i32, i32) {
    %c0_i32 = arith.constant 0 : i32
    %c0_i32_0 = arith.constant 0 : i32
    %c0_i32_1 = arith.constant 0 : i32
    return %c0_i32, %c0_i32_0 : i32, i32
  }
  func.func @transform_13(%arg0: i32) -> (i32, i32, i32) {
    %c0_i32 = arith.constant 0 : i32
    %c0_i32_0 = arith.constant 0 : i32
    %c0_i32_1 = arith.constant 0 : i32
    return %c0_i32, %arg0, %c0_i32_0 : i32, i32, i32
  }
}

</mosaic_0001>

<llo_original>
// kernel: g3block_forward.1
$region0: #{g3block_forward.1}
  #allocation0 [shape = 'u32[]', space=smem, size = 0x4, offset = 0x4, fixed_abs, tag = 'smem constant byte address 0x4 - core index']
  #allocation1 [shape = 'u32[144,128]{1,0:T(1,128)}', space=vmem, size = 0x12000, scoped, tag = 'internal scratch']
  #allocation2 [shape = 'bf16[16,2,192]{2,1,0:T(2,128)(2,1)}', space=vmem, size = 0x4000, scoped, tag = 'scratch operand']
  #allocation3 [shape = 'f32[18,2,32]{2,1,0:T(2,128)}', space=vmem, size = 0x4800, scoped, tag = 'scratch operand']
  %s0 = inlined_call_operand.vmem [shape: f32[16,2,32], index: 0, kind: input, shape index: {}]
  %s1 = inlined_call_operand.vmem [shape: bf16[32,192], index: 1, kind: input, shape index: {}]
  %s2 = inlined_call_operand.vmem [shape: f32[1,192], index: 2, kind: input, shape index: {}]
  %s3 = inlined_call_operand.vmem [shape: bf16[32,96], index: 3, kind: input, shape index: {}]
  %s4 = inlined_call_operand.vmem [shape: f32[1,96], index: 4, kind: input, shape index: {}]
  %s5 = inlined_call_operand.vmem [shape: bf16[32,96], index: 5, kind: input, shape index: {}]
  %s6 = inlined_call_operand.vmem [shape: f32[1,96], index: 6, kind: input, shape index: {}]
  %s7 = inlined_call_operand.vmem [shape: bf16[3,32,32], index: 7, kind: input, shape index: {}]
  %s8 = inlined_call_operand.hbm [shape: f32[1,32], index: 8, kind: input, shape index: {}]
  %s9 = inlined_call_operand.vmem [shape: f32[1,32], index: 9, kind: input, shape index: {}]
  %s10 = inlined_call_operand.hbm [shape: f32[1,32], index: 10, kind: input, shape index: {}]
  %s11 = inlined_call_operand.vmem [shape: f32[32,4], index: 11, kind: input, shape index: {}]
  %s12 = inlined_call_operand.hbm [shape: f32[4,32], index: 12, kind: input, shape index: {}]
  %s13 = inlined_call_operand.vmem [shape: f32[16,2,32], index: 13, kind: output, shape index: {}]
  %s14 = sld [smem:[#allocation0]]
  $region74: #{g3block_forward.1} parent=0
    _
  %s16 = ssub.s32 1, %s14
  %s17 = scalar_select 0, %s16, %s14
  $region1: #{g3block_forward.1} parent=0
    #allocation4 [shape = 'u8[512]{0}', space=vmem, size = 0x400, scoped, tag = 'input window, operand 8, single buffered']
    #allocation5 [shape = 's32[1]{0}', space=sflag, size = 0x4, scoped, tag = 'scoped memory for g3block_forward.1']
    #allocation6 [shape = 'u8[512]{0}', space=vmem, size = 0x400, scoped, tag = 'input window, operand 10, single buffered']
    #allocation7 [shape = 's32[1]{0}', space=sflag, size = 0x4, scoped, tag = 'scoped memory for g3block_forward.1']
    #allocation8 [shape = 'u8[2048]{0}', space=vmem, size = 0x800, scoped, tag = 'input window, operand 12, single buffered']
    %18 = vsyncpa [#allocation5], 0
    %19 = vsyncpa [#allocation7], 0
    // Predicated region
    $region2: #{g3block_forward.1} parent=1 // pred_check
      _
    $region3: #{g3block_forward.1} parent=1 // pred_check_branch
      %21 = sbr.rel (0) target = $region5
    $region4: #{g3block_forward.1} parent=1 // pred_region
      _
    $region5: #{g3block_forward.1} parent=1 // pred_fallthru
      _
    // Predicated region
    $region6: #{g3block_forward.1} parent=1 // pred_check
      _
    $region7: #{g3block_forward.1} parent=1 // pred_check_branch
      %23 = sbr.rel (0) target = $region9
    $region8: #{g3block_forward.1} parent=1 // pred_region
      _
    $region9: #{g3block_forward.1} parent=1 // pred_fallthru
      _
    // Predicated region
    $region10: #{g3block_forward.1} parent=1 // pred_check
      _
    $region11: #{g3block_forward.1} parent=1 // pred_check_branch
      %25 = sbr.rel (0) target = $region13
    $region12: #{g3block_forward.1} parent=1 // pred_region
      _
    $region13: #{g3block_forward.1} parent=1 // pred_fallthru
      _
    // Predicated region
    $region14: #{g3block_forward.1} parent=1 // pred_check
      _
    $region15: #{g3block_forward.1} parent=1 // pred_check_branch
      %27 = sbr.rel (0) target = $region17
    $region16: #{g3block_forward.1} parent=1 // pred_region
      _
    $region17: #{g3block_forward.1} parent=1 // pred_fallthru
      _
    // Predicated region
    $region18: #{g3block_forward.1} parent=1 // pred_check
      _
    $region19: #{g3block_forward.1} parent=1 // pred_check_branch
      %29 = sbr.rel (0) target = $region21
    $region20: #{g3block_forward.1} parent=1 // pred_region
      _
    $region21: #{g3block_forward.1} parent=1 // pred_fallthru
      _
    // Predicated region
    $region22: #{g3block_forward.1} parent=1 // pred_check
      _
    $region23: #{g3block_forward.1} parent=1 // pred_check_branch
      %31 = sbr.rel (0) target = $region25
    $region24: #{g3block_forward.1} parent=1 // pred_region
      _
    $region25: #{g3block_forward.1} parent=1 // pred_fallthru
      _
    // Predicated region
    $region26: #{g3block_forward.1} parent=1 // pred_check
      _
    $region27: #{g3block_forward.1} parent=1 // pred_check_branch
      %33 = sbr.rel (0) target = $region29
    $region28: #{g3block_forward.1} parent=1 // pred_region
      _
    $region29: #{g3block_forward.1} parent=1 // pred_fallthru
      _
    // Predicated region
    $region30: #{g3block_forward.1} parent=1 // pred_check
      _
    $region31: #{g3block_forward.1} parent=1 // pred_check_branch
      %35 = sbr.rel (0) target = $region33
    $region32: #{g3block_forward.1} parent=1 // pred_region
      _
    $region33: #{g3block_forward.1} parent=1 // pred_fallthru
      _
    // Predicated region
    $region34: #{g3block_forward.1} parent=1 // pred_check
      _
    $region35: #{g3block_forward.1} parent=1 // pred_check_branch
      %37 = sbr.rel (0) target = $region37
    $region36: #{g3block_forward.1} parent=1 // pred_region
      %s39 = ssub.s32 16, 16
      %40 = vsyncadd [#allocation5], %s39
      %s42 = sshll.u32 [#allocation4], 4
      %s43 = int_to_ptr.vmem [resolvable:$true] %s42
      %45 = dma.hbm_to_vmem [thread:$0]  %s8, 16, %s43, [#allocation5]
    $region37: #{g3block_forward.1} parent=1 // pred_fallthru
      _
    // Predicated region
    $region38: #{g3block_forward.1} parent=1 // pred_check
      _
    $region39: #{g3block_forward.1} parent=1 // pred_check_branch
      %47 = sbr.rel (0) target = $region41
    $region40: #{g3block_forward.1} parent=1 // pred_region
      _
    $region41: #{g3block_forward.1} parent=1 // pred_fallthru
      _
    // Predicated region
    $region42: #{g3block_forward.1} parent=1 // pred_check
      _
    $region43: #{g3block_forward.1} parent=1 // pred_check_branch
      %49 = sbr.rel (0) target = $region45
    $region44: #{g3block_forward.1} parent=1 // pred_region
      %s51 = ssub.s32 16, 16
      %52 = vsyncadd [#allocation7], %s51
      %s54 = sshll.u32 [#allocation6], 4
      %s55 = int_to_ptr.vmem [resolvable:$true] %s54
      %57 = dma.hbm_to_vmem [thread:$0]  %s10, 16, %s55, [#allocation7]
    $region45: #{g3block_forward.1} parent=1 // pred_fallthru
      _
    // Predicated region
    $region46: #{g3block_forward.1} parent=1 // pred_check
      _
    $region47: #{g3block_forward.1} parent=1 // pred_check_branch
      %59 = sbr.rel (0) target = $region49
    $region48: #{g3block_forward.1} parent=1 // pred_region
      _
    $region49: #{g3block_forward.1} parent=1 // pred_fallthru
      _
    // Predicated region
    $region50: #{g3block_forward.1} parent=1 // pred_check
      _
    $region51: #{g3block_forward.1} parent=1 // pred_check_branch
      %61 = sbr.rel (0) target = $region53
    $region52: #{g3block_forward.1} parent=1 // pred_region
      %s63 = ssub.s32 64, 64
      %64 = vsyncadd [#allocation7], %s63
      %s66 = sshll.u32 [#allocation8], 4
      %s67 = int_to_ptr.vmem [resolvable:$true] %s66
      %69 = dma.hbm_to_vmem [thread:$0]  %s12, 64, %s67, [#allocation7]
    $region53: #{g3block_forward.1} parent=1 // pred_fallthru
      _
    // Predicated region
    $region54: #{g3block_forward.1} parent=1 // pred_check
      _
    $region55: #{g3block_forward.1} parent=1 // pred_check_branch
      %71 = sbr.rel (0) target = $region57
    $region56: #{g3block_forward.1} parent=1 // pred_region
      %72 = dma.done [#allocation5], 16
    $region57: #{g3block_forward.1} parent=1 // pred_fallthru
      _
    // Predicated region
    $region58: #{g3block_forward.1} parent=1 // pred_check
      _
    $region59: #{g3block_forward.1} parent=1 // pred_check_branch
      %74 = sbr.rel (0) target = $region61
    $region60: #{g3block_forward.1} parent=1 // pred_region
      %75 = dma.done [#allocation7], 16
    $region61: #{g3block_forward.1} parent=1 // pred_fallthru
      _
    // Predicated region
    $region62: #{g3block_forward.1} parent=1 // pred_check
      _
    $region63: #{g3block_forward.1} parent=1 // pred_check_branch
      %77 = sbr.rel (0) target = $region65
    $region64: #{g3block_forward.1} parent=1 // pred_region
      %78 = dma.done [#allocation7], 64
    $region65: #{g3block_forward.1} parent=1 // pred_fallthru
      _
    %v80 = vld [vmem:[%s0] sm:$0x3]
    %v81 = vld [vmem:[%s0 + $0x2] sm:$0x3]
    %v82 = vld [vmem:[%s0 + $0x4] sm:$0x3]
    %v83 = vld [vmem:[%s0 + $0x6] sm:$0x3]
    %v84 = vld [vmem:[%s0 + $0x8] sm:$0x3]
    %v85 = vld [vmem:[%s0 + $0xa] sm:$0x3]
    %v86 = vld [vmem:[%s0 + $0xc] sm:$0x3]
    %v87 = vld [vmem:[%s0 + $0xe] sm:$0x3]
    %v88 = vld [vmem:[%s0 + $0x10] sm:$0x3]
    %v89 = vld [vmem:[%s0 + $0x12] sm:$0x3]
    %v90 = vld [vmem:[%s0 + $0x14] sm:$0x3]
    %v91 = vld [vmem:[%s0 + $0x16] sm:$0x3]
    %v92 = vld [vmem:[%s0 + $0x18] sm:$0x3]
    %v93 = vld [vmem:[%s0 + $0x1a] sm:$0x3]
    %v94 = vld [vmem:[%s0 + $0x1c] sm:$0x3]
    %v95 = vld [vmem:[%s0 + $0x1e] sm:$0x3]
    %v112 = vcombine.low %v80, %v81
    %v113 = vcombine.low %v82, %v83
    %v115 = vunpack.c.l.s4 1983009808
    %v116 = vunpack.c.0.s8 %v115
    %v117 = vlaneseq
    %v118 = vshrl.u32 %v117, 7
    %v119 = vsub.s32 %v116, %v118
    %v120 = vrot.slane %v112, %v119
    %v122 = vunpack.c.l.s4 1983009808
    %v123 = vunpack.c.0.s8 %v122
    %v124 = vlaneseq
    %v125 = vshrl.u32 %v124, 7
    %v126 = vsub.s32 %v123, %v125
    %v127 = vrot.slane %v113, %v126
    %v128 = vcombine.low %v120, %v127
    %v129 = vcombine.low %v84, %v85
    %v130 = vcombine.low %v86, %v87
    %v132 = vunpack.c.l.s4 1983009808
    %v133 = vunpack.c.0.s8 %v132
    %v134 = vlaneseq
    %v135 = vshrl.u32 %v134, 7
    %v136 = vsub.s32 %v133, %v135
    %v137 = vrot.slane %v129, %v136
    %v139 = vunpack.c.l.s4 1983009808
    %v140 = vunpack.c.0.s8 %v139
    %v141 = vlaneseq
    %v142 = vshrl.u32 %v141, 7
    %v143 = vsub.s32 %v140, %v142
    %v144 = vrot.slane %v130, %v143
    %v145 = vcombine.low %v137, %v144
    %v146 = vcombine.low %v88, %v89
    %v147 = vcombine.low %v90, %v91
    %v149 = vunpack.c.l.s4 1983009808
    %v150 = vunpack.c.0.s8 %v149
    %v151 = vlaneseq
    %v152 = vshrl.u32 %v151, 7
    %v153 = vsub.s32 %v150, %v152
    %v154 = vrot.slane %v146, %v153
    %v156 = vunpack.c.l.s4 1983009808
    %v157 = vunpack.c.0.s8 %v156
    %v158 = vlaneseq
    %v159 = vshrl.u32 %v158, 7
    %v160 = vsub.s32 %v157, %v159
    %v161 = vrot.slane %v147, %v160
    %v162 = vcombine.low %v154, %v161
    %v163 = vcombine.low %v92, %v93
    %v164 = vcombine.low %v94, %v95
    %v166 = vunpack.c.l.s4 1983009808
    %v167 = vunpack.c.0.s8 %v166
    %v168 = vlaneseq
    %v169 = vshrl.u32 %v168, 7
    %v170 = vsub.s32 %v167, %v169
    %v171 = vrot.slane %v163, %v170
    %v173 = vunpack.c.l.s4 1983009808
    %v174 = vunpack.c.0.s8 %v173
    %v175 = vlaneseq
    %v176 = vshrl.u32 %v175, 7
    %v177 = vsub.s32 %v174, %v176
    %v178 = vrot.slane %v164, %v177
    %v179 = vcombine.low %v171, %v178
    %v184 = vpack.c.bf16 %v145, %v128
    %v185 = vpack.c.bf16 %v179, %v162
    %v186 = vld [vmem:[%s1] sm:$0xff]
    %v187 = vld [vmem:[%s1 + $0x8] sm:$0xff]
    %v188 = vld [vmem:[%s1 + $0x10] sm:$0xff]
    %v189 = vld [vmem:[%s1 + $0x18] sm:$0xff]
    %v190 = vld [vmem:[%s2] sm:$0x3]
    %v192 = vlaneseq
    %v193 = vshrl.u32 %v192, 7
    %v194 = vsub.s32 0, %v193
    %v195 = vrot.slane %v190, %v194
    %v196 = vlaneseq
    %v197 = vshrl.u32 %v196, 7
    %v198 = vsub.s32 1, %v197
    %v199 = vrot.slane %v190, %v198
    %v206 = vunpack.c.l.b16 %v186
    %v207 = vunpack.c.h.b16 %v186
    %v208 = vunpack.c.l.b16 %v187
    %v209 = vunpack.c.h.b16 %v187
    %v210 = vunpack.c.l.b16 %v188
    %v211 = vunpack.c.h.b16 %v188
    %v212 = vunpack.c.l.b16 %v189
    %v213 = vunpack.c.h.b16 %v189
    %v214 = vpack.c.b16 %v208, %v206
    %v215 = vpack.c.b16 %v209, %v207
    %v216 = vpack.c.b16 %v212, %v210
    %v217 = vpack.c.b16 %v213, %v211
    %vm222 = vcmask 261120
    %v224 = vsel %vm222, %v184, 0
    %v227 = vsel %vm222, %v185, 0
    %229 = vmatprep.subr.bf16.mxu0 %v215
    %230 = vmatpush1.bf16.msra.mxu0 %v214
    %231 = vmatprep.subr.bf16.mxu0 %v217
    %232 = vmatpush1.bf16.msra.mxu0 %v216
    %233 = vmatprep.subr.bf16.mxu0 0
    %234 = vmatpush1.bf16.msra.mxu0 0
    %235 = vmatprep.subr.bf16.mxu0 0
    %236 = vmatpush1.bf16.msra.mxu0 0
    %237 = vmatprep.subr.bf16.mxu0 0
    %238 = vmatpush1.bf16.msra.mxu0 0
    %239 = vmatprep.subr.bf16.mxu0 0
    %240 = vmatpush1.bf16.msra.mxu0 0
    %241 = vmatprep.subr.bf16.mxu0 0
    %242 = vmatpush1.bf16.msra.mxu0 0
    %243 = vmatprep.subr.bf16.mxu0 0
    %244 = vmatpush1.bf16.msra.mxu0 0
    %245 = vmatprep.subr.bf16.mxu0 0
    %246 = vmatpush1.bf16.msra.mxu0 0
    %247 = vmatprep.subr.bf16.mxu0 0
    %248 = vmatpush1.bf16.msra.mxu0 0
    %249 = vmatprep.subr.bf16.mxu0 0
    %250 = vmatpush1.bf16.msra.mxu0 0
    %251 = vmatprep.subr.bf16.mxu0 0
    %252 = vmatpush1.bf16.msra.mxu0 0
    %253 = vmatprep.subr.bf16.mxu0 0
    %254 = vmatpush1.bf16.msra.mxu0 0
    %255 = vmatprep.subr.bf16.mxu0 0
    %256 = vmatpush1.bf16.msra.mxu0 0
    %257 = vmatprep.subr.bf16.mxu0 0
    %258 = vmatpush1.bf16.msra.mxu0 0
    %259 = vmatprep.subr.bf16.mxu0 0
    %260 = vmatpush1.bf16.msra.mxu0 0
    %261 = vmatprep.mubr.bf16.mxu0 0
    %262 = vmatmul.mubr.bf16.gmra.mrb[0].mxu0 %v224
    %v263 = vpop.f32.mrb[0].mxu0
    %v264 = vadd.f32 %v195, %v263
    %v265 = vpop.f32.mrb[0].mxu0
    %v266 = vadd.f32 %v199, %v265
    %v267 = vpop.f32.mrb[0].mxu0
    %v268 = vadd.f32 %v195, %v267
    %v269 = vpop.f32.mrb[0].mxu0
    %v270 = vadd.f32 %v199, %v269
    %271 = vmatprep.mubr.bf16.mxu0 0
    %272 = vmatmul.mubr.bf16.gmra.mrb[0].mxu0 %v227
    %v273 = vpop.f32.mrb[0].mxu0
    %v274 = vadd.f32 %v195, %v273
    %v275 = vpop.f32.mrb[0].mxu0
    %v276 = vadd.f32 %v199, %v275
    %v277 = vpop.f32.mrb[0].mxu0
    %v278 = vadd.f32 %v195, %v277
    %v279 = vpop.f32.mrb[0].mxu0
    %v280 = vadd.f32 %v199, %v279
    %281 = vdwg.mxu0
    %v290 = vcombine.low %v264, %v266
    %v291 = vcombine.high %v264, %v266
    %v293 = vunpack.c.l.s4 1983009808
    %v294 = vunpack.c.0.s8 %v293
    %v295 = vlaneseq
    %v296 = vshrl.u32 %v295, 7
    %v297 = vsub.s32 %v294, %v296
    %v298 = vrot.slane %v290, %v297
    %v300 = vunpack.c.l.s4 1983009808
    %v301 = vunpack.c.0.s8 %v300
    %v302 = vlaneseq
    %v303 = vshrl.u32 %v302, 7
    %v304 = vsub.s32 %v301, %v303
    %v305 = vrot.slane %v291, %v304
    %v306 = vcombine.high %v298, %v298
    %v307 = vcombine.high %v305, %v305
    %v308 = vcombine.low %v268, %v270
    %v309 = vcombine.high %v268, %v270
    %v311 = vunpack.c.l.s4 1983009808
    %v312 = vunpack.c.0.s8 %v311
    %v313 = vlaneseq
    %v314 = vshrl.u32 %v313, 7
    %v315 = vsub.s32 %v312, %v314
    %v316 = vrot.slane %v308, %v315
    %v318 = vunpack.c.l.s4 1983009808
    %v319 = vunpack.c.0.s8 %v318
    %v320 = vlaneseq
    %v321 = vshrl.u32 %v320, 7
    %v322 = vsub.s32 %v319, %v321
    %v323 = vrot.slane %v309, %v322
    %v324 = vcombine.high %v316, %v316
    %v325 = vcombine.high %v323, %v323
    %v326 = vcombine.low %v274, %v276
    %v327 = vcombine.high %v274, %v276
    %v329 = vunpack.c.l.s4 1983009808
    %v330 = vunpack.c.0.s8 %v329
    %v331 = vlaneseq
    %v332 = vshrl.u32 %v331, 7
    %v333 = vsub.s32 %v330, %v332
    %v334 = vrot.slane %v326, %v333
    %v336 = vunpack.c.l.s4 1983009808
    %v337 = vunpack.c.0.s8 %v336
    %v338 = vlaneseq
    %v339 = vshrl.u32 %v338, 7
    %v340 = vsub.s32 %v337, %v339
    %v341 = vrot.slane %v327, %v340
    %v342 = vcombine.high %v334, %v334
    %v343 = vcombine.high %v341, %v341
    %v344 = vcombine.low %v278, %v280
    %v345 = vcombine.high %v278, %v280
    %v347 = vunpack.c.l.s4 1983009808
    %v348 = vunpack.c.0.s8 %v347
    %v349 = vlaneseq
    %v350 = vshrl.u32 %v349, 7
    %v351 = vsub.s32 %v348, %v350
    %v352 = vrot.slane %v344, %v351
    %v354 = vunpack.c.l.s4 1983009808
    %v355 = vunpack.c.0.s8 %v354
    %v356 = vlaneseq
    %v357 = vshrl.u32 %v356, 7
    %v358 = vsub.s32 %v355, %v357
    %v359 = vrot.slane %v345, %v358
    %v360 = vcombine.high %v352, %v352
    %v361 = vcombine.high %v359, %v359
    %v363 = vunpack.c.l.s4 1983009808
    %v364 = vunpack.c.0.s8 %v363
    %v365 = vlaneseq
    %v366 = vshrl.u32 %v365, 7
    %v367 = vsub.s32 %v364, %v366
    %v368 = vrot.slane %v298, %v367
    %v369 = vcombine.high %v368, %v368
    %v371 = vunpack.c.l.s4 1983009808
    %v372 = vunpack.c.0.s8 %v371
    %v373 = vlaneseq
    %v374 = vshrl.u32 %v373, 7
    %v375 = vsub.s32 %v372, %v374
    %v376 = vrot.slane %v306, %v375
    %v377 = vcombine.high %v376, %v376
    %v379 = vunpack.c.l.s4 1983009808
    %v380 = vunpack.c.0.s8 %v379
    %v381 = vlaneseq
    %v382 = vshrl.u32 %v381, 7
    %v383 = vsub.s32 %v380, %v382
    %v384 = vrot.slane %v305, %v383
    %v385 = vcombine.high %v384, %v384
    %v387 = vunpack.c.l.s4 1983009808
    %v388 = vunpack.c.0.s8 %v387
    %v389 = vlaneseq
    %v390 = vshrl.u32 %v389, 7
    %v391 = vsub.s32 %v388, %v390
    %v392 = vrot.slane %v307, %v391
    %v393 = vcombine.high %v392, %v392
    %v395 = vunpack.c.l.s4 1983009808
    %v396 = vunpack.c.0.s8 %v395
    %v397 = vlaneseq
    %v398 = vshrl.u32 %v397, 7
    %v399 = vsub.s32 %v396, %v398
    %v400 = vrot.slane %v316, %v399
    %v401 = vcombine.high %v400, %v400
    %v403 = vunpack.c.l.s4 1983009808
    %v404 = vunpack.c.0.s8 %v403
    %v405 = vlaneseq
    %v406 = vshrl.u32 %v405, 7
    %v407 = vsub.s32 %v404, %v406
    %v408 = vrot.slane %v324, %v407
    %v409 = vcombine.high %v408, %v408
    %v411 = vunpack.c.l.s4 1983009808
    %v412 = vunpack.c.0.s8 %v411
    %v413 = vlaneseq
    %v414 = vshrl.u32 %v413, 7
    %v415 = vsub.s32 %v412, %v414
    %v416 = vrot.slane %v323, %v415
    %v417 = vcombine.high %v416, %v416
    %v419 = vunpack.c.l.s4 1983009808
    %v420 = vunpack.c.0.s8 %v419
    %v421 = vlaneseq
    %v422 = vshrl.u32 %v421, 7
    %v423 = vsub.s32 %v420, %v422
    %v424 = vrot.slane %v325, %v423
    %v425 = vcombine.high %v424, %v424
    %v427 = vunpack.c.l.s4 1983009808
    %v428 = vunpack.c.0.s8 %v427
    %v429 = vlaneseq
    %v430 = vshrl.u32 %v429, 7
    %v431 = vsub.s32 %v428, %v430
    %v432 = vrot.slane %v334, %v431
    %v433 = vcombine.high %v432, %v432
    %v435 = vunpack.c.l.s4 1983009808
    %v436 = vunpack.c.0.s8 %v435
    %v437 = vlaneseq
    %v438 = vshrl.u32 %v437, 7
    %v439 = vsub.s32 %v436, %v438
    %v440 = vrot.slane %v342, %v439
    %v441 = vcombine.high %v440, %v440
    %v443 = vunpack.c.l.s4 1983009808
    %v444 = vunpack.c.0.s8 %v443
    %v445 = vlaneseq
    %v446 = vshrl.u32 %v445, 7
    %v447 = vsub.s32 %v444, %v446
    %v448 = vrot.slane %v341, %v447
    %v449 = vcombine.high %v448, %v448
    %v451 = vunpack.c.l.s4 1983009808
    %v452 = vunpack.c.0.s8 %v451
    %v453 = vlaneseq
    %v454 = vshrl.u32 %v453, 7
    %v455 = vsub.s32 %v452, %v454
    %v456 = vrot.slane %v343, %v455
    %v457 = vcombine.high %v456, %v456
    %v459 = vunpack.c.l.s4 1983009808
    %v460 = vunpack.c.0.s8 %v459
    %v461 = vlaneseq
    %v462 = vshrl.u32 %v461, 7
    %v463 = vsub.s32 %v460, %v462
    %v464 = vrot.slane %v352, %v463
    %v465 = vcombine.high %v464, %v464
    %v467 = vunpack.c.l.s4 1983009808
    %v468 = vunpack.c.0.s8 %v467
    %v469 = vlaneseq
    %v470 = vshrl.u32 %v469, 7
    %v471 = vsub.s32 %v468, %v470
    %v472 = vrot.slane %v360, %v471
    %v473 = vcombine.high %v472, %v472
    %v475 = vunpack.c.l.s4 1983009808
    %v476 = vunpack.c.0.s8 %v475
    %v477 = vlaneseq
    %v478 = vshrl.u32 %v477, 7
    %v479 = vsub.s32 %v476, %v478
    %v480 = vrot.slane %v359, %v479
    %v481 = vcombine.high %v480, %v480
    %v483 = vunpack.c.l.s4 1983009808
    %v484 = vunpack.c.0.s8 %v483
    %v485 = vlaneseq
    %v486 = vshrl.u32 %v485, 7
    %v487 = vsub.s32 %v484, %v486
    %v488 = vrot.slane %v361, %v487
    %v489 = vcombine.high %v488, %v488
    %v522 = vpack.c.bf16 %v368, %v368
    %v523 = vpack.c.bf16 %v369, %v369
    %v524 = vpack.c.bf16 %v376, %v376
    %v525 = vpack.c.bf16 %v377, %v377
    %v526 = vpack.c.bf16 %v384, %v384
    %v527 = vpack.c.bf16 %v385, %v385
    %v528 = vpack.c.bf16 %v392, %v392
    %v529 = vpack.c.bf16 %v393, %v393
    %v530 = vpack.c.bf16 %v400, %v400
    %v531 = vpack.c.bf16 %v401, %v401
    %v532 = vpack.c.bf16 %v408, %v408
    %v533 = vpack.c.bf16 %v409, %v409
    %v534 = vpack.c.bf16 %v416, %v416
    %v535 = vpack.c.bf16 %v417, %v417
    %v536 = vpack.c.bf16 %v424, %v424
    %v537 = vpack.c.bf16 %v425, %v425
    %v538 = vpack.c.bf16 %v432, %v432
    %v539 = vpack.c.bf16 %v433, %v433
    %v540 = vpack.c.bf16 %v440, %v440
    %v541 = vpack.c.bf16 %v441, %v441
    %v542 = vpack.c.bf16 %v448, %v448
    %v543 = vpack.c.bf16 %v449, %v449
    %v544 = vpack.c.bf16 %v456, %v456
    %v545 = vpack.c.bf16 %v457, %v457
    %v546 = vpack.c.bf16 %v464, %v464
    %v547 = vpack.c.bf16 %v465, %v465
    %v548 = vpack.c.bf16 %v472, %v472
    %v549 = vpack.c.bf16 %v473, %v473
    %v550 = vpack.c.bf16 %v480, %v480
    %v551 = vpack.c.bf16 %v481, %v481
    %v552 = vpack.c.bf16 %v488, %v488
    %v553 = vpack.c.bf16 %v489, %v489
    %v586 = vcombine.low %v522, %v523
    %v588 = vunpack.c.l.s4 1966171168
    %v589 = vunpack.c.0.s8 %v588
    %v590 = vlaneseq
    %v591 = vshrl.u32 %v590, 7
    %v592 = vsub.s32 %v589, %v591
    %v593 = vrot.slane %v586, %v592
    %v595 = vunpack.c.l.s4 1966171168
    %v596 = vunpack.c.0.s8 %v595
    %v597 = vlaneseq
    %v598 = vshrl.u32 %v597, 7
    %v599 = vsub.s32 %v596, %v598
    %v600 = vrot.slane %v593, %v599
    %v601 = vcombine.low %v524, %v525
    %v603 = vunpack.c.l.s4 1966171168
    %v604 = vunpack.c.0.s8 %v603
    %v605 = vlaneseq
    %v606 = vshrl.u32 %v605, 7
    %v607 = vsub.s32 %v604, %v606
    %v608 = vrot.slane %v601, %v607
    %v610 = vunpack.c.l.s4 1966171168
    %v611 = vunpack.c.0.s8 %v610
    %v612 = vlaneseq
    %v613 = vshrl.u32 %v612, 7
    %v614 = vsub.s32 %v611, %v613
    %v615 = vrot.slane %v608, %v614
    %v616 = vcombine.low %v526, %v527
    %v618 = vunpack.c.l.s4 1966171168
    %v619 = vunpack.c.0.s8 %v618
    %v620 = vlaneseq
    %v621 = vshrl.u32 %v620, 7
    %v622 = vsub.s32 %v619, %v621
    %v623 = vrot.slane %v616, %v622
    %v625 = vunpack.c.l.s4 1966171168
    %v626 = vunpack.c.0.s8 %v625
    %v627 = vlaneseq
    %v628 = vshrl.u32 %v627, 7
    %v629 = vsub.s32 %v626, %v628
    %v630 = vrot.slane %v623, %v629
    %v631 = vcombine.low %v528, %v529
    %v633 = vunpack.c.l.s4 1966171168
    %v634 = vunpack.c.0.s8 %v633
    %v635 = vlaneseq
    %v636 = vshrl.u32 %v635, 7
    %v637 = vsub.s32 %v634, %v636
    %v638 = vrot.slane %v631, %v637
    %v640 = vunpack.c.l.s4 1966171168
    %v641 = vunpack.c.0.s8 %v640
    %v642 = vlaneseq
    %v643 = vshrl.u32 %v642, 7
    %v644 = vsub.s32 %v641, %v643
    %v645 = vrot.slane %v638, %v644
    %v646 = vcombine.low %v530, %v531
    %v648 = vunpack.c.l.s4 1966171168
    %v649 = vunpack.c.0.s8 %v648
    %v650 = vlaneseq
    %v651 = vshrl.u32 %v650, 7
    %v652 = vsub.s32 %v649, %v651
    %v653 = vrot.slane %v646, %v652
    %v655 = vunpack.c.l.s4 1966171168
    %v656 = vunpack.c.0.s8 %v655
    %v657 = vlaneseq
    %v658 = vshrl.u32 %v657, 7
    %v659 = vsub.s32 %v656, %v658
    %v660 = vrot.slane %v653, %v659
    %v661 = vcombine.low %v532, %v533
    %v663 = vunpack.c.l.s4 1966171168
    %v664 = vunpack.c.0.s8 %v663
    %v665 = vlaneseq
    %v666 = vshrl.u32 %v665, 7
    %v667 = vsub.s32 %v664, %v666
    %v668 = vrot.slane %v661, %v667
    %v670 = vunpack.c.l.s4 1966171168
    %v671 = vunpack.c.0.s8 %v670
    %v672 = vlaneseq
    %v673 = vshrl.u32 %v672, 7
    %v674 = vsub.s32 %v671, %v673
    %v675 = vrot.slane %v668, %v674
    %v676 = vcombine.low %v534, %v535
    %v678 = vunpack.c.l.s4 1966171168
    %v679 = vunpack.c.0.s8 %v678
    %v680 = vlaneseq
    %v681 = vshrl.u32 %v680, 7
    %v682 = vsub.s32 %v679, %v681
    %v683 = vrot.slane %v676, %v682
    %v685 = vunpack.c.l.s4 1966171168
    %v686 = vunpack.c.0.s8 %v685
    %v687 = vlaneseq
    %v688 = vshrl.u32 %v687, 7
    %v689 = vsub.s32 %v686, %v688
    %v690 = vrot.slane %v683, %v689
    %v691 = vcombine.low %v536, %v537
    %v693 = vunpack.c.l.s4 1966171168
    %v694 = vunpack.c.0.s8 %v693
    %v695 = vlaneseq
    %v696 = vshrl.u32 %v695, 7
    %v697 = vsub.s32 %v694, %v696
    %v698 = vrot.slane %v691, %v697
    %v700 = vunpack.c.l.s4 1966171168
    %v701 = vunpack.c.0.s8 %v700
    %v702 = vlaneseq
    %v703 = vshrl.u32 %v702, 7
    %v704 = vsub.s32 %v701, %v703
    %v705 = vrot.slane %v698, %v704
    %v706 = vcombine.low %v538, %v539
    %v708 = vunpack.c.l.s4 1966171168
    %v709 = vunpack.c.0.s8 %v708
    %v710 = vlaneseq
    %v711 = vshrl.u32 %v710, 7
    %v712 = vsub.s32 %v709, %v711
    %v713 = vrot.slane %v706, %v712
    %v715 = vunpack.c.l.s4 1966171168
    %v716 = vunpack.c.0.s8 %v715
    %v717 = vlaneseq
    %v718 = vshrl.u32 %v717, 7
    %v719 = vsub.s32 %v716, %v718
    %v720 = vrot.slane %v713, %v719
    %v721 = vcombine.low %v540, %v541
    %v723 = vunpack.c.l.s4 1966171168
    %v724 = vunpack.c.0.s8 %v723
    %v725 = vlaneseq
    %v726 = vshrl.u32 %v725, 7
    %v727 = vsub.s32 %v724, %v726
    %v728 = vrot.slane %v721, %v727
    %v730 = vunpack.c.l.s4 1966171168
    %v731 = vunpack.c.0.s8 %v730
    %v732 = vlaneseq
    %v733 = vshrl.u32 %v732, 7
    %v734 = vsub.s32 %v731, %v733
    %v735 = vrot.slane %v728, %v734
    %v736 = vcombine.low %v542, %v543
    %v738 = vunpack.c.l.s4 1966171168
    %v739 = vunpack.c.0.s8 %v738
    %v740 = vlaneseq
    %v741 = vshrl.u32 %v740, 7
    %v742 = vsub.s32 %v739, %v741
    %v743 = vrot.slane %v736, %v742
    %v745 = vunpack.c.l.s4 1966171168
    %v746 = vunpack.c.0.s8 %v745
    %v747 = vlaneseq
    %v748 = vshrl.u32 %v747, 7
    %v749 = vsub.s32 %v746, %v748
    %v750 = vrot.slane %v743, %v749
    %v751 = vcombine.low %v544, %v545
    %v753 = vunpack.c.l.s4 1966171168
    %v754 = vunpack.c.0.s8 %v753
    %v755 = vlaneseq
    %v756 = vshrl.u32 %v755, 7
    %v757 = vsub.s32 %v754, %v756
    %v758 = vrot.slane %v751, %v757
    %v760 = vunpack.c.l.s4 1966171168
    %v761 = vunpack.c.0.s8 %v760
    %v762 = vlaneseq
    %v763 = vshrl.u32 %v762, 7
    %v764 = vsub.s32 %v761, %v763
    %v765 = vrot.slane %v758, %v764
    %v766 = vcombine.low %v546, %v547
    %v768 = vunpack.c.l.s4 1966171168
    %v769 = vunpack.c.0.s8 %v768
    %v770 = vlaneseq
    %v771 = vshrl.u32 %v770, 7
    %v772 = vsub.s32 %v769, %v771
    %v773 = vrot.slane %v766, %v772
    %v775 = vunpack.c.l.s4 1966171168
    %v776 = vunpack.c.0.s8 %v775
    %v777 = vlaneseq
    %v778 = vshrl.u32 %v777, 7
    %v779 = vsub.s32 %v776, %v778
    %v780 = vrot.slane %v773, %v779
    %v781 = vcombine.low %v548, %v549
    %v783 = vunpack.c.l.s4 1966171168
    %v784 = vunpack.c.0.s8 %v783
    %v785 = vlaneseq
    %v786 = vshrl.u32 %v785, 7
    %v787 = vsub.s32 %v784, %v786
    %v788 = vrot.slane %v781, %v787
    %v790 = vunpack.c.l.s4 1966171168
    %v791 = vunpack.c.0.s8 %v790
    %v792 = vlaneseq
    %v793 = vshrl.u32 %v792, 7
    %v794 = vsub.s32 %v791, %v793
    %v795 = vrot.slane %v788, %v794
    %v796 = vcombine.low %v550, %v551
    %v798 = vunpack.c.l.s4 1966171168
    %v799 = vunpack.c.0.s8 %v798
    %v800 = vlaneseq
    %v801 = vshrl.u32 %v800, 7
    %v802 = vsub.s32 %v799, %v801
    %v803 = vrot.slane %v796, %v802
    %v805 = vunpack.c.l.s4 1966171168
    %v806 = vunpack.c.0.s8 %v805
    %v807 = vlaneseq
    %v808 = vshrl.u32 %v807, 7
    %v809 = vsub.s32 %v806, %v808
    %v810 = vrot.slane %v803, %v809
    %v811 = vcombine.low %v552, %v553
    %v813 = vunpack.c.l.s4 1966171168
    %v814 = vunpack.c.0.s8 %v813
    %v815 = vlaneseq
    %v816 = vshrl.u32 %v815, 7
    %v817 = vsub.s32 %v814, %v816
    %v818 = vrot.slane %v811, %v817
    %v820 = vunpack.c.l.s4 1966171168
    %v821 = vunpack.c.0.s8 %v820
    %v822 = vlaneseq
    %v823 = vshrl.u32 %v822, 7
    %v824 = vsub.s32 %v821, %v823
    %v825 = vrot.slane %v818, %v824
    %vm842 = vcmask 1040384
    %vm843 = vcmask 517121
    %vm844 = vmor %vm843, %vm842
    %845 = vst.msk [vmem:[#allocation2] sm:$0x3] %vm844, %v600
    %846 = vst.msk [vmem:[#allocation2 + $0x2] sm:$0x3] %vm844, %v615
    %847 = vst.msk [vmem:[#allocation2 + $0x4] sm:$0x3] %vm844, %v630
    %848 = vst.msk [vmem:[#allocation2 + $0x6] sm:$0x3] %vm844, %v645
    %849 = vst.msk [vmem:[#allocation2 + $0x8] sm:$0x3] %vm844, %v660
    %850 = vst.msk [vmem:[#allocation2 + $0xa] sm:$0x3] %vm844, %v675
    %851 = vst.msk [vmem:[#allocation2 + $0xc] sm:$0x3] %vm844, %v690
    %852 = vst.msk [vmem:[#allocation2 + $0xe] sm:$0x3] %vm844, %v705
    %853 = vst.msk [vmem:[#allocation2 + $0x10] sm:$0x3] %vm844, %v720
    %854 = vst.msk [vmem:[#allocation2 + $0x12] sm:$0x3] %vm844, %v735
    %855 = vst.msk [vmem:[#allocation2 + $0x14] sm:$0x3] %vm844, %v750
    %856 = vst.msk [vmem:[#allocation2 + $0x16] sm:$0x3] %vm844, %v765
    %857 = vst.msk [vmem:[#allocation2 + $0x18] sm:$0x3] %vm844, %v780
    %858 = vst.msk [vmem:[#allocation2 + $0x1a] sm:$0x3] %vm844, %v795
    %859 = vst.msk [vmem:[#allocation2 + $0x1c] sm:$0x3] %vm844, %v810
    %860 = vst.msk [vmem:[#allocation2 + $0x1e] sm:$0x3] %vm844, %v825
    %vm861 = vcmask 254976
    %862 = vst.msk [vmem:[#allocation3] sm:$0x3] %vm861, 0.0
    %s863 = scalar_lea.vmem [#allocation3], 34
    %864 = vst.msk [vmem:[%s863] sm:$0x3] %vm861, 0.0
    %v865 = vld [vmem:[%s3] sm:$0xf]
    %v866 = vld [vmem:[%s3 + $0x4] sm:$0xf]
    %v867 = vld [vmem:[%s3 + $0x8] sm:$0xf]
    %v868 = vld [vmem:[%s3 + $0xc] sm:$0xf]
    %v869 = vld [vmem:[%s5] sm:$0xf]
    %v870 = vld [vmem:[%s5 + $0x4] sm:$0xf]
    %v871 = vld [vmem:[%s5 + $0x8] sm:$0xf]
    %v872 = vld [vmem:[%s5 + $0xc] sm:$0xf]
    %v873 = vld [vmem:[%s4] sm:$0x1]
    %v875 = vlaneseq
    %v876 = vshrl.u32 %v875, 7
    %v877 = vsub.s32 0, %v876
    %v878 = vrot.slane %v873, %v877
    %v880 = vld [vmem:[%s6] sm:$0x1]
    %v882 = vlaneseq
    %v883 = vshrl.u32 %v882, 7
    %v884 = vsub.s32 0, %v883
    %v885 = vrot.slane %v880, %v884
    %v891 = vunpack.c.l.b16 %v865
    %v892 = vunpack.c.l.b16 %v866
    %v893 = vunpack.c.l.b16 %v867
    %v894 = vunpack.c.l.b16 %v868
    %v895 = vpack.c.b16 %v892, %v891
    %v896 = vpack.c.b16 %v894, %v893
    %v900 = vsel %vm222, 0, 0
    %902 = vmatprep.subr.bf16.mxu0 0
    %903 = vmatpush1.bf16.msra.mxu0 %v895
    %904 = vmatprep.subr.bf16.mxu0 0
    %905 = vmatpush1.bf16.msra.mxu0 %v896
    %906 = vmatprep.subr.bf16.mxu0 0
    %907 = vmatpush1.bf16.msra.mxu0 0
    %908 = vmatprep.subr.bf16.mxu0 0
    %909 = vmatpush1.bf16.msra.mxu0 0
    %910 = vmatprep.subr.bf16.mxu0 0
    %911 = vmatpush1.bf16.msra.mxu0 0
    %912 = vmatprep.subr.bf16.mxu0 0
    %913 = vmatpush1.bf16.msra.mxu0 0
    %914 = vmatprep.subr.bf16.mxu0 0
    %915 = vmatpush1.bf16.msra.mxu0 0
    %916 = vmatprep.subr.bf16.mxu0 0
    %917 = vmatpush1.bf16.msra.mxu0 0
    %918 = vmatprep.subr.bf16.mxu0 0
    %919 = vmatpush1.bf16.msra.mxu0 0
    %920 = vmatprep.subr.bf16.mxu0 0
    %921 = vmatpush1.bf16.msra.mxu0 0
    %922 = vmatprep.subr.bf16.mxu0 0
    %923 = vmatpush1.bf16.msra.mxu0 0
    %924 = vmatprep.subr.bf16.mxu0 0
    %925 = vmatpush1.bf16.msra.mxu0 0
    %926 = vmatprep.subr.bf16.mxu0 0
    %927 = vmatpush1.bf16.msra.mxu0 0
    %928 = vmatprep.subr.bf16.mxu0 0
    %929 = vmatpush1.bf16.msra.mxu0 0
    %930 = vmatprep.subr.bf16.mxu0 0
    %931 = vmatpush1.bf16.msra.mxu0 0
    %932 = vmatprep.subr.bf16.mxu0 0
    %933 = vmatpush1.bf16.msra.mxu0 0
    %934 = vmatprep.mubr.bf16.mxu0 0
    %935 = vmatmul.mubr.bf16.gmra.mrb[0].mxu0 %v900
    %v936 = vpop.f32.mrb[0].mxu0
    %v937 = vadd.f32 %v878, %v936
    %v938 = vpop.f32.mrb[0].mxu0
    %v939 = vpop.f32.mrb[0].mxu0
    %v940 = vpop.f32.mrb[0].mxu0
    %941 = vdwg.mxu0
    %v946 = vunpack.c.l.b16 %v869
    %v947 = vunpack.c.l.b16 %v870
    %v948 = vunpack.c.l.b16 %v871
    %v949 = vunpack.c.l.b16 %v872
    %v950 = vpack.c.b16 %v947, %v946
    %v951 = vpack.c.b16 %v949, %v948
    %954 = vmatprep.subr.bf16.mxu0 0
    %955 = vmatpush1.bf16.msra.mxu0 %v950
    %956 = vmatprep.subr.bf16.mxu0 0
    %957 = vmatpush1.bf16.msra.mxu0 %v951
    %958 = vmatprep.subr.bf16.mxu0 0
    %959 = vmatpush1.bf16.msra.mxu0 0
    %960 = vmatprep.subr.bf16.mxu0 0
    %961 = vmatpush1.bf16.msra.mxu0 0
    %962 = vmatprep.subr.bf16.mxu0 0
    %963 = vmatpush1.bf16.msra.mxu0 0
    %964 = vmatprep.subr.bf16.mxu0 0
    %965 = vmatpush1.bf16.msra.mxu0 0
    %966 = vmatprep.subr.bf16.mxu0 0
    %967 = vmatpush1.bf16.msra.mxu0 0
    %968 = vmatprep.subr.bf16.mxu0 0
    %969 = vmatpush1.bf16.msra.mxu0 0
    %970 = vmatprep.subr.bf16.mxu0 0
    %971 = vmatpush1.bf16.msra.mxu0 0
    %972 = vmatprep.subr.bf16.mxu0 0
    %973 = vmatpush1.bf16.msra.mxu0 0
    %974 = vmatprep.subr.bf16.mxu0 0
    %975 = vmatpush1.bf16.msra.mxu0 0
    %976 = vmatprep.subr.bf16.mxu0 0
    %977 = vmatpush1.bf16.msra.mxu0 0
    %978 = vmatprep.subr.bf16.mxu0 0
    %979 = vmatpush1.bf16.msra.mxu0 0
    %980 = vmatprep.subr.bf16.mxu0 0
    %981 = vmatpush1.bf16.msra.mxu0 0
    %982 = vmatprep.subr.bf16.mxu0 0
    %983 = vmatpush1.bf16.msra.mxu0 0
    %984 = vmatprep.subr.bf16.mxu0 0
    %985 = vmatpush1.bf16.msra.mxu0 0
    %986 = vmatprep.mubr.bf16.mxu0 0
    %987 = vmatmul.mubr.bf16.gmra.mrb[0].mxu0 %v900
    %v988 = vpop.f32.mrb[0].mxu0
    %v989 = vadd.f32 %v885, %v988
    %v990 = vpop.f32.mrb[0].mxu0
    %v991 = vpop.f32.mrb[0].mxu0
    %v992 = vpop.f32.mrb[0].mxu0
    %993 = vdwg.mxu0
    %v994 = vld [vmem:[#allocation2] sm:$0x3]
    %v995 = vunpack.c.l.bf16 %v994
    %s996 = scalar_lea.vmem [#allocation2], 30
    %v997 = vld [vmem:[%s996] sm:$0x3]
    %v998 = vunpack.c.l.bf16 %v997
    %v999 = vadd.f32 %v995, %v937
    %v1000 = vmul.f32 %v999, 0.5
    %v1001 = vtanh.pop %v1000
    %v1002 = vadd.f32 %v1001, 1.0
    %v1003 = vmul.f32 %v1002, 0.5
    %v1006 = vunpack.c.l.s4 1983009808
    %v1007 = vunpack.c.0.s8 %v1006
    %v1008 = vlaneseq
    %v1009 = vshrl.u32 %v1008, 7
    %v1010 = vsub.s32 %v1007, %v1009
    %v1011 = vrot.slane %v937, %v1010
    %1012 = vrot.lane.b32.xlu0 %v1011, 64
    %v1013 = vpop.permute.xlu0 %1012
    %v1015 = vmul.f32 %v1003, %v1013
    %1017 = vrot.lane.b32.xlu0 %v1015, 64
    %v1018 = vpop.permute.xlu0 %1017
    %v1020 = vadd.f32 %v995, %v1018
    %v1021 = vtanh.pop %v1020
    %v1022 = vsub.f32 1.0, %v1003
    %1024 = vrot.lane.b32.xlu0 %v1021, 96
    %v1025 = vpop.permute.xlu0 %1024
    %v1027 = vmul.f32 %v1022, %v1025
    %v1028 = vmul.f32 %v1003, 0.0
    %v1029 = vadd.f32 %v1027, %v1028
    %v1032 = vunpack.c.l.s4 1983009808
    %v1033 = vunpack.c.0.s8 %v1032
    %v1034 = vlaneseq
    %v1035 = vshrl.u32 %v1034, 7
    %v1036 = vsub.s32 %v1033, %v1035
    %v1037 = vrot.slane %v989, %v1036
    %1038 = vrot.lane.b32.xlu0 %v1037, 96
    %v1039 = vpop.permute.xlu0 %1038
    %v1041 = vadd.f32 %v998, %v1039
    %v1042 = vmul.f32 %v1041, 0.5
    %v1043 = vtanh.pop %v1042
    %v1044 = vadd.f32 %v1043, 1.0
    %v1045 = vmul.f32 %v1044, 0.5
    %v1047 = vrot.slane %v998, 2
    %v1049 = vadd.f32 %v1047, %v1039
    %v1050 = vmul.f32 %v1049, 0.5
    %v1051 = vtanh.pop %v1050
    %v1052 = vadd.f32 %v1051, 1.0
    %v1053 = vmul.f32 %v1052, 0.5
    %1054 = vrot.lane.b32.xlu0 %v1037, 32
    %v1055 = vpop.permute.xlu0 %1054
    %v1057 = vmul.f32 %v1045, %v1055
    %1058 = vrot.lane.b32.xlu0 %v998, 96
    %v1059 = vpop.permute.xlu0 %1058
    %v1060 = vrot.slane %v1059, 2
    %1063 = vrot.lane.b32.xlu0 %v1057, 32
    %v1064 = vpop.permute.xlu0 %1063
    %v1066 = vadd.f32 %v1060, %v1064
    %v1067 = vtanh.pop %v1066
    %v1068 = vsub.f32 1.0, %v1053
    %v1069 = vmul.f32 %v1068, %v1067
    %v1070 = vmul.f32 %v1053, 0.0
    %v1071 = vadd.f32 %v1069, %v1070
    %v1074 = vunpack.c.l.s4 1983009808
    %v1075 = vunpack.c.0.s8 %v1074
    %v1076 = vlaneseq
    %v1077 = vshrl.u32 %v1076, 7
    %v1078 = vsub.s32 %v1075, %v1077
    %v1079 = vrot.slane %v1029, %v1078
    %1080 = vrot.lane.b32.xlu0 %v1079, 96
    %v1081 = vpop.permute.xlu0 %1080
    %s1083 = scalar_lea.vmem [#allocation3], 2
    %1084 = vst.msk [vmem:[%s1083] sm:$0x3] %vm861, %v1081
    %s1085 = scalar_lea.vmem [#allocation3], 32
    %1086 = vst.msk [vmem:[%s1085] sm:$0x3] %vm861, %v1071
    %v1087 = vpack.c.bf16 %v1029, %v1029
    %1089 = vrot.lane.b32.xlu0 %v1087, 96
    %v1090 = vpop.permute.xlu0 %1089
    %v1092 = vsel %vm222, %v1090, 0
    %1094 = vmatprep.subr.bf16.mxu0 0
    %1095 = vmatpush1.bf16.msra.mxu0 %v895
    %1096 = vmatprep.subr.bf16.mxu0 0
    %1097 = vmatpush1.bf16.msra.mxu0 %v896
    %1098 = vmatprep.subr.bf16.mxu0 0
    %1099 = vmatpush1.bf16.msra.mxu0 0
    %1100 = vmatprep.subr.bf16.mxu0 0
    %1101 = vmatpush1.bf16.msra.mxu0 0
    %1102 = vmatprep.subr.bf16.mxu0 0
    %1103 = vmatpush1.bf16.msra.mxu0 0
    %1104 = vmatprep.subr.bf16.mxu0 0
    %1105 = vmatpush1.bf16.msra.mxu0 0
    %1106 = vmatprep.subr.bf16.mxu0 0
    %1107 = vmatpush1.bf16.msra.mxu0 0
    %1108 = vmatprep.subr.bf16.mxu0 0
    %1109 = vmatpush1.bf16.msra.mxu0 0
    %1110 = vmatprep.subr.bf16.mxu0 0
    %1111 = vmatpush1.bf16.msra.mxu0 0
    %1112 = vmatprep.subr.bf16.mxu0 0
    %1113 = vmatpush1.bf16.msra.mxu0 0
    %1114 = vmatprep.subr.bf16.mxu0 0
    %1115 = vmatpush1.bf16.msra.mxu0 0
    %1116 = vmatprep.subr.bf16.mxu0 0
    %1117 = vmatpush1.bf16.msra.mxu0 0
    %1118 = vmatprep.subr.bf16.mxu0 0
    %1119 = vmatpush1.bf16.msra.mxu0 0
    %1120 = vmatprep.subr.bf16.mxu0 0
    %1121 = vmatpush1.bf16.msra.mxu0 0
    %1122 = vmatprep.subr.bf16.mxu0 0
    %1123 = vmatpush1.bf16.msra.mxu0 0
    %1124 = vmatprep.subr.bf16.mxu0 0
    %1125 = vmatpush1.bf16.msra.mxu0 0
    %1126 = vmatprep.mubr.bf16.mxu0 0
    %1127 = vmatmul.mubr.bf16.gmra.mrb[0].mxu0 %v1092
    %v1128 = vpop.f32.mrb[0].mxu0
    %v1129 = vadd.f32 %v878, %v1128
    %v1130 = vpop.f32.mrb[0].mxu0
    %v1131 = vpop.f32.mrb[0].mxu0
    %v1132 = vpop.f32.mrb[0].mxu0
    %1133 = vdwg.mxu0
    %v1134 = vpack.c.bf16 %v1071, %v1071
    %v1136 = vsel %vm222, %v1134, 0
    %1138 = vmatprep.subr.bf16.mxu0 0
    %1139 = vmatpush1.bf16.msra.mxu0 %v950
    %1140 = vmatprep.subr.bf16.mxu0 0
    %1141 = vmatpush1.bf16.msra.mxu0 %v951
    %1142 = vmatprep.subr.bf16.mxu0 0
    %1143 = vmatpush1.bf16.msra.mxu0 0
    %1144 = vmatprep.subr.bf16.mxu0 0
    %1145 = vmatpush1.bf16.msra.mxu0 0
    %1146 = vmatprep.subr.bf16.mxu0 0
    %1147 = vmatpush1.bf16.msra.mxu0 0
    %1148 = vmatprep.subr.bf16.mxu0 0
    %1149 = vmatpush1.bf16.msra.mxu0 0
    %1150 = vmatprep.subr.bf16.mxu0 0
    %1151 = vmatpush1.bf16.msra.mxu0 0
    %1152 = vmatprep.subr.bf16.mxu0 0
    %1153 = vmatpush1.bf16.msra.mxu0 0
    %1154 = vmatprep.subr.bf16.mxu0 0
    %1155 = vmatpush1.bf16.msra.mxu0 0
    %1156 = vmatprep.subr.bf16.mxu0 0
    %1157 = vmatpush1.bf16.msra.mxu0 0
    %1158 = vmatprep.subr.bf16.mxu0 0
    %1159 = vmatpush1.bf16.msra.mxu0 0
    %1160 = vmatprep.subr.bf16.mxu0 0
    %1161 = vmatpush1.bf16.msra.mxu0 0
    %1162 = vmatprep.subr.bf16.mxu0 0
    %1163 = vmatpush1.bf16.msra.mxu0 0
    %1164 = vmatprep.subr.bf16.mxu0 0
    %1165 = vmatpush1.bf16.msra.mxu0 0
    %1166 = vmatprep.subr.bf16.mxu0 0
    %1167 = vmatpush1.bf16.msra.mxu0 0
    %1168 = vmatprep.subr.bf16.mxu0 0
    %1169 = vmatpush1.bf16.msra.mxu0 0
    %1170 = vmatprep.mubr.bf16.mxu0 0
    %1171 = vmatmul.mubr.bf16.gmra.mrb[0].mxu0 %v1136
    %v1172 = vpop.f32.mrb[0].mxu0
    %v1173 = vadd.f32 %v885, %v1172
    %v1174 = vpop.f32.mrb[0].mxu0
    %v1175 = vpop.f32.mrb[0].mxu0
    %v1176 = vpop.f32.mrb[0].mxu0
    %1177 = vdwg.mxu0
    %s1178 = scalar_lea.vmem [#allocation2], 2
    %v1179 = vld [vmem:[%s1178] sm:$0x3]
    %v1180 = vunpack.c.l.bf16 %v1179
    %s1181 = scalar_lea.vmem [#allocation2], 28
    %v1182 = vld [vmem:[%s1181] sm:$0x3]
    %v1183 = vunpack.c.l.bf16 %v1182
    %v1184 = vadd.f32 %v1180, %v1129
    %v1185 = vmul.f32 %v1184, 0.5
    %v1186 = vtanh.pop %v1185
    %v1187 = vadd.f32 %v1186, 1.0
    %v1188 = vmul.f32 %v1187, 0.5
    %v1191 = vunpack.c.l.s4 1983009808
    %v1192 = vunpack.c.0.s8 %v1191
    %v1193 = vlaneseq
    %v1194 = vshrl.u32 %v1193, 7
    %v1195 = vsub.s32 %v1192, %v1194
    %v1196 = vrot.slane %v1129, %v1195
    %1197 = vrot.lane.b32.xlu0 %v1196, 64
    %v1198 = vpop.permute.xlu0 %1197
    %v1200 = vmul.f32 %v1188, %v1198
    %1202 = vrot.lane.b32.xlu0 %v1200, 64
    %v1203 = vpop.permute.xlu0 %1202
    %v1205 = vadd.f32 %v1180, %v1203
    %v1206 = vtanh.pop %v1205
    %v1207 = vsub.f32 1.0, %v1188
    %1209 = vrot.lane.b32.xlu0 %v1206, 96
    %v1210 = vpop.permute.xlu0 %1209
    %v1212 = vmul.f32 %v1207, %v1210
    %v1213 = vmul.f32 %v1188, %v1029
    %v1214 = vadd.f32 %v1212, %v1213
    %v1217 = vunpack.c.l.s4 1983009808
    %v1218 = vunpack.c.0.s8 %v1217
    %v1219 = vlaneseq
    %v1220 = vshrl.u32 %v1219, 7
    %v1221 = vsub.s32 %v1218, %v1220
    %v1222 = vrot.slane %v1173, %v1221
    %1223 = vrot.lane.b32.xlu0 %v1222, 96
    %v1224 = vpop.permute.xlu0 %1223
    %v1226 = vadd.f32 %v1183, %v1224
    %v1227 = vmul.f32 %v1226, 0.5
    %v1228 = vtanh.pop %v1227
    %v1229 = vadd.f32 %v1228, 1.0
    %v1230 = vmul.f32 %v1229, 0.5
    %v1232 = vrot.slane %v1183, 2
    %v1234 = vadd.f32 %v1232, %v1224
    %v1235 = vmul.f32 %v1234, 0.5
    %v1236 = vtanh.pop %v1235
    %v1237 = vadd.f32 %v1236, 1.0
    %v1238 = vmul.f32 %v1237, 0.5
    %1239 = vrot.lane.b32.xlu0 %v1222, 32
    %v1240 = vpop.permute.xlu0 %1239
    %v1242 = vmul.f32 %v1230, %v1240
    %1243 = vrot.lane.b32.xlu0 %v1183, 96
    %v1244 = vpop.permute.xlu0 %1243
    %v1245 = vrot.slane %v1244, 2
    %1248 = vrot.lane.b32.xlu0 %v1242, 32
    %v1249 = vpop.permute.xlu0 %1248
    %v1251 = vadd.f32 %v1245, %v1249
    %v1252 = vtanh.pop %v1251
    %v1253 = vsub.f32 1.0, %v1238
    %v1254 = vmul.f32 %v1253, %v1252
    %v1255 = vmul.f32 %v1238, %v1071
    %v1256 = vadd.f32 %v1254, %v1255
    %v1259 = vunpack.c.l.s4 1983009808
    %v1260 = vunpack.c.0.s8 %v1259
    %v1261 = vlaneseq
    %v1262 = vshrl.u32 %v1261, 7
    %v1263 = vsub.s32 %v1260, %v1262
    %v1264 = vrot.slane %v1214, %v1263
    %1265 = vrot.lane.b32.xlu0 %v1264, 96
    %v1266 = vpop.permute.xlu0 %1265
    %s1268 = scalar_lea.vmem [#allocation3], 4
    %1269 = vst.msk [vmem:[%s1268] sm:$0x3] %vm861, %v1266
    %s1270 = scalar_lea.vmem [#allocation3], 30
    %1271 = vst.msk [vmem:[%s1270] sm:$0x3] %vm861, %v1256
    %v1272 = vpack.c.bf16 %v1214, %v1214
    %1274 = vrot.lane.b32.xlu0 %v1272, 96
    %v1275 = vpop.permute.xlu0 %1274
    %v1277 = vsel %vm222, %v1275, 0
    %1279 = vmatprep.subr.bf16.mxu0 0
    %1280 = vmatpush1.bf16.msra.mxu0 %v895
    %1281 = vmatprep.subr.bf16.mxu0 0
    %1282 = vmatpush1.bf16.msra.mxu0 %v896
    %1283 = vmatprep.subr.bf16.mxu0 0
    %1284 = vmatpush1.bf16.msra.mxu0 0
    %1285 = vmatprep.subr.bf16.mxu0 0
    %1286 = vmatpush1.bf16.msra.mxu0 0
    %1287 = vmatprep.subr.bf16.mxu0 0
    %1288 = vmatpush1.bf16.msra.mxu0 0
    %1289 = vmatprep.subr.bf16.mxu0 0
    %1290 = vmatpush1.bf16.msra.mxu0 0
    %1291 = vmatprep.subr.bf16.mxu0 0
    %1292 = vmatpush1.bf16.msra.mxu0 0
    %1293 = vmatprep.subr.bf16.mxu0 0
    %1294 = vmatpush1.bf16.msra.mxu0 0
    %1295 = vmatprep.subr.bf16.mxu0 0
    %1296 = vmatpush1.bf16.msra.mxu0 0
    %1297 = vmatprep.subr.bf16.mxu0 0
    %1298 = vmatpush1.bf16.msra.mxu0 0
    %1299 = vmatprep.subr.bf16.mxu0 0
    %1300 = vmatpush1.bf16.msra.mxu0 0
    %1301 = vmatprep.subr.bf16.mxu0 0
    %1302 = vmatpush1.bf16.msra.mxu0 0
    %1303 = vmatprep.subr.bf16.mxu0 0
    %1304 = vmatpush1.bf16.msra.mxu0 0
    %1305 = vmatprep.subr.bf16.mxu0 0
    %1306 = vmatpush1.bf16.msra.mxu0 0
    %1307 = vmatprep.subr.bf16.mxu0 0
    %1308 = vmatpush1.bf16.msra.mxu0 0
    %1309 = vmatprep.subr.bf16.mxu0 0
    %1310 = vmatpush1.bf16.msra.mxu0 0
    %1311 = vmatprep.mubr.bf16.mxu0 0
    %1312 = vmatmul.mubr.bf16.gmra.mrb[0].mxu0 %v1277
    %v1313 = vpop.f32.mrb[0].mxu0
    %v1314 = vadd.f32 %v878, %v1313
    %v1315 = vpop.f32.mrb[0].mxu0
    %v1316 = vpop.f32.mrb[0].mxu0
    %v1317 = vpop.f32.mrb[0].mxu0
    %1318 = vdwg.mxu0
    %v1319 = vpack.c.bf16 %v1256, %v1256
    %v1321 = vsel %vm222, %v1319, 0
    %1323 = vmatprep.subr.bf16.mxu0 0
    %1324 = vmatpush1.bf16.msra.mxu0 %v950
    %1325 = vmatprep.subr.bf16.mxu0 0
    %1326 = vmatpush1.bf16.msra.mxu0 %v951
    %1327 = vmatprep.subr.bf16.mxu0 0
    %1328 = vmatpush1.bf16.msra.mxu0 0
    %1329 = vmatprep.subr.bf16.mxu0 0
    %1330 = vmatpush1.bf16.msra.mxu0 0
    %1331 = vmatprep.subr.bf16.mxu0 0
    %1332 = vmatpush1.bf16.msra.mxu0 0
    %1333 = vmatprep.subr.bf16.mxu0 0
    %1334 = vmatpush1.bf16.msra.mxu0 0
    %1335 = vmatprep.subr.bf16.mxu0 0
    %1336 = vmatpush1.bf16.msra.mxu0 0
    %1337 = vmatprep.subr.bf16.mxu0 0
    %1338 = vmatpush1.bf16.msra.mxu0 0
    %1339 = vmatprep.subr.bf16.mxu0 0
    %1340 = vmatpush1.bf16.msra.mxu0 0
    %1341 = vmatprep.subr.bf16.mxu0 0
    %1342 = vmatpush1.bf16.msra.mxu0 0
    %1343 = vmatprep.subr.bf16.mxu0 0
    %1344 = vmatpush1.bf16.msra.mxu0 0
    %1345 = vmatprep.subr.bf16.mxu0 0
    %1346 = vmatpush1.bf16.msra.mxu0 0
    %1347 = vmatprep.subr.bf16.mxu0 0
    %1348 = vmatpush1.bf16.msra.mxu0 0
    %1349 = vmatprep.subr.bf16.mxu0 0
    %1350 = vmatpush1.bf16.msra.mxu0 0
    %1351 = vmatprep.subr.bf16.mxu0 0
    %1352 = vmatpush1.bf16.msra.mxu0 0
    %1353 = vmatprep.subr.bf16.mxu0 0
    %1354 = vmatpush1.bf16.msra.mxu0 0
    %1355 = vmatprep.mubr.bf16.mxu0 0
    %1356 = vmatmul.mubr.bf16.gmra.mrb[0].mxu0 %v1321
    %v1357 = vpop.f32.mrb[0].mxu0
    %v1358 = vadd.f32 %v885, %v1357
    %v1359 = vpop.f32.mrb[0].mxu0
    %v1360 = vpop.f32.mrb[0].mxu0
    %v1361 = vpop.f32.mrb[0].mxu0
    %1362 = vdwg.mxu0
    %s1363 = scalar_lea.vmem [#allocation2], 4
    %v1364 = vld [vmem:[%s1363] sm:$0x3]
    %v1365 = vunpack.c.l.bf16 %v1364
    %s1366 = scalar_lea.vmem [#allocation2], 26
    %v1367 = vld [vmem:[%s1366] sm:$0x3]
    %v1368 = vunpack.c.l.bf16 %v1367
    %v1369 = vadd.f32 %v1365, %v1314
    %v1370 = vmul.f32 %v1369, 0.5
    %v1371 = vtanh.pop %v1370
    %v1372 = vadd.f32 %v1371, 1.0
    %v1373 = vmul.f32 %v1372, 0.5
    %v1376 = vunpack.c.l.s4 1983009808
    %v1377 = vunpack.c.0.s8 %v1376
    %v1378 = vlaneseq
    %v1379 = vshrl.u32 %v1378, 7
    %v1380 = vsub.s32 %v1377, %v1379
    %v1381 = vrot.slane %v1314, %v1380
    %1382 = vrot.lane.b32.xlu0 %v1381, 64
    %v1383 = vpop.permute.xlu0 %1382
    %v1385 = vmul.f32 %v1373, %v1383
    %1387 = vrot.lane.b32.xlu0 %v1385, 64
    %v1388 = vpop.permute.xlu0 %1387
    %v1390 = vadd.f32 %v1365, %v1388
    %v1391 = vtanh.pop %v1390
    %v1392 = vsub.f32 1.0, %v1373
    %1394 = vrot.lane.b32.xlu0 %v1391, 96
    %v1395 = vpop.permute.xlu0 %1394
    %v1397 = vmul.f32 %v1392, %v1395
    %v1398 = vmul.f32 %v1373, %v1214
    %v1399 = vadd.f32 %v1397, %v1398
    %v1402 = vunpack.c.l.s4 1983009808
    %v1403 = vunpack.c.0.s8 %v1402
    %v1404 = vlaneseq
    %v1405 = vshrl.u32 %v1404, 7
    %v1406 = vsub.s32 %v1403, %v1405
    %v1407 = vrot.slane %v1358, %v1406
    %1408 = vrot.lane.b32.xlu0 %v1407, 96
    %v1409 = vpop.permute.xlu0 %1408
    %v1411 = vadd.f32 %v1368, %v1409
    %v1412 = vmul.f32 %v1411, 0.5
    %v1413 = vtanh.pop %v1412
    %v1414 = vadd.f32 %v1413, 1.0
    %v1415 = vmul.f32 %v1414, 0.5
    %v1417 = vrot.slane %v1368, 2
    %v1419 = vadd.f32 %v1417, %v1409
    %v1420 = vmul.f32 %v1419, 0.5
    %v1421 = vtanh.pop %v1420
    %v1422 = vadd.f32 %v1421, 1.0
    %v1423 = vmul.f32 %v1422, 0.5
    %1424 = vrot.lane.b32.xlu0 %v1407, 32
    %v1425 = vpop.permute.xlu0 %1424
    %v1427 = vmul.f32 %v1415, %v1425
    %1428 = vrot.lane.b32.xlu0 %v1368, 96
    %v1429 = vpop.permute.xlu0 %1428
    %v1430 = vrot.slane %v1429, 2
    %1433 = vrot.lane.b32.xlu0 %v1427, 32
    %v1434 = vpop.permute.xlu0 %1433
    %v1436 = vadd.f32 %v1430, %v1434
    %v1437 = vtanh.pop %v1436
    %v1438 = vsub.f32 1.0, %v1423
    %v1439 = vmul.f32 %v1438, %v1437
    %v1440 = vmul.f32 %v1423, %v1256
    %v1441 = vadd.f32 %v1439, %v1440
    %v1444 = vunpack.c.l.s4 1983009808
    %v1445 = vunpack.c.0.s8 %v1444
    %v1446 = vlaneseq
    %v1447 = vshrl.u32 %v1446, 7
    %v1448 = vsub.s32 %v1445, %v1447
    %v1449 = vrot.slane %v1399, %v1448
    %1450 = vrot.lane.b32.xlu0 %v1449, 96
    %v1451 = vpop.permute.xlu0 %1450
    %s1453 = scalar_lea.vmem [#allocation3], 6
    %1454 = vst.msk [vmem:[%s1453] sm:$0x3] %vm861, %v1451
    %s1455 = scalar_lea.vmem [#allocation3], 28
    %1456 = vst.msk [vmem:[%s1455] sm:$0x3] %vm861, %v1441
    %v1457 = vpack.c.bf16 %v1399, %v1399
    %1459 = vrot.lane.b32.xlu0 %v1457, 96
    %v1460 = vpop.permute.xlu0 %1459
    %v1462 = vsel %vm222, %v1460, 0
    %1464 = vmatprep.subr.bf16.mxu0 0
    %1465 = vmatpush1.bf16.msra.mxu0 %v895
    %1466 = vmatprep.subr.bf16.mxu0 0
    %1467 = vmatpush1.bf16.msra.mxu0 %v896
    %1468 = vmatprep.subr.bf16.mxu0 0
    %1469 = vmatpush1.bf16.msra.mxu0 0
    %1470 = vmatprep.subr.bf16.mxu0 0
    %1471 = vmatpush1.bf16.msra.mxu0 0
    %1472 = vmatprep.subr.bf16.mxu0 0
    %1473 = vmatpush1.bf16.msra.mxu0 0
    %1474 = vmatprep.subr.bf16.mxu0 0
    %1475 = vmatpush1.bf16.msra.mxu0 0
    %1476 = vmatprep.subr.bf16.mxu0 0
    %1477 = vmatpush1.bf16.msra.mxu0 0
    %1478 = vmatprep.subr.bf16.mxu0 0
    %1479 = vmatpush1.bf16.msra.mxu0 0
    %1480 = vmatprep.subr.bf16.mxu0 0
    %1481 = vmatpush1.bf16.msra.mxu0 0
    %1482 = vmatprep.subr.bf16.mxu0 0
    %1483 = vmatpush1.bf16.msra.mxu0 0
    %1484 = vmatprep.subr.bf16.mxu0 0
    %1485 = vmatpush1.bf16.msra.mxu0 0
    %1486 = vmatprep.subr.bf16.mxu0 0
    %1487 = vmatpush1.bf16.msra.mxu0 0
    %1488 = vmatprep.subr.bf16.mxu0 0
    %1489 = vmatpush1.bf16.msra.mxu0 0
    %1490 = vmatprep.subr.bf16.mxu0 0
    %1491 = vmatpush1.bf16.msra.mxu0 0
    %1492 = vmatprep.subr.bf16.mxu0 0
    %1493 = vmatpush1.bf16.msra.mxu0 0
    %1494 = vmatprep.subr.bf16.mxu0 0
    %1495 = vmatpush1.bf16.msra.mxu0 0
    %1496 = vmatprep.mubr.bf16.mxu0 0
    %1497 = vmatmul.mubr.bf16.gmra.mrb[0].mxu0 %v1462
    %v1498 = vpop.f32.mrb[0].mxu0
    %v1499 = vadd.f32 %v878, %v1498
    %v1500 = vpop.f32.mrb[0].mxu0
    %v1501 = vpop.f32.mrb[0].mxu0
    %v1502 = vpop.f32.mrb[0].mxu0
    %1503 = vdwg.mxu0
    %v1504 = vpack.c.bf16 %v1441, %v1441
    %v1506 = vsel %vm222, %v1504, 0
    %1508 = vmatprep.subr.bf16.mxu0 0
    %1509 = vmatpush1.bf16.msra.mxu0 %v950
    %1510 = vmatprep.subr.bf16.mxu0 0
    %1511 = vmatpush1.bf16.msra.mxu0 %v951
    %1512 = vmatprep.subr.bf16.mxu0 0
    %1513 = vmatpush1.bf16.msra.mxu0 0
    %1514 = vmatprep.subr.bf16.mxu0 0
    %1515 = vmatpush1.bf16.msra.mxu0 0
    %1516 = vmatprep.subr.bf16.mxu0 0
    %1517 = vmatpush1.bf16.msra.mxu0 0
    %1518 = vmatprep.subr.bf16.mxu0 0
    %1519 = vmatpush1.bf16.msra.mxu0 0
    %1520 = vmatprep.subr.bf16.mxu0 0
    %1521 = vmatpush1.bf16.msra.mxu0 0
    %1522 = vmatprep.subr.bf16.mxu0 0
    %1523 = vmatpush1.bf16.msra.mxu0 0
    %1524 = vmatprep.subr.bf16.mxu0 0
    %1525 = vmatpush1.bf16.msra.mxu0 0
    %1526 = vmatprep.subr.bf16.mxu0 0
    %1527 = vmatpush1.bf16.msra.mxu0 0
    %1528 = vmatprep.subr.bf16.mxu0 0
    %1529 = vmatpush1.bf16.msra.mxu0 0
    %1530 = vmatprep.subr.bf16.mxu0 0
    %1531 = vmatpush1.bf16.msra.mxu0 0
    %1532 = vmatprep.subr.bf16.mxu0 0
    %1533 = vmatpush1.bf16.msra.mxu0 0
    %1534 = vmatprep.subr.bf16.mxu0 0
    %1535 = vmatpush1.bf16.msra.mxu0 0
    %1536 = vmatprep.subr.bf16.mxu0 0
    %1537 = vmatpush1.bf16.msra.mxu0 0
    %1538 = vmatprep.subr.bf16.mxu0 0
    %1539 = vmatpush1.bf16.msra.mxu0 0
    %1540 = vmatprep.mubr.bf16.mxu0 0
    %1541 = vmatmul.mubr.bf16.gmra.mrb[0].mxu0 %v1506
    %v1542 = vpop.f32.mrb[0].mxu0
    %v1543 = vadd.f32 %v885, %v1542
    %v1544 = vpop.f32.mrb[0].mxu0
    %v1545 = vpop.f32.mrb[0].mxu0
    %v1546 = vpop.f32.mrb[0].mxu0
    %1547 = vdwg.mxu0
    %s1548 = scalar_lea.vmem [#allocation2], 6
    %v1549 = vld [vmem:[%s1548] sm:$0x3]
    %v1550 = vunpack.c.l.bf16 %v1549
    %s1551 = scalar_lea.vmem [#allocation2], 24
    %v1552 = vld [vmem:[%s1551] sm:$0x3]
    %v1553 = vunpack.c.l.bf16 %v1552
    %v1554 = vadd.f32 %v1550, %v1499
    %v1555 = vmul.f32 %v1554, 0.5
    %v1556 = vtanh.pop %v1555
    %v1557 = vadd.f32 %v1556, 1.0
    %v1558 = vmul.f32 %v1557, 0.5
    %v1561 = vunpack.c.l.s4 1983009808
    %v1562 = vunpack.c.0.s8 %v1561
    %v1563 = vlaneseq
    %v1564 = vshrl.u32 %v1563, 7
    %v1565 = vsub.s32 %v1562, %v1564
    %v1566 = vrot.slane %v1499, %v1565
    %1567 = vrot.lane.b32.xlu0 %v1566, 64
    %v1568 = vpop.permute.xlu0 %1567
    %v1570 = vmul.f32 %v1558, %v1568
    %1572 = vrot.lane.b32.xlu0 %v1570, 64
    %v1573 = vpop.permute.xlu0 %1572
    %v1575 = vadd.f32 %v1550, %v1573
    %v1576 = vtanh.pop %v1575
    %v1577 = vsub.f32 1.0, %v1558
    %1579 = vrot.lane.b32.xlu0 %v1576, 96
    %v1580 = vpop.permute.xlu0 %1579
    %v1582 = vmul.f32 %v1577, %v1580
    %v1583 = vmul.f32 %v1558, %v1399
    %v1584 = vadd.f32 %v1582, %v1583
    %v1587 = vunpack.c.l.s4 1983009808
    %v1588 = vunpack.c.0.s8 %v1587
    %v1589 = vlaneseq
    %v1590 = vshrl.u32 %v1589, 7
    %v1591 = vsub.s32 %v1588, %v1590
    %v1592 = vrot.slane %v1543, %v1591
    %1593 = vrot.lane.b32.xlu0 %v1592, 96
    %v1594 = vpop.permute.xlu0 %1593
    %v1596 = vadd.f32 %v1553, %v1594
    %v1597 = vmul.f32 %v1596, 0.5
    %v1598 = vtanh.pop %v1597
    %v1599 = vadd.f32 %v1598, 1.0
    %v1600 = vmul.f32 %v1599, 0.5
    %v1602 = vrot.slane %v1553, 2
    %v1604 = vadd.f32 %v1602, %v1594
    %v1605 = vmul.f32 %v1604, 0.5
    %v1606 = vtanh.pop %v1605
    %v1607 = vadd.f32 %v1606, 1.0
    %v1608 = vmul.f32 %v1607, 0.5
    %1609 = vrot.lane.b32.xlu0 %v1592, 32
    %v1610 = vpop.permute.xlu0 %1609
    %v1612 = vmul.f32 %v1600, %v1610
    %1613 = vrot.lane.b32.xlu0 %v1553, 96
    %v1614 = vpop.permute.xlu0 %1613
    %v1615 = vrot.slane %v1614, 2
    %1618 = vrot.lane.b32.xlu0 %v1612, 32
    %v1619 = vpop.permute.xlu0 %1618
    %v1621 = vadd.f32 %v1615, %v1619
    %v1622 = vtanh.pop %v1621
    %v1623 = vsub.f32 1.0, %v1608
    %v1624 = vmul.f32 %v1623, %v1622
    %v1625 = vmul.f32 %v1608, %v1441
    %v1626 = vadd.f32 %v1624, %v1625
    %v1629 = vunpack.c.l.s4 1983009808
    %v1630 = vunpack.c.0.s8 %v1629
    %v1631 = vlaneseq
    %v1632 = vshrl.u32 %v1631, 7
    %v1633 = vsub.s32 %v1630, %v1632
    %v1634 = vrot.slane %v1584, %v1633
    %1635 = vrot.lane.b32.xlu0 %v1634, 96
    %v1636 = vpop.permute.xlu0 %1635
    %s1638 = scalar_lea.vmem [#allocation3], 8
    %1639 = vst.msk [vmem:[%s1638] sm:$0x3] %vm861, %v1636
    %s1640 = scalar_lea.vmem [#allocation3], 26
    %1641 = vst.msk [vmem:[%s1640] sm:$0x3] %vm861, %v1626
    %v1642 = vpack.c.bf16 %v1584, %v1584
    %1644 = vrot.lane.b32.xlu0 %v1642, 96
    %v1645 = vpop.permute.xlu0 %1644
    %v1647 = vsel %vm222, %v1645, 0
    %1649 = vmatprep.subr.bf16.mxu0 0
    %1650 = vmatpush1.bf16.msra.mxu0 %v895
    %1651 = vmatprep.subr.bf16.mxu0 0
    %1652 = vmatpush1.bf16.msra.mxu0 %v896
    %1653 = vmatprep.subr.bf16.mxu0 0
    %1654 = vmatpush1.bf16.msra.mxu0 0
    %1655 = vmatprep.subr.bf16.mxu0 0
    %1656 = vmatpush1.bf16.msra.mxu0 0
    %1657 = vmatprep.subr.bf16.mxu0 0
    %1658 = vmatpush1.bf16.msra.mxu0 0
    %1659 = vmatprep.subr.bf16.mxu0 0
    %1660 = vmatpush1.bf16.msra.mxu0 0
    %1661 = vmatprep.subr.bf16.mxu0 0
    %1662 = vmatpush1.bf16.msra.mxu0 0
    %1663 = vmatprep.subr.bf16.mxu0 0
    %1664 = vmatpush1.bf16.msra.mxu0 0
    %1665 = vmatprep.subr.bf16.mxu0 0
    %1666 = vmatpush1.bf16.msra.mxu0 0
    %1667 = vmatprep.subr.bf16.mxu0 0
    %1668 = vmatpush1.bf16.msra.mxu0 0
    %1669 = vmatprep.subr.bf16.mxu0 0
    %1670 = vmatpush1.bf16.msra.mxu0 0
    %1671 = vmatprep.subr.bf16.mxu0 0
    %1672 = vmatpush1.bf16.msra.mxu0 0
    %1673 = vmatprep.subr.bf16.mxu0 0
    %1674 = vmatpush1.bf16.msra.mxu0 0
    %1675 = vmatprep.subr.bf16.mxu0 0
    %1676 = vmatpush1.bf16.msra.mxu0 0
    %1677 = vmatprep.subr.bf16.mxu0 0
    %1678 = vmatpush1.bf16.msra.mxu0 0
    %1679 = vmatprep.subr.bf16.mxu0 0
    %1680 = vmatpush1.bf16.msra.mxu0 0
    %1681 = vmatprep.mubr.bf16.mxu0 0
    %1682 = vmatmul.mubr.bf16.gmra.mrb[0].mxu0 %v1647
    %v1683 = vpop.f32.mrb[0].mxu0
    %v1684 = vadd.f32 %v878, %v1683
    %v1685 = vpop.f32.mrb[0].mxu0
    %v1686 = vpop.f32.mrb[0].mxu0
    %v1687 = vpop.f32.mrb[0].mxu0
    %1688 = vdwg.mxu0
    %v1689 = vpack.c.bf16 %v1626, %v1626
    %v1691 = vsel %vm222, %v1689, 0
    %1693 = vmatprep.subr.bf16.mxu0 0
    %1694 = vmatpush1.bf16.msra.mxu0 %v950
    %1695 = vmatprep.subr.bf16.mxu0 0
    %1696 = vmatpush1.bf16.msra.mxu0 %v951
    %1697 = vmatprep.subr.bf16.mxu0 0
    %1698 = vmatpush1.bf16.msra.mxu0 0
    %1699 = vmatprep.subr.bf16.mxu0 0
    %1700 = vmatpush1.bf16.msra.mxu0 0
    %1701 = vmatprep.subr.bf16.mxu0 0
    %1702 = vmatpush1.bf16.msra.mxu0 0
    %1703 = vmatprep.subr.bf16.mxu0 0
    %1704 = vmatpush1.bf16.msra.mxu0 0
    %1705 = vmatprep.subr.bf16.mxu0 0
    %1706 = vmatpush1.bf16.msra.mxu0 0
    %1707 = vmatprep.subr.bf16.mxu0 0
    %1708 = vmatpush1.bf16.msra.mxu0 0
    %1709 = vmatprep.subr.bf16.mxu0 0
    %1710 = vmatpush1.bf16.msra.mxu0 0
    %1711 = vmatprep.subr.bf16.mxu0 0
    %1712 = vmatpush1.bf16.msra.mxu0 0
    %1713 = vmatprep.subr.bf16.mxu0 0
    %1714 = vmatpush1.bf16.msra.mxu0 0
    %1715 = vmatprep.subr.bf16.mxu0 0
    %1716 = vmatpush1.bf16.msra.mxu0 0
    %1717 = vmatprep.subr.bf16.mxu0 0
    %1718 = vmatpush1.bf16.msra.mxu0 0
    %1719 = vmatprep.subr.bf16.mxu0 0
    %1720 = vmatpush1.bf16.msra.mxu0 0
    %1721 = vmatprep.subr.bf16.mxu0 0
    %1722 = vmatpush1.bf16.msra.mxu0 0
    %1723 = vmatprep.subr.bf16.mxu0 0
    %1724 = vmatpush1.bf16.msra.mxu0 0
    %1725 = vmatprep.mubr.bf16.mxu0 0
    %1726 = vmatmul.mubr.bf16.gmra.mrb[0].mxu0 %v1691
    %v1727 = vpop.f32.mrb[0].mxu0
    %v1728 = vadd.f32 %v885, %v1727
    %v1729 = vpop.f32.mrb[0].mxu0
    %v1730 = vpop.f32.mrb[0].mxu0
    %v1731 = vpop.f32.mrb[0].mxu0
    %1732 = vdwg.mxu0
    %s1733 = scalar_lea.vmem [#allocation2], 8
    %v1734 = vld [vmem:[%s1733] sm:$0x3]
    %v1735 = vunpack.c.l.bf16 %v1734
    %s1736 = scalar_lea.vmem [#allocation2], 22
    %v1737 = vld [vmem:[%s1736] sm:$0x3]
    %v1738 = vunpack.c.l.bf16 %v1737
    %v1739 = vadd.f32 %v1735, %v1684
    %v1740 = vmul.f32 %v1739, 0.5
    %v1741 = vtanh.pop %v1740
    %v1742 = vadd.f32 %v1741, 1.0
    %v1743 = vmul.f32 %v1742, 0.5
    %v1746 = vunpack.c.l.s4 1983009808
    %v1747 = vunpack.c.0.s8 %v1746
    %v1748 = vlaneseq
    %v1749 = vshrl.u32 %v1748, 7
    %v1750 = vsub.s32 %v1747, %v1749
    %v1751 = vrot.slane %v1684, %v1750
    %1752 = vrot.lane.b32.xlu0 %v1751, 64
    %v1753 = vpop.permute.xlu0 %1752
    %v1755 = vmul.f32 %v1743, %v1753
    %1757 = vrot.lane.b32.xlu0 %v1755, 64
    %v1758 = vpop.permute.xlu0 %1757
    %v1760 = vadd.f32 %v1735, %v1758
    %v1761 = vtanh.pop %v1760
    %v1762 = vsub.f32 1.0, %v1743
    %1764 = vrot.lane.b32.xlu0 %v1761, 96
    %v1765 = vpop.permute.xlu0 %1764
    %v1767 = vmul.f32 %v1762, %v1765
    %v1768 = vmul.f32 %v1743, %v1584
    %v1769 = vadd.f32 %v1767, %v1768
    %v1772 = vunpack.c.l.s4 1983009808
    %v1773 = vunpack.c.0.s8 %v1772
    %v1774 = vlaneseq
    %v1775 = vshrl.u32 %v1774, 7
    %v1776 = vsub.s32 %v1773, %v1775
    %v1777 = vrot.slane %v1728, %v1776
    %1778 = vrot.lane.b32.xlu0 %v1777, 96
    %v1779 = vpop.permute.xlu0 %1778
    %v1781 = vadd.f32 %v1738, %v1779
    %v1782 = vmul.f32 %v1781, 0.5
    %v1783 = vtanh.pop %v1782
    %v1784 = vadd.f32 %v1783, 1.0
    %v1785 = vmul.f32 %v1784, 0.5
    %v1787 = vrot.slane %v1738, 2
    %v1789 = vadd.f32 %v1787, %v1779
    %v1790 = vmul.f32 %v1789, 0.5
    %v1791 = vtanh.pop %v1790
    %v1792 = vadd.f32 %v1791, 1.0
    %v1793 = vmul.f32 %v1792, 0.5
    %1794 = vrot.lane.b32.xlu0 %v1777, 32
    %v1795 = vpop.permute.xlu0 %1794
    %v1797 = vmul.f32 %v1785, %v1795
    %1798 = vrot.lane.b32.xlu0 %v1738, 96
    %v1799 = vpop.permute.xlu0 %1798
    %v1800 = vrot.slane %v1799, 2
    %1803 = vrot.lane.b32.xlu0 %v1797, 32
    %v1804 = vpop.permute.xlu0 %1803
    %v1806 = vadd.f32 %v1800, %v1804
    %v1807 = vtanh.pop %v1806
    %v1808 = vsub.f32 1.0, %v1793
    %v1809 = vmul.f32 %v1808, %v1807
    %v1810 = vmul.f32 %v1793, %v1626
    %v1811 = vadd.f32 %v1809, %v1810
    %v1814 = vunpack.c.l.s4 1983009808
    %v1815 = vunpack.c.0.s8 %v1814
    %v1816 = vlaneseq
    %v1817 = vshrl.u32 %v1816, 7
    %v1818 = vsub.s32 %v1815, %v1817
    %v1819 = vrot.slane %v1769, %v1818
    %1820 = vrot.lane.b32.xlu0 %v1819, 96
    %v1821 = vpop.permute.xlu0 %1820
    %s1823 = scalar_lea.vmem [#allocation3], 10
    %1824 = vst.msk [vmem:[%s1823] sm:$0x3] %vm861, %v1821
    %s1825 = scalar_lea.vmem [#allocation3], 24
    %1826 = vst.msk [vmem:[%s1825] sm:$0x3] %vm861, %v1811
    %v1827 = vpack.c.bf16 %v1769, %v1769
    %1829 = vrot.lane.b32.xlu0 %v1827, 96
    %v1830 = vpop.permute.xlu0 %1829
    %v1832 = vsel %vm222, %v1830, 0
    %1834 = vmatprep.subr.bf16.mxu0 0
    %1835 = vmatpush1.bf16.msra.mxu0 %v895
    %1836 = vmatprep.subr.bf16.mxu0 0
    %1837 = vmatpush1.bf16.msra.mxu0 %v896
    %1838 = vmatprep.subr.bf16.mxu0 0
    %1839 = vmatpush1.bf16.msra.mxu0 0
    %1840 = vmatprep.subr.bf16.mxu0 0
    %1841 = vmatpush1.bf16.msra.mxu0 0
    %1842 = vmatprep.subr.bf16.mxu0 0
    %1843 = vmatpush1.bf16.msra.mxu0 0
    %1844 = vmatprep.subr.bf16.mxu0 0
    %1845 = vmatpush1.bf16.msra.mxu0 0
    %1846 = vmatprep.subr.bf16.mxu0 0
    %1847 = vmatpush1.bf16.msra.mxu0 0
    %1848 = vmatprep.subr.bf16.mxu0 0
    %1849 = vmatpush1.bf16.msra.mxu0 0
    %1850 = vmatprep.subr.bf16.mxu0 0
    %1851 = vmatpush1.bf16.msra.mxu0 0
    %1852 = vmatprep.subr.bf16.mxu0 0
    %1853 = vmatpush1.bf16.msra.mxu0 0
    %1854 = vmatprep.subr.bf16.mxu0 0
    %1855 = vmatpush1.bf16.msra.mxu0 0
    %1856 = vmatprep.subr.bf16.mxu0 0
    %1857 = vmatpush1.bf16.msra.mxu0 0
    %1858 = vmatprep.subr.bf16.mxu0 0
    %1859 = vmatpush1.bf16.msra.mxu0 0
    %1860 = vmatprep.subr.bf16.mxu0 0
    %1861 = vmatpush1.bf16.msra.mxu0 0
    %1862 = vmatprep.subr.bf16.mxu0 0
    %1863 = vmatpush1.bf16.msra.mxu0 0
    %1864 = vmatprep.subr.bf16.mxu0 0
    %1865 = vmatpush1.bf16.msra.mxu0 0
    %1866 = vmatprep.mubr.bf16.mxu0 0
    %1867 = vmatmul.mubr.bf16.gmra.mrb[0].mxu0 %v1832
    %v1868 = vpop.f32.mrb[0].mxu0
    %v1869 = vadd.f32 %v878, %v1868
    %v1870 = vpop.f32.mrb[0].mxu0
    %v1871 = vpop.f32.mrb[0].mxu0
    %v1872 = vpop.f32.mrb[0].mxu0
    %1873 = vdwg.mxu0
    %v1874 = vpack.c.bf16 %v1811, %v1811
    %v1876 = vsel %vm222, %v1874, 0
    %1878 = vmatprep.subr.bf16.mxu0 0
    %1879 = vmatpush1.bf16.msra.mxu0 %v950
    %1880 = vmatprep.subr.bf16.mxu0 0
    %1881 = vmatpush1.bf16.msra.mxu0 %v951
    %1882 = vmatprep.subr.bf16.mxu0 0
    %1883 = vmatpush1.bf16.msra.mxu0 0
    %1884 = vmatprep.subr.bf16.mxu0 0
    %1885 = vmatpush1.bf16.msra.mxu0 0
    %1886 = vmatprep.subr.bf16.mxu0 0
    %1887 = vmatpush1.bf16.msra.mxu0 0
    %1888 = vmatprep.subr.bf16.mxu0 0
    %1889 = vmatpush1.bf16.msra.mxu0 0
    %1890 = vmatprep.subr.bf16.mxu0 0
    %1891 = vmatpush1.bf16.msra.mxu0 0
    %1892 = vmatprep.subr.bf16.mxu0 0
    %1893 = vmatpush1.bf16.msra.mxu0 0
    %1894 = vmatprep.subr.bf16.mxu0 0
    %1895 = vmatpush1.bf16.msra.mxu0 0
    %1896 = vmatprep.subr.bf16.mxu0 0
    %1897 = vmatpush1.bf16.msra.mxu0 0
    %1898 = vmatprep.subr.bf16.mxu0 0
    %1899 = vmatpush1.bf16.msra.mxu0 0
    %1900 = vmatprep.subr.bf16.mxu0 0
    %1901 = vmatpush1.bf16.msra.mxu0 0
    %1902 = vmatprep.subr.bf16.mxu0 0
    %1903 = vmatpush1.bf16.msra.mxu0 0
    %1904 = vmatprep.subr.bf16.mxu0 0
    %1905 = vmatpush1.bf16.msra.mxu0 0
    %1906 = vmatprep.subr.bf16.mxu0 0
    %1907 = vmatpush1.bf16.msra.mxu0 0
    %1908 = vmatprep.subr.bf16.mxu0 0
    %1909 = vmatpush1.bf16.msra.mxu0 0
    %1910 = vmatprep.mubr.bf16.mxu0 0
    %1911 = vmatmul.mubr.bf16.gmra.mrb[0].mxu0 %v1876
    %v1912 = vpop.f32.mrb[0].mxu0
    %v1913 = vadd.f32 %v885, %v1912
    %v1914 = vpop.f32.mrb[0].mxu0
    %v1915 = vpop.f32.mrb[0].mxu0
    %v1916 = vpop.f32.mrb[0].mxu0
    %1917 = vdwg.mxu0
    %s1918 = scalar_lea.vmem [#allocation2], 10
    %v1919 = vld [vmem:[%s1918] sm:$0x3]
    %v1920 = vunpack.c.l.bf16 %v1919
    %s1921 = scalar_lea.vmem [#allocation2], 20
    %v1922 = vld [vmem:[%s1921] sm:$0x3]
    %v1923 = vunpack.c.l.bf16 %v1922
    %v1924 = vadd.f32 %v1920, %v1869
    %v1925 = vmul.f32 %v1924, 0.5
    %v1926 = vtanh.pop %v1925
    %v1927 = vadd.f32 %v1926, 1.0
    %v1928 = vmul.f32 %v1927, 0.5
    %v1931 = vunpack.c.l.s4 1983009808
    %v1932 = vunpack.c.0.s8 %v1931
    %v1933 = vlaneseq
    %v1934 = vshrl.u32 %v1933, 7
    %v1935 = vsub.s32 %v1932, %v1934
    %v1936 = vrot.slane %v1869, %v1935
    %1937 = vrot.lane.b32.xlu0 %v1936, 64
    %v1938 = vpop.permute.xlu0 %1937
    %v1940 = vmul.f32 %v1928, %v1938
    %1942 = vrot.lane.b32.xlu0 %v1940, 64
    %v1943 = vpop.permute.xlu0 %1942
    %v1945 = vadd.f32 %v1920, %v1943
    %v1946 = vtanh.pop %v1945
    %v1947 = vsub.f32 1.0, %v1928
    %1949 = vrot.lane.b32.xlu0 %v1946, 96
    %v1950 = vpop.permute.xlu0 %1949
    %v1952 = vmul.f32 %v1947, %v1950
    %v1953 = vmul.f32 %v1928, %v1769
    %v1954 = vadd.f32 %v1952, %v1953
    %v1957 = vunpack.c.l.s4 1983009808
    %v1958 = vunpack.c.0.s8 %v1957
    %v1959 = vlaneseq
    %v1960 = vshrl.u32 %v1959, 7
    %v1961 = vsub.s32 %v1958, %v1960
    %v1962 = vrot.slane %v1913, %v1961
    %1963 = vrot.lane.b32.xlu0 %v1962, 96
    %v1964 = vpop.permute.xlu0 %1963
    %v1966 = vadd.f32 %v1923, %v1964
    %v1967 = vmul.f32 %v1966, 0.5
    %v1968 = vtanh.pop %v1967
    %v1969 = vadd.f32 %v1968, 1.0
    %v1970 = vmul.f32 %v1969, 0.5
    %v1972 = vrot.slane %v1923, 2
    %v1974 = vadd.f32 %v1972, %v1964
    %v1975 = vmul.f32 %v1974, 0.5
    %v1976 = vtanh.pop %v1975
    %v1977 = vadd.f32 %v1976, 1.0
    %v1978 = vmul.f32 %v1977, 0.5
    %1979 = vrot.lane.b32.xlu0 %v1962, 32
    %v1980 = vpop.permute.xlu0 %1979
    %v1982 = vmul.f32 %v1970, %v1980
    %1983 = vrot.lane.b32.xlu0 %v1923, 96
    %v1984 = vpop.permute.xlu0 %1983
    %v1985 = vrot.slane %v1984, 2
    %1988 = vrot.lane.b32.xlu0 %v1982, 32
    %v1989 = vpop.permute.xlu0 %1988
    %v1991 = vadd.f32 %v1985, %v1989
    %v1992 = vtanh.pop %v1991
    %v1993 = vsub.f32 1.0, %v1978
    %v1994 = vmul.f32 %v1993, %v1992
    %v1995 = vmul.f32 %v1978, %v1811
    %v1996 = vadd.f32 %v1994, %v1995
    %v1999 = vunpack.c.l.s4 1983009808
    %v2000 = vunpack.c.0.s8 %v1999
    %v2001 = vlaneseq
    %v2002 = vshrl.u32 %v2001, 7
    %v2003 = vsub.s32 %v2000, %v2002
    %v2004 = vrot.slane %v1954, %v2003
    %2005 = vrot.lane.b32.xlu0 %v2004, 96
    %v2006 = vpop.permute.xlu0 %2005
    %s2008 = scalar_lea.vmem [#allocation3], 12
    %2009 = vst.msk [vmem:[%s2008] sm:$0x3] %vm861, %v2006
    %s2010 = scalar_lea.vmem [#allocation3], 22
    %2011 = vst.msk [vmem:[%s2010] sm:$0x3] %vm861, %v1996
    %v2012 = vpack.c.bf16 %v1954, %v1954
    %2014 = vrot.lane.b32.xlu0 %v2012, 96
    %v2015 = vpop.permute.xlu0 %2014
    %v2017 = vsel %vm222, %v2015, 0
    %2019 = vmatprep.subr.bf16.mxu0 0
    %2020 = vmatpush1.bf16.msra.mxu0 %v895
    %2021 = vmatprep.subr.bf16.mxu0 0
    %2022 = vmatpush1.bf16.msra.mxu0 %v896
    %2023 = vmatprep.subr.bf16.mxu0 0
    %2024 = vmatpush1.bf16.msra.mxu0 0
    %2025 = vmatprep.subr.bf16.mxu0 0
    %2026 = vmatpush1.bf16.msra.mxu0 0
    %2027 = vmatprep.subr.bf16.mxu0 0
    %2028 = vmatpush1.bf16.msra.mxu0 0
    %2029 = vmatprep.subr.bf16.mxu0 0
    %2030 = vmatpush1.bf16.msra.mxu0 0
    %2031 = vmatprep.subr.bf16.mxu0 0
    %2032 = vmatpush1.bf16.msra.mxu0 0
    %2033 = vmatprep.subr.bf16.mxu0 0
    %2034 = vmatpush1.bf16.msra.mxu0 0
    %2035 = vmatprep.subr.bf16.mxu0 0
    %2036 = vmatpush1.bf16.msra.mxu0 0
    %2037 = vmatprep.subr.bf16.mxu0 0
    %2038 = vmatpush1.bf16.msra.mxu0 0
    %2039 = vmatprep.subr.bf16.mxu0 0
    %2040 = vmatpush1.bf16.msra.mxu0 0
    %2041 = vmatprep.subr.bf16.mxu0 0
    %2042 = vmatpush1.bf16.msra.mxu0 0
    %2043 = vmatprep.subr.bf16.mxu0 0
    %2044 = vmatpush1.bf16.msra.mxu0 0
    %2045 = vmatprep.subr.bf16.mxu0 0
    %2046 = vmatpush1.bf16.msra.mxu0 0
    %2047 = vmatprep.subr.bf16.mxu0 0
    %2048 = vmatpush1.bf16.msra.mxu0 0
    %2049 = vmatprep.subr.bf16.mxu0 0
    %2050 = vmatpush1.bf16.msra.mxu0 0
    %2051 = vmatprep.mubr.bf16.mxu0 0
    %2052 = vmatmul.mubr.bf16.gmra.mrb[0].mxu0 %v2017
    %v2053 = vpop.f32.mrb[0].mxu0
    %v2054 = vadd.f32 %v878, %v2053
    %v2055 = vpop.f32.mrb[0].mxu0
    %v2056 = vpop.f32.mrb[0].mxu0
    %v2057 = vpop.f32.mrb[0].mxu0
    %2058 = vdwg.mxu0
    %v2059 = vpack.c.bf16 %v1996, %v1996
    %v2061 = vsel %vm222, %v2059, 0
    %2063 = vmatprep.subr.bf16.mxu0 0
    %2064 = vmatpush1.bf16.msra.mxu0 %v950
    %2065 = vmatprep.subr.bf16.mxu0 0
    %2066 = vmatpush1.bf16.msra.mxu0 %v951
    %2067 = vmatprep.subr.bf16.mxu0 0
    %2068 = vmatpush1.bf16.msra.mxu0 0
    %2069 = vmatprep.subr.bf16.mxu0 0
    %2070 = vmatpush1.bf16.msra.mxu0 0
    %2071 = vmatprep.subr.bf16.mxu0 0
    %2072 = vmatpush1.bf16.msra.mxu0 0
    %2073 = vmatprep.subr.bf16.mxu0 0
    %2074 = vmatpush1.bf16.msra.mxu0 0
    %2075 = vmatprep.subr.bf16.mxu0 0
    %2076 = vmatpush1.bf16.msra.mxu0 0
    %2077 = vmatprep.subr.bf16.mxu0 0
    %2078 = vmatpush1.bf16.msra.mxu0 0
    %2079 = vmatprep.subr.bf16.mxu0 0
    %2080 = vmatpush1.bf16.msra.mxu0 0
    %2081 = vmatprep.subr.bf16.mxu0 0
    %2082 = vmatpush1.bf16.msra.mxu0 0
    %2083 = vmatprep.subr.bf16.mxu0 0
    %2084 = vmatpush1.bf16.msra.mxu0 0
    %2085 = vmatprep.subr.bf16.mxu0 0
    %2086 = vmatpush1.bf16.msra.mxu0 0
    %2087 = vmatprep.subr.bf16.mxu0 0
    %2088 = vmatpush1.bf16.msra.mxu0 0
    %2089 = vmatprep.subr.bf16.mxu0 0
    %2090 = vmatpush1.bf16.msra.mxu0 0
    %2091 = vmatprep.subr.bf16.mxu0 0
    %2092 = vmatpush1.bf16.msra.mxu0 0
    %2093 = vmatprep.subr.bf16.mxu0 0
    %2094 = vmatpush1.bf16.msra.mxu0 0
    %2095 = vmatprep.mubr.bf16.mxu0 0
    %2096 = vmatmul.mubr.bf16.gmra.mrb[0].mxu0 %v2061
    %v2097 = vpop.f32.mrb[0].mxu0
    %v2098 = vadd.f32 %v885, %v2097
    %v2099 = vpop.f32.mrb[0].mxu0
    %v2100 = vpop.f32.mrb[0].mxu0
    %v2101 = vpop.f32.mrb[0].mxu0
    %2102 = vdwg.mxu0
    %s2103 = scalar_lea.vmem [#allocation2], 12
    %v2104 = vld [vmem:[%s2103] sm:$0x3]
    %v2105 = vunpack.c.l.bf16 %v2104
    %s2106 = scalar_lea.vmem [#allocation2], 18
    %v2107 = vld [vmem:[%s2106] sm:$0x3]
    %v2108 = vunpack.c.l.bf16 %v2107
    %v2109 = vadd.f32 %v2105, %v2054
    %v2110 = vmul.f32 %v2109, 0.5
    %v2111 = vtanh.pop %v2110
    %v2112 = vadd.f32 %v2111, 1.0
    %v2113 = vmul.f32 %v2112, 0.5
    %v2116 = vunpack.c.l.s4 1983009808
    %v2117 = vunpack.c.0.s8 %v2116
    %v2118 = vlaneseq
    %v2119 = vshrl.u32 %v2118, 7
    %v2120 = vsub.s32 %v2117, %v2119
    %v2121 = vrot.slane %v2054, %v2120
    %2122 = vrot.lane.b32.xlu0 %v2121, 64
    %v2123 = vpop.permute.xlu0 %2122
    %v2125 = vmul.f32 %v2113, %v2123
    %2127 = vrot.lane.b32.xlu0 %v2125, 64
    %v2128 = vpop.permute.xlu0 %2127
    %v2130 = vadd.f32 %v2105, %v2128
    %v2131 = vtanh.pop %v2130
    %v2132 = vsub.f32 1.0, %v2113
    %2134 = vrot.lane.b32.xlu0 %v2131, 96
    %v2135 = vpop.permute.xlu0 %2134
    %v2137 = vmul.f32 %v2132, %v2135
    %v2138 = vmul.f32 %v2113, %v1954
    %v2139 = vadd.f32 %v2137, %v2138
    %v2142 = vunpack.c.l.s4 1983009808
    %v2143 = vunpack.c.0.s8 %v2142
    %v2144 = vlaneseq
    %v2145 = vshrl.u32 %v2144, 7
    %v2146 = vsub.s32 %v2143, %v2145
    %v2147 = vrot.slane %v2098, %v2146
    %2148 = vrot.lane.b32.xlu0 %v2147, 96
    %v2149 = vpop.permute.xlu0 %2148
    %v2151 = vadd.f32 %v2108, %v2149
    %v2152 = vmul.f32 %v2151, 0.5
    %v2153 = vtanh.pop %v2152
    %v2154 = vadd.f32 %v2153, 1.0
    %v2155 = vmul.f32 %v2154, 0.5
    %v2157 = vrot.slane %v2108, 2
    %v2159 = vadd.f32 %v2157, %v2149
    %v2160 = vmul.f32 %v2159, 0.5
    %v2161 = vtanh.pop %v2160
    %v2162 = vadd.f32 %v2161, 1.0
    %v2163 = vmul.f32 %v2162, 0.5
    %2164 = vrot.lane.b32.xlu0 %v2147, 32
    %v2165 = vpop.permute.xlu0 %2164
    %v2167 = vmul.f32 %v2155, %v2165
    %2168 = vrot.lane.b32.xlu0 %v2108, 96
    %v2169 = vpop.permute.xlu0 %2168
    %v2170 = vrot.slane %v2169, 2
    %2173 = vrot.lane.b32.xlu0 %v2167, 32
    %v2174 = vpop.permute.xlu0 %2173
    %v2176 = vadd.f32 %v2170, %v2174
    %v2177 = vtanh.pop %v2176
    %v2178 = vsub.f32 1.0, %v2163
    %v2179 = vmul.f32 %v2178, %v2177
    %v2180 = vmul.f32 %v2163, %v1996
    %v2181 = vadd.f32 %v2179, %v2180
    %v2184 = vunpack.c.l.s4 1983009808
    %v2185 = vunpack.c.0.s8 %v2184
    %v2186 = vlaneseq
    %v2187 = vshrl.u32 %v2186, 7
    %v2188 = vsub.s32 %v2185, %v2187
    %v2189 = vrot.slane %v2139, %v2188
    %2190 = vrot.lane.b32.xlu0 %v2189, 96
    %v2191 = vpop.permute.xlu0 %2190
    %s2193 = scalar_lea.vmem [#allocation3], 14
    %2194 = vst.msk [vmem:[%s2193] sm:$0x3] %vm861, %v2191
    %s2195 = scalar_lea.vmem [#allocation3], 20
    %2196 = vst.msk [vmem:[%s2195] sm:$0x3] %vm861, %v2181
    %v2197 = vpack.c.bf16 %v2139, %v2139
    %2199 = vrot.lane.b32.xlu0 %v2197, 96
    %v2200 = vpop.permute.xlu0 %2199
    %v2202 = vsel %vm222, %v2200, 0
    %2204 = vmatprep.subr.bf16.mxu0 0
    %2205 = vmatpush1.bf16.msra.mxu0 %v895
    %2206 = vmatprep.subr.bf16.mxu0 0
    %2207 = vmatpush1.bf16.msra.mxu0 %v896
    %2208 = vmatprep.subr.bf16.mxu0 0
    %2209 = vmatpush1.bf16.msra.mxu0 0
    %2210 = vmatprep.subr.bf16.mxu0 0
    %2211 = vmatpush1.bf16.msra.mxu0 0
    %2212 = vmatprep.subr.bf16.mxu0 0
    %2213 = vmatpush1.bf16.msra.mxu0 0
    %2214 = vmatprep.subr.bf16.mxu0 0
    %2215 = vmatpush1.bf16.msra.mxu0 0
    %2216 = vmatprep.subr.bf16.mxu0 0
    %2217 = vmatpush1.bf16.msra.mxu0 0
    %2218 = vmatprep.subr.bf16.mxu0 0
    %2219 = vmatpush1.bf16.msra.mxu0 0
    %2220 = vmatprep.subr.bf16.mxu0 0
    %2221 = vmatpush1.bf16.msra.mxu0 0
    %2222 = vmatprep.subr.bf16.mxu0 0
    %2223 = vmatpush1.bf16.msra.mxu0 0
    %2224 = vmatprep.subr.bf16.mxu0 0
    %2225 = vmatpush1.bf16.msra.mxu0 0
    %2226 = vmatprep.subr.bf16.mxu0 0
    %2227 = vmatpush1.bf16.msra.mxu0 0
    %2228 = vmatprep.subr.bf16.mxu0 0
    %2229 = vmatpush1.bf16.msra.mxu0 0
    %2230 = vmatprep.subr.bf16.mxu0 0
    %2231 = vmatpush1.bf16.msra.mxu0 0
    %2232 = vmatprep.subr.bf16.mxu0 0
    %2233 = vmatpush1.bf16.msra.mxu0 0
    %2234 = vmatprep.subr.bf16.mxu0 0
    %2235 = vmatpush1.bf16.msra.mxu0 0
    %2236 = vmatprep.mubr.bf16.mxu0 0
    %2237 = vmatmul.mubr.bf16.gmra.mrb[0].mxu0 %v2202
    %v2238 = vpop.f32.mrb[0].mxu0
    %v2239 = vadd.f32 %v878, %v2238
    %v2240 = vpop.f32.mrb[0].mxu0
    %v2241 = vpop.f32.mrb[0].mxu0
    %v2242 = vpop.f32.mrb[0].mxu0
    %2243 = vdwg.mxu0
    %v2244 = vpack.c.bf16 %v2181, %v2181
    %v2246 = vsel %vm222, %v2244, 0
    %2248 = vmatprep.subr.bf16.mxu0 0
    %2249 = vmatpush1.bf16.msra.mxu0 %v950
    %2250 = vmatprep.subr.bf16.mxu0 0
    %2251 = vmatpush1.bf16.msra.mxu0 %v951
    %2252 = vmatprep.subr.bf16.mxu0 0
    %2253 = vmatpush1.bf16.msra.mxu0 0
    %2254 = vmatprep.subr.bf16.mxu0 0
    %2255 = vmatpush1.bf16.msra.mxu0 0
    %2256 = vmatprep.subr.bf16.mxu0 0
    %2257 = vmatpush1.bf16.msra.mxu0 0
    %2258 = vmatprep.subr.bf16.mxu0 0
    %2259 = vmatpush1.bf16.msra.mxu0 0
    %2260 = vmatprep.subr.bf16.mxu0 0
    %2261 = vmatpush1.bf16.msra.mxu0 0
    %2262 = vmatprep.subr.bf16.mxu0 0
    %2263 = vmatpush1.bf16.msra.mxu0 0
    %2264 = vmatprep.subr.bf16.mxu0 0
    %2265 = vmatpush1.bf16.msra.mxu0 0
    %2266 = vmatprep.subr.bf16.mxu0 0
    %2267 = vmatpush1.bf16.msra.mxu0 0
    %2268 = vmatprep.subr.bf16.mxu0 0
    %2269 = vmatpush1.bf16.msra.mxu0 0
    %2270 = vmatprep.subr.bf16.mxu0 0
    %2271 = vmatpush1.bf16.msra.mxu0 0
    %2272 = vmatprep.subr.bf16.mxu0 0
    %2273 = vmatpush1.bf16.msra.mxu0 0
    %2274 = vmatprep.subr.bf16.mxu0 0
    %2275 = vmatpush1.bf16.msra.mxu0 0
    %2276 = vmatprep.subr.bf16.mxu0 0
    %2277 = vmatpush1.bf16.msra.mxu0 0
    %2278 = vmatprep.subr.bf16.mxu0 0
    %2279 = vmatpush1.bf16.msra.mxu0 0
    %2280 = vmatprep.mubr.bf16.mxu0 0
    %2281 = vmatmul.mubr.bf16.gmra.mrb[0].mxu0 %v2246
    %v2282 = vpop.f32.mrb[0].mxu0
    %v2283 = vadd.f32 %v885, %v2282
    %v2284 = vpop.f32.mrb[0].mxu0
    %v2285 = vpop.f32.mrb[0].mxu0
    %v2286 = vpop.f32.mrb[0].mxu0
    %2287 = vdwg.mxu0
    %s2288 = scalar_lea.vmem [#allocation2], 14
    %v2289 = vld [vmem:[%s2288] sm:$0x3]
    %v2290 = vunpack.c.l.bf16 %v2289
    %s2291 = scalar_lea.vmem [#allocation2], 16
    %v2292 = vld [vmem:[%s2291] sm:$0x3]
    %v2293 = vunpack.c.l.bf16 %v2292
    %v2294 = vadd.f32 %v2290, %v2239
    %v2295 = vmul.f32 %v2294, 0.5
    %v2296 = vtanh.pop %v2295
    %v2297 = vadd.f32 %v2296, 1.0
    %v2298 = vmul.f32 %v2297, 0.5
    %v2301 = vunpack.c.l.s4 1983009808
    %v2302 = vunpack.c.0.s8 %v2301
    %v2303 = vlaneseq
    %v2304 = vshrl.u32 %v2303, 7
    %v2305 = vsub.s32 %v2302, %v2304
    %v2306 = vrot.slane %v2239, %v2305
    %2307 = vrot.lane.b32.xlu0 %v2306, 64
    %v2308 = vpop.permute.xlu0 %2307
    %v2310 = vmul.f32 %v2298, %v2308
    %2312 = vrot.lane.b32.xlu0 %v2310, 64
    %v2313 = vpop.permute.xlu0 %2312
    %v2315 = vadd.f32 %v2290, %v2313
    %v2316 = vtanh.pop %v2315
    %v2317 = vsub.f32 1.0, %v2298
    %2319 = vrot.lane.b32.xlu0 %v2316, 96
    %v2320 = vpop.permute.xlu0 %2319
    %v2322 = vmul.f32 %v2317, %v2320
    %v2323 = vmul.f32 %v2298, %v2139
    %v2324 = vadd.f32 %v2322, %v2323
    %v2327 = vunpack.c.l.s4 1983009808
    %v2328 = vunpack.c.0.s8 %v2327
    %v2329 = vlaneseq
    %v2330 = vshrl.u32 %v2329, 7
    %v2331 = vsub.s32 %v2328, %v2330
    %v2332 = vrot.slane %v2283, %v2331
    %2333 = vrot.lane.b32.xlu0 %v2332, 96
    %v2334 = vpop.permute.xlu0 %2333
    %v2336 = vadd.f32 %v2293, %v2334
    %v2337 = vmul.f32 %v2336, 0.5
    %v2338 = vtanh.pop %v2337
    %v2339 = vadd.f32 %v2338, 1.0
    %v2340 = vmul.f32 %v2339, 0.5
    %v2342 = vrot.slane %v2293, 2
    %v2344 = vadd.f32 %v2342, %v2334
    %v2345 = vmul.f32 %v2344, 0.5
    %v2346 = vtanh.pop %v2345
    %v2347 = vadd.f32 %v2346, 1.0
    %v2348 = vmul.f32 %v2347, 0.5
    %2349 = vrot.lane.b32.xlu0 %v2332, 32
    %v2350 = vpop.permute.xlu0 %2349
    %v2352 = vmul.f32 %v2340, %v2350
    %2353 = vrot.lane.b32.xlu0 %v2293, 96
    %v2354 = vpop.permute.xlu0 %2353
    %v2355 = vrot.slane %v2354, 2
    %2358 = vrot.lane.b32.xlu0 %v2352, 32
    %v2359 = vpop.permute.xlu0 %2358
    %v2361 = vadd.f32 %v2355, %v2359
    %v2362 = vtanh.pop %v2361
    %v2363 = vsub.f32 1.0, %v2348
    %v2364 = vmul.f32 %v2363, %v2362
    %v2365 = vmul.f32 %v2348, %v2181
    %v2366 = vadd.f32 %v2364, %v2365
    %v2369 = vunpack.c.l.s4 1983009808
    %v2370 = vunpack.c.0.s8 %v2369
    %v2371 = vlaneseq
    %v2372 = vshrl.u32 %v2371, 7
    %v2373 = vsub.s32 %v2370, %v2372
    %v2374 = vrot.slane %v2324, %v2373
    %2375 = vrot.lane.b32.xlu0 %v2374, 96
    %v2376 = vpop.permute.xlu0 %2375
    %s2378 = scalar_lea.vmem [#allocation3], 16
    %2379 = vst.msk [vmem:[%s2378] sm:$0x3] %vm861, %v2376
    %s2380 = scalar_lea.vmem [#allocation3], 18
    %2381 = vst.msk [vmem:[%s2380] sm:$0x3] %vm861, %v2366
    %v2382 = vpack.c.bf16 %v2324, %v2324
    %2384 = vrot.lane.b32.xlu0 %v2382, 96
    %v2385 = vpop.permute.xlu0 %2384
    %v2387 = vsel %vm222, %v2385, 0
    %2389 = vmatprep.subr.bf16.mxu0 0
    %2390 = vmatpush1.bf16.msra.mxu0 %v895
    %2391 = vmatprep.subr.bf16.mxu0 0
    %2392 = vmatpush1.bf16.msra.mxu0 %v896
    %2393 = vmatprep.subr.bf16.mxu0 0
    %2394 = vmatpush1.bf16.msra.mxu0 0
    %2395 = vmatprep.subr.bf16.mxu0 0
    %2396 = vmatpush1.bf16.msra.mxu0 0
    %2397 = vmatprep.subr.bf16.mxu0 0
    %2398 = vmatpush1.bf16.msra.mxu0 0
    %2399 = vmatprep.subr.bf16.mxu0 0
    %2400 = vmatpush1.bf16.msra.mxu0 0
    %2401 = vmatprep.subr.bf16.mxu0 0
    %2402 = vmatpush1.bf16.msra.mxu0 0
    %2403 = vmatprep.subr.bf16.mxu0 0
    %2404 = vmatpush1.bf16.msra.mxu0 0
    %2405 = vmatprep.subr.bf16.mxu0 0
    %2406 = vmatpush1.bf16.msra.mxu0 0
    %2407 = vmatprep.subr.bf16.mxu0 0
    %2408 = vmatpush1.bf16.msra.mxu0 0
    %2409 = vmatprep.subr.bf16.mxu0 0
    %2410 = vmatpush1.bf16.msra.mxu0 0
    %2411 = vmatprep.subr.bf16.mxu0 0
    %2412 = vmatpush1.bf16.msra.mxu0 0
    %2413 = vmatprep.subr.bf16.mxu0 0
    %2414 = vmatpush1.bf16.msra.mxu0 0
    %2415 = vmatprep.subr.bf16.mxu0 0
    %2416 = vmatpush1.bf16.msra.mxu0 0
    %2417 = vmatprep.subr.bf16.mxu0 0
    %2418 = vmatpush1.bf16.msra.mxu0 0
    %2419 = vmatprep.subr.bf16.mxu0 0
    %2420 = vmatpush1.bf16.msra.mxu0 0
    %2421 = vmatprep.mubr.bf16.mxu0 0
    %2422 = vmatmul.mubr.bf16.gmra.mrb[0].mxu0 %v2387
    %v2423 = vpop.f32.mrb[0].mxu0
    %v2424 = vadd.f32 %v878, %v2423
    %v2425 = vpop.f32.mrb[0].mxu0
    %v2426 = vpop.f32.mrb[0].mxu0
    %v2427 = vpop.f32.mrb[0].mxu0
    %2428 = vdwg.mxu0
    %v2429 = vpack.c.bf16 %v2366, %v2366
    %v2431 = vsel %vm222, %v2429, 0
    %2433 = vmatprep.subr.bf16.mxu0 0
    %2434 = vmatpush1.bf16.msra.mxu0 %v950
    %2435 = vmatprep.subr.bf16.mxu0 0
    %2436 = vmatpush1.bf16.msra.mxu0 %v951
    %2437 = vmatprep.subr.bf16.mxu0 0
    %2438 = vmatpush1.bf16.msra.mxu0 0
    %2439 = vmatprep.subr.bf16.mxu0 0
    %2440 = vmatpush1.bf16.msra.mxu0 0
    %2441 = vmatprep.subr.bf16.mxu0 0
    %2442 = vmatpush1.bf16.msra.mxu0 0
    %2443 = vmatprep.subr.bf16.mxu0 0
    %2444 = vmatpush1.bf16.msra.mxu0 0
    %2445 = vmatprep.subr.bf16.mxu0 0
    %2446 = vmatpush1.bf16.msra.mxu0 0
    %2447 = vmatprep.subr.bf16.mxu0 0
    %2448 = vmatpush1.bf16.msra.mxu0 0
    %2449 = vmatprep.subr.bf16.mxu0 0
    %2450 = vmatpush1.bf16.msra.mxu0 0
    %2451 = vmatprep.subr.bf16.mxu0 0
    %2452 = vmatpush1.bf16.msra.mxu0 0
    %2453 = vmatprep.subr.bf16.mxu0 0
    %2454 = vmatpush1.bf16.msra.mxu0 0
    %2455 = vmatprep.subr.bf16.mxu0 0
    %2456 = vmatpush1.bf16.msra.mxu0 0
    %2457 = vmatprep.subr.bf16.mxu0 0
    %2458 = vmatpush1.bf16.msra.mxu0 0
    %2459 = vmatprep.subr.bf16.mxu0 0
    %2460 = vmatpush1.bf16.msra.mxu0 0
    %2461 = vmatprep.subr.bf16.mxu0 0
    %2462 = vmatpush1.bf16.msra.mxu0 0
    %2463 = vmatprep.subr.bf16.mxu0 0
    %2464 = vmatpush1.bf16.msra.mxu0 0
    %2465 = vmatprep.mubr.bf16.mxu0 0
    %2466 = vmatmul.mubr.bf16.gmra.mrb[0].mxu0 %v2431
    %v2467 = vpop.f32.mrb[0].mxu0
    %v2468 = vadd.f32 %v885, %v2467
    %v2469 = vpop.f32.mrb[0].mxu0
    %v2470 = vpop.f32.mrb[0].mxu0
    %v2471 = vpop.f32.mrb[0].mxu0
    %2472 = vdwg.mxu0
    %v2473 = vld [vmem:[%s2291] sm:$0x3]
    %v2474 = vunpack.c.l.bf16 %v2473
    %v2475 = vld [vmem:[%s2288] sm:$0x3]
    %v2476 = vunpack.c.l.bf16 %v2475
    %v2477 = vadd.f32 %v2474, %v2424
    %v2478 = vmul.f32 %v2477, 0.5
    %v2479 = vtanh.pop %v2478
    %v2480 = vadd.f32 %v2479, 1.0
    %v2481 = vmul.f32 %v2480, 0.5
    %v2484 = vunpack.c.l.s4 1983009808
    %v2485 = vunpack.c.0.s8 %v2484
    %v2486 = vlaneseq
    %v2487 = vshrl.u32 %v2486, 7
    %v2488 = vsub.s32 %v2485, %v2487
    %v2489 = vrot.slane %v2424, %v2488
    %2490 = vrot.lane.b32.xlu0 %v2489, 64
    %v2491 = vpop.permute.xlu0 %2490
    %v2493 = vmul.f32 %v2481, %v2491
    %2495 = vrot.lane.b32.xlu0 %v2493, 64
    %v2496 = vpop.permute.xlu0 %2495
    %v2498 = vadd.f32 %v2474, %v2496
    %v2499 = vtanh.pop %v2498
    %v2500 = vsub.f32 1.0, %v2481
    %2502 = vrot.lane.b32.xlu0 %v2499, 96
    %v2503 = vpop.permute.xlu0 %2502
    %v2505 = vmul.f32 %v2500, %v2503
    %v2506 = vmul.f32 %v2481, %v2324
    %v2507 = vadd.f32 %v2505, %v2506
    %v2510 = vunpack.c.l.s4 1983009808
    %v2511 = vunpack.c.0.s8 %v2510
    %v2512 = vlaneseq
    %v2513 = vshrl.u32 %v2512, 7
    %v2514 = vsub.s32 %v2511, %v2513
    %v2515 = vrot.slane %v2468, %v2514
    %2516 = vrot.lane.b32.xlu0 %v2515, 96
    %v2517 = vpop.permute.xlu0 %2516
    %v2519 = vadd.f32 %v2476, %v2517
    %v2520 = vmul.f32 %v2519, 0.5
    %v2521 = vtanh.pop %v2520
    %v2522 = vadd.f32 %v2521, 1.0
    %v2523 = vmul.f32 %v2522, 0.5
    %v2525 = vrot.slane %v2476, 2
    %v2527 = vadd.f32 %v2525, %v2517
    %v2528 = vmul.f32 %v2527, 0.5
    %v2529 = vtanh.pop %v2528
    %v2530 = vadd.f32 %v2529, 1.0
    %v2531 = vmul.f32 %v2530, 0.5
    %2532 = vrot.lane.b32.xlu0 %v2515, 32
    %v2533 = vpop.permute.xlu0 %2532
    %v2535 = vmul.f32 %v2523, %v2533
    %2536 = vrot.lane.b32.xlu0 %v2476, 96
    %v2537 = vpop.permute.xlu0 %2536
    %v2538 = vrot.slane %v2537, 2
    %2541 = vrot.lane.b32.xlu0 %v2535, 32
    %v2542 = vpop.permute.xlu0 %2541
    %v2544 = vadd.f32 %v2538, %v2542
    %v2545 = vtanh.pop %v2544
    %v2546 = vsub.f32 1.0, %v2531
    %v2547 = vmul.f32 %v2546, %v2545
    %v2548 = vmul.f32 %v2531, %v2366
    %v2549 = vadd.f32 %v2547, %v2548
    %v2550 = vld [vmem:[%s2380] sm:$0x3]
    %v2553 = vunpack.c.l.s4 1983009808
    %v2554 = vunpack.c.0.s8 %v2553
    %v2555 = vlaneseq
    %v2556 = vshrl.u32 %v2555, 7
    %v2557 = vsub.s32 %v2554, %v2556
    %v2558 = vrot.slane %v2507, %v2557
    %2559 = vrot.lane.b32.xlu0 %v2558, 96
    %v2560 = vpop.permute.xlu0 %2559
    %v2562 = vadd.f32 %v2550, %v2560
    %2563 = vst.msk [vmem:[%s2380] sm:$0x3] %vm861, %v2562
    %v2564 = vld [vmem:[%s2378] sm:$0x3]
    %v2565 = vadd.f32 %v2564, %v2549
    %2566 = vst.msk [vmem:[%s2378] sm:$0x3] %vm861, %v2565
    %v2567 = vpack.c.bf16 %v2507, %v2507
    %2569 = vrot.lane.b32.xlu0 %v2567, 96
    %v2570 = vpop.permute.xlu0 %2569
    %v2572 = vsel %vm222, %v2570, 0
    %2574 = vmatprep.subr.bf16.mxu0 0
    %2575 = vmatpush1.bf16.msra.mxu0 %v895
    %2576 = vmatprep.subr.bf16.mxu0 0
    %2577 = vmatpush1.bf16.msra.mxu0 %v896
    %2578 = vmatprep.subr.bf16.mxu0 0
    %2579 = vmatpush1.bf16.msra.mxu0 0
    %2580 = vmatprep.subr.bf16.mxu0 0
    %2581 = vmatpush1.bf16.msra.mxu0 0
    %2582 = vmatprep.subr.bf16.mxu0 0
    %2583 = vmatpush1.bf16.msra.mxu0 0
    %2584 = vmatprep.subr.bf16.mxu0 0
    %2585 = vmatpush1.bf16.msra.mxu0 0
    %2586 = vmatprep.subr.bf16.mxu0 0
    %2587 = vmatpush1.bf16.msra.mxu0 0
    %2588 = vmatprep.subr.bf16.mxu0 0
    %2589 = vmatpush1.bf16.msra.mxu0 0
    %2590 = vmatprep.subr.bf16.mxu0 0
    %2591 = vmatpush1.bf16.msra.mxu0 0
    %2592 = vmatprep.subr.bf16.mxu0 0
    %2593 = vmatpush1.bf16.msra.mxu0 0
    %2594 = vmatprep.subr.bf16.mxu0 0
    %2595 = vmatpush1.bf16.msra.mxu0 0
    %2596 = vmatprep.subr.bf16.mxu0 0
    %2597 = vmatpush1.bf16.msra.mxu0 0
    %2598 = vmatprep.subr.bf16.mxu0 0
    %2599 = vmatpush1.bf16.msra.mxu0 0
    %2600 = vmatprep.subr.bf16.mxu0 0
    %2601 = vmatpush1.bf16.msra.mxu0 0
    %2602 = vmatprep.subr.bf16.mxu0 0
    %2603 = vmatpush1.bf16.msra.mxu0 0
    %2604 = vmatprep.subr.bf16.mxu0 0
    %2605 = vmatpush1.bf16.msra.mxu0 0
    %2606 = vmatprep.mubr.bf16.mxu0 0
    %2607 = vmatmul.mubr.bf16.gmra.mrb[0].mxu0 %v2572
    %v2608 = vpop.f32.mrb[0].mxu0
    %v2609 = vadd.f32 %v878, %v2608
    %v2610 = vpop.f32.mrb[0].mxu0
    %v2611 = vpop.f32.mrb[0].mxu0
    %v2612 = vpop.f32.mrb[0].mxu0
    %2613 = vdwg.mxu0
    %v2614 = vpack.c.bf16 %v2549, %v2549
    %v2616 = vsel %vm222, %v2614, 0
    %2618 = vmatprep.subr.bf16.mxu0 0
    %2619 = vmatpush1.bf16.msra.mxu0 %v950
    %2620 = vmatprep.subr.bf16.mxu0 0
    %2621 = vmatpush1.bf16.msra.mxu0 %v951
    %2622 = vmatprep.subr.bf16.mxu0 0
    %2623 = vmatpush1.bf16.msra.mxu0 0
    %2624 = vmatprep.subr.bf16.mxu0 0
    %2625 = vmatpush1.bf16.msra.mxu0 0
    %2626 = vmatprep.subr.bf16.mxu0 0
    %2627 = vmatpush1.bf16.msra.mxu0 0
    %2628 = vmatprep.subr.bf16.mxu0 0
    %2629 = vmatpush1.bf16.msra.mxu0 0
    %2630 = vmatprep.subr.bf16.mxu0 0
    %2631 = vmatpush1.bf16.msra.mxu0 0
    %2632 = vmatprep.subr.bf16.mxu0 0
    %2633 = vmatpush1.bf16.msra.mxu0 0
    %2634 = vmatprep.subr.bf16.mxu0 0
    %2635 = vmatpush1.bf16.msra.mxu0 0
    %2636 = vmatprep.subr.bf16.mxu0 0
    %2637 = vmatpush1.bf16.msra.mxu0 0
    %2638 = vmatprep.subr.bf16.mxu0 0
    %2639 = vmatpush1.bf16.msra.mxu0 0
    %2640 = vmatprep.subr.bf16.mxu0 0
    %2641 = vmatpush1.bf16.msra.mxu0 0
    %2642 = vmatprep.subr.bf16.mxu0 0
    %2643 = vmatpush1.bf16.msra.mxu0 0
    %2644 = vmatprep.subr.bf16.mxu0 0
    %2645 = vmatpush1.bf16.msra.mxu0 0
    %2646 = vmatprep.subr.bf16.mxu0 0
    %2647 = vmatpush1.bf16.msra.mxu0 0
    %2648 = vmatprep.subr.bf16.mxu0 0
    %2649 = vmatpush1.bf16.msra.mxu0 0
    %2650 = vmatprep.mubr.bf16.mxu0 0
    %2651 = vmatmul.mubr.bf16.gmra.mrb[0].mxu0 %v2616
    %v2652 = vpop.f32.mrb[0].mxu0
    %v2653 = vadd.f32 %v885, %v2652
    %v2654 = vpop.f32.mrb[0].mxu0
    %v2655 = vpop.f32.mrb[0].mxu0
    %v2656 = vpop.f32.mrb[0].mxu0
    %2657 = vdwg.mxu0
    %v2658 = vld [vmem:[%s2106] sm:$0x3]
    %v2659 = vunpack.c.l.bf16 %v2658
    %v2660 = vld [vmem:[%s2103] sm:$0x3]
    %v2661 = vunpack.c.l.bf16 %v2660
    %v2662 = vadd.f32 %v2659, %v2609
    %v2663 = vmul.f32 %v2662, 0.5
    %v2664 = vtanh.pop %v2663
    %v2665 = vadd.f32 %v2664, 1.0
    %v2666 = vmul.f32 %v2665, 0.5
    %v2669 = vunpack.c.l.s4 1983009808
    %v2670 = vunpack.c.0.s8 %v2669
    %v2671 = vlaneseq
    %v2672 = vshrl.u32 %v2671, 7
    %v2673 = vsub.s32 %v2670, %v2672
    %v2674 = vrot.slane %v2609, %v2673
    %2675 = vrot.lane.b32.xlu0 %v2674, 64
    %v2676 = vpop.permute.xlu0 %2675
    %v2678 = vmul.f32 %v2666, %v2676
    %2680 = vrot.lane.b32.xlu0 %v2678, 64
    %v2681 = vpop.permute.xlu0 %2680
    %v2683 = vadd.f32 %v2659, %v2681
    %v2684 = vtanh.pop %v2683
    %v2685 = vsub.f32 1.0, %v2666
    %2687 = vrot.lane.b32.xlu0 %v2684, 96
    %v2688 = vpop.permute.xlu0 %2687
    %v2690 = vmul.f32 %v2685, %v2688
    %v2691 = vmul.f32 %v2666, %v2507
    %v2692 = vadd.f32 %v2690, %v2691
    %v2695 = vunpack.c.l.s4 1983009808
    %v2696 = vunpack.c.0.s8 %v2695
    %v2697 = vlaneseq
    %v2698 = vshrl.u32 %v2697, 7
    %v2699 = vsub.s32 %v2696, %v2698
    %v2700 = vrot.slane %v2653, %v2699
    %2701 = vrot.lane.b32.xlu0 %v2700, 96
    %v2702 = vpop.permute.xlu0 %2701
    %v2704 = vadd.f32 %v2661, %v2702
    %v2705 = vmul.f32 %v2704, 0.5
    %v2706 = vtanh.pop %v2705
    %v2707 = vadd.f32 %v2706, 1.0
    %v2708 = vmul.f32 %v2707, 0.5
    %v2710 = vrot.slane %v2661, 2
    %v2712 = vadd.f32 %v2710, %v2702
    %v2713 = vmul.f32 %v2712, 0.5
    %v2714 = vtanh.pop %v2713
    %v2715 = vadd.f32 %v2714, 1.0
    %v2716 = vmul.f32 %v2715, 0.5
    %2717 = vrot.lane.b32.xlu0 %v2700, 32
    %v2718 = vpop.permute.xlu0 %2717
    %v2720 = vmul.f32 %v2708, %v2718
    %2721 = vrot.lane.b32.xlu0 %v2661, 96
    %v2722 = vpop.permute.xlu0 %2721
    %v2723 = vrot.slane %v2722, 2
    %2726 = vrot.lane.b32.xlu0 %v2720, 32
    %v2727 = vpop.permute.xlu0 %2726
    %v2729 = vadd.f32 %v2723, %v2727
    %v2730 = vtanh.pop %v2729
    %v2731 = vsub.f32 1.0, %v2716
    %v2732 = vmul.f32 %v2731, %v2730
    %v2733 = vmul.f32 %v2716, %v2549
    %v2734 = vadd.f32 %v2732, %v2733
    %v2735 = vld [vmem:[%s2195] sm:$0x3]
    %v2738 = vunpack.c.l.s4 1983009808
    %v2739 = vunpack.c.0.s8 %v2738
    %v2740 = vlaneseq
    %v2741 = vshrl.u32 %v2740, 7
    %v2742 = vsub.s32 %v2739, %v2741
    %v2743 = vrot.slane %v2692, %v2742
    %2744 = vrot.lane.b32.xlu0 %v2743, 96
    %v2745 = vpop.permute.xlu0 %2744
    %v2747 = vadd.f32 %v2735, %v2745
    %2748 = vst.msk [vmem:[%s2195] sm:$0x3] %vm861, %v2747
    %v2749 = vld [vmem:[%s2193] sm:$0x3]
    %v2750 = vadd.f32 %v2749, %v2734
    %2751 = vst.msk [vmem:[%s2193] sm:$0x3] %vm861, %v2750
    %v2752 = vpack.c.bf16 %v2692, %v2692
    %2754 = vrot.lane.b32.xlu0 %v2752, 96
    %v2755 = vpop.permute.xlu0 %2754
    %v2757 = vsel %vm222, %v2755, 0
    %2759 = vmatprep.subr.bf16.mxu0 0
    %2760 = vmatpush1.bf16.msra.mxu0 %v895
    %2761 = vmatprep.subr.bf16.mxu0 0
    %2762 = vmatpush1.bf16.msra.mxu0 %v896
    %2763 = vmatprep.subr.bf16.mxu0 0
    %2764 = vmatpush1.bf16.msra.mxu0 0
    %2765 = vmatprep.subr.bf16.mxu0 0
    %2766 = vmatpush1.bf16.msra.mxu0 0
    %2767 = vmatprep.subr.bf16.mxu0 0
    %2768 = vmatpush1.bf16.msra.mxu0 0
    %2769 = vmatprep.subr.bf16.mxu0 0
    %2770 = vmatpush1.bf16.msra.mxu0 0
    %2771 = vmatprep.subr.bf16.mxu0 0
    %2772 = vmatpush1.bf16.msra.mxu0 0
    %2773 = vmatprep.subr.bf16.mxu0 0
    %2774 = vmatpush1.bf16.msra.mxu0 0
    %2775 = vmatprep.subr.bf16.mxu0 0
    %2776 = vmatpush1.bf16.msra.mxu0 0
    %2777 = vmatprep.subr.bf16.mxu0 0
    %2778 = vmatpush1.bf16.msra.mxu0 0
    %2779 = vmatprep.subr.bf16.mxu0 0
    %2780 = vmatpush1.bf16.msra.mxu0 0
    %2781 = vmatprep.subr.bf16.mxu0 0
    %2782 = vmatpush1.bf16.msra.mxu0 0
    %2783 = vmatprep.subr.bf16.mxu0 0
    %2784 = vmatpush1.bf16.msra.mxu0 0
    %2785 = vmatprep.subr.bf16.mxu0 0
    %2786 = vmatpush1.bf16.msra.mxu0 0
    %2787 = vmatprep.subr.bf16.mxu0 0
    %2788 = vmatpush1.bf16.msra.mxu0 0
    %2789 = vmatprep.subr.bf16.mxu0 0
    %2790 = vmatpush1.bf16.msra.mxu0 0
    %2791 = vmatprep.mubr.bf16.mxu0 0
    %2792 = vmatmul.mubr.bf16.gmra.mrb[0].mxu0 %v2757
    %v2793 = vpop.f32.mrb[0].mxu0
    %v2794 = vadd.f32 %v878, %v2793
    %v2795 = vpop.f32.mrb[0].mxu0
    %v2796 = vpop.f32.mrb[0].mxu0
    %v2797 = vpop.f32.mrb[0].mxu0
    %2798 = vdwg.mxu0
    %v2799 = vpack.c.bf16 %v2734, %v2734
    %v2801 = vsel %vm222, %v2799, 0
    %2803 = vmatprep.subr.bf16.mxu0 0
    %2804 = vmatpush1.bf16.msra.mxu0 %v950
    %2805 = vmatprep.subr.bf16.mxu0 0
    %2806 = vmatpush1.bf16.msra.mxu0 %v951
    %2807 = vmatprep.subr.bf16.mxu0 0
    %2808 = vmatpush1.bf16.msra.mxu0 0
    %2809 = vmatprep.subr.bf16.mxu0 0
    %2810 = vmatpush1.bf16.msra.mxu0 0
    %2811 = vmatprep.subr.bf16.mxu0 0
    %2812 = vmatpush1.bf16.msra.mxu0 0
    %2813 = vmatprep.subr.bf16.mxu0 0
    %2814 = vmatpush1.bf16.msra.mxu0 0
    %2815 = vmatprep.subr.bf16.mxu0 0
    %2816 = vmatpush1.bf16.msra.mxu0 0
    %2817 = vmatprep.subr.bf16.mxu0 0
    %2818 = vmatpush1.bf16.msra.mxu0 0
    %2819 = vmatprep.subr.bf16.mxu0 0
    %2820 = vmatpush1.bf16.msra.mxu0 0
    %2821 = vmatprep.subr.bf16.mxu0 0
    %2822 = vmatpush1.bf16.msra.mxu0 0
    %2823 = vmatprep.subr.bf16.mxu0 0
    %2824 = vmatpush1.bf16.msra.mxu0 0
    %2825 = vmatprep.subr.bf16.mxu0 0
    %2826 = vmatpush1.bf16.msra.mxu0 0
    %2827 = vmatprep.subr.bf16.mxu0 0
    %2828 = vmatpush1.bf16.msra.mxu0 0
    %2829 = vmatprep.subr.bf16.mxu0 0
    %2830 = vmatpush1.bf16.msra.mxu0 0
    %2831 = vmatprep.subr.bf16.mxu0 0
    %2832 = vmatpush1.bf16.msra.mxu0 0
    %2833 = vmatprep.subr.bf16.mxu0 0
    %2834 = vmatpush1.bf16.msra.mxu0 0
    %2835 = vmatprep.mubr.bf16.mxu0 0
    %2836 = vmatmul.mubr.bf16.gmra.mrb[0].mxu0 %v2801
    %v2837 = vpop.f32.mrb[0].mxu0
    %v2838 = vadd.f32 %v885, %v2837
    %v2839 = vpop.f32.mrb[0].mxu0
    %v2840 = vpop.f32.mrb[0].mxu0
    %v2841 = vpop.f32.mrb[0].mxu0
    %2842 = vdwg.mxu0
    %v2843 = vld [vmem:[%s1921] sm:$0x3]
    %v2844 = vunpack.c.l.bf16 %v2843
    %v2845 = vld [vmem:[%s1918] sm:$0x3]
    %v2846 = vunpack.c.l.bf16 %v2845
    %v2847 = vadd.f32 %v2844, %v2794
    %v2848 = vmul.f32 %v2847, 0.5
    %v2849 = vtanh.pop %v2848
    %v2850 = vadd.f32 %v2849, 1.0
    %v2851 = vmul.f32 %v2850, 0.5
    %v2854 = vunpack.c.l.s4 1983009808
    %v2855 = vunpack.c.0.s8 %v2854
    %v2856 = vlaneseq
    %v2857 = vshrl.u32 %v2856, 7
    %v2858 = vsub.s32 %v2855, %v2857
    %v2859 = vrot.slane %v2794, %v2858
    %2860 = vrot.lane.b32.xlu0 %v2859, 64
    %v2861 = vpop.permute.xlu0 %2860
    %v2863 = vmul.f32 %v2851, %v2861
    %2865 = vrot.lane.b32.xlu0 %v2863, 64
    %v2866 = vpop.permute.xlu0 %2865
    %v2868 = vadd.f32 %v2844, %v2866
    %v2869 = vtanh.pop %v2868
    %v2870 = vsub.f32 1.0, %v2851
    %2872 = vrot.lane.b32.xlu0 %v2869, 96
    %v2873 = vpop.permute.xlu0 %2872
    %v2875 = vmul.f32 %v2870, %v2873
    %v2876 = vmul.f32 %v2851, %v2692
    %v2877 = vadd.f32 %v2875, %v2876
    %v2880 = vunpack.c.l.s4 1983009808
    %v2881 = vunpack.c.0.s8 %v2880
    %v2882 = vlaneseq
    %v2883 = vshrl.u32 %v2882, 7
    %v2884 = vsub.s32 %v2881, %v2883
    %v2885 = vrot.slane %v2838, %v2884
    %2886 = vrot.lane.b32.xlu0 %v2885, 96
    %v2887 = vpop.permute.xlu0 %2886
    %v2889 = vadd.f32 %v2846, %v2887
    %v2890 = vmul.f32 %v2889, 0.5
    %v2891 = vtanh.pop %v2890
    %v2892 = vadd.f32 %v2891, 1.0
    %v2893 = vmul.f32 %v2892, 0.5
    %v2895 = vrot.slane %v2846, 2
    %v2897 = vadd.f32 %v2895, %v2887
    %v2898 = vmul.f32 %v2897, 0.5
    %v2899 = vtanh.pop %v2898
    %v2900 = vadd.f32 %v2899, 1.0
    %v2901 = vmul.f32 %v2900, 0.5
    %2902 = vrot.lane.b32.xlu0 %v2885, 32
    %v2903 = vpop.permute.xlu0 %2902
    %v2905 = vmul.f32 %v2893, %v2903
    %2906 = vrot.lane.b32.xlu0 %v2846, 96
    %v2907 = vpop.permute.xlu0 %2906
    %v2908 = vrot.slane %v2907, 2
    %2911 = vrot.lane.b32.xlu0 %v2905, 32
    %v2912 = vpop.permute.xlu0 %2911
    %v2914 = vadd.f32 %v2908, %v2912
    %v2915 = vtanh.pop %v2914
    %v2916 = vsub.f32 1.0, %v2901
    %v2917 = vmul.f32 %v2916, %v2915
    %v2918 = vmul.f32 %v2901, %v2734
    %v2919 = vadd.f32 %v2917, %v2918
    %v2920 = vld [vmem:[%s2010] sm:$0x3]
    %v2923 = vunpack.c.l.s4 1983009808
    %v2924 = vunpack.c.0.s8 %v2923
    %v2925 = vlaneseq
    %v2926 = vshrl.u32 %v2925, 7
    %v2927 = vsub.s32 %v2924, %v2926
    %v2928 = vrot.slane %v2877, %v2927
    %2929 = vrot.lane.b32.xlu0 %v2928, 96
    %v2930 = vpop.permute.xlu0 %2929
    %v2932 = vadd.f32 %v2920, %v2930
    %2933 = vst.msk [vmem:[%s2010] sm:$0x3] %vm861, %v2932
    %v2934 = vld [vmem:[%s2008] sm:$0x3]
    %v2935 = vadd.f32 %v2934, %v2919
    %2936 = vst.msk [vmem:[%s2008] sm:$0x3] %vm861, %v2935
    %v2937 = vpack.c.bf16 %v2877, %v2877
    %2939 = vrot.lane.b32.xlu0 %v2937, 96
    %v2940 = vpop.permute.xlu0 %2939
    %v2942 = vsel %vm222, %v2940, 0
    %2944 = vmatprep.subr.bf16.mxu0 0
    %2945 = vmatpush1.bf16.msra.mxu0 %v895
    %2946 = vmatprep.subr.bf16.mxu0 0
    %2947 = vmatpush1.bf16.msra.mxu0 %v896
    %2948 = vmatprep.subr.bf16.mxu0 0
    %2949 = vmatpush1.bf16.msra.mxu0 0
    %2950 = vmatprep.subr.bf16.mxu0 0
    %2951 = vmatpush1.bf16.msra.mxu0 0
    %2952 = vmatprep.subr.bf16.mxu0 0
    %2953 = vmatpush1.bf16.msra.mxu0 0
    %2954 = vmatprep.subr.bf16.mxu0 0
    %2955 = vmatpush1.bf16.msra.mxu0 0
    %2956 = vmatprep.subr.bf16.mxu0 0
    %2957 = vmatpush1.bf16.msra.mxu0 0
    %2958 = vmatprep.subr.bf16.mxu0 0
    %2959 = vmatpush1.bf16.msra.mxu0 0
    %2960 = vmatprep.subr.bf16.mxu0 0
    %2961 = vmatpush1.bf16.msra.mxu0 0
    %2962 = vmatprep.subr.bf16.mxu0 0
    %2963 = vmatpush1.bf16.msra.mxu0 0
    %2964 = vmatprep.subr.bf16.mxu0 0
    %2965 = vmatpush1.bf16.msra.mxu0 0
    %2966 = vmatprep.subr.bf16.mxu0 0
    %2967 = vmatpush1.bf16.msra.mxu0 0
    %2968 = vmatprep.subr.bf16.mxu0 0
    %2969 = vmatpush1.bf16.msra.mxu0 0
    %2970 = vmatprep.subr.bf16.mxu0 0
    %2971 = vmatpush1.bf16.msra.mxu0 0
    %2972 = vmatprep.subr.bf16.mxu0 0
    %2973 = vmatpush1.bf16.msra.mxu0 0
    %2974 = vmatprep.subr.bf16.mxu0 0
    %2975 = vmatpush1.bf16.msra.mxu0 0
    %2976 = vmatprep.mubr.bf16.mxu0 0
    %2977 = vmatmul.mubr.bf16.gmra.mrb[0].mxu0 %v2942
    %v2978 = vpop.f32.mrb[0].mxu0
    %v2979 = vadd.f32 %v878, %v2978
    %v2980 = vpop.f32.mrb[0].mxu0
    %v2981 = vpop.f32.mrb[0].mxu0
    %v2982 = vpop.f32.mrb[0].mxu0
    %2983 = vdwg.mxu0
    %v2984 = vpack.c.bf16 %v2919, %v2919
    %v2986 = vsel %vm222, %v2984, 0
    %2988 = vmatprep.subr.bf16.mxu0 0
    %2989 = vmatpush1.bf16.msra.mxu0 %v950
    %2990 = vmatprep.subr.bf16.mxu0 0
    %2991 = vmatpush1.bf16.msra.mxu0 %v951
    %2992 = vmatprep.subr.bf16.mxu0 0
    %2993 = vmatpush1.bf16.msra.mxu0 0
    %2994 = vmatprep.subr.bf16.mxu0 0
    %2995 = vmatpush1.bf16.msra.mxu0 0
    %2996 = vmatprep.subr.bf16.mxu0 0
    %2997 = vmatpush1.bf16.msra.mxu0 0
    %2998 = vmatprep.subr.bf16.mxu0 0
    %2999 = vmatpush1.bf16.msra.mxu0 0
    %3000 = vmatprep.subr.bf16.mxu0 0
    %3001 = vmatpush1.bf16.msra.mxu0 0
    %3002 = vmatprep.subr.bf16.mxu0 0
    %3003 = vmatpush1.bf16.msra.mxu0 0
    %3004 = vmatprep.subr.bf16.mxu0 0
    %3005 = vmatpush1.bf16.msra.mxu0 0
    %3006 = vmatprep.subr.bf16.mxu0 0
    %3007 = vmatpush1.bf16.msra.mxu0 0
    %3008 = vmatprep.subr.bf16.mxu0 0
    %3009 = vmatpush1.bf16.msra.mxu0 0
    %3010 = vmatprep.subr.bf16.mxu0 0
    %3011 = vmatpush1.bf16.msra.mxu0 0
    %3012 = vmatprep.subr.bf16.mxu0 0
    %3013 = vmatpush1.bf16.msra.mxu0 0
    %3014 = vmatprep.subr.bf16.mxu0 0
    %3015 = vmatpush1.bf16.msra.mxu0 0
    %3016 = vmatprep.subr.bf16.mxu0 0
    %3017 = vmatpush1.bf16.msra.mxu0 0
    %3018 = vmatprep.subr.bf16.mxu0 0
    %3019 = vmatpush1.bf16.msra.mxu0 0
    %3020 = vmatprep.mubr.bf16.mxu0 0
    %3021 = vmatmul.mubr.bf16.gmra.mrb[0].mxu0 %v2986
    %v3022 = vpop.f32.mrb[0].mxu0
    %v3023 = vadd.f32 %v885, %v3022
    %v3024 = vpop.f32.mrb[0].mxu0
    %v3025 = vpop.f32.mrb[0].mxu0
    %v3026 = vpop.f32.mrb[0].mxu0
    %3027 = vdwg.mxu0
    %v3028 = vld [vmem:[%s1736] sm:$0x3]
    %v3029 = vunpack.c.l.bf16 %v3028
    %v3030 = vld [vmem:[%s1733] sm:$0x3]
    %v3031 = vunpack.c.l.bf16 %v3030
    %v3032 = vadd.f32 %v3029, %v2979
    %v3033 = vmul.f32 %v3032, 0.5
    %v3034 = vtanh.pop %v3033
    %v3035 = vadd.f32 %v3034, 1.0
    %v3036 = vmul.f32 %v3035, 0.5
    %v3039 = vunpack.c.l.s4 1983009808
    %v3040 = vunpack.c.0.s8 %v3039
    %v3041 = vlaneseq
    %v3042 = vshrl.u32 %v3041, 7
    %v3043 = vsub.s32 %v3040, %v3042
    %v3044 = vrot.slane %v2979, %v3043
    %3045 = vrot.lane.b32.xlu0 %v3044, 64
    %v3046 = vpop.permute.xlu0 %3045
    %v3048 = vmul.f32 %v3036, %v3046
    %3050 = vrot.lane.b32.xlu0 %v3048, 64
    %v3051 = vpop.permute.xlu0 %3050
    %v3053 = vadd.f32 %v3029, %v3051
    %v3054 = vtanh.pop %v3053
    %v3055 = vsub.f32 1.0, %v3036
    %3057 = vrot.lane.b32.xlu0 %v3054, 96
    %v3058 = vpop.permute.xlu0 %3057
    %v3060 = vmul.f32 %v3055, %v3058
    %v3061 = vmul.f32 %v3036, %v2877
    %v3062 = vadd.f32 %v3060, %v3061
    %v3065 = vunpack.c.l.s4 1983009808
    %v3066 = vunpack.c.0.s8 %v3065
    %v3067 = vlaneseq
    %v3068 = vshrl.u32 %v3067, 7
    %v3069 = vsub.s32 %v3066, %v3068
    %v3070 = vrot.slane %v3023, %v3069
    %3071 = vrot.lane.b32.xlu0 %v3070, 96
    %v3072 = vpop.permute.xlu0 %3071
    %v3074 = vadd.f32 %v3031, %v3072
    %v3075 = vmul.f32 %v3074, 0.5
    %v3076 = vtanh.pop %v3075
    %v3077 = vadd.f32 %v3076, 1.0
    %v3078 = vmul.f32 %v3077, 0.5
    %v3080 = vrot.slane %v3031, 2
    %v3082 = vadd.f32 %v3080, %v3072
    %v3083 = vmul.f32 %v3082, 0.5
    %v3084 = vtanh.pop %v3083
    %v3085 = vadd.f32 %v3084, 1.0
    %v3086 = vmul.f32 %v3085, 0.5
    %3087 = vrot.lane.b32.xlu0 %v3070, 32
    %v3088 = vpop.permute.xlu0 %3087
    %v3090 = vmul.f32 %v3078, %v3088
    %3091 = vrot.lane.b32.xlu0 %v3031, 96
    %v3092 = vpop.permute.xlu0 %3091
    %v3093 = vrot.slane %v3092, 2
    %3096 = vrot.lane.b32.xlu0 %v3090, 32
    %v3097 = vpop.permute.xlu0 %3096
    %v3099 = vadd.f32 %v3093, %v3097
    %v3100 = vtanh.pop %v3099
    %v3101 = vsub.f32 1.0, %v3086
    %v3102 = vmul.f32 %v3101, %v3100
    %v3103 = vmul.f32 %v3086, %v2919
    %v3104 = vadd.f32 %v3102, %v3103
    %v3105 = vld [vmem:[%s1825] sm:$0x3]
    %v3108 = vunpack.c.l.s4 1983009808
    %v3109 = vunpack.c.0.s8 %v3108
    %v3110 = vlaneseq
    %v3111 = vshrl.u32 %v3110, 7
    %v3112 = vsub.s32 %v3109, %v3111
    %v3113 = vrot.slane %v3062, %v3112
    %3114 = vrot.lane.b32.xlu0 %v3113, 96
    %v3115 = vpop.permute.xlu0 %3114
    %v3117 = vadd.f32 %v3105, %v3115
    %3118 = vst.msk [vmem:[%s1825] sm:$0x3] %vm861, %v3117
    %v3119 = vld [vmem:[%s1823] sm:$0x3]
    %v3120 = vadd.f32 %v3119, %v3104
    %3121 = vst.msk [vmem:[%s1823] sm:$0x3] %vm861, %v3120
    %v3122 = vpack.c.bf16 %v3062, %v3062
    %3124 = vrot.lane.b32.xlu0 %v3122, 96
    %v3125 = vpop.permute.xlu0 %3124
    %v3127 = vsel %vm222, %v3125, 0
    %3129 = vmatprep.subr.bf16.mxu0 0
    %3130 = vmatpush1.bf16.msra.mxu0 %v895
    %3131 = vmatprep.subr.bf16.mxu0 0
    %3132 = vmatpush1.bf16.msra.mxu0 %v896
    %3133 = vmatprep.subr.bf16.mxu0 0
    %3134 = vmatpush1.bf16.msra.mxu0 0
    %3135 = vmatprep.subr.bf16.mxu0 0
    %3136 = vmatpush1.bf16.msra.mxu0 0
    %3137 = vmatprep.subr.bf16.mxu0 0
    %3138 = vmatpush1.bf16.msra.mxu0 0
    %3139 = vmatprep.subr.bf16.mxu0 0
    %3140 = vmatpush1.bf16.msra.mxu0 0
    %3141 = vmatprep.subr.bf16.mxu0 0
    %3142 = vmatpush1.bf16.msra.mxu0 0
    %3143 = vmatprep.subr.bf16.mxu0 0
    %3144 = vmatpush1.bf16.msra.mxu0 0
    %3145 = vmatprep.subr.bf16.mxu0 0
    %3146 = vmatpush1.bf16.msra.mxu0 0
    %3147 = vmatprep.subr.bf16.mxu0 0
    %3148 = vmatpush1.bf16.msra.mxu0 0
    %3149 = vmatprep.subr.bf16.mxu0 0
    %3150 = vmatpush1.bf16.msra.mxu0 0
    %3151 = vmatprep.subr.bf16.mxu0 0
    %3152 = vmatpush1.bf16.msra.mxu0 0
    %3153 = vmatprep.subr.bf16.mxu0 0
    %3154 = vmatpush1.bf16.msra.mxu0 0
    %3155 = vmatprep.subr.bf16.mxu0 0
    %3156 = vmatpush1.bf16.msra.mxu0 0
    %3157 = vmatprep.subr.bf16.mxu0 0
    %3158 = vmatpush1.bf16.msra.mxu0 0
    %3159 = vmatprep.subr.bf16.mxu0 0
    %3160 = vmatpush1.bf16.msra.mxu0 0
    %3161 = vmatprep.mubr.bf16.mxu0 0
    %3162 = vmatmul.mubr.bf16.gmra.mrb[0].mxu0 %v3127
    %v3163 = vpop.f32.mrb[0].mxu0
    %v3164 = vadd.f32 %v878, %v3163
    %v3165 = vpop.f32.mrb[0].mxu0
    %v3166 = vpop.f32.mrb[0].mxu0
    %v3167 = vpop.f32.mrb[0].mxu0
    %3168 = vdwg.mxu0
    %v3169 = vpack.c.bf16 %v3104, %v3104
    %v3171 = vsel %vm222, %v3169, 0
    %3173 = vmatprep.subr.bf16.mxu0 0
    %3174 = vmatpush1.bf16.msra.mxu0 %v950
    %3175 = vmatprep.subr.bf16.mxu0 0
    %3176 = vmatpush1.bf16.msra.mxu0 %v951
    %3177 = vmatprep.subr.bf16.mxu0 0
    %3178 = vmatpush1.bf16.msra.mxu0 0
    %3179 = vmatprep.subr.bf16.mxu0 0
    %3180 = vmatpush1.bf16.msra.mxu0 0
    %3181 = vmatprep.subr.bf16.mxu0 0
    %3182 = vmatpush1.bf16.msra.mxu0 0
    %3183 = vmatprep.subr.bf16.mxu0 0
    %3184 = vmatpush1.bf16.msra.mxu0 0
    %3185 = vmatprep.subr.bf16.mxu0 0
    %3186 = vmatpush1.bf16.msra.mxu0 0
    %3187 = vmatprep.subr.bf16.mxu0 0
    %3188 = vmatpush1.bf16.msra.mxu0 0
    %3189 = vmatprep.subr.bf16.mxu0 0
    %3190 = vmatpush1.bf16.msra.mxu0 0
    %3191 = vmatprep.subr.bf16.mxu0 0
    %3192 = vmatpush1.bf16.msra.mxu0 0
    %3193 = vmatprep.subr.bf16.mxu0 0
    %3194 = vmatpush1.bf16.msra.mxu0 0
    %3195 = vmatprep.subr.bf16.mxu0 0
    %3196 = vmatpush1.bf16.msra.mxu0 0
    %3197 = vmatprep.subr.bf16.mxu0 0
    %3198 = vmatpush1.bf16.msra.mxu0 0
    %3199 = vmatprep.subr.bf16.mxu0 0
    %3200 = vmatpush1.bf16.msra.mxu0 0
    %3201 = vmatprep.subr.bf16.mxu0 0
    %3202 = vmatpush1.bf16.msra.mxu0 0
    %3203 = vmatprep.subr.bf16.mxu0 0
    %3204 = vmatpush1.bf16.msra.mxu0 0
    %3205 = vmatprep.mubr.bf16.mxu0 0
    %3206 = vmatmul.mubr.bf16.gmra.mrb[0].mxu0 %v3171
    %v3207 = vpop.f32.mrb[0].mxu0
    %v3208 = vadd.f32 %v885, %v3207
    %v3209 = vpop.f32.mrb[0].mxu0
    %v3210 = vpop.f32.mrb[0].mxu0
    %v3211 = vpop.f32.mrb[0].mxu0
    %3212 = vdwg.mxu0
    %v3213 = vld [vmem:[%s1551] sm:$0x3]
    %v3214 = vunpack.c.l.bf16 %v3213
    %v3215 = vld [vmem:[%s1548] sm:$0x3]
    %v3216 = vunpack.c.l.bf16 %v3215
    %v3217 = vadd.f32 %v3214, %v3164
    %v3218 = vmul.f32 %v3217, 0.5
    %v3219 = vtanh.pop %v3218
    %v3220 = vadd.f32 %v3219, 1.0
    %v3221 = vmul.f32 %v3220, 0.5
    %v3224 = vunpack.c.l.s4 1983009808
    %v3225 = vunpack.c.0.s8 %v3224
    %v3226 = vlaneseq
    %v3227 = vshrl.u32 %v3226, 7
    %v3228 = vsub.s32 %v3225, %v3227
    %v3229 = vrot.slane %v3164, %v3228
    %3230 = vrot.lane.b32.xlu0 %v3229, 64
    %v3231 = vpop.permute.xlu0 %3230
    %v3233 = vmul.f32 %v3221, %v3231
    %3235 = vrot.lane.b32.xlu0 %v3233, 64
    %v3236 = vpop.permute.xlu0 %3235
    %v3238 = vadd.f32 %v3214, %v3236
    %v3239 = vtanh.pop %v3238
    %v3240 = vsub.f32 1.0, %v3221
    %3242 = vrot.lane.b32.xlu0 %v3239, 96
    %v3243 = vpop.permute.xlu0 %3242
    %v3245 = vmul.f32 %v3240, %v3243
    %v3246 = vmul.f32 %v3221, %v3062
    %v3247 = vadd.f32 %v3245, %v3246
    %v3250 = vunpack.c.l.s4 1983009808
    %v3251 = vunpack.c.0.s8 %v3250
    %v3252 = vlaneseq
    %v3253 = vshrl.u32 %v3252, 7
    %v3254 = vsub.s32 %v3251, %v3253
    %v3255 = vrot.slane %v3208, %v3254
    %3256 = vrot.lane.b32.xlu0 %v3255, 96
    %v3257 = vpop.permute.xlu0 %3256
    %v3259 = vadd.f32 %v3216, %v3257
    %v3260 = vmul.f32 %v3259, 0.5
    %v3261 = vtanh.pop %v3260
    %v3262 = vadd.f32 %v3261, 1.0
    %v3263 = vmul.f32 %v3262, 0.5
    %v3265 = vrot.slane %v3216, 2
    %v3267 = vadd.f32 %v3265, %v3257
    %v3268 = vmul.f32 %v3267, 0.5
    %v3269 = vtanh.pop %v3268
    %v3270 = vadd.f32 %v3269, 1.0
    %v3271 = vmul.f32 %v3270, 0.5
    %3272 = vrot.lane.b32.xlu0 %v3255, 32
    %v3273 = vpop.permute.xlu0 %3272
    %v3275 = vmul.f32 %v3263, %v3273
    %3276 = vrot.lane.b32.xlu0 %v3216, 96
    %v3277 = vpop.permute.xlu0 %3276
    %v3278 = vrot.slane %v3277, 2
    %3281 = vrot.lane.b32.xlu0 %v3275, 32
    %v3282 = vpop.permute.xlu0 %3281
    %v3284 = vadd.f32 %v3278, %v3282
    %v3285 = vtanh.pop %v3284
    %v3286 = vsub.f32 1.0, %v3271
    %v3287 = vmul.f32 %v3286, %v3285
    %v3288 = vmul.f32 %v3271, %v3104
    %v3289 = vadd.f32 %v3287, %v3288
    %v3290 = vld [vmem:[%s1640] sm:$0x3]
    %v3293 = vunpack.c.l.s4 1983009808
    %v3294 = vunpack.c.0.s8 %v3293
    %v3295 = vlaneseq
    %v3296 = vshrl.u32 %v3295, 7
    %v3297 = vsub.s32 %v3294, %v3296
    %v3298 = vrot.slane %v3247, %v3297
    %3299 = vrot.lane.b32.xlu0 %v3298, 96
    %v3300 = vpop.permute.xlu0 %3299
    %v3302 = vadd.f32 %v3290, %v3300
    %3303 = vst.msk [vmem:[%s1640] sm:$0x3] %vm861, %v3302
    %v3304 = vld [vmem:[%s1638] sm:$0x3]
    %v3305 = vadd.f32 %v3304, %v3289
    %3306 = vst.msk [vmem:[%s1638] sm:$0x3] %vm861, %v3305
    %v3307 = vpack.c.bf16 %v3247, %v3247
    %3309 = vrot.lane.b32.xlu0 %v3307, 96
    %v3310 = vpop.permute.xlu0 %3309
    %v3312 = vsel %vm222, %v3310, 0
    %3314 = vmatprep.subr.bf16.mxu0 0
    %3315 = vmatpush1.bf16.msra.mxu0 %v895
    %3316 = vmatprep.subr.bf16.mxu0 0
    %3317 = vmatpush1.bf16.msra.mxu0 %v896
    %3318 = vmatprep.subr.bf16.mxu0 0
    %3319 = vmatpush1.bf16.msra.mxu0 0
    %3320 = vmatprep.subr.bf16.mxu0 0
    %3321 = vmatpush1.bf16.msra.mxu0 0
    %3322 = vmatprep.subr.bf16.mxu0 0
    %3323 = vmatpush1.bf16.msra.mxu0 0
    %3324 = vmatprep.subr.bf16.mxu0 0
    %3325 = vmatpush1.bf16.msra.mxu0 0
    %3326 = vmatprep.subr.bf16.mxu0 0
    %3327 = vmatpush1.bf16.msra.mxu0 0
    %3328 = vmatprep.subr.bf16.mxu0 0
    %3329 = vmatpush1.bf16.msra.mxu0 0
    %3330 = vmatprep.subr.bf16.mxu0 0
    %3331 = vmatpush1.bf16.msra.mxu0 0
    %3332 = vmatprep.subr.bf16.mxu0 0
    %3333 = vmatpush1.bf16.msra.mxu0 0
    %3334 = vmatprep.subr.bf16.mxu0 0
    %3335 = vmatpush1.bf16.msra.mxu0 0
    %3336 = vmatprep.subr.bf16.mxu0 0
    %3337 = vmatpush1.bf16.msra.mxu0 0
    %3338 = vmatprep.subr.bf16.mxu0 0
    %3339 = vmatpush1.bf16.msra.mxu0 0
    %3340 = vmatprep.subr.bf16.mxu0 0
    %3341 = vmatpush1.bf16.msra.mxu0 0
    %3342 = vmatprep.subr.bf16.mxu0 0
    %3343 = vmatpush1.bf16.msra.mxu0 0
    %3344 = vmatprep.subr.bf16.mxu0 0
    %3345 = vmatpush1.bf16.msra.mxu0 0
    %3346 = vmatprep.mubr.bf16.mxu0 0
    %3347 = vmatmul.mubr.bf16.gmra.mrb[0].mxu0 %v3312
    %v3348 = vpop.f32.mrb[0].mxu0
    %v3349 = vadd.f32 %v878, %v3348
    %v3350 = vpop.f32.mrb[0].mxu0
    %v3351 = vpop.f32.mrb[0].mxu0
    %v3352 = vpop.f32.mrb[0].mxu0
    %3353 = vdwg.mxu0
    %v3354 = vpack.c.bf16 %v3289, %v3289
    %v3356 = vsel %vm222, %v3354, 0
    %3358 = vmatprep.subr.bf16.mxu0 0
    %3359 = vmatpush1.bf16.msra.mxu0 %v950
    %3360 = vmatprep.subr.bf16.mxu0 0
    %3361 = vmatpush1.bf16.msra.mxu0 %v951
    %3362 = vmatprep.subr.bf16.mxu0 0
    %3363 = vmatpush1.bf16.msra.mxu0 0
    %3364 = vmatprep.subr.bf16.mxu0 0
    %3365 = vmatpush1.bf16.msra.mxu0 0
    %3366 = vmatprep.subr.bf16.mxu0 0
    %3367 = vmatpush1.bf16.msra.mxu0 0
    %3368 = vmatprep.subr.bf16.mxu0 0
    %3369 = vmatpush1.bf16.msra.mxu0 0
    %3370 = vmatprep.subr.bf16.mxu0 0
    %3371 = vmatpush1.bf16.msra.mxu0 0
    %3372 = vmatprep.subr.bf16.mxu0 0
    %3373 = vmatpush1.bf16.msra.mxu0 0
    %3374 = vmatprep.subr.bf16.mxu0 0
    %3375 = vmatpush1.bf16.msra.mxu0 0
    %3376 = vmatprep.subr.bf16.mxu0 0
    %3377 = vmatpush1.bf16.msra.mxu0 0
    %3378 = vmatprep.subr.bf16.mxu0 0
    %3379 = vmatpush1.bf16.msra.mxu0 0
    %3380 = vmatprep.subr.bf16.mxu0 0
    %3381 = vmatpush1.bf16.msra.mxu0 0
    %3382 = vmatprep.subr.bf16.mxu0 0
    %3383 = vmatpush1.bf16.msra.mxu0 0
    %3384 = vmatprep.subr.bf16.mxu0 0
    %3385 = vmatpush1.bf16.msra.mxu0 0
    %3386 = vmatprep.subr.bf16.mxu0 0
    %3387 = vmatpush1.bf16.msra.mxu0 0
    %3388 = vmatprep.subr.bf16.mxu0 0
    %3389 = vmatpush1.bf16.msra.mxu0 0
    %3390 = vmatprep.mubr.bf16.mxu0 0
    %3391 = vmatmul.mubr.bf16.gmra.mrb[0].mxu0 %v3356
    %v3392 = vpop.f32.mrb[0].mxu0
    %v3393 = vadd.f32 %v885, %v3392
    %v3394 = vpop.f32.mrb[0].mxu0
    %v3395 = vpop.f32.mrb[0].mxu0
    %v3396 = vpop.f32.mrb[0].mxu0
    %3397 = vdwg.mxu0
    %v3398 = vld [vmem:[%s1366] sm:$0x3]
    %v3399 = vunpack.c.l.bf16 %v3398
    %v3400 = vld [vmem:[%s1363] sm:$0x3]
    %v3401 = vunpack.c.l.bf16 %v3400
    %v3402 = vadd.f32 %v3399, %v3349
    %v3403 = vmul.f32 %v3402, 0.5
    %v3404 = vtanh.pop %v3403
    %v3405 = vadd.f32 %v3404, 1.0
    %v3406 = vmul.f32 %v3405, 0.5
    %v3409 = vunpack.c.l.s4 1983009808
    %v3410 = vunpack.c.0.s8 %v3409
    %v3411 = vlaneseq
    %v3412 = vshrl.u32 %v3411, 7
    %v3413 = vsub.s32 %v3410, %v3412
    %v3414 = vrot.slane %v3349, %v3413
    %3415 = vrot.lane.b32.xlu0 %v3414, 64
    %v3416 = vpop.permute.xlu0 %3415
    %v3418 = vmul.f32 %v3406, %v3416
    %3420 = vrot.lane.b32.xlu0 %v3418, 64
    %v3421 = vpop.permute.xlu0 %3420
    %v3423 = vadd.f32 %v3399, %v3421
    %v3424 = vtanh.pop %v3423
    %v3425 = vsub.f32 1.0, %v3406
    %3427 = vrot.lane.b32.xlu0 %v3424, 96
    %v3428 = vpop.permute.xlu0 %3427
    %v3430 = vmul.f32 %v3425, %v3428
    %v3431 = vmul.f32 %v3406, %v3247
    %v3432 = vadd.f32 %v3430, %v3431
    %v3435 = vunpack.c.l.s4 1983009808
    %v3436 = vunpack.c.0.s8 %v3435
    %v3437 = vlaneseq
    %v3438 = vshrl.u32 %v3437, 7
    %v3439 = vsub.s32 %v3436, %v3438
    %v3440 = vrot.slane %v3393, %v3439
    %3441 = vrot.lane.b32.xlu0 %v3440, 96
    %v3442 = vpop.permute.xlu0 %3441
    %v3444 = vadd.f32 %v3401, %v3442
    %v3445 = vmul.f32 %v3444, 0.5
    %v3446 = vtanh.pop %v3445
    %v3447 = vadd.f32 %v3446, 1.0
    %v3448 = vmul.f32 %v3447, 0.5
    %v3450 = vrot.slane %v3401, 2
    %v3452 = vadd.f32 %v3450, %v3442
    %v3453 = vmul.f32 %v3452, 0.5
    %v3454 = vtanh.pop %v3453
    %v3455 = vadd.f32 %v3454, 1.0
    %v3456 = vmul.f32 %v3455, 0.5
    %3457 = vrot.lane.b32.xlu0 %v3440, 32
    %v3458 = vpop.permute.xlu0 %3457
    %v3460 = vmul.f32 %v3448, %v3458
    %3461 = vrot.lane.b32.xlu0 %v3401, 96
    %v3462 = vpop.permute.xlu0 %3461
    %v3463 = vrot.slane %v3462, 2
    %3466 = vrot.lane.b32.xlu0 %v3460, 32
    %v3467 = vpop.permute.xlu0 %3466
    %v3469 = vadd.f32 %v3463, %v3467
    %v3470 = vtanh.pop %v3469
    %v3471 = vsub.f32 1.0, %v3456
    %v3472 = vmul.f32 %v3471, %v3470
    %v3473 = vmul.f32 %v3456, %v3289
    %v3474 = vadd.f32 %v3472, %v3473
    %v3475 = vld [vmem:[%s1455] sm:$0x3]
    %v3478 = vunpack.c.l.s4 1983009808
    %v3479 = vunpack.c.0.s8 %v3478
    %v3480 = vlaneseq
    %v3481 = vshrl.u32 %v3480, 7
    %v3482 = vsub.s32 %v3479, %v3481
    %v3483 = vrot.slane %v3432, %v3482
    %3484 = vrot.lane.b32.xlu0 %v3483, 96
    %v3485 = vpop.permute.xlu0 %3484
    %v3487 = vadd.f32 %v3475, %v3485
    %3488 = vst.msk [vmem:[%s1455] sm:$0x3] %vm861, %v3487
    %v3489 = vld [vmem:[%s1453] sm:$0x3]
    %v3490 = vadd.f32 %v3489, %v3474
    %3491 = vst.msk [vmem:[%s1453] sm:$0x3] %vm861, %v3490
    %v3492 = vpack.c.bf16 %v3432, %v3432
    %3494 = vrot.lane.b32.xlu0 %v3492, 96
    %v3495 = vpop.permute.xlu0 %3494
    %v3497 = vsel %vm222, %v3495, 0
    %3499 = vmatprep.subr.bf16.mxu0 0
    %3500 = vmatpush1.bf16.msra.mxu0 %v895
    %3501 = vmatprep.subr.bf16.mxu0 0
    %3502 = vmatpush1.bf16.msra.mxu0 %v896
    %3503 = vmatprep.subr.bf16.mxu0 0
    %3504 = vmatpush1.bf16.msra.mxu0 0
    %3505 = vmatprep.subr.bf16.mxu0 0
    %3506 = vmatpush1.bf16.msra.mxu0 0
    %3507 = vmatprep.subr.bf16.mxu0 0
    %3508 = vmatpush1.bf16.msra.mxu0 0
    %3509 = vmatprep.subr.bf16.mxu0 0
    %3510 = vmatpush1.bf16.msra.mxu0 0
    %3511 = vmatprep.subr.bf16.mxu0 0
    %3512 = vmatpush1.bf16.msra.mxu0 0
    %3513 = vmatprep.subr.bf16.mxu0 0
    %3514 = vmatpush1.bf16.msra.mxu0 0
    %3515 = vmatprep.subr.bf16.mxu0 0
    %3516 = vmatpush1.bf16.msra.mxu0 0
    %3517 = vmatprep.subr.bf16.mxu0 0
    %3518 = vmatpush1.bf16.msra.mxu0 0
    %3519 = vmatprep.subr.bf16.mxu0 0
    %3520 = vmatpush1.bf16.msra.mxu0 0
    %3521 = vmatprep.subr.bf16.mxu0 0
    %3522 = vmatpush1.bf16.msra.mxu0 0
    %3523 = vmatprep.subr.bf16.mxu0 0
    %3524 = vmatpush1.bf16.msra.mxu0 0
    %3525 = vmatprep.subr.bf16.mxu0 0
    %3526 = vmatpush1.bf16.msra.mxu0 0
    %3527 = vmatprep.subr.bf16.mxu0 0
    %3528 = vmatpush1.bf16.msra.mxu0 0
    %3529 = vmatprep.subr.bf16.mxu0 0
    %3530 = vmatpush1.bf16.msra.mxu0 0
    %3531 = vmatprep.mubr.bf16.mxu0 0
    %3532 = vmatmul.mubr.bf16.gmra.mrb[0].mxu0 %v3497
    %v3533 = vpop.f32.mrb[0].mxu0
    %v3534 = vadd.f32 %v878, %v3533
    %v3535 = vpop.f32.mrb[0].mxu0
    %v3536 = vpop.f32.mrb[0].mxu0
    %v3537 = vpop.f32.mrb[0].mxu0
    %3538 = vdwg.mxu0
    %v3539 = vpack.c.bf16 %v3474, %v3474
    %v3541 = vsel %vm222, %v3539, 0
    %3543 = vmatprep.subr.bf16.mxu0 0
    %3544 = vmatpush1.bf16.msra.mxu0 %v950
    %3545 = vmatprep.subr.bf16.mxu0 0
    %3546 = vmatpush1.bf16.msra.mxu0 %v951
    %3547 = vmatprep.subr.bf16.mxu0 0
    %3548 = vmatpush1.bf16.msra.mxu0 0
    %3549 = vmatprep.subr.bf16.mxu0 0
    %3550 = vmatpush1.bf16.msra.mxu0 0
    %3551 = vmatprep.subr.bf16.mxu0 0
    %3552 = vmatpush1.bf16.msra.mxu0 0
    %3553 = vmatprep.subr.bf16.mxu0 0
    %3554 = vmatpush1.bf16.msra.mxu0 0
    %3555 = vmatprep.subr.bf16.mxu0 0
    %3556 = vmatpush1.bf16.msra.mxu0 0
    %3557 = vmatprep.subr.bf16.mxu0 0
    %3558 = vmatpush1.bf16.msra.mxu0 0
    %3559 = vmatprep.subr.bf16.mxu0 0
    %3560 = vmatpush1.bf16.msra.mxu0 0
    %3561 = vmatprep.subr.bf16.mxu0 0
    %3562 = vmatpush1.bf16.msra.mxu0 0
    %3563 = vmatprep.subr.bf16.mxu0 0
    %3564 = vmatpush1.bf16.msra.mxu0 0
    %3565 = vmatprep.subr.bf16.mxu0 0
    %3566 = vmatpush1.bf16.msra.mxu0 0
    %3567 = vmatprep.subr.bf16.mxu0 0
    %3568 = vmatpush1.bf16.msra.mxu0 0
    %3569 = vmatprep.subr.bf16.mxu0 0
    %3570 = vmatpush1.bf16.msra.mxu0 0
    %3571 = vmatprep.subr.bf16.mxu0 0
    %3572 = vmatpush1.bf16.msra.mxu0 0
    %3573 = vmatprep.subr.bf16.mxu0 0
    %3574 = vmatpush1.bf16.msra.mxu0 0
    %3575 = vmatprep.mubr.bf16.mxu0 0
    %3576 = vmatmul.mubr.bf16.gmra.mrb[0].mxu0 %v3541
    %v3577 = vpop.f32.mrb[0].mxu0
    %v3578 = vadd.f32 %v885, %v3577
    %v3579 = vpop.f32.mrb[0].mxu0
    %v3580 = vpop.f32.mrb[0].mxu0
    %v3581 = vpop.f32.mrb[0].mxu0
    %3582 = vdwg.mxu0
    %v3583 = vld [vmem:[%s1181] sm:$0x3]
    %v3584 = vunpack.c.l.bf16 %v3583
    %v3585 = vld [vmem:[%s1178] sm:$0x3]
    %v3586 = vunpack.c.l.bf16 %v3585
    %v3587 = vadd.f32 %v3584, %v3534
    %v3588 = vmul.f32 %v3587, 0.5
    %v3589 = vtanh.pop %v3588
    %v3590 = vadd.f32 %v3589, 1.0
    %v3591 = vmul.f32 %v3590, 0.5
    %v3594 = vunpack.c.l.s4 1983009808
    %v3595 = vunpack.c.0.s8 %v3594
    %v3596 = vlaneseq
    %v3597 = vshrl.u32 %v3596, 7
    %v3598 = vsub.s32 %v3595, %v3597
    %v3599 = vrot.slane %v3534, %v3598
    %3600 = vrot.lane.b32.xlu0 %v3599, 64
    %v3601 = vpop.permute.xlu0 %3600
    %v3603 = vmul.f32 %v3591, %v3601
    %3605 = vrot.lane.b32.xlu0 %v3603, 64
    %v3606 = vpop.permute.xlu0 %3605
    %v3608 = vadd.f32 %v3584, %v3606
    %v3609 = vtanh.pop %v3608
    %v3610 = vsub.f32 1.0, %v3591
    %3612 = vrot.lane.b32.xlu0 %v3609, 96
    %v3613 = vpop.permute.xlu0 %3612
    %v3615 = vmul.f32 %v3610, %v3613
    %v3616 = vmul.f32 %v3591, %v3432
    %v3617 = vadd.f32 %v3615, %v3616
    %v3620 = vunpack.c.l.s4 1983009808
    %v3621 = vunpack.c.0.s8 %v3620
    %v3622 = vlaneseq
    %v3623 = vshrl.u32 %v3622, 7
    %v3624 = vsub.s32 %v3621, %v3623
    %v3625 = vrot.slane %v3578, %v3624
    %3626 = vrot.lane.b32.xlu0 %v3625, 96
    %v3627 = vpop.permute.xlu0 %3626
    %v3629 = vadd.f32 %v3586, %v3627
    %v3630 = vmul.f32 %v3629, 0.5
    %v3631 = vtanh.pop %v3630
    %v3632 = vadd.f32 %v3631, 1.0
    %v3633 = vmul.f32 %v3632, 0.5
    %v3635 = vrot.slane %v3586, 2
    %v3637 = vadd.f32 %v3635, %v3627
    %v3638 = vmul.f32 %v3637, 0.5
    %v3639 = vtanh.pop %v3638
    %v3640 = vadd.f32 %v3639, 1.0
    %v3641 = vmul.f32 %v3640, 0.5
    %3642 = vrot.lane.b32.xlu0 %v3625, 32
    %v3643 = vpop.permute.xlu0 %3642
    %v3645 = vmul.f32 %v3633, %v3643
    %3646 = vrot.lane.b32.xlu0 %v3586, 96
    %v3647 = vpop.permute.xlu0 %3646
    %v3648 = vrot.slane %v3647, 2
    %3651 = vrot.lane.b32.xlu0 %v3645, 32
    %v3652 = vpop.permute.xlu0 %3651
    %v3654 = vadd.f32 %v3648, %v3652
    %v3655 = vtanh.pop %v3654
    %v3656 = vsub.f32 1.0, %v3641
    %v3657 = vmul.f32 %v3656, %v3655
    %v3658 = vmul.f32 %v3641, %v3474
    %v3659 = vadd.f32 %v3657, %v3658
    %v3660 = vld [vmem:[%s1270] sm:$0x3]
    %v3663 = vunpack.c.l.s4 1983009808
    %v3664 = vunpack.c.0.s8 %v3663
    %v3665 = vlaneseq
    %v3666 = vshrl.u32 %v3665, 7
    %v3667 = vsub.s32 %v3664, %v3666
    %v3668 = vrot.slane %v3617, %v3667
    %3669 = vrot.lane.b32.xlu0 %v3668, 96
    %v3670 = vpop.permute.xlu0 %3669
    %v3672 = vadd.f32 %v3660, %v3670
    %3673 = vst.msk [vmem:[%s1270] sm:$0x3] %vm861, %v3672
    %v3674 = vld [vmem:[%s1268] sm:$0x3]
    %v3675 = vadd.f32 %v3674, %v3659
    %3676 = vst.msk [vmem:[%s1268] sm:$0x3] %vm861, %v3675
    %v3677 = vpack.c.bf16 %v3617, %v3617
    %3679 = vrot.lane.b32.xlu0 %v3677, 96
    %v3680 = vpop.permute.xlu0 %3679
    %v3682 = vsel %vm222, %v3680, 0
    %3684 = vmatprep.subr.bf16.mxu0 0
    %3685 = vmatpush1.bf16.msra.mxu0 %v895
    %3686 = vmatprep.subr.bf16.mxu0 0
    %3687 = vmatpush1.bf16.msra.mxu0 %v896
    %3688 = vmatprep.subr.bf16.mxu0 0
    %3689 = vmatpush1.bf16.msra.mxu0 0
    %3690 = vmatprep.subr.bf16.mxu0 0
    %3691 = vmatpush1.bf16.msra.mxu0 0
    %3692 = vmatprep.subr.bf16.mxu0 0
    %3693 = vmatpush1.bf16.msra.mxu0 0
    %3694 = vmatprep.subr.bf16.mxu0 0
    %3695 = vmatpush1.bf16.msra.mxu0 0
    %3696 = vmatprep.subr.bf16.mxu0 0
    %3697 = vmatpush1.bf16.msra.mxu0 0
    %3698 = vmatprep.subr.bf16.mxu0 0
    %3699 = vmatpush1.bf16.msra.mxu0 0
    %3700 = vmatprep.subr.bf16.mxu0 0
    %3701 = vmatpush1.bf16.msra.mxu0 0
    %3702 = vmatprep.subr.bf16.mxu0 0
    %3703 = vmatpush1.bf16.msra.mxu0 0
    %3704 = vmatprep.subr.bf16.mxu0 0
    %3705 = vmatpush1.bf16.msra.mxu0 0
    %3706 = vmatprep.subr.bf16.mxu0 0
    %3707 = vmatpush1.bf16.msra.mxu0 0
    %3708 = vmatprep.subr.bf16.mxu0 0
    %3709 = vmatpush1.bf16.msra.mxu0 0
    %3710 = vmatprep.subr.bf16.mxu0 0
    %3711 = vmatpush1.bf16.msra.mxu0 0
    %3712 = vmatprep.subr.bf16.mxu0 0
    %3713 = vmatpush1.bf16.msra.mxu0 0
    %3714 = vmatprep.subr.bf16.mxu0 0
    %3715 = vmatpush1.bf16.msra.mxu0 0
    %3716 = vmatprep.mubr.bf16.mxu0 0
    %3717 = vmatmul.mubr.bf16.gmra.mrb[0].mxu0 %v3682
    %v3718 = vpop.f32.mrb[0].mxu0
    %v3719 = vadd.f32 %v878, %v3718
    %v3720 = vpop.f32.mrb[0].mxu0
    %v3721 = vpop.f32.mrb[0].mxu0
    %v3722 = vpop.f32.mrb[0].mxu0
    %3723 = vdwg.mxu0
    %v3724 = vpack.c.bf16 %v3659, %v3659
    %v3726 = vsel %vm222, %v3724, 0
    %3728 = vmatprep.subr.bf16.mxu0 0
    %3729 = vmatpush1.bf16.msra.mxu0 %v950
    %3730 = vmatprep.subr.bf16.mxu0 0
    %3731 = vmatpush1.bf16.msra.mxu0 %v951
    %3732 = vmatprep.subr.bf16.mxu0 0
    %3733 = vmatpush1.bf16.msra.mxu0 0
    %3734 = vmatprep.subr.bf16.mxu0 0
    %3735 = vmatpush1.bf16.msra.mxu0 0
    %3736 = vmatprep.subr.bf16.mxu0 0
    %3737 = vmatpush1.bf16.msra.mxu0 0
    %3738 = vmatprep.subr.bf16.mxu0 0
    %3739 = vmatpush1.bf16.msra.mxu0 0
    %3740 = vmatprep.subr.bf16.mxu0 0
    %3741 = vmatpush1.bf16.msra.mxu0 0
    %3742 = vmatprep.subr.bf16.mxu0 0
    %3743 = vmatpush1.bf16.msra.mxu0 0
    %3744 = vmatprep.subr.bf16.mxu0 0
    %3745 = vmatpush1.bf16.msra.mxu0 0
    %3746 = vmatprep.subr.bf16.mxu0 0
    %3747 = vmatpush1.bf16.msra.mxu0 0
    %3748 = vmatprep.subr.bf16.mxu0 0
    %3749 = vmatpush1.bf16.msra.mxu0 0
    %3750 = vmatprep.subr.bf16.mxu0 0
    %3751 = vmatpush1.bf16.msra.mxu0 0
    %3752 = vmatprep.subr.bf16.mxu0 0
    %3753 = vmatpush1.bf16.msra.mxu0 0
    %3754 = vmatprep.subr.bf16.mxu0 0
    %3755 = vmatpush1.bf16.msra.mxu0 0
    %3756 = vmatprep.subr.bf16.mxu0 0
    %3757 = vmatpush1.bf16.msra.mxu0 0
    %3758 = vmatprep.subr.bf16.mxu0 0
    %3759 = vmatpush1.bf16.msra.mxu0 0
    %3760 = vmatprep.mubr.bf16.mxu0 0
    %3761 = vmatmul.mubr.bf16.gmra.mrb[0].mxu0 %v3726
    %v3762 = vpop.f32.mrb[0].mxu0
    %v3763 = vadd.f32 %v885, %v3762
    %v3764 = vpop.f32.mrb[0].mxu0
    %v3765 = vpop.f32.mrb[0].mxu0
    %v3766 = vpop.f32.mrb[0].mxu0
    %3767 = vdwg.mxu0
    %v3768 = vld [vmem:[%s996] sm:$0x3]
    %v3769 = vunpack.c.l.bf16 %v3768
    %v3770 = vld [vmem:[#allocation2] sm:$0x3]
    %v3771 = vunpack.c.l.bf16 %v3770
    %v3772 = vadd.f32 %v3769, %v3719
    %v3773 = vmul.f32 %v3772, 0.5
    %v3774 = vtanh.pop %v3773
    %v3775 = vadd.f32 %v3774, 1.0
    %v3776 = vmul.f32 %v3775, 0.5
    %v3779 = vunpack.c.l.s4 1983009808
    %v3780 = vunpack.c.0.s8 %v3779
    %v3781 = vlaneseq
    %v3782 = vshrl.u32 %v3781, 7
    %v3783 = vsub.s32 %v3780, %v3782
    %v3784 = vrot.slane %v3719, %v3783
    %3785 = vrot.lane.b32.xlu0 %v3784, 64
    %v3786 = vpop.permute.xlu0 %3785
    %v3788 = vmul.f32 %v3776, %v3786
    %3790 = vrot.lane.b32.xlu0 %v3788, 64
    %v3791 = vpop.permute.xlu0 %3790
    %v3793 = vadd.f32 %v3769, %v3791
    %v3794 = vtanh.pop %v3793
    %v3795 = vsub.f32 1.0, %v3776
    %3797 = vrot.lane.b32.xlu0 %v3794, 96
    %v3798 = vpop.permute.xlu0 %3797
    %v3800 = vmul.f32 %v3795, %v3798
    %v3801 = vmul.f32 %v3776, %v3617
    %v3802 = vadd.f32 %v3800, %v3801
    %v3805 = vunpack.c.l.s4 1983009808
    %v3806 = vunpack.c.0.s8 %v3805
    %v3807 = vlaneseq
    %v3808 = vshrl.u32 %v3807, 7
    %v3809 = vsub.s32 %v3806, %v3808
    %v3810 = vrot.slane %v3763, %v3809
    %3811 = vrot.lane.b32.xlu0 %v3810, 96
    %v3812 = vpop.permute.xlu0 %3811
    %v3814 = vadd.f32 %v3771, %v3812
    %v3815 = vmul.f32 %v3814, 0.5
    %v3816 = vtanh.pop %v3815
    %v3817 = vadd.f32 %v3816, 1.0
    %v3818 = vmul.f32 %v3817, 0.5
    %v3820 = vrot.slane %v3771, 2
    %v3822 = vadd.f32 %v3820, %v3812
    %v3823 = vmul.f32 %v3822, 0.5
    %v3824 = vtanh.pop %v3823
    %v3825 = vadd.f32 %v3824, 1.0
    %v3826 = vmul.f32 %v3825, 0.5
    %3827 = vrot.lane.b32.xlu0 %v3810, 32
    %v3828 = vpop.permute.xlu0 %3827
    %v3830 = vmul.f32 %v3818, %v3828
    %3831 = vrot.lane.b32.xlu0 %v3771, 96
    %v3832 = vpop.permute.xlu0 %3831
    %v3833 = vrot.slane %v3832, 2
    %3836 = vrot.lane.b32.xlu0 %v3830, 32
    %v3837 = vpop.permute.xlu0 %3836
    %v3839 = vadd.f32 %v3833, %v3837
    %v3840 = vtanh.pop %v3839
    %v3841 = vsub.f32 1.0, %v3826
    %v3842 = vmul.f32 %v3841, %v3840
    %v3843 = vmul.f32 %v3826, %v3659
    %v3844 = vadd.f32 %v3842, %v3843
    %v3845 = vld [vmem:[%s1085] sm:$0x3]
    %v3848 = vunpack.c.l.s4 1983009808
    %v3849 = vunpack.c.0.s8 %v3848
    %v3850 = vlaneseq
    %v3851 = vshrl.u32 %v3850, 7
    %v3852 = vsub.s32 %v3849, %v3851
    %v3853 = vrot.slane %v3802, %v3852
    %3854 = vrot.lane.b32.xlu0 %v3853, 96
    %v3855 = vpop.permute.xlu0 %3854
    %v3857 = vadd.f32 %v3845, %v3855
    %3858 = vst.msk [vmem:[%s1085] sm:$0x3] %vm861, %v3857
    %v3859 = vld [vmem:[%s1083] sm:$0x3]
    %v3860 = vadd.f32 %v3859, %v3844
    %3861 = vst.msk [vmem:[%s1083] sm:$0x3] %vm861, %v3860
    %v3862 = vld [vmem:[#allocation3] sm:$0x3]
    %v3863 = vld [vmem:[#allocation3 + $0x2] sm:$0x3]
    %v3864 = vld [vmem:[#allocation3 + $0x4] sm:$0x3]
    %v3865 = vld [vmem:[#allocation3 + $0x6] sm:$0x3]
    %v3866 = vld [vmem:[#allocation3 + $0x8] sm:$0x3]
    %v3867 = vld [vmem:[#allocation3 + $0xa] sm:$0x3]
    %v3868 = vld [vmem:[#allocation3 + $0xc] sm:$0x3]
    %v3869 = vld [vmem:[#allocation3 + $0xe] sm:$0x3]
    %v3870 = vld [vmem:[#allocation3 + $0x10] sm:$0x3]
    %v3871 = vld [vmem:[#allocation3 + $0x12] sm:$0x3]
    %v3872 = vld [vmem:[#allocation3 + $0x14] sm:$0x3]
    %v3873 = vld [vmem:[#allocation3 + $0x16] sm:$0x3]
    %v3874 = vld [vmem:[#allocation3 + $0x18] sm:$0x3]
    %v3875 = vld [vmem:[#allocation3 + $0x1a] sm:$0x3]
    %v3876 = vld [vmem:[#allocation3 + $0x1c] sm:$0x3]
    %v3877 = vld [vmem:[#allocation3 + $0x1e] sm:$0x3]
    %v3878 = vld [vmem:[#allocation3 + $0x20] sm:$0x3]
    %v3879 = vld [vmem:[#allocation3 + $0x22] sm:$0x3]
    %v3880 = vpack.c.bf16 %v3862, %v3862
    %v3881 = vpack.c.bf16 %v3863, %v3863
    %v3882 = vpack.c.bf16 %v3864, %v3864
    %v3883 = vpack.c.bf16 %v3865, %v3865
    %v3884 = vpack.c.bf16 %v3866, %v3866
    %v3885 = vpack.c.bf16 %v3867, %v3867
    %v3886 = vpack.c.bf16 %v3868, %v3868
    %v3887 = vpack.c.bf16 %v3869, %v3869
    %v3888 = vpack.c.bf16 %v3870, %v3870
    %v3889 = vpack.c.bf16 %v3871, %v3871
    %v3890 = vpack.c.bf16 %v3872, %v3872
    %v3891 = vpack.c.bf16 %v3873, %v3873
    %v3892 = vpack.c.bf16 %v3874, %v3874
    %v3893 = vpack.c.bf16 %v3875, %v3875
    %v3894 = vpack.c.bf16 %v3876, %v3876
    %v3895 = vpack.c.bf16 %v3877, %v3877
    %v3896 = vpack.c.bf16 %v3878, %v3878
    %v3897 = vpack.c.bf16 %v3879, %v3879
    %v3898 = vld [vmem:[%s7] sm:$0xf]
    %v3899 = vld [vmem:[%s7 + $0x4] sm:$0xf]
    %v3900 = vld [vmem:[%s7 + $0x8] sm:$0xf]
    %v3901 = vld [vmem:[%s7 + $0xc] sm:$0xf]
    %s3902 = scalar_lea.vmem %s7, 16
    %v3903 = vld [vmem:[%s3902] sm:$0xf]
    %v3904 = vld [vmem:[%s3902 + $0x4] sm:$0xf]
    %v3905 = vld [vmem:[%s3902 + $0x8] sm:$0xf]
    %v3906 = vld [vmem:[%s3902 + $0xc] sm:$0xf]
    %v3923 = vcombine.low %v3881, %v3882
    %v3924 = vcombine.low %v3883, %v3884
    %v3925 = vcombine.low %v3885, %v3886
    %v3926 = vcombine.low %v3887, %v3888
    %v3928 = vunpack.c.l.s4 1966171168
    %v3929 = vunpack.c.0.s8 %v3928
    %v3930 = vlaneseq
    %v3931 = vshrl.u32 %v3930, 7
    %v3932 = vsub.s32 %v3929, %v3931
    %v3933 = vrot.slane %v3923, %v3932
    %v3935 = vunpack.c.l.s4 1966171168
    %v3936 = vunpack.c.0.s8 %v3935
    %v3937 = vlaneseq
    %v3938 = vshrl.u32 %v3937, 7
    %v3939 = vsub.s32 %v3936, %v3938
    %v3940 = vrot.slane %v3924, %v3939
    %v3942 = vunpack.c.l.s4 1966171168
    %v3943 = vunpack.c.0.s8 %v3942
    %v3944 = vlaneseq
    %v3945 = vshrl.u32 %v3944, 7
    %v3946 = vsub.s32 %v3943, %v3945
    %v3947 = vrot.slane %v3925, %v3946
    %v3949 = vunpack.c.l.s4 1966171168
    %v3950 = vunpack.c.0.s8 %v3949
    %v3951 = vlaneseq
    %v3952 = vshrl.u32 %v3951, 7
    %v3953 = vsub.s32 %v3950, %v3952
    %v3954 = vrot.slane %v3926, %v3953
    %v3955 = vcombine.low %v3933, %v3940
    %v3956 = vcombine.low %v3947, %v3954
    %v3958 = vunpack.c.l.s4 1966171168
    %v3959 = vunpack.c.0.s8 %v3958
    %v3960 = vlaneseq
    %v3961 = vshrl.u32 %v3960, 7
    %v3962 = vsub.s32 %v3959, %v3961
    %v3963 = vrot.slane %v3955, %v3962
    %v3965 = vunpack.c.l.s4 1966171168
    %v3966 = vunpack.c.0.s8 %v3965
    %v3967 = vlaneseq
    %v3968 = vshrl.u32 %v3967, 7
    %v3969 = vsub.s32 %v3966, %v3968
    %v3970 = vrot.slane %v3956, %v3969
    %v3971 = vcombine.low %v3963, %v3970
    %v3972 = vcombine.low %v3889, %v3890
    %v3973 = vcombine.low %v3891, %v3892
    %v3974 = vcombine.low %v3893, %v3894
    %v3975 = vcombine.low %v3895, %v3896
    %v3977 = vunpack.c.l.s4 1966171168
    %v3978 = vunpack.c.0.s8 %v3977
    %v3979 = vlaneseq
    %v3980 = vshrl.u32 %v3979, 7
    %v3981 = vsub.s32 %v3978, %v3980
    %v3982 = vrot.slane %v3972, %v3981
    %v3984 = vunpack.c.l.s4 1966171168
    %v3985 = vunpack.c.0.s8 %v3984
    %v3986 = vlaneseq
    %v3987 = vshrl.u32 %v3986, 7
    %v3988 = vsub.s32 %v3985, %v3987
    %v3989 = vrot.slane %v3973, %v3988
    %v3991 = vunpack.c.l.s4 1966171168
    %v3992 = vunpack.c.0.s8 %v3991
    %v3993 = vlaneseq
    %v3994 = vshrl.u32 %v3993, 7
    %v3995 = vsub.s32 %v3992, %v3994
    %v3996 = vrot.slane %v3974, %v3995
    %v3998 = vunpack.c.l.s4 1966171168
    %v3999 = vunpack.c.0.s8 %v3998
    %v4000 = vlaneseq
    %v4001 = vshrl.u32 %v4000, 7
    %v4002 = vsub.s32 %v3999, %v4001
    %v4003 = vrot.slane %v3975, %v4002
    %v4004 = vcombine.low %v3982, %v3989
    %v4005 = vcombine.low %v3996, %v4003
    %v4007 = vunpack.c.l.s4 1966171168
    %v4008 = vunpack.c.0.s8 %v4007
    %v4009 = vlaneseq
    %v4010 = vshrl.u32 %v4009, 7
    %v4011 = vsub.s32 %v4008, %v4010
    %v4012 = vrot.slane %v4004, %v4011
    %v4014 = vunpack.c.l.s4 1966171168
    %v4015 = vunpack.c.0.s8 %v4014
    %v4016 = vlaneseq
    %v4017 = vshrl.u32 %v4016, 7
    %v4018 = vsub.s32 %v4015, %v4017
    %v4019 = vrot.slane %v4005, %v4018
    %v4020 = vcombine.low %v4012, %v4019
    %v4025 = vunpack.c.l.b16 %v3903
    %v4026 = vunpack.c.l.b16 %v3904
    %v4027 = vunpack.c.l.b16 %v3905
    %v4028 = vunpack.c.l.b16 %v3906
    %v4029 = vpack.c.b16 %v4026, %v4025
    %v4030 = vpack.c.b16 %v4028, %v4027
    %v4034 = vsel %vm222, %v3971, 0
    %v4037 = vsel %vm222, %v4020, 0
    %4039 = vmatprep.subr.bf16.mxu0 0
    %4040 = vmatpush1.bf16.msra.mxu0 %v4029
    %4041 = vmatprep.subr.bf16.mxu0 0
    %4042 = vmatpush1.bf16.msra.mxu0 %v4030
    %4043 = vmatprep.subr.bf16.mxu0 0
    %4044 = vmatpush1.bf16.msra.mxu0 0
    %4045 = vmatprep.subr.bf16.mxu0 0
    %4046 = vmatpush1.bf16.msra.mxu0 0
    %4047 = vmatprep.subr.bf16.mxu0 0
    %4048 = vmatpush1.bf16.msra.mxu0 0
    %4049 = vmatprep.subr.bf16.mxu0 0
    %4050 = vmatpush1.bf16.msra.mxu0 0
    %4051 = vmatprep.subr.bf16.mxu0 0
    %4052 = vmatpush1.bf16.msra.mxu0 0
    %4053 = vmatprep.subr.bf16.mxu0 0
    %4054 = vmatpush1.bf16.msra.mxu0 0
    %4055 = vmatprep.subr.bf16.mxu0 0
    %4056 = vmatpush1.bf16.msra.mxu0 0
    %4057 = vmatprep.subr.bf16.mxu0 0
    %4058 = vmatpush1.bf16.msra.mxu0 0
    %4059 = vmatprep.subr.bf16.mxu0 0
    %4060 = vmatpush1.bf16.msra.mxu0 0
    %4061 = vmatprep.subr.bf16.mxu0 0
    %4062 = vmatpush1.bf16.msra.mxu0 0
    %4063 = vmatprep.subr.bf16.mxu0 0
    %4064 = vmatpush1.bf16.msra.mxu0 0
    %4065 = vmatprep.subr.bf16.mxu0 0
    %4066 = vmatpush1.bf16.msra.mxu0 0
    %4067 = vmatprep.subr.bf16.mxu0 0
    %4068 = vmatpush1.bf16.msra.mxu0 0
    %4069 = vmatprep.subr.bf16.mxu0 0
    %4070 = vmatpush1.bf16.msra.mxu0 0
    %4071 = vmatprep.mubr.bf16.mxu0 0
    %4072 = vmatmul.mubr.bf16.gmra.mrb[0].mxu0 %v4034
    %v4073 = vpop.f32.mrb[0].mxu0
    %v4074 = vadd.f32 0.0, %v4073
    %v4075 = vpop.f32.mrb[0].mxu0
    %v4076 = vpop.f32.mrb[0].mxu0
    %v4077 = vadd.f32 0.0, %v4076
    %v4078 = vpop.f32.mrb[0].mxu0
    %4079 = vmatprep.mubr.bf16.mxu0 0
    %4080 = vmatmul.mubr.bf16.gmra.mrb[0].mxu0 %v4037
    %v4081 = vpop.f32.mrb[0].mxu0
    %v4082 = vadd.f32 0.0, %v4081
    %v4083 = vpop.f32.mrb[0].mxu0
    %v4084 = vpop.f32.mrb[0].mxu0
    %v4085 = vadd.f32 0.0, %v4084
    %v4086 = vpop.f32.mrb[0].mxu0
    %4087 = vdwg.mxu0
    %v4089 = vcombine.low %v3880, %v3881
    %v4090 = vcombine.low %v3882, %v3883
    %v4091 = vcombine.low %v3884, %v3885
    %v4092 = vcombine.low %v3886, %v3887
    %v4094 = vunpack.c.l.s4 1966171168
    %v4095 = vunpack.c.0.s8 %v4094
    %v4096 = vlaneseq
    %v4097 = vshrl.u32 %v4096, 7
    %v4098 = vsub.s32 %v4095, %v4097
    %v4099 = vrot.slane %v4089, %v4098
    %v4101 = vunpack.c.l.s4 1966171168
    %v4102 = vunpack.c.0.s8 %v4101
    %v4103 = vlaneseq
    %v4104 = vshrl.u32 %v4103, 7
    %v4105 = vsub.s32 %v4102, %v4104
    %v4106 = vrot.slane %v4090, %v4105
    %v4108 = vunpack.c.l.s4 1966171168
    %v4109 = vunpack.c.0.s8 %v4108
    %v4110 = vlaneseq
    %v4111 = vshrl.u32 %v4110, 7
    %v4112 = vsub.s32 %v4109, %v4111
    %v4113 = vrot.slane %v4091, %v4112
    %v4115 = vunpack.c.l.s4 1966171168
    %v4116 = vunpack.c.0.s8 %v4115
    %v4117 = vlaneseq
    %v4118 = vshrl.u32 %v4117, 7
    %v4119 = vsub.s32 %v4116, %v4118
    %v4120 = vrot.slane %v4092, %v4119
    %v4121 = vcombine.low %v4099, %v4106
    %v4122 = vcombine.low %v4113, %v4120
    %v4124 = vunpack.c.l.s4 1966171168
    %v4125 = vunpack.c.0.s8 %v4124
    %v4126 = vlaneseq
    %v4127 = vshrl.u32 %v4126, 7
    %v4128 = vsub.s32 %v4125, %v4127
    %v4129 = vrot.slane %v4121, %v4128
    %v4131 = vunpack.c.l.s4 1966171168
    %v4132 = vunpack.c.0.s8 %v4131
    %v4133 = vlaneseq
    %v4134 = vshrl.u32 %v4133, 7
    %v4135 = vsub.s32 %v4132, %v4134
    %v4136 = vrot.slane %v4122, %v4135
    %v4137 = vcombine.low %v4129, %v4136
    %v4138 = vcombine.low %v3888, %v3889
    %v4139 = vcombine.low %v3890, %v3891
    %v4140 = vcombine.low %v3892, %v3893
    %v4141 = vcombine.low %v3894, %v3895
    %v4143 = vunpack.c.l.s4 1966171168
    %v4144 = vunpack.c.0.s8 %v4143
    %v4145 = vlaneseq
    %v4146 = vshrl.u32 %v4145, 7
    %v4147 = vsub.s32 %v4144, %v4146
    %v4148 = vrot.slane %v4138, %v4147
    %v4150 = vunpack.c.l.s4 1966171168
    %v4151 = vunpack.c.0.s8 %v4150
    %v4152 = vlaneseq
    %v4153 = vshrl.u32 %v4152, 7
    %v4154 = vsub.s32 %v4151, %v4153
    %v4155 = vrot.slane %v4139, %v4154
    %v4157 = vunpack.c.l.s4 1966171168
    %v4158 = vunpack.c.0.s8 %v4157
    %v4159 = vlaneseq
    %v4160 = vshrl.u32 %v4159, 7
    %v4161 = vsub.s32 %v4158, %v4160
    %v4162 = vrot.slane %v4140, %v4161
    %v4164 = vunpack.c.l.s4 1966171168
    %v4165 = vunpack.c.0.s8 %v4164
    %v4166 = vlaneseq
    %v4167 = vshrl.u32 %v4166, 7
    %v4168 = vsub.s32 %v4165, %v4167
    %v4169 = vrot.slane %v4141, %v4168
    %v4170 = vcombine.low %v4148, %v4155
    %v4171 = vcombine.low %v4162, %v4169
    %v4173 = vunpack.c.l.s4 1966171168
    %v4174 = vunpack.c.0.s8 %v4173
    %v4175 = vlaneseq
    %v4176 = vshrl.u32 %v4175, 7
    %v4177 = vsub.s32 %v4174, %v4176
    %v4178 = vrot.slane %v4170, %v4177
    %v4180 = vunpack.c.l.s4 1966171168
    %v4181 = vunpack.c.0.s8 %v4180
    %v4182 = vlaneseq
    %v4183 = vshrl.u32 %v4182, 7
    %v4184 = vsub.s32 %v4181, %v4183
    %v4185 = vrot.slane %v4171, %v4184
    %v4186 = vcombine.low %v4178, %v4185
    %v4191 = vunpack.c.l.b16 %v3898
    %v4192 = vunpack.c.l.b16 %v3899
    %v4193 = vunpack.c.l.b16 %v3900
    %v4194 = vunpack.c.l.b16 %v3901
    %v4195 = vpack.c.b16 %v4192, %v4191
    %v4196 = vpack.c.b16 %v4194, %v4193
    %v4200 = vsel %vm222, %v4137, 0
    %v4203 = vsel %vm222, %v4186, 0
    %4205 = vmatprep.subr.bf16.mxu0 0
    %4206 = vmatpush1.bf16.msra.mxu0 %v4195
    %4207 = vmatprep.subr.bf16.mxu0 0
    %4208 = vmatpush1.bf16.msra.mxu0 %v4196
    %4209 = vmatprep.subr.bf16.mxu0 0
    %4210 = vmatpush1.bf16.msra.mxu0 0
    %4211 = vmatprep.subr.bf16.mxu0 0
    %4212 = vmatpush1.bf16.msra.mxu0 0
    %4213 = vmatprep.subr.bf16.mxu0 0
    %4214 = vmatpush1.bf16.msra.mxu0 0
    %4215 = vmatprep.subr.bf16.mxu0 0
    %4216 = vmatpush1.bf16.msra.mxu0 0
    %4217 = vmatprep.subr.bf16.mxu0 0
    %4218 = vmatpush1.bf16.msra.mxu0 0
    %4219 = vmatprep.subr.bf16.mxu0 0
    %4220 = vmatpush1.bf16.msra.mxu0 0
    %4221 = vmatprep.subr.bf16.mxu0 0
    %4222 = vmatpush1.bf16.msra.mxu0 0
    %4223 = vmatprep.subr.bf16.mxu0 0
    %4224 = vmatpush1.bf16.msra.mxu0 0
    %4225 = vmatprep.subr.bf16.mxu0 0
    %4226 = vmatpush1.bf16.msra.mxu0 0
    %4227 = vmatprep.subr.bf16.mxu0 0
    %4228 = vmatpush1.bf16.msra.mxu0 0
    %4229 = vmatprep.subr.bf16.mxu0 0
    %4230 = vmatpush1.bf16.msra.mxu0 0
    %4231 = vmatprep.subr.bf16.mxu0 0
    %4232 = vmatpush1.bf16.msra.mxu0 0
    %4233 = vmatprep.subr.bf16.mxu0 0
    %4234 = vmatpush1.bf16.msra.mxu0 0
    %4235 = vmatprep.subr.bf16.mxu0 0
    %4236 = vmatpush1.bf16.msra.mxu0 0
    %4237 = vmatprep.mubr.bf16.mxu0 0
    %4238 = vmatmul.mubr.bf16.gmra.mrb[0].mxu0 %v4200
    %v4239 = vpop.f32.mrb[0].mxu0
    %v4240 = vadd.f32 %v4074, %v4239
    %v4241 = vpop.f32.mrb[0].mxu0
    %v4242 = vpop.f32.mrb[0].mxu0
    %v4243 = vadd.f32 %v4077, %v4242
    %v4244 = vpop.f32.mrb[0].mxu0
    %4245 = vmatprep.mubr.bf16.mxu0 0
    %4246 = vmatmul.mubr.bf16.gmra.mrb[0].mxu0 %v4203
    %v4247 = vpop.f32.mrb[0].mxu0
    %v4248 = vadd.f32 %v4082, %v4247
    %v4249 = vpop.f32.mrb[0].mxu0
    %v4250 = vpop.f32.mrb[0].mxu0
    %v4251 = vadd.f32 %v4085, %v4250
    %v4252 = vpop.f32.mrb[0].mxu0
    %4253 = vdwg.mxu0
    %s4254 = scalar_lea.vmem %s7, 32
    %v4255 = vld [vmem:[%s4254] sm:$0xf]
    %v4256 = vld [vmem:[%s4254 + $0x4] sm:$0xf]
    %v4257 = vld [vmem:[%s4254 + $0x8] sm:$0xf]
    %v4258 = vld [vmem:[%s4254 + $0xc] sm:$0xf]
    %v4260 = vcombine.low %v4106, %v4113
    %v4261 = vcombine.low %v4120, %v4148
    %v4263 = vunpack.c.l.s4 1966171168
    %v4264 = vunpack.c.0.s8 %v4263
    %v4265 = vlaneseq
    %v4266 = vshrl.u32 %v4265, 7
    %v4267 = vsub.s32 %v4264, %v4266
    %v4268 = vrot.slane %v4260, %v4267
    %v4270 = vunpack.c.l.s4 1966171168
    %v4271 = vunpack.c.0.s8 %v4270
    %v4272 = vlaneseq
    %v4273 = vshrl.u32 %v4272, 7
    %v4274 = vsub.s32 %v4271, %v4273
    %v4275 = vrot.slane %v4261, %v4274
    %v4276 = vcombine.low %v4268, %v4275
    %v4277 = vcombine.low %v3896, %v3897
    %v4279 = vunpack.c.l.s4 1966171168
    %v4280 = vunpack.c.0.s8 %v4279
    %v4281 = vlaneseq
    %v4282 = vshrl.u32 %v4281, 7
    %v4283 = vsub.s32 %v4280, %v4282
    %v4284 = vrot.slane %v4277, %v4283
    %v4285 = vcombine.low %v4155, %v4162
    %v4286 = vcombine.low %v4169, %v4284
    %v4288 = vunpack.c.l.s4 1966171168
    %v4289 = vunpack.c.0.s8 %v4288
    %v4290 = vlaneseq
    %v4291 = vshrl.u32 %v4290, 7
    %v4292 = vsub.s32 %v4289, %v4291
    %v4293 = vrot.slane %v4285, %v4292
    %v4295 = vunpack.c.l.s4 1966171168
    %v4296 = vunpack.c.0.s8 %v4295
    %v4297 = vlaneseq
    %v4298 = vshrl.u32 %v4297, 7
    %v4299 = vsub.s32 %v4296, %v4298
    %v4300 = vrot.slane %v4286, %v4299
    %v4301 = vcombine.low %v4293, %v4300
    %v4306 = vunpack.c.l.b16 %v4255
    %v4307 = vunpack.c.l.b16 %v4256
    %v4308 = vunpack.c.l.b16 %v4257
    %v4309 = vunpack.c.l.b16 %v4258
    %v4310 = vpack.c.b16 %v4307, %v4306
    %v4311 = vpack.c.b16 %v4309, %v4308
    %v4315 = vsel %vm222, %v4276, 0
    %v4318 = vsel %vm222, %v4301, 0
    %4320 = vmatprep.subr.bf16.mxu0 0
    %4321 = vmatpush1.bf16.msra.mxu0 %v4310
    %4322 = vmatprep.subr.bf16.mxu0 0
    %4323 = vmatpush1.bf16.msra.mxu0 %v4311
    %4324 = vmatprep.subr.bf16.mxu0 0
    %4325 = vmatpush1.bf16.msra.mxu0 0
    %4326 = vmatprep.subr.bf16.mxu0 0
    %4327 = vmatpush1.bf16.msra.mxu0 0
    %4328 = vmatprep.subr.bf16.mxu0 0
    %4329 = vmatpush1.bf16.msra.mxu0 0
    %4330 = vmatprep.subr.bf16.mxu0 0
    %4331 = vmatpush1.bf16.msra.mxu0 0
    %4332 = vmatprep.subr.bf16.mxu0 0
    %4333 = vmatpush1.bf16.msra.mxu0 0
    %4334 = vmatprep.subr.bf16.mxu0 0
    %4335 = vmatpush1.bf16.msra.mxu0 0
    %4336 = vmatprep.subr.bf16.mxu0 0
    %4337 = vmatpush1.bf16.msra.mxu0 0
    %4338 = vmatprep.subr.bf16.mxu0 0
    %4339 = vmatpush1.bf16.msra.mxu0 0
    %4340 = vmatprep.subr.bf16.mxu0 0
    %4341 = vmatpush1.bf16.msra.mxu0 0
    %4342 = vmatprep.subr.bf16.mxu0 0
    %4343 = vmatpush1.bf16.msra.mxu0 0
    %4344 = vmatprep.subr.bf16.mxu0 0
    %4345 = vmatpush1.bf16.msra.mxu0 0
    %4346 = vmatprep.subr.bf16.mxu0 0
    %4347 = vmatpush1.bf16.msra.mxu0 0
    %4348 = vmatprep.subr.bf16.mxu0 0
    %4349 = vmatpush1.bf16.msra.mxu0 0
    %4350 = vmatprep.subr.bf16.mxu0 0
    %4351 = vmatpush1.bf16.msra.mxu0 0
    %4352 = vmatprep.mubr.bf16.mxu0 0
    %4353 = vmatmul.mubr.bf16.gmra.mrb[0].mxu0 %v4315
    %v4354 = vpop.f32.mrb[0].mxu0
    %v4355 = vadd.f32 0.0, %v4354
    %v4356 = vpop.f32.mrb[0].mxu0
    %v4357 = vpop.f32.mrb[0].mxu0
    %v4358 = vadd.f32 0.0, %v4357
    %v4359 = vpop.f32.mrb[0].mxu0
    %4360 = vmatprep.mubr.bf16.mxu0 0
    %4361 = vmatmul.mubr.bf16.gmra.mrb[0].mxu0 %v4318
    %v4362 = vpop.f32.mrb[0].mxu0
    %v4363 = vadd.f32 0.0, %v4362
    %v4364 = vpop.f32.mrb[0].mxu0
    %v4365 = vpop.f32.mrb[0].mxu0
    %v4366 = vadd.f32 0.0, %v4365
    %v4367 = vpop.f32.mrb[0].mxu0
    %4368 = vdwg.mxu0
    %v4369 = vadd.f32 %v4240, %v4355
    %v4370 = vadd.f32 %v4243, %v4358
    %v4371 = vadd.f32 %v4248, %v4363
    %v4372 = vadd.f32 %v4251, %v4366
    %v4377 = vcombine.high %v4369, %v4369
    %v4379 = vunpack.c.l.s4 1983009808
    %v4380 = vunpack.c.0.s8 %v4379
    %v4381 = vlaneseq
    %v4382 = vshrl.u32 %v4381, 7
    %v4383 = vsub.s32 %v4380, %v4382
    %v4384 = vrot.slane %v4369, %v4383
    %v4386 = vunpack.c.l.s4 1983009808
    %v4387 = vunpack.c.0.s8 %v4386
    %v4388 = vlaneseq
    %v4389 = vshrl.u32 %v4388, 7
    %v4390 = vsub.s32 %v4387, %v4389
    %v4391 = vrot.slane %v4377, %v4390
    %v4392 = vcombine.high %v4384, %v4384
    %v4393 = vcombine.high %v4391, %v4391
    %v4394 = vcombine.high %v4370, %v4370
    %v4396 = vunpack.c.l.s4 1983009808
    %v4397 = vunpack.c.0.s8 %v4396
    %v4398 = vlaneseq
    %v4399 = vshrl.u32 %v4398, 7
    %v4400 = vsub.s32 %v4397, %v4399
    %v4401 = vrot.slane %v4370, %v4400
    %v4403 = vunpack.c.l.s4 1983009808
    %v4404 = vunpack.c.0.s8 %v4403
    %v4405 = vlaneseq
    %v4406 = vshrl.u32 %v4405, 7
    %v4407 = vsub.s32 %v4404, %v4406
    %v4408 = vrot.slane %v4394, %v4407
    %v4409 = vcombine.high %v4401, %v4401
    %v4410 = vcombine.high %v4408, %v4408
    %v4411 = vcombine.high %v4371, %v4371
    %v4413 = vunpack.c.l.s4 1983009808
    %v4414 = vunpack.c.0.s8 %v4413
    %v4415 = vlaneseq
    %v4416 = vshrl.u32 %v4415, 7
    %v4417 = vsub.s32 %v4414, %v4416
    %v4418 = vrot.slane %v4371, %v4417
    %v4420 = vunpack.c.l.s4 1983009808
    %v4421 = vunpack.c.0.s8 %v4420
    %v4422 = vlaneseq
    %v4423 = vshrl.u32 %v4422, 7
    %v4424 = vsub.s32 %v4421, %v4423
    %v4425 = vrot.slane %v4411, %v4424
    %v4426 = vcombine.high %v4418, %v4418
    %v4427 = vcombine.high %v4425, %v4425
    %v4428 = vcombine.high %v4372, %v4372
    %v4430 = vunpack.c.l.s4 1983009808
    %v4431 = vunpack.c.0.s8 %v4430
    %v4432 = vlaneseq
    %v4433 = vshrl.u32 %v4432, 7
    %v4434 = vsub.s32 %v4431, %v4433
    %v4435 = vrot.slane %v4372, %v4434
    %v4437 = vunpack.c.l.s4 1983009808
    %v4438 = vunpack.c.0.s8 %v4437
    %v4439 = vlaneseq
    %v4440 = vshrl.u32 %v4439, 7
    %v4441 = vsub.s32 %v4438, %v4440
    %v4442 = vrot.slane %v4428, %v4441
    %v4443 = vcombine.high %v4435, %v4435
    %v4444 = vcombine.high %v4442, %v4442
    %v4461 = vld [vmem:[#allocation4] sm:$0x1]
    %v4463 = vlaneseq
    %v4464 = vshrl.u32 %v4463, 7
    %v4465 = vsub.s32 0, %v4464
    %v4466 = vrot.slane %v4461, %v4465
    %v4468 = vadd.f32 %v4384, %v4466
    %v4469 = vadd.f32 %v4392, %v4466
    %v4470 = vadd.f32 %v4391, %v4466
    %v4471 = vadd.f32 %v4393, %v4466
    %v4472 = vadd.f32 %v4401, %v4466
    %v4473 = vadd.f32 %v4409, %v4466
    %v4474 = vadd.f32 %v4408, %v4466
    %v4475 = vadd.f32 %v4410, %v4466
    %v4476 = vadd.f32 %v4418, %v4466
    %v4477 = vadd.f32 %v4426, %v4466
    %v4478 = vadd.f32 %v4425, %v4466
    %v4479 = vadd.f32 %v4427, %v4466
    %v4480 = vadd.f32 %v4435, %v4466
    %v4481 = vadd.f32 %v4443, %v4466
    %v4482 = vadd.f32 %v4442, %v4466
    %v4483 = vadd.f32 %v4444, %v4466
    %v4484 = vld [vmem:[%s11] sm:$0xff]
    %v4485 = vld [vmem:[%s11 + $0x8] sm:$0xff]
    %v4486 = vld [vmem:[%s11 + $0x10] sm:$0xff]
    %v4487 = vld [vmem:[%s11 + $0x18] sm:$0xff]
    %v4488 = vld [vmem:[#allocation8] sm:$0xf]
    %v4489 = vsel %vm861, %v4468, 0.0
    %v4490 = vsel %vm861, %v4469, 0.0
    %v4491 = vadd.f32 %v4489, %v4490
    %v4492 = vsel %vm861, %v4470, 0.0
    %v4493 = vadd.f32 %v4491, %v4492
    %v4494 = vsel %vm861, %v4471, 0.0
    %v4495 = vadd.f32 %v4493, %v4494
    %v4496 = vsel %vm861, %v4472, 0.0
    %v4497 = vadd.f32 %v4495, %v4496
    %v4498 = vsel %vm861, %v4473, 0.0
    %v4499 = vadd.f32 %v4497, %v4498
    %v4500 = vsel %vm861, %v4474, 0.0
    %v4501 = vadd.f32 %v4499, %v4500
    %v4502 = vsel %vm861, %v4475, 0.0
    %v4503 = vadd.f32 %v4501, %v4502
    %v4504 = vsel %vm861, %v4476, 0.0
    %v4505 = vadd.f32 %v4503, %v4504
    %v4506 = vsel %vm861, %v4477, 0.0
    %v4507 = vadd.f32 %v4505, %v4506
    %v4508 = vsel %vm861, %v4478, 0.0
    %v4509 = vadd.f32 %v4507, %v4508
    %v4510 = vsel %vm861, %v4479, 0.0
    %v4511 = vadd.f32 %v4509, %v4510
    %v4512 = vsel %vm861, %v4480, 0.0
    %v4513 = vadd.f32 %v4511, %v4512
    %v4514 = vsel %vm861, %v4481, 0.0
    %v4515 = vadd.f32 %v4513, %v4514
    %v4516 = vsel %vm861, %v4482, 0.0
    %v4517 = vadd.f32 %v4515, %v4516
    %v4518 = vsel %vm861, %v4483, 0.0
    %v4519 = vadd.f32 %v4517, %v4518
    %v4521 = vsel %vm222, %v4519, 0
    %4523 = vmatprep.subr.mxu0 0.0
    %4524 = vmatpush1.msra.mxu0 %v4484
    %4525 = vmatprep.subr.mxu0 0.0
    %4526 = vmatpush1.msra.mxu0 %v4485
    %4527 = vmatprep.subr.mxu0 0.0
    %4528 = vmatpush1.msra.mxu0 %v4486
    %4529 = vmatprep.subr.mxu0 0.0
    %4530 = vmatpush1.msra.mxu0 %v4487
    %4531 = vmatprep.subr.mxu0 0.0
    %4532 = vmatpush1.msra.mxu0 0.0
    %4533 = vmatprep.subr.mxu0 0.0
    %4534 = vmatpush1.msra.mxu0 0.0
    %4535 = vmatprep.subr.mxu0 0.0
    %4536 = vmatpush1.msra.mxu0 0.0
    %4537 = vmatprep.subr.mxu0 0.0
    %4538 = vmatpush1.msra.mxu0 0.0
    %4539 = vmatprep.subr.mxu0 0.0
    %4540 = vmatpush1.msra.mxu0 0.0
    %4541 = vmatprep.subr.mxu0 0.0
    %4542 = vmatpush1.msra.mxu0 0.0
    %4543 = vmatprep.subr.mxu0 0.0
    %4544 = vmatpush1.msra.mxu0 0.0
    %4545 = vmatprep.subr.mxu0 0.0
    %4546 = vmatpush1.msra.mxu0 0.0
    %4547 = vmatprep.subr.mxu0 0.0
    %4548 = vmatpush1.msra.mxu0 0.0
    %4549 = vmatprep.subr.mxu0 0.0
    %4550 = vmatpush1.msra.mxu0 0.0
    %4551 = vmatprep.subr.mxu0 0.0
    %4552 = vmatpush1.msra.mxu0 0.0
    %4553 = vmatprep.subr.mxu0 0.0
    %4554 = vmatpush1.msra.mxu0 0.0
    %4555 = vmatprep.subr.mxu0 0.0
    %4556 = vmatpush1.msra.mxu0 0.0
    %4557 = vmatprep.subr.mxu0 0.0
    %4558 = vmatpush1.msra.mxu0 0.0
    %4559 = vmatprep.subr.mxu0 0.0
    %4560 = vmatpush1.msra.mxu0 0.0
    %4561 = vmatprep.subr.mxu0 0.0
    %4562 = vmatpush1.msra.mxu0 0.0
    %4563 = vmatprep.subr.mxu0 0.0
    %4564 = vmatpush1.msra.mxu0 0.0
    %4565 = vmatprep.subr.mxu0 0.0
    %4566 = vmatpush1.msra.mxu0 0.0
    %4567 = vmatprep.subr.mxu0 0.0
    %4568 = vmatpush1.msra.mxu0 0.0
    %4569 = vmatprep.subr.mxu0 0.0
    %4570 = vmatpush1.msra.mxu0 0.0
    %4571 = vmatprep.subr.mxu0 0.0
    %4572 = vmatpush1.msra.mxu0 0.0
    %4573 = vmatprep.subr.mxu0 0.0
    %4574 = vmatpush1.msra.mxu0 0.0
    %4575 = vmatprep.subr.mxu0 0.0
    %4576 = vmatpush1.msra.mxu0 0.0
    %4577 = vmatprep.subr.mxu0 0.0
    %4578 = vmatpush1.msra.mxu0 0.0
    %4579 = vmatprep.subr.mxu0 0.0
    %4580 = vmatpush1.msra.mxu0 0.0
    %4581 = vmatprep.subr.mxu0 0.0
    %4582 = vmatpush1.msra.mxu0 0.0
    %4583 = vmatprep.subr.mxu0 0.0
    %4584 = vmatpush1.msra.mxu0 0.0
    %4585 = vmatprep.subr.mxu0 0.0
    %4586 = vmatpush1.msra.mxu0 0.0
    %4587 = vmatprep.mubr.f32.mxu0 0.0
    %4588 = vmatmul.mubr.f32.gmra.mrb[0].mxu0 %v4521
    %v4589 = vpop.f32.mrb[0].mxu0
    %v4590 = vadd.f32 0.0, %v4589
    %v4591 = vpop.f32.mrb[0].mxu0
    %4592 = vdwg.mxu0
    %v4593 = vrcp.pop 128.0
    %v4594 = vmul.f32 %v4590, %v4593
    %vm4595 = vcmask 31744
    %v4597 = vsel %vm4595, %v4594, 0
    %vm4599 = vcmask 1043456
    %v4601 = vsel %vm4599, %v4488, 0
    %4603 = vmatprep.subr.mxu0 0.0
    %4604 = vmatpush1.msra.mxu0 %v4601
    %4605 = vmatprep.subr.mxu0 0.0
    %4606 = vmatpush1.msra.mxu0 0.0
    %4607 = vmatprep.subr.mxu0 0.0
    %4608 = vmatpush1.msra.mxu0 0.0
    %4609 = vmatprep.subr.mxu0 0.0
    %4610 = vmatpush1.msra.mxu0 0.0
    %4611 = vmatprep.subr.mxu0 0.0
    %4612 = vmatpush1.msra.mxu0 0.0
    %4613 = vmatprep.subr.mxu0 0.0
    %4614 = vmatpush1.msra.mxu0 0.0
    %4615 = vmatprep.subr.mxu0 0.0
    %4616 = vmatpush1.msra.mxu0 0.0
    %4617 = vmatprep.subr.mxu0 0.0
    %4618 = vmatpush1.msra.mxu0 0.0
    %4619 = vmatprep.subr.mxu0 0.0
    %4620 = vmatpush1.msra.mxu0 0.0
    %4621 = vmatprep.subr.mxu0 0.0
    %4622 = vmatpush1.msra.mxu0 0.0
    %4623 = vmatprep.subr.mxu0 0.0
    %4624 = vmatpush1.msra.mxu0 0.0
    %4625 = vmatprep.subr.mxu0 0.0
    %4626 = vmatpush1.msra.mxu0 0.0
    %4627 = vmatprep.subr.mxu0 0.0
    %4628 = vmatpush1.msra.mxu0 0.0
    %4629 = vmatprep.subr.mxu0 0.0
    %4630 = vmatpush1.msra.mxu0 0.0
    %4631 = vmatprep.subr.mxu0 0.0
    %4632 = vmatpush1.msra.mxu0 0.0
    %4633 = vmatprep.subr.mxu0 0.0
    %4634 = vmatpush1.msra.mxu0 0.0
    %4635 = vmatprep.subr.mxu0 0.0
    %4636 = vmatpush1.msra.mxu0 0.0
    %4637 = vmatprep.subr.mxu0 0.0
    %4638 = vmatpush1.msra.mxu0 0.0
    %4639 = vmatprep.subr.mxu0 0.0
    %4640 = vmatpush1.msra.mxu0 0.0
    %4641 = vmatprep.subr.mxu0 0.0
    %4642 = vmatpush1.msra.mxu0 0.0
    %4643 = vmatprep.subr.mxu0 0.0
    %4644 = vmatpush1.msra.mxu0 0.0
    %4645 = vmatprep.subr.mxu0 0.0
    %4646 = vmatpush1.msra.mxu0 0.0
    %4647 = vmatprep.subr.mxu0 0.0
    %4648 = vmatpush1.msra.mxu0 0.0
    %4649 = vmatprep.subr.mxu0 0.0
    %4650 = vmatpush1.msra.mxu0 0.0
    %4651 = vmatprep.subr.mxu0 0.0
    %4652 = vmatpush1.msra.mxu0 0.0
    %4653 = vmatprep.subr.mxu0 0.0
    %4654 = vmatpush1.msra.mxu0 0.0
    %4655 = vmatprep.subr.mxu0 0.0
    %4656 = vmatpush1.msra.mxu0 0.0
    %4657 = vmatprep.subr.mxu0 0.0
    %4658 = vmatpush1.msra.mxu0 0.0
    %4659 = vmatprep.subr.mxu0 0.0
    %4660 = vmatpush1.msra.mxu0 0.0
    %4661 = vmatprep.subr.mxu0 0.0
    %4662 = vmatpush1.msra.mxu0 0.0
    %4663 = vmatprep.subr.mxu0 0.0
    %4664 = vmatpush1.msra.mxu0 0.0
    %4665 = vmatprep.subr.mxu0 0.0
    %4666 = vmatpush1.msra.mxu0 0.0
    %4667 = vmatprep.mubr.f32.mxu0 0.0
    %4668 = vmatmul.mubr.f32.gmra.mrb[0].mxu0 %v4597
    %v4669 = vpop.f32.mrb[0].mxu0
    %v4670 = vadd.f32 0.0, %v4669
    %v4671 = vpop.f32.mrb[0].mxu0
    %4672 = vdwg.mxu0
    %v4673 = vsub.f32 %v4468, %v4670
    %v4674 = vsub.f32 %v4469, %v4670
    %v4675 = vsub.f32 %v4470, %v4670
    %v4676 = vsub.f32 %v4471, %v4670
    %v4677 = vsub.f32 %v4472, %v4670
    %v4678 = vsub.f32 %v4473, %v4670
    %v4679 = vsub.f32 %v4474, %v4670
    %v4680 = vsub.f32 %v4475, %v4670
    %v4681 = vsub.f32 %v4476, %v4670
    %v4682 = vsub.f32 %v4477, %v4670
    %v4683 = vsub.f32 %v4478, %v4670
    %v4684 = vsub.f32 %v4479, %v4670
    %v4685 = vsub.f32 %v4480, %v4670
    %v4686 = vsub.f32 %v4481, %v4670
    %v4687 = vsub.f32 %v4482, %v4670
    %v4688 = vsub.f32 %v4483, %v4670
    %v4689 = vmul.f32 %v4673, %v4673
    %v4690 = vmul.f32 %v4674, %v4674
    %v4691 = vmul.f32 %v4675, %v4675
    %v4692 = vmul.f32 %v4676, %v4676
    %v4693 = vmul.f32 %v4677, %v4677
    %v4694 = vmul.f32 %v4678, %v4678
    %v4695 = vmul.f32 %v4679, %v4679
    %v4696 = vmul.f32 %v4680, %v4680
    %v4697 = vmul.f32 %v4681, %v4681
    %v4698 = vmul.f32 %v4682, %v4682
    %v4699 = vmul.f32 %v4683, %v4683
    %v4700 = vmul.f32 %v4684, %v4684
    %v4701 = vmul.f32 %v4685, %v4685
    %v4702 = vmul.f32 %v4686, %v4686
    %v4703 = vmul.f32 %v4687, %v4687
    %v4704 = vmul.f32 %v4688, %v4688
    %v4705 = vsel %vm861, %v4689, 0.0
    %v4706 = vsel %vm861, %v4690, 0.0
    %v4707 = vadd.f32 %v4705, %v4706
    %v4708 = vsel %vm861, %v4691, 0.0
    %v4709 = vadd.f32 %v4707, %v4708
    %v4710 = vsel %vm861, %v4692, 0.0
    %v4711 = vadd.f32 %v4709, %v4710
    %v4712 = vsel %vm861, %v4693, 0.0
    %v4713 = vadd.f32 %v4711, %v4712
    %v4714 = vsel %vm861, %v4694, 0.0
    %v4715 = vadd.f32 %v4713, %v4714
    %v4716 = vsel %vm861, %v4695, 0.0
    %v4717 = vadd.f32 %v4715, %v4716
    %v4718 = vsel %vm861, %v4696, 0.0
    %v4719 = vadd.f32 %v4717, %v4718
    %v4720 = vsel %vm861, %v4697, 0.0
    %v4721 = vadd.f32 %v4719, %v4720
    %v4722 = vsel %vm861, %v4698, 0.0
    %v4723 = vadd.f32 %v4721, %v4722
    %v4724 = vsel %vm861, %v4699, 0.0
    %v4725 = vadd.f32 %v4723, %v4724
    %v4726 = vsel %vm861, %v4700, 0.0
    %v4727 = vadd.f32 %v4725, %v4726
    %v4728 = vsel %vm861, %v4701, 0.0
    %v4729 = vadd.f32 %v4727, %v4728
    %v4730 = vsel %vm861, %v4702, 0.0
    %v4731 = vadd.f32 %v4729, %v4730
    %v4732 = vsel %vm861, %v4703, 0.0
    %v4733 = vadd.f32 %v4731, %v4732
    %v4734 = vsel %vm861, %v4704, 0.0
    %v4735 = vadd.f32 %v4733, %v4734
    %v4737 = vsel %vm222, %v4735, 0
    %4739 = vmatprep.subr.mxu0 0.0
    %4740 = vmatpush1.msra.mxu0 %v4484
    %4741 = vmatprep.subr.mxu0 0.0
    %4742 = vmatpush1.msra.mxu0 %v4485
    %4743 = vmatprep.subr.mxu0 0.0
    %4744 = vmatpush1.msra.mxu0 %v4486
    %4745 = vmatprep.subr.mxu0 0.0
    %4746 = vmatpush1.msra.mxu0 %v4487
    %4747 = vmatprep.subr.mxu0 0.0
    %4748 = vmatpush1.msra.mxu0 0.0
    %4749 = vmatprep.subr.mxu0 0.0
    %4750 = vmatpush1.msra.mxu0 0.0
    %4751 = vmatprep.subr.mxu0 0.0
    %4752 = vmatpush1.msra.mxu0 0.0
    %4753 = vmatprep.subr.mxu0 0.0
    %4754 = vmatpush1.msra.mxu0 0.0
    %4755 = vmatprep.subr.mxu0 0.0
    %4756 = vmatpush1.msra.mxu0 0.0
    %4757 = vmatprep.subr.mxu0 0.0
    %4758 = vmatpush1.msra.mxu0 0.0
    %4759 = vmatprep.subr.mxu0 0.0
    %4760 = vmatpush1.msra.mxu0 0.0
    %4761 = vmatprep.subr.mxu0 0.0
    %4762 = vmatpush1.msra.mxu0 0.0
    %4763 = vmatprep.subr.mxu0 0.0
    %4764 = vmatpush1.msra.mxu0 0.0
    %4765 = vmatprep.subr.mxu0 0.0
    %4766 = vmatpush1.msra.mxu0 0.0
    %4767 = vmatprep.subr.mxu0 0.0
    %4768 = vmatpush1.msra.mxu0 0.0
    %4769 = vmatprep.subr.mxu0 0.0
    %4770 = vmatpush1.msra.mxu0 0.0
    %4771 = vmatprep.subr.mxu0 0.0
    %4772 = vmatpush1.msra.mxu0 0.0
    %4773 = vmatprep.subr.mxu0 0.0
    %4774 = vmatpush1.msra.mxu0 0.0
    %4775 = vmatprep.subr.mxu0 0.0
    %4776 = vmatpush1.msra.mxu0 0.0
    %4777 = vmatprep.subr.mxu0 0.0
    %4778 = vmatpush1.msra.mxu0 0.0
    %4779 = vmatprep.subr.mxu0 0.0
    %4780 = vmatpush1.msra.mxu0 0.0
    %4781 = vmatprep.subr.mxu0 0.0
    %4782 = vmatpush1.msra.mxu0 0.0
    %4783 = vmatprep.subr.mxu0 0.0
    %4784 = vmatpush1.msra.mxu0 0.0
    %4785 = vmatprep.subr.mxu0 0.0
    %4786 = vmatpush1.msra.mxu0 0.0
    %4787 = vmatprep.subr.mxu0 0.0
    %4788 = vmatpush1.msra.mxu0 0.0
    %4789 = vmatprep.subr.mxu0 0.0
    %4790 = vmatpush1.msra.mxu0 0.0
    %4791 = vmatprep.subr.mxu0 0.0
    %4792 = vmatpush1.msra.mxu0 0.0
    %4793 = vmatprep.subr.mxu0 0.0
    %4794 = vmatpush1.msra.mxu0 0.0
    %4795 = vmatprep.subr.mxu0 0.0
    %4796 = vmatpush1.msra.mxu0 0.0
    %4797 = vmatprep.subr.mxu0 0.0
    %4798 = vmatpush1.msra.mxu0 0.0
    %4799 = vmatprep.subr.mxu0 0.0
    %4800 = vmatpush1.msra.mxu0 0.0
    %4801 = vmatprep.subr.mxu0 0.0
    %4802 = vmatpush1.msra.mxu0 0.0
    %4803 = vmatprep.mubr.f32.mxu0 0.0
    %4804 = vmatmul.mubr.f32.gmra.mrb[0].mxu0 %v4737
    %v4805 = vpop.f32.mrb[0].mxu0
    %v4806 = vadd.f32 0.0, %v4805
    %v4807 = vpop.f32.mrb[0].mxu0
    %4808 = vdwg.mxu0
    %v4809 = vmul.f32 %v4806, %v4593
    %v4810 = vadd.f32 %v4809, 1e-05
    %v4811 = vrsqrt.pop %v4810
    %v4813 = vsel %vm4595, %v4811, 0
    %4815 = vmatprep.subr.mxu0 0.0
    %4816 = vmatpush1.msra.mxu0 %v4601
    %4817 = vmatprep.subr.mxu0 0.0
    %4818 = vmatpush1.msra.mxu0 0.0
    %4819 = vmatprep.subr.mxu0 0.0
    %4820 = vmatpush1.msra.mxu0 0.0
    %4821 = vmatprep.subr.mxu0 0.0
    %4822 = vmatpush1.msra.mxu0 0.0
    %4823 = vmatprep.subr.mxu0 0.0
    %4824 = vmatpush1.msra.mxu0 0.0
    %4825 = vmatprep.subr.mxu0 0.0
    %4826 = vmatpush1.msra.mxu0 0.0
    %4827 = vmatprep.subr.mxu0 0.0
    %4828 = vmatpush1.msra.mxu0 0.0
    %4829 = vmatprep.subr.mxu0 0.0
    %4830 = vmatpush1.msra.mxu0 0.0
    %4831 = vmatprep.subr.mxu0 0.0
    %4832 = vmatpush1.msra.mxu0 0.0
    %4833 = vmatprep.subr.mxu0 0.0
    %4834 = vmatpush1.msra.mxu0 0.0
    %4835 = vmatprep.subr.mxu0 0.0
    %4836 = vmatpush1.msra.mxu0 0.0
    %4837 = vmatprep.subr.mxu0 0.0
    %4838 = vmatpush1.msra.mxu0 0.0
    %4839 = vmatprep.subr.mxu0 0.0
    %4840 = vmatpush1.msra.mxu0 0.0
    %4841 = vmatprep.subr.mxu0 0.0
    %4842 = vmatpush1.msra.mxu0 0.0
    %4843 = vmatprep.subr.mxu0 0.0
    %4844 = vmatpush1.msra.mxu0 0.0
    %4845 = vmatprep.subr.mxu0 0.0
    %4846 = vmatpush1.msra.mxu0 0.0
    %4847 = vmatprep.subr.mxu0 0.0
    %4848 = vmatpush1.msra.mxu0 0.0
    %4849 = vmatprep.subr.mxu0 0.0
    %4850 = vmatpush1.msra.mxu0 0.0
    %4851 = vmatprep.subr.mxu0 0.0
    %4852 = vmatpush1.msra.mxu0 0.0
    %4853 = vmatprep.subr.mxu0 0.0
    %4854 = vmatpush1.msra.mxu0 0.0
    %4855 = vmatprep.subr.mxu0 0.0
    %4856 = vmatpush1.msra.mxu0 0.0
    %4857 = vmatprep.subr.mxu0 0.0
    %4858 = vmatpush1.msra.mxu0 0.0
    %4859 = vmatprep.subr.mxu0 0.0
    %4860 = vmatpush1.msra.mxu0 0.0
    %4861 = vmatprep.subr.mxu0 0.0
    %4862 = vmatpush1.msra.mxu0 0.0
    %4863 = vmatprep.subr.mxu0 0.0
    %4864 = vmatpush1.msra.mxu0 0.0
    %4865 = vmatprep.subr.mxu0 0.0
    %4866 = vmatpush1.msra.mxu0 0.0
    %4867 = vmatprep.subr.mxu0 0.0
    %4868 = vmatpush1.msra.mxu0 0.0
    %4869 = vmatprep.subr.mxu0 0.0
    %4870 = vmatpush1.msra.mxu0 0.0
    %4871 = vmatprep.subr.mxu0 0.0
    %4872 = vmatpush1.msra.mxu0 0.0
    %4873 = vmatprep.subr.mxu0 0.0
    %4874 = vmatpush1.msra.mxu0 0.0
    %4875 = vmatprep.subr.mxu0 0.0
    %4876 = vmatpush1.msra.mxu0 0.0
    %4877 = vmatprep.subr.mxu0 0.0
    %4878 = vmatpush1.msra.mxu0 0.0
    %4879 = vmatprep.mubr.f32.mxu0 0.0
    %4880 = vmatmul.mubr.f32.gmra.mrb[0].mxu0 %v4813
    %v4881 = vpop.f32.mrb[0].mxu0
    %v4882 = vadd.f32 0.0, %v4881
    %v4883 = vpop.f32.mrb[0].mxu0
    %4884 = vdwg.mxu0
    %v4885 = vmul.f32 %v4673, %v4882
    %v4886 = vmul.f32 %v4674, %v4882
    %v4887 = vmul.f32 %v4675, %v4882
    %v4888 = vmul.f32 %v4676, %v4882
    %v4889 = vmul.f32 %v4677, %v4882
    %v4890 = vmul.f32 %v4678, %v4882
    %v4891 = vmul.f32 %v4679, %v4882
    %v4892 = vmul.f32 %v4680, %v4882
    %v4893 = vmul.f32 %v4681, %v4882
    %v4894 = vmul.f32 %v4682, %v4882
    %v4895 = vmul.f32 %v4683, %v4882
    %v4896 = vmul.f32 %v4684, %v4882
    %v4897 = vmul.f32 %v4685, %v4882
    %v4898 = vmul.f32 %v4686, %v4882
    %v4899 = vmul.f32 %v4687, %v4882
    %v4900 = vmul.f32 %v4688, %v4882
    %v4901 = vld [vmem:[%s9] sm:$0x1]
    %v4903 = vlaneseq
    %v4904 = vshrl.u32 %v4903, 7
    %v4905 = vsub.s32 0, %v4904
    %v4906 = vrot.slane %v4901, %v4905
    %v4908 = vmul.f32 %v4885, %v4906
    %v4909 = vmul.f32 %v4886, %v4906
    %v4910 = vmul.f32 %v4887, %v4906
    %v4911 = vmul.f32 %v4888, %v4906
    %v4912 = vmul.f32 %v4889, %v4906
    %v4913 = vmul.f32 %v4890, %v4906
    %v4914 = vmul.f32 %v4891, %v4906
    %v4915 = vmul.f32 %v4892, %v4906
    %v4916 = vmul.f32 %v4893, %v4906
    %v4917 = vmul.f32 %v4894, %v4906
    %v4918 = vmul.f32 %v4895, %v4906
    %v4919 = vmul.f32 %v4896, %v4906
    %v4920 = vmul.f32 %v4897, %v4906
    %v4921 = vmul.f32 %v4898, %v4906
    %v4922 = vmul.f32 %v4899, %v4906
    %v4923 = vmul.f32 %v4900, %v4906
    %v4924 = vld [vmem:[#allocation6] sm:$0x1]
    %v4926 = vlaneseq
    %v4927 = vshrl.u32 %v4926, 7
    %v4928 = vsub.s32 0, %v4927
    %v4929 = vrot.slane %v4924, %v4928
    %v4931 = vadd.f32 %v4908, %v4929
    %v4932 = vadd.f32 %v4909, %v4929
    %v4933 = vadd.f32 %v4910, %v4929
    %v4934 = vadd.f32 %v4911, %v4929
    %v4935 = vadd.f32 %v4912, %v4929
    %v4936 = vadd.f32 %v4913, %v4929
    %v4937 = vadd.f32 %v4914, %v4929
    %v4938 = vadd.f32 %v4915, %v4929
    %v4939 = vadd.f32 %v4916, %v4929
    %v4940 = vadd.f32 %v4917, %v4929
    %v4941 = vadd.f32 %v4918, %v4929
    %v4942 = vadd.f32 %v4919, %v4929
    %v4943 = vadd.f32 %v4920, %v4929
    %v4944 = vadd.f32 %v4921, %v4929
    %v4945 = vadd.f32 %v4922, %v4929
    %v4946 = vadd.f32 %v4923, %v4929
    %vm4947 = vcmp.ge.f32.partialorder %v4931, 0.0
    %vm4948 = vcmp.ge.f32.partialorder %v4932, 0.0
    %vm4949 = vcmp.ge.f32.partialorder %v4933, 0.0
    %vm4950 = vcmp.ge.f32.partialorder %v4934, 0.0
    %vm4951 = vcmp.ge.f32.partialorder %v4935, 0.0
    %vm4952 = vcmp.ge.f32.partialorder %v4936, 0.0
    %vm4953 = vcmp.ge.f32.partialorder %v4937, 0.0
    %vm4954 = vcmp.ge.f32.partialorder %v4938, 0.0
    %vm4955 = vcmp.ge.f32.partialorder %v4939, 0.0
    %vm4956 = vcmp.ge.f32.partialorder %v4940, 0.0
    %vm4957 = vcmp.ge.f32.partialorder %v4941, 0.0
    %vm4958 = vcmp.ge.f32.partialorder %v4942, 0.0
    %vm4959 = vcmp.ge.f32.partialorder %v4943, 0.0
    %vm4960 = vcmp.ge.f32.partialorder %v4944, 0.0
    %vm4961 = vcmp.ge.f32.partialorder %v4945, 0.0
    %vm4962 = vcmp.ge.f32.partialorder %v4946, 0.0
    %v4963 = vmul.f32 %v4931, 0.01
    %v4964 = vmul.f32 %v4932, 0.01
    %v4965 = vmul.f32 %v4933, 0.01
    %v4966 = vmul.f32 %v4934, 0.01
    %v4967 = vmul.f32 %v4935, 0.01
    %v4968 = vmul.f32 %v4936, 0.01
    %v4969 = vmul.f32 %v4937, 0.01
    %v4970 = vmul.f32 %v4938, 0.01
    %v4971 = vmul.f32 %v4939, 0.01
    %v4972 = vmul.f32 %v4940, 0.01
    %v4973 = vmul.f32 %v4941, 0.01
    %v4974 = vmul.f32 %v4942, 0.01
    %v4975 = vmul.f32 %v4943, 0.01
    %v4976 = vmul.f32 %v4944, 0.01
    %v4977 = vmul.f32 %v4945, 0.01
    %v4978 = vmul.f32 %v4946, 0.01
    %v4979 = vsel %vm4947, %v4931, %v4963
    %v4980 = vsel %vm4948, %v4932, %v4964
    %v4981 = vsel %vm4949, %v4933, %v4965
    %v4982 = vsel %vm4950, %v4934, %v4966
    %v4983 = vsel %vm4951, %v4935, %v4967
    %v4984 = vsel %vm4952, %v4936, %v4968
    %v4985 = vsel %vm4953, %v4937, %v4969
    %v4986 = vsel %vm4954, %v4938, %v4970
    %v4987 = vsel %vm4955, %v4939, %v4971
    %v4988 = vsel %vm4956, %v4940, %v4972
    %v4989 = vsel %vm4957, %v4941, %v4973
    %v4990 = vsel %vm4958, %v4942, %v4974
    %v4991 = vsel %vm4959, %v4943, %v4975
    %v4992 = vsel %vm4960, %v4944, %v4976
    %v4993 = vsel %vm4961, %v4945, %v4977
    %v4994 = vsel %vm4962, %v4946, %v4978
    %v4995 = vld [vmem:[%s0] sm:$0x3]
    %v4996 = vld [vmem:[%s0 + $0x2] sm:$0x3]
    %v4997 = vld [vmem:[%s0 + $0x4] sm:$0x3]
    %v4998 = vld [vmem:[%s0 + $0x6] sm:$0x3]
    %v4999 = vld [vmem:[%s0 + $0x8] sm:$0x3]
    %v5000 = vld [vmem:[%s0 + $0xa] sm:$0x3]
    %v5001 = vld [vmem:[%s0 + $0xc] sm:$0x3]
    %v5002 = vld [vmem:[%s0 + $0xe] sm:$0x3]
    %v5003 = vld [vmem:[%s0 + $0x10] sm:$0x3]
    %v5004 = vld [vmem:[%s0 + $0x12] sm:$0x3]
    %v5005 = vld [vmem:[%s0 + $0x14] sm:$0x3]
    %v5006 = vld [vmem:[%s0 + $0x16] sm:$0x3]
    %v5007 = vld [vmem:[%s0 + $0x18] sm:$0x3]
    %v5008 = vld [vmem:[%s0 + $0x1a] sm:$0x3]
    %v5009 = vld [vmem:[%s0 + $0x1c] sm:$0x3]
    %v5010 = vld [vmem:[%s0 + $0x1e] sm:$0x3]
    %v5011 = vld [vmem:[%s1083] sm:$0x3]
    %v5012 = vld [vmem:[%s1083 + $0x2] sm:$0x3]
    %v5013 = vld [vmem:[%s1083 + $0x4] sm:$0x3]
    %v5014 = vld [vmem:[%s1083 + $0x6] sm:$0x3]
    %v5015 = vld [vmem:[%s1083 + $0x8] sm:$0x3]
    %v5016 = vld [vmem:[%s1083 + $0xa] sm:$0x3]
    %v5017 = vld [vmem:[%s1083 + $0xc] sm:$0x3]
    %v5018 = vld [vmem:[%s1083 + $0xe] sm:$0x3]
    %v5019 = vld [vmem:[%s1083 + $0x10] sm:$0x3]
    %v5020 = vld [vmem:[%s1083 + $0x12] sm:$0x3]
    %v5021 = vld [vmem:[%s1083 + $0x14] sm:$0x3]
    %v5022 = vld [vmem:[%s1083 + $0x16] sm:$0x3]
    %v5023 = vld [vmem:[%s1083 + $0x18] sm:$0x3]
    %v5024 = vld [vmem:[%s1083 + $0x1a] sm:$0x3]
    %v5025 = vld [vmem:[%s1083 + $0x1c] sm:$0x3]
    %v5026 = vld [vmem:[%s1083 + $0x1e] sm:$0x3]
    %v5027 = vadd.f32 %v4995, %v5011
    %v5028 = vadd.f32 %v4996, %v5012
    %v5029 = vadd.f32 %v4997, %v5013
    %v5030 = vadd.f32 %v4998, %v5014
    %v5031 = vadd.f32 %v4999, %v5015
    %v5032 = vadd.f32 %v5000, %v5016
    %v5033 = vadd.f32 %v5001, %v5017
    %v5034 = vadd.f32 %v5002, %v5018
    %v5035 = vadd.f32 %v5003, %v5019
    %v5036 = vadd.f32 %v5004, %v5020
    %v5037 = vadd.f32 %v5005, %v5021
    %v5038 = vadd.f32 %v5006, %v5022
    %v5039 = vadd.f32 %v5007, %v5023
    %v5040 = vadd.f32 %v5008, %v5024
    %v5041 = vadd.f32 %v5009, %v5025
    %v5042 = vadd.f32 %v5010, %v5026
    %v5043 = vadd.f32 %v5027, %v4979
    %v5044 = vadd.f32 %v5028, %v4980
    %v5045 = vadd.f32 %v5029, %v4981
    %v5046 = vadd.f32 %v5030, %v4982
    %v5047 = vadd.f32 %v5031, %v4983
    %v5048 = vadd.f32 %v5032, %v4984
    %v5049 = vadd.f32 %v5033, %v4985
    %v5050 = vadd.f32 %v5034, %v4986
    %v5051 = vadd.f32 %v5035, %v4987
    %v5052 = vadd.f32 %v5036, %v4988
    %v5053 = vadd.f32 %v5037, %v4989
    %v5054 = vadd.f32 %v5038, %v4990
    %v5055 = vadd.f32 %v5039, %v4991
    %v5056 = vadd.f32 %v5040, %v4992
    %v5057 = vadd.f32 %v5041, %v4993
    %v5058 = vadd.f32 %v5042, %v4994
    %5059 = vst.msk [vmem:[%s13] sm:$0x3] %vm861, %v5043
    %5060 = vst.msk [vmem:[%s13 + $0x2] sm:$0x3] %vm861, %v5044
    %5061 = vst.msk [vmem:[%s13 + $0x4] sm:$0x3] %vm861, %v5045
    %5062 = vst.msk [vmem:[%s13 + $0x6] sm:$0x3] %vm861, %v5046
    %5063 = vst.msk [vmem:[%s13 + $0x8] sm:$0x3] %vm861, %v5047
    %5064 = vst.msk [vmem:[%s13 + $0xa] sm:$0x3] %vm861, %v5048
    %5065 = vst.msk [vmem:[%s13 + $0xc] sm:$0x3] %vm861, %v5049
    %5066 = vst.msk [vmem:[%s13 + $0xe] sm:$0x3] %vm861, %v5050
    %5067 = vst.msk [vmem:[%s13 + $0x10] sm:$0x3] %vm861, %v5051
    %5068 = vst.msk [vmem:[%s13 + $0x12] sm:$0x3] %vm861, %v5052
    %5069 = vst.msk [vmem:[%s13 + $0x14] sm:$0x3] %vm861, %v5053
    %5070 = vst.msk [vmem:[%s13 + $0x16] sm:$0x3] %vm861, %v5054
    %5071 = vst.msk [vmem:[%s13 + $0x18] sm:$0x3] %vm861, %v5055
    %5072 = vst.msk [vmem:[%s13 + $0x1a] sm:$0x3] %vm861, %v5056
    %5073 = vst.msk [vmem:[%s13 + $0x1c] sm:$0x3] %vm861, %v5057
    %5074 = vst.msk [vmem:[%s13 + $0x1e] sm:$0x3] %vm861, %v5058
    // Predicated region
    $region66: #{g3block_forward.1} parent=1 // pred_check
      _
    $region67: #{g3block_forward.1} parent=1 // pred_check_branch
      %5076 = sbr.rel (0) target = $region69
    $region68: #{g3block_forward.1} parent=1 // pred_region
      _
    $region69: #{g3block_forward.1} parent=1 // pred_fallthru
      _
    // Predicated region
    $region70: #{g3block_forward.1} parent=1 // pred_check
      _
    $region71: #{g3block_forward.1} parent=1 // pred_check_branch
      %5078 = sbr.rel (0) target = $region73
    $region72: #{g3block_forward.1} parent=1 // pred_region
      _
    $region73: #{g3block_forward.1} parent=1 // pred_fallthru
      _
    %5079 = vsyncpa [#allocation5], 1
    %5080 = vsyncpa [#allocation7], 1

</llo_original>
